<compile_context>
chip_gen: v6e
topology: v6e:2x2x1
jax: 0.10.0
libtpu: 0.0.40
codegen_flags: <defaults>
</compile_context>

<pallas_src>
import functools

import jax
import jax.numpy as jnp
from jax.experimental import pallas as pl
from jax.experimental.pallas import tpu as pltpu


DEFAULT_TILE_ROWS = 512                  # big row tiles -> DMA efficiency
VMEM_LIMIT_BYTES = 64 * 1024 * 1024      # explicit scoped-VMEM cap
VMEM_BUDGET_BYTES = 24 * 1024 * 1024     # target working set when sizing tiles


def _round_up(x, m):
    return ((x + m - 1) // m) * m


def _pad2d(a, rows, cols):
    r, c = a.shape
    if r == rows and c == cols:
        return a
    return jnp.pad(a, ((0, rows - r), (0, cols - c)))


# ----------------------------------------------------------------------------
# Pallas kernels.
# ----------------------------------------------------------------------------
def _make_fused_kernel(relu, has_res):
    """matmul (MXU, f32 acc) + bias (+ residual) (+ ReLU), all in one kernel."""
    if has_res:
        def kernel(x_ref, w_ref, b_ref, r_ref, o_ref):
            acc = jnp.dot(x_ref[...], w_ref[...],
                          preferred_element_type=jnp.float32)
            y = acc + b_ref[...] + r_ref[...]
            if relu:
                y = jnp.maximum(y, 0.0)
            o_ref[...] = y
    else:
        def kernel(x_ref, w_ref, b_ref, o_ref):
            acc = jnp.dot(x_ref[...], w_ref[...],
                          preferred_element_type=jnp.float32)
            y = acc + b_ref[...]
            if relu:
                y = jnp.maximum(y, 0.0)
            o_ref[...] = y
    return kernel


def _maxpool_kernel(p_ref, o_ref):
    # p_ref: (P, tile_m, C) stacked window slabs -> elementwise max over P.
    m = p_ref[0]
    for k in range(1, p_ref.shape[0]):
        m = jnp.maximum(m, p_ref[k])
    o_ref[...] = m


# ----------------------------------------------------------------------------
# Pallas wrappers (called inside the single whole-forward jit).
# ----------------------------------------------------------------------------
def _choose_tile_m(M, k_pad, n_pad, has_res):
    tile_m = min(DEFAULT_TILE_ROWS, _round_up(max(M, 1), 8))

    def vmem_bytes(tm):
        per_tile = tm * k_pad + tm * n_pad + (tm * n_pad if has_res else 0)
        resident = k_pad * n_pad + n_pad
        return (2 * per_tile + 2 * resident) * 4   # double-buffered f32

    while tile_m > 8 and vmem_bytes(tile_m) > VMEM_BUDGET_BYTES:
        tile_m = _round_up(tile_m // 2, 8)
    return tile_m


def _fused_conv_core(x2d, w2d, bias, res2d, *, relu, has_res):
    """out[:M, :N] = act( x2d @ w2d + bias (+ res2d) ). w2d has BN scale folded."""
    M, K = x2d.shape
    N = w2d.shape[1]
    k_pad = _round_up(K, 128)
    n_pad = _round_up(N, 128)
    tile_m = _choose_tile_m(M, k_pad, n_pad, has_res)
    m_pad = _round_up(M, tile_m)

    x_p = _pad2d(x2d, m_pad, k_pad)
    w_p = _pad2d(w2d, k_pad, n_pad)
    b_p = _pad2d(bias.reshape(1, N), 1, n_pad)

    args = [x_p, w_p, b_p]
    in_specs = [
        pl.BlockSpec((tile_m, k_pad), lambda i: (i, 0)),
        pl.BlockSpec((k_pad, n_pad), lambda i: (0, 0)),
        pl.BlockSpec((1, n_pad), lambda i: (0, 0)),
    ]
    if has_res:
        args.append(_pad2d(res2d, m_pad, n_pad))
        in_specs.append(pl.BlockSpec((tile_m, n_pad), lambda i: (i, 0)))

    out = pl.pallas_call(
        _make_fused_kernel(relu, has_res),
        out_shape=jax.ShapeDtypeStruct((m_pad, n_pad), jnp.float32),
        grid_spec=pltpu.PrefetchScalarGridSpec(
            num_scalar_prefetch=0,
            grid=(m_pad // tile_m,),
            in_specs=in_specs,
            out_specs=pl.BlockSpec((tile_m, n_pad), lambda i: (i, 0)),
        ),
        compiler_params=pltpu.CompilerParams(
            dimension_semantics=("parallel",),
            vmem_limit_bytes=VMEM_LIMIT_BYTES,
        ),
    )(*args)
    return out[:M, :N]


def _pallas_maxpool(patches):
    """patches: (P, M, C) stacked window slabs -> (M, C) max over P."""
    P, M, C = patches.shape
    tile_m = min(DEFAULT_TILE_ROWS, _round_up(max(M, 1), 8))
    m_pad = _round_up(M, tile_m)
    c_pad = _round_up(C, 128)
    p = jnp.pad(patches, ((0, 0), (0, m_pad - M), (0, c_pad - C)))

    out = pl.pallas_call(
        _maxpool_kernel,
        out_shape=jax.ShapeDtypeStruct((m_pad, c_pad), jnp.float32),
        grid_spec=pltpu.PrefetchScalarGridSpec(
            num_scalar_prefetch=0,
            grid=(m_pad // tile_m,),
            in_specs=[pl.BlockSpec((P, tile_m, c_pad), lambda i: (0, i, 0))],
            out_specs=pl.BlockSpec((tile_m, c_pad), lambda i: (i, 0)),
        ),
        compiler_params=pltpu.CompilerParams(
            dimension_semantics=("parallel",),
            vmem_limit_bytes=VMEM_LIMIT_BYTES,
        ),
    )(p)
    return out[:M, :C]


# ----------------------------------------------------------------------------
# Layout plumbing (im2col / window extraction) — NHWC internally (lane-dense C).
# ----------------------------------------------------------------------------
def _im2col(x, ksize, stride, pad):
    B, H, W, C = x.shape
    ho = (H + 2 * pad - ksize) // stride + 1
    wo = (W + 2 * pad - ksize) // stride + 1
    if pad:
        x = jnp.pad(x, ((0, 0), (pad, pad), (pad, pad), (0, 0)))
    cols = []
    for ki in range(ksize):
        for kj in range(ksize):
            patch = jax.lax.slice(
                x, (0, ki, kj, 0),
                (B, ki + (ho - 1) * stride + 1, kj + (wo - 1) * stride + 1, C),
                (1, stride, stride, 1))
            cols.append(patch)
    mat = jnp.concatenate(cols, axis=-1).reshape(B * ho * wo, ksize * ksize * C)
    return mat, (B, ho, wo)


def _pool_patches(x, ksize, stride, pad):
    B, H, W, C = x.shape
    ho = (H + 2 * pad - ksize) // stride + 1
    wo = (W + 2 * pad - ksize) // stride + 1
    if pad:
        x = jnp.pad(x, ((0, 0), (pad, pad), (pad, pad), (0, 0)),
                    constant_values=-jnp.inf)
    cols = []
    for ki in range(ksize):
        for kj in range(ksize):
            patch = jax.lax.slice(
                x, (0, ki, kj, 0),
                (B, ki + (ho - 1) * stride + 1, kj + (wo - 1) * stride + 1, C),
                (1, stride, stride, 1))
            cols.append(patch.reshape(B * ho * wo, C))
    return jnp.stack(cols, axis=0), (B, ho, wo)


# ----------------------------------------------------------------------------
# High-level ops (Pallas hot path + pure-JAX reference path for self-check).
# ----------------------------------------------------------------------------
def conv_bn(x, params, *, ksize, stride, pad, relu=True, residual=None,
            use_pallas=True):
    w2d, bias = params                                # BN scale pre-folded into w2d
    mat, (B, ho, wo) = _im2col(x, ksize, stride, pad)
    N = w2d.shape[1]
    res2d = None if residual is None else residual.reshape(B * ho * wo, N)
    if use_pallas:
        y2d = _fused_conv_core(mat, w2d, bias, res2d,
                               relu=relu, has_res=res2d is not None)
    else:
        y2d = jnp.dot(mat, w2d, preferred_element_type=jnp.float32) + bias[None, :]
        if res2d is not None:
            y2d = y2d + res2d
        if relu:
            y2d = jnp.maximum(y2d, 0.0)
    return y2d.reshape(B, ho, wo, N)


def maxpool(x, *, ksize, stride, pad, use_pallas=True):
    C = x.shape[-1]
    patches, (B, ho, wo) = _pool_patches(x, ksize, stride, pad)
    y = _pallas_maxpool(patches) if use_pallas else jnp.max(patches, axis=0)
    return y.reshape(B, ho, wo, C)


def bottleneck(x, p, *, stride, has_down, use_pallas=True):
    out = conv_bn(x, p["c1"], ksize=1, stride=1, pad=0, relu=True,
                  use_pallas=use_pallas)
    out = conv_bn(out, p["c2"], ksize=3, stride=stride, pad=1, relu=True,
                  use_pallas=use_pallas)
    if has_down:
        identity = conv_bn(x, p["cd"], ksize=1, stride=stride, pad=0, relu=False,
                           use_pallas=use_pallas)
    else:
        identity = x
    # final 1x1 conv + bn + residual add + relu fused into one Pallas kernel
    out = conv_bn(out, p["c3"], ksize=1, stride=1, pad=0, relu=True,
                  residual=identity, use_pallas=use_pallas)
    return out


def _to_nchw(x_nhwc):
    return jnp.transpose(x_nhwc, (0, 3, 1, 2))


# ----------------------------------------------------------------------------
# Deterministic slim ResNet-50-style network (stand-in for the external arg).
# ----------------------------------------------------------------------------
class _KeyGen:
    def __init__(self, key):
        self._key = key
        self._i = 0

    def __call__(self):
        self._i += 1
        return jax.random.fold_in(self._key, self._i)


def build_network(key, in_ch=3, base=16, blocks=(3, 4, 6, 3)):
    """Returns (params_pytree, arch) where arch is a static/hashable description."""
    kg = _KeyGen(key)

    def conv_params(kh, kw, cin, cout):
        std = (2.0 / (kh * kw * cin)) ** 0.5
        w = std * jax.random.normal(kg(), (kh, kw, cin, cout), jnp.float32)
        w2d = w.reshape(kh * kw * cin, cout)            # rows ordered (kh, kw, cin)
        gamma = 1.0 + 0.1 * jax.random.normal(kg(), (cout,), jnp.float32)
        beta = 0.1 * jax.random.normal(kg(), (cout,), jnp.float32)
        mean = 0.1 * jax.random.normal(kg(), (cout,), jnp.float32)
        var = 1.0 + 0.1 * jnp.abs(jax.random.normal(kg(), (cout,), jnp.float32))
        scale = gamma / jnp.sqrt(var + 1e-5)            # eval-mode BN folded
        shift = beta - mean * scale
        return (w2d * scale[None, :], shift)            # fold scale into the weight

    params = {"conv1": conv_params(7, 7, in_ch, base)}
    inplanes = base
    all_layers = []
    arch = []
    for li, nb in enumerate(blocks):
        planes = base * (2 ** li)
        layer_stride = 1 if li == 0 else 2
        layer, layer_arch = [], []
        for bi in range(nb):
            s = layer_stride if bi == 0 else 1
            has_down = (s != 1) or (inplanes != planes * 4)
            p = {"c1": conv_params(1, 1, inplanes, planes),
                 "c2": conv_params(3, 3, planes, planes),
                 "c3": conv_params(1, 1, planes, planes * 4)}
            if has_down:
                p["cd"] = conv_params(1, 1, inplanes, planes * 4)
            layer.append(p)
            layer_arch.append((int(s), bool(has_down)))
            inplanes = planes * 4
        all_layers.append(tuple(layer))
        arch.append(tuple(layer_arch))
    params["layers"] = tuple(all_layers)
    return params, tuple(arch)


# ----------------------------------------------------------------------------
# get_features equivalent — whole forward under one jit.
# ----------------------------------------------------------------------------
_LAYERS1 = {'0': 'conv1_0', '1': 'conv1_1', '2': 'conv1_2'}
_LAYERS2 = {'0': 'conv2_0', '1': 'conv2_1', '2': 'conv2_2', '3': 'conv2_3'}
_LAYERS3 = {'0': 'conv3_0', '1': 'conv3_1', '2': 'conv3_2',
            '3': 'conv3_3', '4': 'conv3_4', '5': 'conv3_5'}
_LAYERS4 = {'0': 'conv4_0', '1': 'conv4_1', '2': 'conv4_2'}


@functools.partial(jax.jit, static_argnames=("arch", "use_pallas"))
def _forward_impl(params, image_nchw, *, arch, use_pallas):
    features = {}
    x = jnp.transpose(image_nchw, (0, 2, 3, 1))          # NCHW -> NHWC (lane-dense C)

    # conv1 + bn1 + relu (single fused Pallas kernel)
    x = conv_bn(x, params["conv1"], ksize=7, stride=2, pad=3, relu=True,
                use_pallas=use_pallas)
    features['conv0_0'] = _to_nchw(x)

    x = maxpool(x, ksize=3, stride=2, pad=1, use_pallas=use_pallas)

    names_per_layer = (_LAYERS1, _LAYERS2, _LAYERS3, _LAYERS4)
    for li, (layer_params, layer_arch) in enumerate(zip(params["layers"], arch)):
        names = names_per_layer[li]
        for bi, (bp, (stride, has_down)) in enumerate(zip(layer_params, layer_arch)):
            x = bottleneck(x, bp, stride=stride, has_down=has_down,
                           use_pallas=use_pallas)
            if str(bi) in names:
                features[names[str(bi)]] = _to_nchw(x)
    return features


class GetFeatures:
    """JAX/Pallas port of the PyTorch `get_features` forward pass.

    `network` is the (params, arch) pair from build_network, standing in for the
    DataParallel-wrapped pretrained ResNet (`self.network.module.<...>`) of the
    original module.
    """

    def __init__(self, network):
        self.params, self.arch = network
        self.layers1 = dict(_LAYERS1)
        self.layers2 = dict(_LAYERS2)
        self.layers3 = dict(_LAYERS3)
        self.layers4 = dict(_LAYERS4)

    def forward(self, image_nchw, use_pallas=True):
        return _forward_impl(self.params, image_nchw,
                             arch=self.arch, use_pallas=use_pallas)

    __call__ = forward


# Alias matching the original PyTorch class name.
get_features = GetFeatures


# ----------------------------------------------------------------------------
# Demo / self-test.
# ----------------------------------------------------------------------------
if __name__ == "__main__":
    key = jax.random.PRNGKey(0)
    k_net, k_img = jax.random.split(key)

    network = build_network(k_net, in_ch=3, base=16, blocks=(3, 4, 6, 3))
    image = jax.random.normal(k_img, (2, 3, 32, 32), dtype=jnp.float32)  # NCHW

    extractor = GetFeatures(network)

    feats = extractor(image, use_pallas=True)            # Pallas hot path
    feats = jax.block_until_ready(feats)

    feats_ref = extractor(image, use_pallas=False)       # pure-JAX reference
    feats_ref = jax.block_until_ready(feats_ref)

    expected_keys = (['conv0_0']
                     + ['conv1_%d' % i for i in range(3)]
                     + ['conv2_%d' % i for i in range(4)]
                     + ['conv3_%d' % i for i in range(6)]
                     + ['conv4_%d' % i for i in range(3)])
    assert set(feats.keys()) == set(expected_keys), sorted(feats.keys())

    for name in expected_keys:
        a, b = feats[name], feats_ref[name]
        assert a.shape == b.shape, (name, a.shape, b.shape)
        denom = float(jnp.maximum(jnp.max(jnp.abs(b)), 1.0))
        err = float(jnp.max(jnp.abs(a - b))) / denom
        # Real layout/stride bugs give O(1) errors; loose bound tolerates
        # MXU-precision differences compounding through 50+ matmuls.
        tol = 0.05 if name == 'conv0_0' else 0.3
        assert err < tol, (name, err)

    print("KERNEL_OK")
</pallas_src>

<mosaic_0001>
module attributes {stable_mosaic.version = 11 : i64} {
  func.func @kernel(%arg0: i32, %arg1: memref<512x256xf32, #tpu.memory_space<vmem>>, %arg2: memref<256x128xf32, #tpu.memory_space<vmem>>, %arg3: memref<1x128xf32, #tpu.memory_space<vmem>>, %arg4: memref<512x128xf32, #tpu.memory_space<vmem>>) attributes {dimension_semantics = [#tpu.dimension_semantics<parallel>], iteration_bounds = array<i64: 1>, scalar_prefetch = 0 : i64, scratch_operands = 0 : i64, tpu.core_type = #tpu.core_type<tc>, window_params = [{transform_indices = @transform_0, window_bounds = array<i64: 512, 256>}, {pipeline_mode = #tpu.pipeline_mode<synchronous>, transform_indices = @transform_1, window_bounds = array<i64: 256, 128>}, {pipeline_mode = #tpu.pipeline_mode<synchronous>, transform_indices = @transform_2, window_bounds = array<i64: 1, 128>}, {transform_indices = @transform_3, window_bounds = array<i64: 512, 128>}]} {
    %c0 = arith.constant 0 : index
    %c0_0 = arith.constant 0 : index
    %0 = vector.load %arg1[%c0, %c0_0] : memref<512x256xf32, #tpu.memory_space<vmem>>, vector<512x256xf32>
    %c0_1 = arith.constant 0 : index
    %c0_2 = arith.constant 0 : index
    %1 = vector.load %arg2[%c0_1, %c0_2] : memref<256x128xf32, #tpu.memory_space<vmem>>, vector<256x128xf32>
    %cst = arith.constant dense<0.000000e+00> : vector<512x128xf32>
    %2 = tpu.matmul %0, %1, %cst {dimension_numbers = #tpu.dot_dimension_numbers<[1], [0], [0], [1], [0, 0, 1, 1], [], []>} : vector<512x256xf32>, vector<256x128xf32>, vector<512x128xf32> -> vector<512x128xf32>
    %c0_3 = arith.constant 0 : index
    %c0_4 = arith.constant 0 : index
    %3 = vector.load %arg3[%c0_3, %c0_4] : memref<1x128xf32, #tpu.memory_space<vmem>>, vector<1x128xf32>
    %4 = vector.broadcast %3 : vector<1x128xf32> to vector<512x128xf32>
    %5 = arith.addf %2, %4 : vector<512x128xf32>
    %cst_5 = arith.constant 0.000000e+00 : f32
    %6 = vector.broadcast %cst_5 : f32 to vector<512x128xf32>
    %7 = arith.maximumf %5, %6 : vector<512x128xf32>
    %c0_6 = arith.constant 0 : index
    %c0_7 = arith.constant 0 : index
    %8 = vector.load %arg4[%c0_6, %c0_7] : memref<512x128xf32, #tpu.memory_space<vmem>>, vector<512x128xf32>
    tpu.vector_store %arg4[%c0_6, %c0_7], %7 {strides = array<i32>} : memref<512x128xf32, #tpu.memory_space<vmem>>, vector<512x128xf32>,
    return
  }
  func.func @transform_0(%arg0: i32) -> (i32, i32) {
    %c0_i32 = arith.constant 0 : i32
    %c0_i32_0 = arith.constant 0 : i32
    return %arg0, %c0_i32 : i32, i32
  }
  func.func @transform_1(%arg0: i32) -> (i32, i32) {
    %c0_i32 = arith.constant 0 : i32
    %c0_i32_0 = arith.constant 0 : i32
    %c0_i32_1 = arith.constant 0 : i32
    return %c0_i32, %c0_i32_0 : i32, i32
  }
  func.func @transform_2(%arg0: i32) -> (i32, i32) {
    %c0_i32 = arith.constant 0 : i32
    %c0_i32_0 = arith.constant 0 : i32
    %c0_i32_1 = arith.constant 0 : i32
    return %c0_i32, %c0_i32_0 : i32, i32
  }
  func.func @transform_3(%arg0: i32) -> (i32, i32) {
    %c0_i32 = arith.constant 0 : i32
    %c0_i32_0 = arith.constant 0 : i32
    return %arg0, %c0_i32 : i32, i32
  }
}

module attributes {stable_mosaic.version = 11 : i64} {
  func.func @_maxpool_kernel(%arg0: i32, %arg1: memref<9x128x128xf32, #tpu.memory_space<vmem>>, %arg2: memref<128x128xf32, #tpu.memory_space<vmem>>) attributes {dimension_semantics = [#tpu.dimension_semantics<parallel>], iteration_bounds = array<i64: 1>, scalar_prefetch = 0 : i64, scratch_operands = 0 : i64, tpu.core_type = #tpu.core_type<tc>, window_params = [{transform_indices = @transform_0, window_bounds = array<i64: 9, 128, 128>}, {transform_indices = @transform_1, window_bounds = array<i64: 128, 128>}]} {
    %c0 = arith.constant 0 : index
    %c0_0 = arith.constant 0 : index
    %c0_1 = arith.constant 0 : index
    %0 = vector.load %arg1[%c0, %c0_0, %c0_1] : memref<9x128x128xf32, #tpu.memory_space<vmem>>, vector<1x128x128xf32>
    %1 = vector.shape_cast %0 : vector<1x128x128xf32> to vector<128x128xf32>
    %c1 = arith.constant 1 : index
    %c0_2 = arith.constant 0 : index
    %c0_3 = arith.constant 0 : index
    %2 = vector.load %arg1[%c1, %c0_2, %c0_3] : memref<9x128x128xf32, #tpu.memory_space<vmem>>, vector<1x128x128xf32>
    %3 = vector.shape_cast %2 : vector<1x128x128xf32> to vector<128x128xf32>
    %4 = arith.maximumf %1, %3 : vector<128x128xf32>
    %c2 = arith.constant 2 : index
    %c0_4 = arith.constant 0 : index
    %c0_5 = arith.constant 0 : index
    %5 = vector.load %arg1[%c2, %c0_4, %c0_5] : memref<9x128x128xf32, #tpu.memory_space<vmem>>, vector<1x128x128xf32>
    %6 = vector.shape_cast %5 : vector<1x128x128xf32> to vector<128x128xf32>
    %7 = arith.maximumf %4, %6 : vector<128x128xf32>
    %c3 = arith.constant 3 : index
    %c0_6 = arith.constant 0 : index
    %c0_7 = arith.constant 0 : index
    %8 = vector.load %arg1[%c3, %c0_6, %c0_7] : memref<9x128x128xf32, #tpu.memory_space<vmem>>, vector<1x128x128xf32>
    %9 = vector.shape_cast %8 : vector<1x128x128xf32> to vector<128x128xf32>
    %10 = arith.maximumf %7, %9 : vector<128x128xf32>
    %c4 = arith.constant 4 : index
    %c0_8 = arith.constant 0 : index
    %c0_9 = arith.constant 0 : index
    %11 = vector.load %arg1[%c4, %c0_8, %c0_9] : memref<9x128x128xf32, #tpu.memory_space<vmem>>, vector<1x128x128xf32>
    %12 = vector.shape_cast %11 : vector<1x128x128xf32> to vector<128x128xf32>
    %13 = arith.maximumf %10, %12 : vector<128x128xf32>
    %c5 = arith.constant 5 : index
    %c0_10 = arith.constant 0 : index
    %c0_11 = arith.constant 0 : index
    %14 = vector.load %arg1[%c5, %c0_10, %c0_11] : memref<9x128x128xf32, #tpu.memory_space<vmem>>, vector<1x128x128xf32>
    %15 = vector.shape_cast %14 : vector<1x128x128xf32> to vector<128x128xf32>
    %16 = arith.maximumf %13, %15 : vector<128x128xf32>
    %c6 = arith.constant 6 : index
    %c0_12 = arith.constant 0 : index
    %c0_13 = arith.constant 0 : index
    %17 = vector.load %arg1[%c6, %c0_12, %c0_13] : memref<9x128x128xf32, #tpu.memory_space<vmem>>, vector<1x128x128xf32>
    %18 = vector.shape_cast %17 : vector<1x128x128xf32> to vector<128x128xf32>
    %19 = arith.maximumf %16, %18 : vector<128x128xf32>
    %c7 = arith.constant 7 : index
    %c0_14 = arith.constant 0 : index
    %c0_15 = arith.constant 0 : index
    %20 = vector.load %arg1[%c7, %c0_14, %c0_15] : memref<9x128x128xf32, #tpu.memory_space<vmem>>, vector<1x128x128xf32>
    %21 = vector.shape_cast %20 : vector<1x128x128xf32> to vector<128x128xf32>
    %22 = arith.maximumf %19, %21 : vector<128x128xf32>
    %c8 = arith.constant 8 : index
    %c0_16 = arith.constant 0 : index
    %c0_17 = arith.constant 0 : index
    %23 = vector.load %arg1[%c8, %c0_16, %c0_17] : memref<9x128x128xf32, #tpu.memory_space<vmem>>, vector<1x128x128xf32>
    %24 = vector.shape_cast %23 : vector<1x128x128xf32> to vector<128x128xf32>
    %25 = arith.maximumf %22, %24 : vector<128x128xf32>
    %c0_18 = arith.constant 0 : index
    %c0_19 = arith.constant 0 : index
    %26 = vector.load %arg2[%c0_18, %c0_19] : memref<128x128xf32, #tpu.memory_space<vmem>>, vector<128x128xf32>
    tpu.vector_store %arg2[%c0_18, %c0_19], %25 {strides = array<i32>} : memref<128x128xf32, #tpu.memory_space<vmem>>, vector<128x128xf32>,
    return
  }
  func.func @transform_0(%arg0: i32) -> (i32, i32, i32) {
    %c0_i32 = arith.constant 0 : i32
    %c0_i32_0 = arith.constant 0 : i32
    %c0_i32_1 = arith.constant 0 : i32
    return %c0_i32, %arg0, %c0_i32_0 : i32, i32, i32
  }
  func.func @transform_1(%arg0: i32) -> (i32, i32) {
    %c0_i32 = arith.constant 0 : i32
    %c0_i32_0 = arith.constant 0 : i32
    return %arg0, %c0_i32 : i32, i32
  }
}

module attributes {stable_mosaic.version = 11 : i64} {
  func.func @kernel(%arg0: i32, %arg1: memref<128x128xf32, #tpu.memory_space<vmem>>, %arg2: memref<128x128xf32, #tpu.memory_space<vmem>>, %arg3: memref<1x128xf32, #tpu.memory_space<vmem>>, %arg4: memref<128x128xf32, #tpu.memory_space<vmem>>) attributes {dimension_semantics = [#tpu.dimension_semantics<parallel>], iteration_bounds = array<i64: 1>, scalar_prefetch = 0 : i64, scratch_operands = 0 : i64, tpu.core_type = #tpu.core_type<tc>, window_params = [{transform_indices = @transform_0, window_bounds = array<i64: 128, 128>}, {pipeline_mode = #tpu.pipeline_mode<synchronous>, transform_indices = @transform_1, window_bounds = array<i64: 128, 128>}, {pipeline_mode = #tpu.pipeline_mode<synchronous>, transform_indices = @transform_2, window_bounds = array<i64: 1, 128>}, {transform_indices = @transform_3, window_bounds = array<i64: 128, 128>}]} {
    %c0 = arith.constant 0 : index
    %c0_0 = arith.constant 0 : index
    %0 = vector.load %arg1[%c0, %c0_0] : memref<128x128xf32, #tpu.memory_space<vmem>>, vector<128x128xf32>
    %c0_1 = arith.constant 0 : index
    %c0_2 = arith.constant 0 : index
    %1 = vector.load %arg2[%c0_1, %c0_2] : memref<128x128xf32, #tpu.memory_space<vmem>>, vector<128x128xf32>
    %cst = arith.constant dense<0.000000e+00> : vector<128x128xf32>
    %2 = tpu.matmul %0, %1, %cst {dimension_numbers = #tpu.dot_dimension_numbers<[1], [0], [0], [1], [0, 0, 1, 1], [], []>} : vector<128x128xf32>, vector<128x128xf32>, vector<128x128xf32> -> vector<128x128xf32>
    %c0_3 = arith.constant 0 : index
    %c0_4 = arith.constant 0 : index
    %3 = vector.load %arg3[%c0_3, %c0_4] : memref<1x128xf32, #tpu.memory_space<vmem>>, vector<1x128xf32>
    %4 = vector.broadcast %3 : vector<1x128xf32> to vector<128x128xf32>
    %5 = arith.addf %2, %4 : vector<128x128xf32>
    %cst_5 = arith.constant 0.000000e+00 : f32
    %6 = vector.broadcast %cst_5 : f32 to vector<128x128xf32>
    %7 = arith.maximumf %5, %6 : vector<128x128xf32>
    %c0_6 = arith.constant 0 : index
    %c0_7 = arith.constant 0 : index
    %8 = vector.load %arg4[%c0_6, %c0_7] : memref<128x128xf32, #tpu.memory_space<vmem>>, vector<128x128xf32>
    tpu.vector_store %arg4[%c0_6, %c0_7], %7 {strides = array<i32>} : memref<128x128xf32, #tpu.memory_space<vmem>>, vector<128x128xf32>,
    return
  }
  func.func @transform_0(%arg0: i32) -> (i32, i32) {
    %c0_i32 = arith.constant 0 : i32
    %c0_i32_0 = arith.constant 0 : i32
    return %arg0, %c0_i32 : i32, i32
  }
  func.func @transform_1(%arg0: i32) -> (i32, i32) {
    %c0_i32 = arith.constant 0 : i32
    %c0_i32_0 = arith.constant 0 : i32
    %c0_i32_1 = arith.constant 0 : i32
    return %c0_i32, %c0_i32_0 : i32, i32
  }
  func.func @transform_2(%arg0: i32) -> (i32, i32) {
    %c0_i32 = arith.constant 0 : i32
    %c0_i32_0 = arith.constant 0 : i32
    %c0_i32_1 = arith.constant 0 : i32
    return %c0_i32, %c0_i32_0 : i32, i32
  }
  func.func @transform_3(%arg0: i32) -> (i32, i32) {
    %c0_i32 = arith.constant 0 : i32
    %c0_i32_0 = arith.constant 0 : i32
    return %arg0, %c0_i32 : i32, i32
  }
}

module attributes {stable_mosaic.version = 11 : i64} {
  func.func @kernel(%arg0: i32, %arg1: memref<128x256xf32, #tpu.memory_space<vmem>>, %arg2: memref<256x128xf32, #tpu.memory_space<vmem>>, %arg3: memref<1x128xf32, #tpu.memory_space<vmem>>, %arg4: memref<128x128xf32, #tpu.memory_space<vmem>>) attributes {dimension_semantics = [#tpu.dimension_semantics<parallel>], iteration_bounds = array<i64: 1>, scalar_prefetch = 0 : i64, scratch_operands = 0 : i64, tpu.core_type = #tpu.core_type<tc>, window_params = [{transform_indices = @transform_0, window_bounds = array<i64: 128, 256>}, {pipeline_mode = #tpu.pipeline_mode<synchronous>, transform_indices = @transform_1, window_bounds = array<i64: 256, 128>}, {pipeline_mode = #tpu.pipeline_mode<synchronous>, transform_indices = @transform_2, window_bounds = array<i64: 1, 128>}, {transform_indices = @transform_3, window_bounds = array<i64: 128, 128>}]} {
    %c0 = arith.constant 0 : index
    %c0_0 = arith.constant 0 : index
    %0 = vector.load %arg1[%c0, %c0_0] : memref<128x256xf32, #tpu.memory_space<vmem>>, vector<128x256xf32>
    %c0_1 = arith.constant 0 : index
    %c0_2 = arith.constant 0 : index
    %1 = vector.load %arg2[%c0_1, %c0_2] : memref<256x128xf32, #tpu.memory_space<vmem>>, vector<256x128xf32>
    %cst = arith.constant dense<0.000000e+00> : vector<128x128xf32>
    %2 = tpu.matmul %0, %1, %cst {dimension_numbers = #tpu.dot_dimension_numbers<[1], [0], [0], [1], [0, 0, 1, 1], [], []>} : vector<128x256xf32>, vector<256x128xf32>, vector<128x128xf32> -> vector<128x128xf32>
    %c0_3 = arith.constant 0 : index
    %c0_4 = arith.constant 0 : index
    %3 = vector.load %arg3[%c0_3, %c0_4] : memref<1x128xf32, #tpu.memory_space<vmem>>, vector<1x128xf32>
    %4 = vector.broadcast %3 : vector<1x128xf32> to vector<128x128xf32>
    %5 = arith.addf %2, %4 : vector<128x128xf32>
    %cst_5 = arith.constant 0.000000e+00 : f32
    %6 = vector.broadcast %cst_5 : f32 to vector<128x128xf32>
    %7 = arith.maximumf %5, %6 : vector<128x128xf32>
    %c0_6 = arith.constant 0 : index
    %c0_7 = arith.constant 0 : index
    %8 = vector.load %arg4[%c0_6, %c0_7] : memref<128x128xf32, #tpu.memory_space<vmem>>, vector<128x128xf32>
    tpu.vector_store %arg4[%c0_6, %c0_7], %7 {strides = array<i32>} : memref<128x128xf32, #tpu.memory_space<vmem>>, vector<128x128xf32>,
    return
  }
  func.func @transform_0(%arg0: i32) -> (i32, i32) {
    %c0_i32 = arith.constant 0 : i32
    %c0_i32_0 = arith.constant 0 : i32
    return %arg0, %c0_i32 : i32, i32
  }
  func.func @transform_1(%arg0: i32) -> (i32, i32) {
    %c0_i32 = arith.constant 0 : i32
    %c0_i32_0 = arith.constant 0 : i32
    %c0_i32_1 = arith.constant 0 : i32
    return %c0_i32, %c0_i32_0 : i32, i32
  }
  func.func @transform_2(%arg0: i32) -> (i32, i32) {
    %c0_i32 = arith.constant 0 : i32
    %c0_i32_0 = arith.constant 0 : i32
    %c0_i32_1 = arith.constant 0 : i32
    return %c0_i32, %c0_i32_0 : i32, i32
  }
  func.func @transform_3(%arg0: i32) -> (i32, i32) {
    %c0_i32 = arith.constant 0 : i32
    %c0_i32_0 = arith.constant 0 : i32
    return %arg0, %c0_i32 : i32, i32
  }
}

module attributes {stable_mosaic.version = 11 : i64} {
  func.func @kernel(%arg0: i32, %arg1: memref<128x128xf32, #tpu.memory_space<vmem>>, %arg2: memref<128x128xf32, #tpu.memory_space<vmem>>, %arg3: memref<1x128xf32, #tpu.memory_space<vmem>>, %arg4: memref<128x128xf32, #tpu.memory_space<vmem>>) attributes {dimension_semantics = [#tpu.dimension_semantics<parallel>], iteration_bounds = array<i64: 1>, scalar_prefetch = 0 : i64, scratch_operands = 0 : i64, tpu.core_type = #tpu.core_type<tc>, window_params = [{transform_indices = @transform_0, window_bounds = array<i64: 128, 128>}, {pipeline_mode = #tpu.pipeline_mode<synchronous>, transform_indices = @transform_1, window_bounds = array<i64: 128, 128>}, {pipeline_mode = #tpu.pipeline_mode<synchronous>, transform_indices = @transform_2, window_bounds = array<i64: 1, 128>}, {transform_indices = @transform_3, window_bounds = array<i64: 128, 128>}]} {
    %c0 = arith.constant 0 : index
    %c0_0 = arith.constant 0 : index
    %0 = vector.load %arg1[%c0, %c0_0] : memref<128x128xf32, #tpu.memory_space<vmem>>, vector<128x128xf32>
    %c0_1 = arith.constant 0 : index
    %c0_2 = arith.constant 0 : index
    %1 = vector.load %arg2[%c0_1, %c0_2] : memref<128x128xf32, #tpu.memory_space<vmem>>, vector<128x128xf32>
    %cst = arith.constant dense<0.000000e+00> : vector<128x128xf32>
    %2 = tpu.matmul %0, %1, %cst {dimension_numbers = #tpu.dot_dimension_numbers<[1], [0], [0], [1], [0, 0, 1, 1], [], []>} : vector<128x128xf32>, vector<128x128xf32>, vector<128x128xf32> -> vector<128x128xf32>
    %c0_3 = arith.constant 0 : index
    %c0_4 = arith.constant 0 : index
    %3 = vector.load %arg3[%c0_3, %c0_4] : memref<1x128xf32, #tpu.memory_space<vmem>>, vector<1x128xf32>
    %4 = vector.broadcast %3 : vector<1x128xf32> to vector<128x128xf32>
    %5 = arith.addf %2, %4 : vector<128x128xf32>
    %c0_5 = arith.constant 0 : index
    %c0_6 = arith.constant 0 : index
    %6 = vector.load %arg4[%c0_5, %c0_6] : memref<128x128xf32, #tpu.memory_space<vmem>>, vector<128x128xf32>
    tpu.vector_store %arg4[%c0_5, %c0_6], %5 {strides = array<i32>} : memref<128x128xf32, #tpu.memory_space<vmem>>, vector<128x128xf32>,
    return
  }
  func.func @transform_0(%arg0: i32) -> (i32, i32) {
    %c0_i32 = arith.constant 0 : i32
    %c0_i32_0 = arith.constant 0 : i32
    return %arg0, %c0_i32 : i32, i32
  }
  func.func @transform_1(%arg0: i32) -> (i32, i32) {
    %c0_i32 = arith.constant 0 : i32
    %c0_i32_0 = arith.constant 0 : i32
    %c0_i32_1 = arith.constant 0 : i32
    return %c0_i32, %c0_i32_0 : i32, i32
  }
  func.func @transform_2(%arg0: i32) -> (i32, i32) {
    %c0_i32 = arith.constant 0 : i32
    %c0_i32_0 = arith.constant 0 : i32
    %c0_i32_1 = arith.constant 0 : i32
    return %c0_i32, %c0_i32_0 : i32, i32
  }
  func.func @transform_3(%arg0: i32) -> (i32, i32) {
    %c0_i32 = arith.constant 0 : i32
    %c0_i32_0 = arith.constant 0 : i32
    return %arg0, %c0_i32 : i32, i32
  }
}

module attributes {stable_mosaic.version = 11 : i64} {
  func.func @kernel(%arg0: i32, %arg1: memref<128x128xf32, #tpu.memory_space<vmem>>, %arg2: memref<128x128xf32, #tpu.memory_space<vmem>>, %arg3: memref<1x128xf32, #tpu.memory_space<vmem>>, %arg4: memref<128x128xf32, #tpu.memory_space<vmem>>, %arg5: memref<128x128xf32, #tpu.memory_space<vmem>>) attributes {dimension_semantics = [#tpu.dimension_semantics<parallel>], iteration_bounds = array<i64: 1>, scalar_prefetch = 0 : i64, scratch_operands = 0 : i64, tpu.core_type = #tpu.core_type<tc>, window_params = [{transform_indices = @transform_0, window_bounds = array<i64: 128, 128>}, {pipeline_mode = #tpu.pipeline_mode<synchronous>, transform_indices = @transform_1, window_bounds = array<i64: 128, 128>}, {pipeline_mode = #tpu.pipeline_mode<synchronous>, transform_indices = @transform_2, window_bounds = array<i64: 1, 128>}, {transform_indices = @transform_3, window_bounds = array<i64: 128, 128>}, {transform_indices = @transform_4, window_bounds = array<i64: 128, 128>}]} {
    %c0 = arith.constant 0 : index
    %c0_0 = arith.constant 0 : index
    %0 = vector.load %arg1[%c0, %c0_0] : memref<128x128xf32, #tpu.memory_space<vmem>>, vector<128x128xf32>
    %c0_1 = arith.constant 0 : index
    %c0_2 = arith.constant 0 : index
    %1 = vector.load %arg2[%c0_1, %c0_2] : memref<128x128xf32, #tpu.memory_space<vmem>>, vector<128x128xf32>
    %cst = arith.constant dense<0.000000e+00> : vector<128x128xf32>
    %2 = tpu.matmul %0, %1, %cst {dimension_numbers = #tpu.dot_dimension_numbers<[1], [0], [0], [1], [0, 0, 1, 1], [], []>} : vector<128x128xf32>, vector<128x128xf32>, vector<128x128xf32> -> vector<128x128xf32>
    %c0_3 = arith.constant 0 : index
    %c0_4 = arith.constant 0 : index
    %3 = vector.load %arg3[%c0_3, %c0_4] : memref<1x128xf32, #tpu.memory_space<vmem>>, vector<1x128xf32>
    %4 = vector.broadcast %3 : vector<1x128xf32> to vector<128x128xf32>
    %5 = arith.addf %2, %4 : vector<128x128xf32>
    %c0_5 = arith.constant 0 : index
    %c0_6 = arith.constant 0 : index
    %6 = vector.load %arg4[%c0_5, %c0_6] : memref<128x128xf32, #tpu.memory_space<vmem>>, vector<128x128xf32>
    %7 = arith.addf %5, %6 : vector<128x128xf32>
    %cst_7 = arith.constant 0.000000e+00 : f32
    %8 = vector.broadcast %cst_7 : f32 to vector<128x128xf32>
    %9 = arith.maximumf %7, %8 : vector<128x128xf32>
    %c0_8 = arith.constant 0 : index
    %c0_9 = arith.constant 0 : index
    %10 = vector.load %arg5[%c0_8, %c0_9] : memref<128x128xf32, #tpu.memory_space<vmem>>, vector<128x128xf32>
    tpu.vector_store %arg5[%c0_8, %c0_9], %9 {strides = array<i32>} : memref<128x128xf32, #tpu.memory_space<vmem>>, vector<128x128xf32>,
    return
  }
  func.func @transform_0(%arg0: i32) -> (i32, i32) {
    %c0_i32 = arith.constant 0 : i32
    %c0_i32_0 = arith.constant 0 : i32
    return %arg0, %c0_i32 : i32, i32
  }
  func.func @transform_1(%arg0: i32) -> (i32, i32) {
    %c0_i32 = arith.constant 0 : i32
    %c0_i32_0 = arith.constant 0 : i32
    %c0_i32_1 = arith.constant 0 : i32
    return %c0_i32, %c0_i32_0 : i32, i32
  }
  func.func @transform_2(%arg0: i32) -> (i32, i32) {
    %c0_i32 = arith.constant 0 : i32
    %c0_i32_0 = arith.constant 0 : i32
    %c0_i32_1 = arith.constant 0 : i32
    return %c0_i32, %c0_i32_0 : i32, i32
  }
  func.func @transform_3(%arg0: i32) -> (i32, i32) {
    %c0_i32 = arith.constant 0 : i32
    %c0_i32_0 = arith.constant 0 : i32
    return %arg0, %c0_i32 : i32, i32
  }
  func.func @transform_4(%arg0: i32) -> (i32, i32) {
    %c0_i32 = arith.constant 0 : i32
    %c0_i32_0 = arith.constant 0 : i32
    return %arg0, %c0_i32 : i32, i32
  }
}

module attributes {stable_mosaic.version = 11 : i64} {
  func.func @kernel(%arg0: i32, %arg1: memref<32x384xf32, #tpu.memory_space<vmem>>, %arg2: memref<384x128xf32, #tpu.memory_space<vmem>>, %arg3: memref<1x128xf32, #tpu.memory_space<vmem>>, %arg4: memref<32x128xf32, #tpu.memory_space<vmem>>) attributes {dimension_semantics = [#tpu.dimension_semantics<parallel>], iteration_bounds = array<i64: 1>, scalar_prefetch = 0 : i64, scratch_operands = 0 : i64, tpu.core_type = #tpu.core_type<tc>, window_params = [{transform_indices = @transform_0, window_bounds = array<i64: 32, 384>}, {pipeline_mode = #tpu.pipeline_mode<synchronous>, transform_indices = @transform_1, window_bounds = array<i64: 384, 128>}, {pipeline_mode = #tpu.pipeline_mode<synchronous>, transform_indices = @transform_2, window_bounds = array<i64: 1, 128>}, {transform_indices = @transform_3, window_bounds = array<i64: 32, 128>}]} {
    %c0 = arith.constant 0 : index
    %c0_0 = arith.constant 0 : index
    %0 = vector.load %arg1[%c0, %c0_0] : memref<32x384xf32, #tpu.memory_space<vmem>>, vector<32x384xf32>
    %c0_1 = arith.constant 0 : index
    %c0_2 = arith.constant 0 : index
    %1 = vector.load %arg2[%c0_1, %c0_2] : memref<384x128xf32, #tpu.memory_space<vmem>>, vector<384x128xf32>
    %cst = arith.constant dense<0.000000e+00> : vector<32x128xf32>
    %2 = tpu.matmul %0, %1, %cst {dimension_numbers = #tpu.dot_dimension_numbers<[1], [0], [0], [1], [0, 0, 1, 1], [], []>} : vector<32x384xf32>, vector<384x128xf32>, vector<32x128xf32> -> vector<32x128xf32>
    %c0_3 = arith.constant 0 : index
    %c0_4 = arith.constant 0 : index
    %3 = vector.load %arg3[%c0_3, %c0_4] : memref<1x128xf32, #tpu.memory_space<vmem>>, vector<1x128xf32>
    %4 = vector.broadcast %3 : vector<1x128xf32> to vector<32x128xf32>
    %5 = arith.addf %2, %4 : vector<32x128xf32>
    %cst_5 = arith.constant 0.000000e+00 : f32
    %6 = vector.broadcast %cst_5 : f32 to vector<32x128xf32>
    %7 = arith.maximumf %5, %6 : vector<32x128xf32>
    %c0_6 = arith.constant 0 : index
    %c0_7 = arith.constant 0 : index
    %8 = vector.load %arg4[%c0_6, %c0_7] : memref<32x128xf32, #tpu.memory_space<vmem>>, vector<32x128xf32>
    tpu.vector_store %arg4[%c0_6, %c0_7], %7 {strides = array<i32>} : memref<32x128xf32, #tpu.memory_space<vmem>>, vector<32x128xf32>,
    return
  }
  func.func @transform_0(%arg0: i32) -> (i32, i32) {
    %c0_i32 = arith.constant 0 : i32
    %c0_i32_0 = arith.constant 0 : i32
    return %arg0, %c0_i32 : i32, i32
  }
  func.func @transform_1(%arg0: i32) -> (i32, i32) {
    %c0_i32 = arith.constant 0 : i32
    %c0_i32_0 = arith.constant 0 : i32
    %c0_i32_1 = arith.constant 0 : i32
    return %c0_i32, %c0_i32_0 : i32, i32
  }
  func.func @transform_2(%arg0: i32) -> (i32, i32) {
    %c0_i32 = arith.constant 0 : i32
    %c0_i32_0 = arith.constant 0 : i32
    %c0_i32_1 = arith.constant 0 : i32
    return %c0_i32, %c0_i32_0 : i32, i32
  }
  func.func @transform_3(%arg0: i32) -> (i32, i32) {
    %c0_i32 = arith.constant 0 : i32
    %c0_i32_0 = arith.constant 0 : i32
    return %arg0, %c0_i32 : i32, i32
  }
}

module attributes {stable_mosaic.version = 11 : i64} {
  func.func @kernel(%arg0: i32, %arg1: memref<32x128xf32, #tpu.memory_space<vmem>>, %arg2: memref<128x128xf32, #tpu.memory_space<vmem>>, %arg3: memref<1x128xf32, #tpu.memory_space<vmem>>, %arg4: memref<32x128xf32, #tpu.memory_space<vmem>>) attributes {dimension_semantics = [#tpu.dimension_semantics<parallel>], iteration_bounds = array<i64: 1>, scalar_prefetch = 0 : i64, scratch_operands = 0 : i64, tpu.core_type = #tpu.core_type<tc>, window_params = [{transform_indices = @transform_0, window_bounds = array<i64: 32, 128>}, {pipeline_mode = #tpu.pipeline_mode<synchronous>, transform_indices = @transform_1, window_bounds = array<i64: 128, 128>}, {pipeline_mode = #tpu.pipeline_mode<synchronous>, transform_indices = @transform_2, window_bounds = array<i64: 1, 128>}, {transform_indices = @transform_3, window_bounds = array<i64: 32, 128>}]} {
    %c0 = arith.constant 0 : index
    %c0_0 = arith.constant 0 : index
    %0 = vector.load %arg1[%c0, %c0_0] : memref<32x128xf32, #tpu.memory_space<vmem>>, vector<32x128xf32>
    %c0_1 = arith.constant 0 : index
    %c0_2 = arith.constant 0 : index
    %1 = vector.load %arg2[%c0_1, %c0_2] : memref<128x128xf32, #tpu.memory_space<vmem>>, vector<128x128xf32>
    %cst = arith.constant dense<0.000000e+00> : vector<32x128xf32>
    %2 = tpu.matmul %0, %1, %cst {dimension_numbers = #tpu.dot_dimension_numbers<[1], [0], [0], [1], [0, 0, 1, 1], [], []>} : vector<32x128xf32>, vector<128x128xf32>, vector<32x128xf32> -> vector<32x128xf32>
    %c0_3 = arith.constant 0 : index
    %c0_4 = arith.constant 0 : index
    %3 = vector.load %arg3[%c0_3, %c0_4] : memref<1x128xf32, #tpu.memory_space<vmem>>, vector<1x128xf32>
    %4 = vector.broadcast %3 : vector<1x128xf32> to vector<32x128xf32>
    %5 = arith.addf %2, %4 : vector<32x128xf32>
    %c0_5 = arith.constant 0 : index
    %c0_6 = arith.constant 0 : index
    %6 = vector.load %arg4[%c0_5, %c0_6] : memref<32x128xf32, #tpu.memory_space<vmem>>, vector<32x128xf32>
    tpu.vector_store %arg4[%c0_5, %c0_6], %5 {strides = array<i32>} : memref<32x128xf32, #tpu.memory_space<vmem>>, vector<32x128xf32>,
    return
  }
  func.func @transform_0(%arg0: i32) -> (i32, i32) {
    %c0_i32 = arith.constant 0 : i32
    %c0_i32_0 = arith.constant 0 : i32
    return %arg0, %c0_i32 : i32, i32
  }
  func.func @transform_1(%arg0: i32) -> (i32, i32) {
    %c0_i32 = arith.constant 0 : i32
    %c0_i32_0 = arith.constant 0 : i32
    %c0_i32_1 = arith.constant 0 : i32
    return %c0_i32, %c0_i32_0 : i32, i32
  }
  func.func @transform_2(%arg0: i32) -> (i32, i32) {
    %c0_i32 = arith.constant 0 : i32
    %c0_i32_0 = arith.constant 0 : i32
    %c0_i32_1 = arith.constant 0 : i32
    return %c0_i32, %c0_i32_0 : i32, i32
  }
  func.func @transform_3(%arg0: i32) -> (i32, i32) {
    %c0_i32 = arith.constant 0 : i32
    %c0_i32_0 = arith.constant 0 : i32
    return %arg0, %c0_i32 : i32, i32
  }
}

module attributes {stable_mosaic.version = 11 : i64} {
  func.func @kernel(%arg0: i32, %arg1: memref<32x128xf32, #tpu.memory_space<vmem>>, %arg2: memref<128x128xf32, #tpu.memory_space<vmem>>, %arg3: memref<1x128xf32, #tpu.memory_space<vmem>>, %arg4: memref<32x128xf32, #tpu.memory_space<vmem>>, %arg5: memref<32x128xf32, #tpu.memory_space<vmem>>) attributes {dimension_semantics = [#tpu.dimension_semantics<parallel>], iteration_bounds = array<i64: 1>, scalar_prefetch = 0 : i64, scratch_operands = 0 : i64, tpu.core_type = #tpu.core_type<tc>, window_params = [{transform_indices = @transform_0, window_bounds = array<i64: 32, 128>}, {pipeline_mode = #tpu.pipeline_mode<synchronous>, transform_indices = @transform_1, window_bounds = array<i64: 128, 128>}, {pipeline_mode = #tpu.pipeline_mode<synchronous>, transform_indices = @transform_2, window_bounds = array<i64: 1, 128>}, {transform_indices = @transform_3, window_bounds = array<i64: 32, 128>}, {transform_indices = @transform_4, window_bounds = array<i64: 32, 128>}]} {
    %c0 = arith.constant 0 : index
    %c0_0 = arith.constant 0 : index
    %0 = vector.load %arg1[%c0, %c0_0] : memref<32x128xf32, #tpu.memory_space<vmem>>, vector<32x128xf32>
    %c0_1 = arith.constant 0 : index
    %c0_2 = arith.constant 0 : index
    %1 = vector.load %arg2[%c0_1, %c0_2] : memref<128x128xf32, #tpu.memory_space<vmem>>, vector<128x128xf32>
    %cst = arith.constant dense<0.000000e+00> : vector<32x128xf32>
    %2 = tpu.matmul %0, %1, %cst {dimension_numbers = #tpu.dot_dimension_numbers<[1], [0], [0], [1], [0, 0, 1, 1], [], []>} : vector<32x128xf32>, vector<128x128xf32>, vector<32x128xf32> -> vector<32x128xf32>
    %c0_3 = arith.constant 0 : index
    %c0_4 = arith.constant 0 : index
    %3 = vector.load %arg3[%c0_3, %c0_4] : memref<1x128xf32, #tpu.memory_space<vmem>>, vector<1x128xf32>
    %4 = vector.broadcast %3 : vector<1x128xf32> to vector<32x128xf32>
    %5 = arith.addf %2, %4 : vector<32x128xf32>
    %c0_5 = arith.constant 0 : index
    %c0_6 = arith.constant 0 : index
    %6 = vector.load %arg4[%c0_5, %c0_6] : memref<32x128xf32, #tpu.memory_space<vmem>>, vector<32x128xf32>
    %7 = arith.addf %5, %6 : vector<32x128xf32>
    %cst_7 = arith.constant 0.000000e+00 : f32
    %8 = vector.broadcast %cst_7 : f32 to vector<32x128xf32>
    %9 = arith.maximumf %7, %8 : vector<32x128xf32>
    %c0_8 = arith.constant 0 : index
    %c0_9 = arith.constant 0 : index
    %10 = vector.load %arg5[%c0_8, %c0_9] : memref<32x128xf32, #tpu.memory_space<vmem>>, vector<32x128xf32>
    tpu.vector_store %arg5[%c0_8, %c0_9], %9 {strides = array<i32>} : memref<32x128xf32, #tpu.memory_space<vmem>>, vector<32x128xf32>,
    return
  }
  func.func @transform_0(%arg0: i32) -> (i32, i32) {
    %c0_i32 = arith.constant 0 : i32
    %c0_i32_0 = arith.constant 0 : i32
    return %arg0, %c0_i32 : i32, i32
  }
  func.func @transform_1(%arg0: i32) -> (i32, i32) {
    %c0_i32 = arith.constant 0 : i32
    %c0_i32_0 = arith.constant 0 : i32
    %c0_i32_1 = arith.constant 0 : i32
    return %c0_i32, %c0_i32_0 : i32, i32
  }
  func.func @transform_2(%arg0: i32) -> (i32, i32) {
    %c0_i32 = arith.constant 0 : i32
    %c0_i32_0 = arith.constant 0 : i32
    %c0_i32_1 = arith.constant 0 : i32
    return %c0_i32, %c0_i32_0 : i32, i32
  }
  func.func @transform_3(%arg0: i32) -> (i32, i32) {
    %c0_i32 = arith.constant 0 : i32
    %c0_i32_0 = arith.constant 0 : i32
    return %arg0, %c0_i32 : i32, i32
  }
  func.func @transform_4(%arg0: i32) -> (i32, i32) {
    %c0_i32 = arith.constant 0 : i32
    %c0_i32_0 = arith.constant 0 : i32
    return %arg0, %c0_i32 : i32, i32
  }
}

module attributes {stable_mosaic.version = 11 : i64} {
  func.func @kernel(%arg0: i32, %arg1: memref<32x128xf32, #tpu.memory_space<vmem>>, %arg2: memref<128x128xf32, #tpu.memory_space<vmem>>, %arg3: memref<1x128xf32, #tpu.memory_space<vmem>>, %arg4: memref<32x128xf32, #tpu.memory_space<vmem>>) attributes {dimension_semantics = [#tpu.dimension_semantics<parallel>], iteration_bounds = array<i64: 1>, scalar_prefetch = 0 : i64, scratch_operands = 0 : i64, tpu.core_type = #tpu.core_type<tc>, window_params = [{transform_indices = @transform_0, window_bounds = array<i64: 32, 128>}, {pipeline_mode = #tpu.pipeline_mode<synchronous>, transform_indices = @transform_1, window_bounds = array<i64: 128, 128>}, {pipeline_mode = #tpu.pipeline_mode<synchronous>, transform_indices = @transform_2, window_bounds = array<i64: 1, 128>}, {transform_indices = @transform_3, window_bounds = array<i64: 32, 128>}]} {
    %c0 = arith.constant 0 : index
    %c0_0 = arith.constant 0 : index
    %0 = vector.load %arg1[%c0, %c0_0] : memref<32x128xf32, #tpu.memory_space<vmem>>, vector<32x128xf32>
    %c0_1 = arith.constant 0 : index
    %c0_2 = arith.constant 0 : index
    %1 = vector.load %arg2[%c0_1, %c0_2] : memref<128x128xf32, #tpu.memory_space<vmem>>, vector<128x128xf32>
    %cst = arith.constant dense<0.000000e+00> : vector<32x128xf32>
    %2 = tpu.matmul %0, %1, %cst {dimension_numbers = #tpu.dot_dimension_numbers<[1], [0], [0], [1], [0, 0, 1, 1], [], []>} : vector<32x128xf32>, vector<128x128xf32>, vector<32x128xf32> -> vector<32x128xf32>
    %c0_3 = arith.constant 0 : index
    %c0_4 = arith.constant 0 : index
    %3 = vector.load %arg3[%c0_3, %c0_4] : memref<1x128xf32, #tpu.memory_space<vmem>>, vector<1x128xf32>
    %4 = vector.broadcast %3 : vector<1x128xf32> to vector<32x128xf32>
    %5 = arith.addf %2, %4 : vector<32x128xf32>
    %cst_5 = arith.constant 0.000000e+00 : f32
    %6 = vector.broadcast %cst_5 : f32 to vector<32x128xf32>
    %7 = arith.maximumf %5, %6 : vector<32x128xf32>
    %c0_6 = arith.constant 0 : index
    %c0_7 = arith.constant 0 : index
    %8 = vector.load %arg4[%c0_6, %c0_7] : memref<32x128xf32, #tpu.memory_space<vmem>>, vector<32x128xf32>
    tpu.vector_store %arg4[%c0_6, %c0_7], %7 {strides = array<i32>} : memref<32x128xf32, #tpu.memory_space<vmem>>, vector<32x128xf32>,
    return
  }
  func.func @transform_0(%arg0: i32) -> (i32, i32) {
    %c0_i32 = arith.constant 0 : i32
    %c0_i32_0 = arith.constant 0 : i32
    return %arg0, %c0_i32 : i32, i32
  }
  func.func @transform_1(%arg0: i32) -> (i32, i32) {
    %c0_i32 = arith.constant 0 : i32
    %c0_i32_0 = arith.constant 0 : i32
    %c0_i32_1 = arith.constant 0 : i32
    return %c0_i32, %c0_i32_0 : i32, i32
  }
  func.func @transform_2(%arg0: i32) -> (i32, i32) {
    %c0_i32 = arith.constant 0 : i32
    %c0_i32_0 = arith.constant 0 : i32
    %c0_i32_1 = arith.constant 0 : i32
    return %c0_i32, %c0_i32_0 : i32, i32
  }
  func.func @transform_3(%arg0: i32) -> (i32, i32) {
    %c0_i32 = arith.constant 0 : i32
    %c0_i32_0 = arith.constant 0 : i32
    return %arg0, %c0_i32 : i32, i32
  }
}

module attributes {stable_mosaic.version = 11 : i64} {
  func.func @kernel(%arg0: i32, %arg1: memref<8x640xf32, #tpu.memory_space<vmem>>, %arg2: memref<640x128xf32, #tpu.memory_space<vmem>>, %arg3: memref<1x128xf32, #tpu.memory_space<vmem>>, %arg4: memref<8x128xf32, #tpu.memory_space<vmem>>) attributes {dimension_semantics = [#tpu.dimension_semantics<parallel>], iteration_bounds = array<i64: 1>, scalar_prefetch = 0 : i64, scratch_operands = 0 : i64, tpu.core_type = #tpu.core_type<tc>, window_params = [{transform_indices = @transform_0, window_bounds = array<i64: 8, 640>}, {pipeline_mode = #tpu.pipeline_mode<synchronous>, transform_indices = @transform_1, window_bounds = array<i64: 640, 128>}, {pipeline_mode = #tpu.pipeline_mode<synchronous>, transform_indices = @transform_2, window_bounds = array<i64: 1, 128>}, {transform_indices = @transform_3, window_bounds = array<i64: 8, 128>}]} {
    %c0 = arith.constant 0 : index
    %c0_0 = arith.constant 0 : index
    %0 = vector.load %arg1[%c0, %c0_0] : memref<8x640xf32, #tpu.memory_space<vmem>>, vector<8x640xf32>
    %c0_1 = arith.constant 0 : index
    %c0_2 = arith.constant 0 : index
    %1 = vector.load %arg2[%c0_1, %c0_2] : memref<640x128xf32, #tpu.memory_space<vmem>>, vector<640x128xf32>
    %cst = arith.constant dense<0.000000e+00> : vector<8x128xf32>
    %2 = tpu.matmul %0, %1, %cst {dimension_numbers = #tpu.dot_dimension_numbers<[1], [0], [0], [1], [0, 0, 1, 1], [], []>} : vector<8x640xf32>, vector<640x128xf32>, vector<8x128xf32> -> vector<8x128xf32>
    %c0_3 = arith.constant 0 : index
    %c0_4 = arith.constant 0 : index
    %3 = vector.load %arg3[%c0_3, %c0_4] : memref<1x128xf32, #tpu.memory_space<vmem>>, vector<1x128xf32>
    %4 = vector.broadcast %3 : vector<1x128xf32> to vector<8x128xf32>
    %5 = arith.addf %2, %4 : vector<8x128xf32>
    %cst_5 = arith.constant 0.000000e+00 : f32
    %6 = vector.broadcast %cst_5 : f32 to vector<8x128xf32>
    %7 = arith.maximumf %5, %6 : vector<8x128xf32>
    %c0_6 = arith.constant 0 : index
    %c0_7 = arith.constant 0 : index
    %8 = vector.load %arg4[%c0_6, %c0_7] : memref<8x128xf32, #tpu.memory_space<vmem>>, vector<8x128xf32>
    tpu.vector_store %arg4[%c0_6, %c0_7], %7 {strides = array<i32>} : memref<8x128xf32, #tpu.memory_space<vmem>>, vector<8x128xf32>,
    return
  }
  func.func @transform_0(%arg0: i32) -> (i32, i32) {
    %c0_i32 = arith.constant 0 : i32
    %c0_i32_0 = arith.constant 0 : i32
    return %arg0, %c0_i32 : i32, i32
  }
  func.func @transform_1(%arg0: i32) -> (i32, i32) {
    %c0_i32 = arith.constant 0 : i32
    %c0_i32_0 = arith.constant 0 : i32
    %c0_i32_1 = arith.constant 0 : i32
    return %c0_i32, %c0_i32_0 : i32, i32
  }
  func.func @transform_2(%arg0: i32) -> (i32, i32) {
    %c0_i32 = arith.constant 0 : i32
    %c0_i32_0 = arith.constant 0 : i32
    %c0_i32_1 = arith.constant 0 : i32
    return %c0_i32, %c0_i32_0 : i32, i32
  }
  func.func @transform_3(%arg0: i32) -> (i32, i32) {
    %c0_i32 = arith.constant 0 : i32
    %c0_i32_0 = arith.constant 0 : i32
    return %arg0, %c0_i32 : i32, i32
  }
}

module attributes {stable_mosaic.version = 11 : i64} {
  func.func @kernel(%arg0: i32, %arg1: memref<8x128xf32, #tpu.memory_space<vmem>>, %arg2: memref<128x256xf32, #tpu.memory_space<vmem>>, %arg3: memref<1x256xf32, #tpu.memory_space<vmem>>, %arg4: memref<8x256xf32, #tpu.memory_space<vmem>>) attributes {dimension_semantics = [#tpu.dimension_semantics<parallel>], iteration_bounds = array<i64: 1>, scalar_prefetch = 0 : i64, scratch_operands = 0 : i64, tpu.core_type = #tpu.core_type<tc>, window_params = [{transform_indices = @transform_0, window_bounds = array<i64: 8, 128>}, {pipeline_mode = #tpu.pipeline_mode<synchronous>, transform_indices = @transform_1, window_bounds = array<i64: 128, 256>}, {pipeline_mode = #tpu.pipeline_mode<synchronous>, transform_indices = @transform_2, window_bounds = array<i64: 1, 256>}, {transform_indices = @transform_3, window_bounds = array<i64: 8, 256>}]} {
    %c0 = arith.constant 0 : index
    %c0_0 = arith.constant 0 : index
    %0 = vector.load %arg1[%c0, %c0_0] : memref<8x128xf32, #tpu.memory_space<vmem>>, vector<8x128xf32>
    %c0_1 = arith.constant 0 : index
    %c0_2 = arith.constant 0 : index
    %1 = vector.load %arg2[%c0_1, %c0_2] : memref<128x256xf32, #tpu.memory_space<vmem>>, vector<128x256xf32>
    %cst = arith.constant dense<0.000000e+00> : vector<8x256xf32>
    %2 = tpu.matmul %0, %1, %cst {dimension_numbers = #tpu.dot_dimension_numbers<[1], [0], [0], [1], [0, 0, 1, 1], [], []>} : vector<8x128xf32>, vector<128x256xf32>, vector<8x256xf32> -> vector<8x256xf32>
    %c0_3 = arith.constant 0 : index
    %c0_4 = arith.constant 0 : index
    %3 = vector.load %arg3[%c0_3, %c0_4] : memref<1x256xf32, #tpu.memory_space<vmem>>, vector<1x256xf32>
    %4 = vector.broadcast %3 : vector<1x256xf32> to vector<8x256xf32>
    %5 = arith.addf %2, %4 : vector<8x256xf32>
    %c0_5 = arith.constant 0 : index
    %c0_6 = arith.constant 0 : index
    %6 = vector.load %arg4[%c0_5, %c0_6] : memref<8x256xf32, #tpu.memory_space<vmem>>, vector<8x256xf32>
    tpu.vector_store %arg4[%c0_5, %c0_6], %5 {strides = array<i32>} : memref<8x256xf32, #tpu.memory_space<vmem>>, vector<8x256xf32>,
    return
  }
  func.func @transform_0(%arg0: i32) -> (i32, i32) {
    %c0_i32 = arith.constant 0 : i32
    %c0_i32_0 = arith.constant 0 : i32
    return %arg0, %c0_i32 : i32, i32
  }
  func.func @transform_1(%arg0: i32) -> (i32, i32) {
    %c0_i32 = arith.constant 0 : i32
    %c0_i32_0 = arith.constant 0 : i32
    %c0_i32_1 = arith.constant 0 : i32
    return %c0_i32, %c0_i32_0 : i32, i32
  }
  func.func @transform_2(%arg0: i32) -> (i32, i32) {
    %c0_i32 = arith.constant 0 : i32
    %c0_i32_0 = arith.constant 0 : i32
    %c0_i32_1 = arith.constant 0 : i32
    return %c0_i32, %c0_i32_0 : i32, i32
  }
  func.func @transform_3(%arg0: i32) -> (i32, i32) {
    %c0_i32 = arith.constant 0 : i32
    %c0_i32_0 = arith.constant 0 : i32
    return %arg0, %c0_i32 : i32, i32
  }
}

module attributes {stable_mosaic.version = 11 : i64} {
  func.func @kernel(%arg0: i32, %arg1: memref<8x128xf32, #tpu.memory_space<vmem>>, %arg2: memref<128x256xf32, #tpu.memory_space<vmem>>, %arg3: memref<1x256xf32, #tpu.memory_space<vmem>>, %arg4: memref<8x256xf32, #tpu.memory_space<vmem>>, %arg5: memref<8x256xf32, #tpu.memory_space<vmem>>) attributes {dimension_semantics = [#tpu.dimension_semantics<parallel>], iteration_bounds = array<i64: 1>, scalar_prefetch = 0 : i64, scratch_operands = 0 : i64, tpu.core_type = #tpu.core_type<tc>, window_params = [{transform_indices = @transform_0, window_bounds = array<i64: 8, 128>}, {pipeline_mode = #tpu.pipeline_mode<synchronous>, transform_indices = @transform_1, window_bounds = array<i64: 128, 256>}, {pipeline_mode = #tpu.pipeline_mode<synchronous>, transform_indices = @transform_2, window_bounds = array<i64: 1, 256>}, {transform_indices = @transform_3, window_bounds = array<i64: 8, 256>}, {transform_indices = @transform_4, window_bounds = array<i64: 8, 256>}]} {
    %c0 = arith.constant 0 : index
    %c0_0 = arith.constant 0 : index
    %0 = vector.load %arg1[%c0, %c0_0] : memref<8x128xf32, #tpu.memory_space<vmem>>, vector<8x128xf32>
    %c0_1 = arith.constant 0 : index
    %c0_2 = arith.constant 0 : index
    %1 = vector.load %arg2[%c0_1, %c0_2] : memref<128x256xf32, #tpu.memory_space<vmem>>, vector<128x256xf32>
    %cst = arith.constant dense<0.000000e+00> : vector<8x256xf32>
    %2 = tpu.matmul %0, %1, %cst {dimension_numbers = #tpu.dot_dimension_numbers<[1], [0], [0], [1], [0, 0, 1, 1], [], []>} : vector<8x128xf32>, vector<128x256xf32>, vector<8x256xf32> -> vector<8x256xf32>
    %c0_3 = arith.constant 0 : index
    %c0_4 = arith.constant 0 : index
    %3 = vector.load %arg3[%c0_3, %c0_4] : memref<1x256xf32, #tpu.memory_space<vmem>>, vector<1x256xf32>
    %4 = vector.broadcast %3 : vector<1x256xf32> to vector<8x256xf32>
    %5 = arith.addf %2, %4 : vector<8x256xf32>
    %c0_5 = arith.constant 0 : index
    %c0_6 = arith.constant 0 : index
    %6 = vector.load %arg4[%c0_5, %c0_6] : memref<8x256xf32, #tpu.memory_space<vmem>>, vector<8x256xf32>
    %7 = arith.addf %5, %6 : vector<8x256xf32>
    %cst_7 = arith.constant 0.000000e+00 : f32
    %8 = vector.broadcast %cst_7 : f32 to vector<8x256xf32>
    %9 = arith.maximumf %7, %8 : vector<8x256xf32>
    %c0_8 = arith.constant 0 : index
    %c0_9 = arith.constant 0 : index
    %10 = vector.load %arg5[%c0_8, %c0_9] : memref<8x256xf32, #tpu.memory_space<vmem>>, vector<8x256xf32>
    tpu.vector_store %arg5[%c0_8, %c0_9], %9 {strides = array<i32>} : memref<8x256xf32, #tpu.memory_space<vmem>>, vector<8x256xf32>,
    return
  }
  func.func @transform_0(%arg0: i32) -> (i32, i32) {
    %c0_i32 = arith.constant 0 : i32
    %c0_i32_0 = arith.constant 0 : i32
    return %arg0, %c0_i32 : i32, i32
  }
  func.func @transform_1(%arg0: i32) -> (i32, i32) {
    %c0_i32 = arith.constant 0 : i32
    %c0_i32_0 = arith.constant 0 : i32
    %c0_i32_1 = arith.constant 0 : i32
    return %c0_i32, %c0_i32_0 : i32, i32
  }
  func.func @transform_2(%arg0: i32) -> (i32, i32) {
    %c0_i32 = arith.constant 0 : i32
    %c0_i32_0 = arith.constant 0 : i32
    %c0_i32_1 = arith.constant 0 : i32
    return %c0_i32, %c0_i32_0 : i32, i32
  }
  func.func @transform_3(%arg0: i32) -> (i32, i32) {
    %c0_i32 = arith.constant 0 : i32
    %c0_i32_0 = arith.constant 0 : i32
    return %arg0, %c0_i32 : i32, i32
  }
  func.func @transform_4(%arg0: i32) -> (i32, i32) {
    %c0_i32 = arith.constant 0 : i32
    %c0_i32_0 = arith.constant 0 : i32
    return %arg0, %c0_i32 : i32, i32
  }
}

module attributes {stable_mosaic.version = 11 : i64} {
  func.func @kernel(%arg0: i32, %arg1: memref<8x256xf32, #tpu.memory_space<vmem>>, %arg2: memref<256x128xf32, #tpu.memory_space<vmem>>, %arg3: memref<1x128xf32, #tpu.memory_space<vmem>>, %arg4: memref<8x128xf32, #tpu.memory_space<vmem>>) attributes {dimension_semantics = [#tpu.dimension_semantics<parallel>], iteration_bounds = array<i64: 1>, scalar_prefetch = 0 : i64, scratch_operands = 0 : i64, tpu.core_type = #tpu.core_type<tc>, window_params = [{transform_indices = @transform_0, window_bounds = array<i64: 8, 256>}, {pipeline_mode = #tpu.pipeline_mode<synchronous>, transform_indices = @transform_1, window_bounds = array<i64: 256, 128>}, {pipeline_mode = #tpu.pipeline_mode<synchronous>, transform_indices = @transform_2, window_bounds = array<i64: 1, 128>}, {transform_indices = @transform_3, window_bounds = array<i64: 8, 128>}]} {
    %c0 = arith.constant 0 : index
    %c0_0 = arith.constant 0 : index
    %0 = vector.load %arg1[%c0, %c0_0] : memref<8x256xf32, #tpu.memory_space<vmem>>, vector<8x256xf32>
    %c0_1 = arith.constant 0 : index
    %c0_2 = arith.constant 0 : index
    %1 = vector.load %arg2[%c0_1, %c0_2] : memref<256x128xf32, #tpu.memory_space<vmem>>, vector<256x128xf32>
    %cst = arith.constant dense<0.000000e+00> : vector<8x128xf32>
    %2 = tpu.matmul %0, %1, %cst {dimension_numbers = #tpu.dot_dimension_numbers<[1], [0], [0], [1], [0, 0, 1, 1], [], []>} : vector<8x256xf32>, vector<256x128xf32>, vector<8x128xf32> -> vector<8x128xf32>
    %c0_3 = arith.constant 0 : index
    %c0_4 = arith.constant 0 : index
    %3 = vector.load %arg3[%c0_3, %c0_4] : memref<1x128xf32, #tpu.memory_space<vmem>>, vector<1x128xf32>
    %4 = vector.broadcast %3 : vector<1x128xf32> to vector<8x128xf32>
    %5 = arith.addf %2, %4 : vector<8x128xf32>
    %cst_5 = arith.constant 0.000000e+00 : f32
    %6 = vector.broadcast %cst_5 : f32 to vector<8x128xf32>
    %7 = arith.maximumf %5, %6 : vector<8x128xf32>
    %c0_6 = arith.constant 0 : index
    %c0_7 = arith.constant 0 : index
    %8 = vector.load %arg4[%c0_6, %c0_7] : memref<8x128xf32, #tpu.memory_space<vmem>>, vector<8x128xf32>
    tpu.vector_store %arg4[%c0_6, %c0_7], %7 {strides = array<i32>} : memref<8x128xf32, #tpu.memory_space<vmem>>, vector<8x128xf32>,
    return
  }
  func.func @transform_0(%arg0: i32) -> (i32, i32) {
    %c0_i32 = arith.constant 0 : i32
    %c0_i32_0 = arith.constant 0 : i32
    return %arg0, %c0_i32 : i32, i32
  }
  func.func @transform_1(%arg0: i32) -> (i32, i32) {
    %c0_i32 = arith.constant 0 : i32
    %c0_i32_0 = arith.constant 0 : i32
    %c0_i32_1 = arith.constant 0 : i32
    return %c0_i32, %c0_i32_0 : i32, i32
  }
  func.func @transform_2(%arg0: i32) -> (i32, i32) {
    %c0_i32 = arith.constant 0 : i32
    %c0_i32_0 = arith.constant 0 : i32
    %c0_i32_1 = arith.constant 0 : i32
    return %c0_i32, %c0_i32_0 : i32, i32
  }
  func.func @transform_3(%arg0: i32) -> (i32, i32) {
    %c0_i32 = arith.constant 0 : i32
    %c0_i32_0 = arith.constant 0 : i32
    return %arg0, %c0_i32 : i32, i32
  }
}

module attributes {stable_mosaic.version = 11 : i64} {
  func.func @kernel(%arg0: i32, %arg1: memref<8x1152xf32, #tpu.memory_space<vmem>>, %arg2: memref<1152x128xf32, #tpu.memory_space<vmem>>, %arg3: memref<1x128xf32, #tpu.memory_space<vmem>>, %arg4: memref<8x128xf32, #tpu.memory_space<vmem>>) attributes {dimension_semantics = [#tpu.dimension_semantics<parallel>], iteration_bounds = array<i64: 1>, scalar_prefetch = 0 : i64, scratch_operands = 0 : i64, tpu.core_type = #tpu.core_type<tc>, window_params = [{transform_indices = @transform_0, window_bounds = array<i64: 8, 1152>}, {pipeline_mode = #tpu.pipeline_mode<synchronous>, transform_indices = @transform_1, window_bounds = array<i64: 1152, 128>}, {pipeline_mode = #tpu.pipeline_mode<synchronous>, transform_indices = @transform_2, window_bounds = array<i64: 1, 128>}, {transform_indices = @transform_3, window_bounds = array<i64: 8, 128>}]} {
    %c0 = arith.constant 0 : index
    %c0_0 = arith.constant 0 : index
    %0 = vector.load %arg1[%c0, %c0_0] : memref<8x1152xf32, #tpu.memory_space<vmem>>, vector<8x1152xf32>
    %c0_1 = arith.constant 0 : index
    %c0_2 = arith.constant 0 : index
    %1 = vector.load %arg2[%c0_1, %c0_2] : memref<1152x128xf32, #tpu.memory_space<vmem>>, vector<1152x128xf32>
    %cst = arith.constant dense<0.000000e+00> : vector<8x128xf32>
    %2 = tpu.matmul %0, %1, %cst {dimension_numbers = #tpu.dot_dimension_numbers<[1], [0], [0], [1], [0, 0, 1, 1], [], []>} : vector<8x1152xf32>, vector<1152x128xf32>, vector<8x128xf32> -> vector<8x128xf32>
    %c0_3 = arith.constant 0 : index
    %c0_4 = arith.constant 0 : index
    %3 = vector.load %arg3[%c0_3, %c0_4] : memref<1x128xf32, #tpu.memory_space<vmem>>, vector<1x128xf32>
    %4 = vector.broadcast %3 : vector<1x128xf32> to vector<8x128xf32>
    %5 = arith.addf %2, %4 : vector<8x128xf32>
    %cst_5 = arith.constant 0.000000e+00 : f32
    %6 = vector.broadcast %cst_5 : f32 to vector<8x128xf32>
    %7 = arith.maximumf %5, %6 : vector<8x128xf32>
    %c0_6 = arith.constant 0 : index
    %c0_7 = arith.constant 0 : index
    %8 = vector.load %arg4[%c0_6, %c0_7] : memref<8x128xf32, #tpu.memory_space<vmem>>, vector<8x128xf32>
    tpu.vector_store %arg4[%c0_6, %c0_7], %7 {strides = array<i32>} : memref<8x128xf32, #tpu.memory_space<vmem>>, vector<8x128xf32>,
    return
  }
  func.func @transform_0(%arg0: i32) -> (i32, i32) {
    %c0_i32 = arith.constant 0 : i32
    %c0_i32_0 = arith.constant 0 : i32
    return %arg0, %c0_i32 : i32, i32
  }
  func.func @transform_1(%arg0: i32) -> (i32, i32) {
    %c0_i32 = arith.constant 0 : i32
    %c0_i32_0 = arith.constant 0 : i32
    %c0_i32_1 = arith.constant 0 : i32
    return %c0_i32, %c0_i32_0 : i32, i32
  }
  func.func @transform_2(%arg0: i32) -> (i32, i32) {
    %c0_i32 = arith.constant 0 : i32
    %c0_i32_0 = arith.constant 0 : i32
    %c0_i32_1 = arith.constant 0 : i32
    return %c0_i32, %c0_i32_0 : i32, i32
  }
  func.func @transform_3(%arg0: i32) -> (i32, i32) {
    %c0_i32 = arith.constant 0 : i32
    %c0_i32_0 = arith.constant 0 : i32
    return %arg0, %c0_i32 : i32, i32
  }
}

module attributes {stable_mosaic.version = 11 : i64} {
  func.func @kernel(%arg0: i32, %arg1: memref<8x256xf32, #tpu.memory_space<vmem>>, %arg2: memref<256x512xf32, #tpu.memory_space<vmem>>, %arg3: memref<1x512xf32, #tpu.memory_space<vmem>>, %arg4: memref<8x512xf32, #tpu.memory_space<vmem>>) attributes {dimension_semantics = [#tpu.dimension_semantics<parallel>], iteration_bounds = array<i64: 1>, scalar_prefetch = 0 : i64, scratch_operands = 0 : i64, tpu.core_type = #tpu.core_type<tc>, window_params = [{transform_indices = @transform_0, window_bounds = array<i64: 8, 256>}, {pipeline_mode = #tpu.pipeline_mode<synchronous>, transform_indices = @transform_1, window_bounds = array<i64: 256, 512>}, {pipeline_mode = #tpu.pipeline_mode<synchronous>, transform_indices = @transform_2, window_bounds = array<i64: 1, 512>}, {transform_indices = @transform_3, window_bounds = array<i64: 8, 512>}]} {
    %c0 = arith.constant 0 : index
    %c0_0 = arith.constant 0 : index
    %0 = vector.load %arg1[%c0, %c0_0] : memref<8x256xf32, #tpu.memory_space<vmem>>, vector<8x256xf32>
    %c0_1 = arith.constant 0 : index
    %c0_2 = arith.constant 0 : index
    %1 = vector.load %arg2[%c0_1, %c0_2] : memref<256x512xf32, #tpu.memory_space<vmem>>, vector<256x512xf32>
    %cst = arith.constant dense<0.000000e+00> : vector<8x512xf32>
    %2 = tpu.matmul %0, %1, %cst {dimension_numbers = #tpu.dot_dimension_numbers<[1], [0], [0], [1], [0, 0, 1, 1], [], []>} : vector<8x256xf32>, vector<256x512xf32>, vector<8x512xf32> -> vector<8x512xf32>
    %c0_3 = arith.constant 0 : index
    %c0_4 = arith.constant 0 : index
    %3 = vector.load %arg3[%c0_3, %c0_4] : memref<1x512xf32, #tpu.memory_space<vmem>>, vector<1x512xf32>
    %4 = vector.broadcast %3 : vector<1x512xf32> to vector<8x512xf32>
    %5 = arith.addf %2, %4 : vector<8x512xf32>
    %c0_5 = arith.constant 0 : index
    %c0_6 = arith.constant 0 : index
    %6 = vector.load %arg4[%c0_5, %c0_6] : memref<8x512xf32, #tpu.memory_space<vmem>>, vector<8x512xf32>
    tpu.vector_store %arg4[%c0_5, %c0_6], %5 {strides = array<i32>} : memref<8x512xf32, #tpu.memory_space<vmem>>, vector<8x512xf32>,
    return
  }
  func.func @transform_0(%arg0: i32) -> (i32, i32) {
    %c0_i32 = arith.constant 0 : i32
    %c0_i32_0 = arith.constant 0 : i32
    return %arg0, %c0_i32 : i32, i32
  }
  func.func @transform_1(%arg0: i32) -> (i32, i32) {
    %c0_i32 = arith.constant 0 : i32
    %c0_i32_0 = arith.constant 0 : i32
    %c0_i32_1 = arith.constant 0 : i32
    return %c0_i32, %c0_i32_0 : i32, i32
  }
  func.func @transform_2(%arg0: i32) -> (i32, i32) {
    %c0_i32 = arith.constant 0 : i32
    %c0_i32_0 = arith.constant 0 : i32
    %c0_i32_1 = arith.constant 0 : i32
    return %c0_i32, %c0_i32_0 : i32, i32
  }
  func.func @transform_3(%arg0: i32) -> (i32, i32) {
    %c0_i32 = arith.constant 0 : i32
    %c0_i32_0 = arith.constant 0 : i32
    return %arg0, %c0_i32 : i32, i32
  }
}

module attributes {stable_mosaic.version = 11 : i64} {
  func.func @kernel(%arg0: i32, %arg1: memref<8x128xf32, #tpu.memory_space<vmem>>, %arg2: memref<128x512xf32, #tpu.memory_space<vmem>>, %arg3: memref<1x512xf32, #tpu.memory_space<vmem>>, %arg4: memref<8x512xf32, #tpu.memory_space<vmem>>, %arg5: memref<8x512xf32, #tpu.memory_space<vmem>>) attributes {dimension_semantics = [#tpu.dimension_semantics<parallel>], iteration_bounds = array<i64: 1>, scalar_prefetch = 0 : i64, scratch_operands = 0 : i64, tpu.core_type = #tpu.core_type<tc>, window_params = [{transform_indices = @transform_0, window_bounds = array<i64: 8, 128>}, {pipeline_mode = #tpu.pipeline_mode<synchronous>, transform_indices = @transform_1, window_bounds = array<i64: 128, 512>}, {pipeline_mode = #tpu.pipeline_mode<synchronous>, transform_indices = @transform_2, window_bounds = array<i64: 1, 512>}, {transform_indices = @transform_3, window_bounds = array<i64: 8, 512>}, {transform_indices = @transform_4, window_bounds = array<i64: 8, 512>}]} {
    %c0 = arith.constant 0 : index
    %c0_0 = arith.constant 0 : index
    %0 = vector.load %arg1[%c0, %c0_0] : memref<8x128xf32, #tpu.memory_space<vmem>>, vector<8x128xf32>
    %c0_1 = arith.constant 0 : index
    %c0_2 = arith.constant 0 : index
    %1 = vector.load %arg2[%c0_1, %c0_2] : memref<128x512xf32, #tpu.memory_space<vmem>>, vector<128x512xf32>
    %cst = arith.constant dense<0.000000e+00> : vector<8x512xf32>
    %2 = tpu.matmul %0, %1, %cst {dimension_numbers = #tpu.dot_dimension_numbers<[1], [0], [0], [1], [0, 0, 1, 1], [], []>} : vector<8x128xf32>, vector<128x512xf32>, vector<8x512xf32> -> vector<8x512xf32>
    %c0_3 = arith.constant 0 : index
    %c0_4 = arith.constant 0 : index
    %3 = vector.load %arg3[%c0_3, %c0_4] : memref<1x512xf32, #tpu.memory_space<vmem>>, vector<1x512xf32>
    %4 = vector.broadcast %3 : vector<1x512xf32> to vector<8x512xf32>
    %5 = arith.addf %2, %4 : vector<8x512xf32>
    %c0_5 = arith.constant 0 : index
    %c0_6 = arith.constant 0 : index
    %6 = vector.load %arg4[%c0_5, %c0_6] : memref<8x512xf32, #tpu.memory_space<vmem>>, vector<8x512xf32>
    %7 = arith.addf %5, %6 : vector<8x512xf32>
    %cst_7 = arith.constant 0.000000e+00 : f32
    %8 = vector.broadcast %cst_7 : f32 to vector<8x512xf32>
    %9 = arith.maximumf %7, %8 : vector<8x512xf32>
    %c0_8 = arith.constant 0 : index
    %c0_9 = arith.constant 0 : index
    %10 = vector.load %arg5[%c0_8, %c0_9] : memref<8x512xf32, #tpu.memory_space<vmem>>, vector<8x512xf32>
    tpu.vector_store %arg5[%c0_8, %c0_9], %9 {strides = array<i32>} : memref<8x512xf32, #tpu.memory_space<vmem>>, vector<8x512xf32>,
    return
  }
  func.func @transform_0(%arg0: i32) -> (i32, i32) {
    %c0_i32 = arith.constant 0 : i32
    %c0_i32_0 = arith.constant 0 : i32
    return %arg0, %c0_i32 : i32, i32
  }
  func.func @transform_1(%arg0: i32) -> (i32, i32) {
    %c0_i32 = arith.constant 0 : i32
    %c0_i32_0 = arith.constant 0 : i32
    %c0_i32_1 = arith.constant 0 : i32
    return %c0_i32, %c0_i32_0 : i32, i32
  }
  func.func @transform_2(%arg0: i32) -> (i32, i32) {
    %c0_i32 = arith.constant 0 : i32
    %c0_i32_0 = arith.constant 0 : i32
    %c0_i32_1 = arith.constant 0 : i32
    return %c0_i32, %c0_i32_0 : i32, i32
  }
  func.func @transform_3(%arg0: i32) -> (i32, i32) {
    %c0_i32 = arith.constant 0 : i32
    %c0_i32_0 = arith.constant 0 : i32
    return %arg0, %c0_i32 : i32, i32
  }
  func.func @transform_4(%arg0: i32) -> (i32, i32) {
    %c0_i32 = arith.constant 0 : i32
    %c0_i32_0 = arith.constant 0 : i32
    return %arg0, %c0_i32 : i32, i32
  }
}

module attributes {stable_mosaic.version = 11 : i64} {
  func.func @kernel(%arg0: i32, %arg1: memref<8x512xf32, #tpu.memory_space<vmem>>, %arg2: memref<512x128xf32, #tpu.memory_space<vmem>>, %arg3: memref<1x128xf32, #tpu.memory_space<vmem>>, %arg4: memref<8x128xf32, #tpu.memory_space<vmem>>) attributes {dimension_semantics = [#tpu.dimension_semantics<parallel>], iteration_bounds = array<i64: 1>, scalar_prefetch = 0 : i64, scratch_operands = 0 : i64, tpu.core_type = #tpu.core_type<tc>, window_params = [{transform_indices = @transform_0, window_bounds = array<i64: 8, 512>}, {pipeline_mode = #tpu.pipeline_mode<synchronous>, transform_indices = @transform_1, window_bounds = array<i64: 512, 128>}, {pipeline_mode = #tpu.pipeline_mode<synchronous>, transform_indices = @transform_2, window_bounds = array<i64: 1, 128>}, {transform_indices = @transform_3, window_bounds = array<i64: 8, 128>}]} {
    %c0 = arith.constant 0 : index
    %c0_0 = arith.constant 0 : index
    %0 = vector.load %arg1[%c0, %c0_0] : memref<8x512xf32, #tpu.memory_space<vmem>>, vector<8x512xf32>
    %c0_1 = arith.constant 0 : index
    %c0_2 = arith.constant 0 : index
    %1 = vector.load %arg2[%c0_1, %c0_2] : memref<512x128xf32, #tpu.memory_space<vmem>>, vector<512x128xf32>
    %cst = arith.constant dense<0.000000e+00> : vector<8x128xf32>
    %2 = tpu.matmul %0, %1, %cst {dimension_numbers = #tpu.dot_dimension_numbers<[1], [0], [0], [1], [0, 0, 1, 1], [], []>} : vector<8x512xf32>, vector<512x128xf32>, vector<8x128xf32> -> vector<8x128xf32>
    %c0_3 = arith.constant 0 : index
    %c0_4 = arith.constant 0 : index
    %3 = vector.load %arg3[%c0_3, %c0_4] : memref<1x128xf32, #tpu.memory_space<vmem>>, vector<1x128xf32>
    %4 = vector.broadcast %3 : vector<1x128xf32> to vector<8x128xf32>
    %5 = arith.addf %2, %4 : vector<8x128xf32>
    %cst_5 = arith.constant 0.000000e+00 : f32
    %6 = vector.broadcast %cst_5 : f32 to vector<8x128xf32>
    %7 = arith.maximumf %5, %6 : vector<8x128xf32>
    %c0_6 = arith.constant 0 : index
    %c0_7 = arith.constant 0 : index
    %8 = vector.load %arg4[%c0_6, %c0_7] : memref<8x128xf32, #tpu.memory_space<vmem>>, vector<8x128xf32>
    tpu.vector_store %arg4[%c0_6, %c0_7], %7 {strides = array<i32>} : memref<8x128xf32, #tpu.memory_space<vmem>>, vector<8x128xf32>,
    return
  }
  func.func @transform_0(%arg0: i32) -> (i32, i32) {
    %c0_i32 = arith.constant 0 : i32
    %c0_i32_0 = arith.constant 0 : i32
    return %arg0, %c0_i32 : i32, i32
  }
  func.func @transform_1(%arg0: i32) -> (i32, i32) {
    %c0_i32 = arith.constant 0 : i32
    %c0_i32_0 = arith.constant 0 : i32
    %c0_i32_1 = arith.constant 0 : i32
    return %c0_i32, %c0_i32_0 : i32, i32
  }
  func.func @transform_2(%arg0: i32) -> (i32, i32) {
    %c0_i32 = arith.constant 0 : i32
    %c0_i32_0 = arith.constant 0 : i32
    %c0_i32_1 = arith.constant 0 : i32
    return %c0_i32, %c0_i32_0 : i32, i32
  }
  func.func @transform_3(%arg0: i32) -> (i32, i32) {
    %c0_i32 = arith.constant 0 : i32
    %c0_i32_0 = arith.constant 0 : i32
    return %arg0, %c0_i32 : i32, i32
  }
}

</mosaic_0001>

<llo_original>
// kernel: _forward_impl.54
$region0: #{_forward_impl.54}
  #allocation0 [shape = 'u32[]', space=smem, size = 0x4, offset = 0x4, fixed_abs, tag = 'smem constant byte address 0x4 - core index']
  #allocation1 [shape = 'u32[144,128]{1,0:T(1,128)}', space=vmem, size = 0x12000, scoped, tag = 'internal scratch']
  %s0 = inlined_call_operand.vmem [shape: f32[512,256], index: 0, kind: input, shape index: {}]
  %s1 = inlined_call_operand.vmem [shape: f32[256,128], index: 1, kind: input, shape index: {}]
  %s2 = inlined_call_operand.vmem [shape: f32[1,128], index: 2, kind: input, shape index: {}]
  %s3 = inlined_call_operand.vmem [shape: f32[512,128], index: 3, kind: output, shape index: {}]
  %s4 = sld [smem:[#allocation0]]
  $region22: #{_forward_impl.54} parent=0
    _
  %s6 = ssub.s32 1, %s4
  %s7 = scalar_select 0, %s6, %s4
  // Predicated region
  $region2: #{_forward_impl.54} parent=0 // pred_check
    _
  $region3: #{_forward_impl.54} parent=0 // pred_check_branch
    %9 = sbr.rel (0) target = $region5
  $region4: #{_forward_impl.54} parent=0 // pred_region
    _
  $region5: #{_forward_impl.54} parent=0 // pred_fallthru
    _
  // Predicated region
  $region6: #{_forward_impl.54} parent=0 // pred_check
    _
  $region7: #{_forward_impl.54} parent=0 // pred_check_branch
    %11 = sbr.rel (0) target = $region9
  $region8: #{_forward_impl.54} parent=0 // pred_region
    _
  $region9: #{_forward_impl.54} parent=0 // pred_fallthru
    _
  // Predicated region
  $region10: #{_forward_impl.54} parent=0 // pred_check
    _
  $region11: #{_forward_impl.54} parent=0 // pred_check_branch
    %13 = sbr.rel (0) target = $region13
  $region12: #{_forward_impl.54} parent=0 // pred_region
    _
  $region13: #{_forward_impl.54} parent=0 // pred_fallthru
    _
  %v14 = vld [vmem:[%s0] sm:$0xff]
  %v15 = vld [vmem:[%s0 + $0x8] sm:$0xff]
  %v16 = vld [vmem:[%s0 + $0x10] sm:$0xff]
  %v17 = vld [vmem:[%s0 + $0x18] sm:$0xff]
  %v18 = vld [vmem:[%s0 + $0x20] sm:$0xff]
  %v19 = vld [vmem:[%s0 + $0x28] sm:$0xff]
  %v20 = vld [vmem:[%s0 + $0x30] sm:$0xff]
  %v21 = vld [vmem:[%s0 + $0x38] sm:$0xff]
  %v22 = vld [vmem:[%s0 + $0x40] sm:$0xff]
  %v23 = vld [vmem:[%s0 + $0x48] sm:$0xff]
  %v24 = vld [vmem:[%s0 + $0x50] sm:$0xff]
  %v25 = vld [vmem:[%s0 + $0x58] sm:$0xff]
  %v26 = vld [vmem:[%s0 + $0x60] sm:$0xff]
  %v27 = vld [vmem:[%s0 + $0x68] sm:$0xff]
  %v28 = vld [vmem:[%s0 + $0x70] sm:$0xff]
  %v29 = vld [vmem:[%s0 + $0x78] sm:$0xff]
  %v30 = vld [vmem:[%s0 + $0x80] sm:$0xff]
  %v31 = vld [vmem:[%s0 + $0x88] sm:$0xff]
  %v32 = vld [vmem:[%s0 + $0x90] sm:$0xff]
  %v33 = vld [vmem:[%s0 + $0x98] sm:$0xff]
  %v34 = vld [vmem:[%s0 + $0xa0] sm:$0xff]
  %v35 = vld [vmem:[%s0 + $0xa8] sm:$0xff]
  %v36 = vld [vmem:[%s0 + $0xb0] sm:$0xff]
  %v37 = vld [vmem:[%s0 + $0xb8] sm:$0xff]
  %v38 = vld [vmem:[%s0 + $0xc0] sm:$0xff]
  %v39 = vld [vmem:[%s0 + $0xc8] sm:$0xff]
  %v40 = vld [vmem:[%s0 + $0xd0] sm:$0xff]
  %v41 = vld [vmem:[%s0 + $0xd8] sm:$0xff]
  %v42 = vld [vmem:[%s0 + $0xe0] sm:$0xff]
  %v43 = vld [vmem:[%s0 + $0xe8] sm:$0xff]
  %v44 = vld [vmem:[%s0 + $0xf0] sm:$0xff]
  %v45 = vld [vmem:[%s0 + $0xf8] sm:$0xff]
  %v46 = vld [vmem:[%s0 + $0x100] sm:$0xff]
  %v47 = vld [vmem:[%s0 + $0x108] sm:$0xff]
  %v48 = vld [vmem:[%s0 + $0x110] sm:$0xff]
  %v49 = vld [vmem:[%s0 + $0x118] sm:$0xff]
  %v50 = vld [vmem:[%s0 + $0x120] sm:$0xff]
  %v51 = vld [vmem:[%s0 + $0x128] sm:$0xff]
  %v52 = vld [vmem:[%s0 + $0x130] sm:$0xff]
  %v53 = vld [vmem:[%s0 + $0x138] sm:$0xff]
  %v54 = vld [vmem:[%s0 + $0x140] sm:$0xff]
  %v55 = vld [vmem:[%s0 + $0x148] sm:$0xff]
  %v56 = vld [vmem:[%s0 + $0x150] sm:$0xff]
  %v57 = vld [vmem:[%s0 + $0x158] sm:$0xff]
  %v58 = vld [vmem:[%s0 + $0x160] sm:$0xff]
  %v59 = vld [vmem:[%s0 + $0x168] sm:$0xff]
  %v60 = vld [vmem:[%s0 + $0x170] sm:$0xff]
  %v61 = vld [vmem:[%s0 + $0x178] sm:$0xff]
  %v62 = vld [vmem:[%s0 + $0x180] sm:$0xff]
  %v63 = vld [vmem:[%s0 + $0x188] sm:$0xff]
  %v64 = vld [vmem:[%s0 + $0x190] sm:$0xff]
  %v65 = vld [vmem:[%s0 + $0x198] sm:$0xff]
  %v66 = vld [vmem:[%s0 + $0x1a0] sm:$0xff]
  %v67 = vld [vmem:[%s0 + $0x1a8] sm:$0xff]
  %v68 = vld [vmem:[%s0 + $0x1b0] sm:$0xff]
  %v69 = vld [vmem:[%s0 + $0x1b8] sm:$0xff]
  %v70 = vld [vmem:[%s0 + $0x1c0] sm:$0xff]
  %v71 = vld [vmem:[%s0 + $0x1c8] sm:$0xff]
  %v72 = vld [vmem:[%s0 + $0x1d0] sm:$0xff]
  %v73 = vld [vmem:[%s0 + $0x1d8] sm:$0xff]
  %v74 = vld [vmem:[%s0 + $0x1e0] sm:$0xff]
  %v75 = vld [vmem:[%s0 + $0x1e8] sm:$0xff]
  %v76 = vld [vmem:[%s0 + $0x1f0] sm:$0xff]
  %v77 = vld [vmem:[%s0 + $0x1f8] sm:$0xff]
  %v78 = vld [vmem:[%s0 + $0x200] sm:$0xff]
  %v79 = vld [vmem:[%s0 + $0x208] sm:$0xff]
  %v80 = vld [vmem:[%s0 + $0x210] sm:$0xff]
  %v81 = vld [vmem:[%s0 + $0x218] sm:$0xff]
  %v82 = vld [vmem:[%s0 + $0x220] sm:$0xff]
  %v83 = vld [vmem:[%s0 + $0x228] sm:$0xff]
  %v84 = vld [vmem:[%s0 + $0x230] sm:$0xff]
  %v85 = vld [vmem:[%s0 + $0x238] sm:$0xff]
  %v86 = vld [vmem:[%s0 + $0x240] sm:$0xff]
  %v87 = vld [vmem:[%s0 + $0x248] sm:$0xff]
  %v88 = vld [vmem:[%s0 + $0x250] sm:$0xff]
  %v89 = vld [vmem:[%s0 + $0x258] sm:$0xff]
  %v90 = vld [vmem:[%s0 + $0x260] sm:$0xff]
  %v91 = vld [vmem:[%s0 + $0x268] sm:$0xff]
  %v92 = vld [vmem:[%s0 + $0x270] sm:$0xff]
  %v93 = vld [vmem:[%s0 + $0x278] sm:$0xff]
  %v94 = vld [vmem:[%s0 + $0x280] sm:$0xff]
  %v95 = vld [vmem:[%s0 + $0x288] sm:$0xff]
  %v96 = vld [vmem:[%s0 + $0x290] sm:$0xff]
  %v97 = vld [vmem:[%s0 + $0x298] sm:$0xff]
  %v98 = vld [vmem:[%s0 + $0x2a0] sm:$0xff]
  %v99 = vld [vmem:[%s0 + $0x2a8] sm:$0xff]
  %v100 = vld [vmem:[%s0 + $0x2b0] sm:$0xff]
  %v101 = vld [vmem:[%s0 + $0x2b8] sm:$0xff]
  %v102 = vld [vmem:[%s0 + $0x2c0] sm:$0xff]
  %v103 = vld [vmem:[%s0 + $0x2c8] sm:$0xff]
  %v104 = vld [vmem:[%s0 + $0x2d0] sm:$0xff]
  %v105 = vld [vmem:[%s0 + $0x2d8] sm:$0xff]
  %v106 = vld [vmem:[%s0 + $0x2e0] sm:$0xff]
  %v107 = vld [vmem:[%s0 + $0x2e8] sm:$0xff]
  %v108 = vld [vmem:[%s0 + $0x2f0] sm:$0xff]
  %v109 = vld [vmem:[%s0 + $0x2f8] sm:$0xff]
  %v110 = vld [vmem:[%s0 + $0x300] sm:$0xff]
  %v111 = vld [vmem:[%s0 + $0x308] sm:$0xff]
  %v112 = vld [vmem:[%s0 + $0x310] sm:$0xff]
  %v113 = vld [vmem:[%s0 + $0x318] sm:$0xff]
  %v114 = vld [vmem:[%s0 + $0x320] sm:$0xff]
  %v115 = vld [vmem:[%s0 + $0x328] sm:$0xff]
  %v116 = vld [vmem:[%s0 + $0x330] sm:$0xff]
  %v117 = vld [vmem:[%s0 + $0x338] sm:$0xff]
  %v118 = vld [vmem:[%s0 + $0x340] sm:$0xff]
  %v119 = vld [vmem:[%s0 + $0x348] sm:$0xff]
  %v120 = vld [vmem:[%s0 + $0x350] sm:$0xff]
  %v121 = vld [vmem:[%s0 + $0x358] sm:$0xff]
  %v122 = vld [vmem:[%s0 + $0x360] sm:$0xff]
  %v123 = vld [vmem:[%s0 + $0x368] sm:$0xff]
  %v124 = vld [vmem:[%s0 + $0x370] sm:$0xff]
  %v125 = vld [vmem:[%s0 + $0x378] sm:$0xff]
  %v126 = vld [vmem:[%s0 + $0x380] sm:$0xff]
  %v127 = vld [vmem:[%s0 + $0x388] sm:$0xff]
  %v128 = vld [vmem:[%s0 + $0x390] sm:$0xff]
  %v129 = vld [vmem:[%s0 + $0x398] sm:$0xff]
  %v130 = vld [vmem:[%s0 + $0x3a0] sm:$0xff]
  %v131 = vld [vmem:[%s0 + $0x3a8] sm:$0xff]
  %v132 = vld [vmem:[%s0 + $0x3b0] sm:$0xff]
  %v133 = vld [vmem:[%s0 + $0x3b8] sm:$0xff]
  %v134 = vld [vmem:[%s0 + $0x3c0] sm:$0xff]
  %v135 = vld [vmem:[%s0 + $0x3c8] sm:$0xff]
  %v136 = vld [vmem:[%s0 + $0x3d0] sm:$0xff]
  %v137 = vld [vmem:[%s0 + $0x3d8] sm:$0xff]
  %v138 = vld [vmem:[%s0 + $0x3e0] sm:$0xff]
  %v139 = vld [vmem:[%s0 + $0x3e8] sm:$0xff]
  %v140 = vld [vmem:[%s0 + $0x3f0] sm:$0xff]
  %v141 = vld [vmem:[%s0 + $0x3f8] sm:$0xff]
  %v142 = vld [vmem:[%s1] sm:$0xff]
  %v143 = vld [vmem:[%s1 + $0x8] sm:$0xff]
  %v144 = vld [vmem:[%s1 + $0x10] sm:$0xff]
  %v145 = vld [vmem:[%s1 + $0x18] sm:$0xff]
  %v146 = vld [vmem:[%s1 + $0x20] sm:$0xff]
  %v147 = vld [vmem:[%s1 + $0x28] sm:$0xff]
  %v148 = vld [vmem:[%s1 + $0x30] sm:$0xff]
  %v149 = vld [vmem:[%s1 + $0x38] sm:$0xff]
  %v150 = vld [vmem:[%s1 + $0x40] sm:$0xff]
  %v151 = vld [vmem:[%s1 + $0x48] sm:$0xff]
  %v152 = vld [vmem:[%s1 + $0x50] sm:$0xff]
  %v153 = vld [vmem:[%s1 + $0x58] sm:$0xff]
  %v154 = vld [vmem:[%s1 + $0x60] sm:$0xff]
  %v155 = vld [vmem:[%s1 + $0x68] sm:$0xff]
  %v156 = vld [vmem:[%s1 + $0x70] sm:$0xff]
  %v157 = vld [vmem:[%s1 + $0x78] sm:$0xff]
  %v158 = vld [vmem:[%s1 + $0x80] sm:$0xff]
  %v159 = vld [vmem:[%s1 + $0x88] sm:$0xff]
  %v160 = vld [vmem:[%s1 + $0x90] sm:$0xff]
  %v161 = vld [vmem:[%s1 + $0x98] sm:$0xff]
  %v162 = vld [vmem:[%s1 + $0xa0] sm:$0xff]
  %v163 = vld [vmem:[%s1 + $0xa8] sm:$0xff]
  %v164 = vld [vmem:[%s1 + $0xb0] sm:$0xff]
  %v165 = vld [vmem:[%s1 + $0xb8] sm:$0xff]
  %v166 = vld [vmem:[%s1 + $0xc0] sm:$0xff]
  %v167 = vld [vmem:[%s1 + $0xc8] sm:$0xff]
  %v168 = vld [vmem:[%s1 + $0xd0] sm:$0xff]
  %v169 = vld [vmem:[%s1 + $0xd8] sm:$0xff]
  %v170 = vld [vmem:[%s1 + $0xe0] sm:$0xff]
  %v171 = vld [vmem:[%s1 + $0xe8] sm:$0xff]
  %v172 = vld [vmem:[%s1 + $0xf0] sm:$0xff]
  %v173 = vld [vmem:[%s1 + $0xf8] sm:$0xff]
  %v174 = vld [vmem:[%s2] sm:$0x1]
  %v176 = vlaneseq
  %v177 = vshrl.u32 %v176, 7
  %v178 = vsub.s32 0, %v177
  %v179 = vrot.slane %v174, %v178
  %181 = vmatprep.subr.mxu0 0.0
  %182 = vmatpush1.msra.mxu0 %v157
  %183 = vmatprep.subr.mxu0 0.0
  %184 = vmatpush1.msra.mxu0 %v156
  %185 = vmatprep.subr.mxu0 0.0
  %186 = vmatpush1.msra.mxu0 %v155
  %187 = vmatprep.subr.mxu0 0.0
  %188 = vmatpush1.msra.mxu0 %v154
  %189 = vmatprep.subr.mxu0 0.0
  %190 = vmatpush1.msra.mxu0 %v153
  %191 = vmatprep.subr.mxu0 0.0
  %192 = vmatpush1.msra.mxu0 %v152
  %193 = vmatprep.subr.mxu0 0.0
  %194 = vmatpush1.msra.mxu0 %v151
  %195 = vmatprep.subr.mxu0 0.0
  %196 = vmatpush1.msra.mxu0 %v150
  %197 = vmatprep.subr.mxu0 0.0
  %198 = vmatpush1.msra.mxu0 %v149
  %199 = vmatprep.subr.mxu0 0.0
  %200 = vmatpush1.msra.mxu0 %v148
  %201 = vmatprep.subr.mxu0 0.0
  %202 = vmatpush1.msra.mxu0 %v147
  %203 = vmatprep.subr.mxu0 0.0
  %204 = vmatpush1.msra.mxu0 %v146
  %205 = vmatprep.subr.mxu0 0.0
  %206 = vmatpush1.msra.mxu0 %v145
  %207 = vmatprep.subr.mxu0 0.0
  %208 = vmatpush1.msra.mxu0 %v144
  %209 = vmatprep.subr.mxu0 0.0
  %210 = vmatpush1.msra.mxu0 %v143
  %211 = vmatprep.subr.mxu0 0.0
  %212 = vmatpush1.msra.mxu0 %v142
  %213 = vmatprep.subr.mxu0 0.0
  %214 = vmatpush2.msra.mxu0 %v173
  %215 = vmatprep.subr.mxu0 0.0
  %216 = vmatpush2.msra.mxu0 %v172
  %217 = vmatprep.subr.mxu0 0.0
  %218 = vmatpush2.msra.mxu0 %v171
  %219 = vmatprep.subr.mxu0 0.0
  %220 = vmatpush2.msra.mxu0 %v170
  %221 = vmatprep.subr.mxu0 0.0
  %222 = vmatpush2.msra.mxu0 %v169
  %223 = vmatprep.subr.mxu0 0.0
  %224 = vmatpush2.msra.mxu0 %v168
  %225 = vmatprep.subr.mxu0 0.0
  %226 = vmatpush2.msra.mxu0 %v167
  %227 = vmatprep.subr.mxu0 0.0
  %228 = vmatpush2.msra.mxu0 %v166
  %229 = vmatprep.subr.mxu0 0.0
  %230 = vmatpush2.msra.mxu0 %v165
  %231 = vmatprep.subr.mxu0 0.0
  %232 = vmatpush2.msra.mxu0 %v164
  %233 = vmatprep.subr.mxu0 0.0
  %234 = vmatpush2.msra.mxu0 %v163
  %235 = vmatprep.subr.mxu0 0.0
  %236 = vmatpush2.msra.mxu0 %v162
  %237 = vmatprep.subr.mxu0 0.0
  %238 = vmatpush2.msra.mxu0 %v161
  %239 = vmatprep.subr.mxu0 0.0
  %240 = vmatpush2.msra.mxu0 %v160
  %241 = vmatprep.subr.mxu0 0.0
  %242 = vmatpush2.msra.mxu0 %v159
  %243 = vmatprep.subr.mxu0 0.0
  %244 = vmatpush2.msra.mxu0 %v158
  %245 = vmatprep.mubr.f32.mxu0 %v15
  %246 = vmatmul.mubr.f32.gmra.mxu0 %v14
  %v247 = vpop.f32.mrf.mxu0
  %v248 = vadd.f32 %v179, %v247
  %v249 = vpop.f32.mrf.mxu0
  %250 = vmatprep.mubr.f32.mxu0 %v17
  %251 = vmatmul.mubr.f32.gmra.mxu0 %v16
  %v252 = vpop.f32.mrf.mxu0
  %v253 = vadd.f32 %v179, %v252
  %v254 = vpop.f32.mrf.mxu0
  %255 = vmatprep.mubr.f32.mxu0 %v19
  %256 = vmatmul.mubr.f32.gmra.mxu0 %v18
  %v257 = vpop.f32.mrf.mxu0
  %v258 = vadd.f32 %v179, %v257
  %v259 = vpop.f32.mrf.mxu0
  %260 = vmatprep.mubr.f32.mxu0 %v21
  %261 = vmatmul.mubr.f32.gmra.mxu0 %v20
  %v262 = vpop.f32.mrf.mxu0
  %v263 = vadd.f32 %v179, %v262
  %v264 = vpop.f32.mrf.mxu0
  %265 = vmatprep.mubr.f32.mxu0 %v23
  %266 = vmatmul.mubr.f32.gmra.mxu0 %v22
  %v267 = vpop.f32.mrf.mxu0
  %v268 = vadd.f32 %v179, %v267
  %v269 = vpop.f32.mrf.mxu0
  %270 = vmatprep.mubr.f32.mxu0 %v25
  %271 = vmatmul.mubr.f32.gmra.mxu0 %v24
  %v272 = vpop.f32.mrf.mxu0
  %v273 = vadd.f32 %v179, %v272
  %v274 = vpop.f32.mrf.mxu0
  %275 = vmatprep.mubr.f32.mxu0 %v27
  %276 = vmatmul.mubr.f32.gmra.mxu0 %v26
  %v277 = vpop.f32.mrf.mxu0
  %v278 = vadd.f32 %v179, %v277
  %v279 = vpop.f32.mrf.mxu0
  %280 = vmatprep.mubr.f32.mxu0 %v29
  %281 = vmatmul.mubr.f32.gmra.mxu0 %v28
  %v282 = vpop.f32.mrf.mxu0
  %v283 = vadd.f32 %v179, %v282
  %v284 = vpop.f32.mrf.mxu0
  %285 = vmatprep.mubr.f32.mxu0 %v31
  %286 = vmatmul.mubr.f32.gmra.mxu0 %v30
  %v287 = vpop.f32.mrf.mxu0
  %v288 = vadd.f32 %v179, %v287
  %v289 = vpop.f32.mrf.mxu0
  %290 = vmatprep.mubr.f32.mxu0 %v33
  %291 = vmatmul.mubr.f32.gmra.mxu0 %v32
  %v292 = vpop.f32.mrf.mxu0
  %v293 = vadd.f32 %v179, %v292
  %v294 = vpop.f32.mrf.mxu0
  %295 = vmatprep.mubr.f32.mxu0 %v35
  %296 = vmatmul.mubr.f32.gmra.mxu0 %v34
  %v297 = vpop.f32.mrf.mxu0
  %v298 = vadd.f32 %v179, %v297
  %v299 = vpop.f32.mrf.mxu0
  %300 = vmatprep.mubr.f32.mxu0 %v37
  %301 = vmatmul.mubr.f32.gmra.mxu0 %v36
  %v302 = vpop.f32.mrf.mxu0
  %v303 = vadd.f32 %v179, %v302
  %v304 = vpop.f32.mrf.mxu0
  %305 = vmatprep.mubr.f32.mxu0 %v39
  %306 = vmatmul.mubr.f32.gmra.mxu0 %v38
  %v307 = vpop.f32.mrf.mxu0
  %v308 = vadd.f32 %v179, %v307
  %v309 = vpop.f32.mrf.mxu0
  %310 = vmatprep.mubr.f32.mxu0 %v41
  %311 = vmatmul.mubr.f32.gmra.mxu0 %v40
  %v312 = vpop.f32.mrf.mxu0
  %v313 = vadd.f32 %v179, %v312
  %v314 = vpop.f32.mrf.mxu0
  %315 = vmatprep.mubr.f32.mxu0 %v43
  %316 = vmatmul.mubr.f32.gmra.mxu0 %v42
  %v317 = vpop.f32.mrf.mxu0
  %v318 = vadd.f32 %v179, %v317
  %v319 = vpop.f32.mrf.mxu0
  %320 = vmatprep.mubr.f32.mxu0 %v45
  %321 = vmatmul.mubr.f32.gmra.mxu0 %v44
  %v322 = vpop.f32.mrf.mxu0
  %v323 = vadd.f32 %v179, %v322
  %v324 = vpop.f32.mrf.mxu0
  %325 = vmatprep.mubr.f32.mxu0 %v47
  %326 = vmatmul.mubr.f32.gmra.mxu0 %v46
  %v327 = vpop.f32.mrf.mxu0
  %v328 = vadd.f32 %v179, %v327
  %v329 = vpop.f32.mrf.mxu0
  %330 = vmatprep.mubr.f32.mxu0 %v49
  %331 = vmatmul.mubr.f32.gmra.mxu0 %v48
  %v332 = vpop.f32.mrf.mxu0
  %v333 = vadd.f32 %v179, %v332
  %v334 = vpop.f32.mrf.mxu0
  %335 = vmatprep.mubr.f32.mxu0 %v51
  %336 = vmatmul.mubr.f32.gmra.mxu0 %v50
  %v337 = vpop.f32.mrf.mxu0
  %v338 = vadd.f32 %v179, %v337
  %v339 = vpop.f32.mrf.mxu0
  %340 = vmatprep.mubr.f32.mxu0 %v53
  %341 = vmatmul.mubr.f32.gmra.mxu0 %v52
  %v342 = vpop.f32.mrf.mxu0
  %v343 = vadd.f32 %v179, %v342
  %v344 = vpop.f32.mrf.mxu0
  %345 = vmatprep.mubr.f32.mxu0 %v55
  %346 = vmatmul.mubr.f32.gmra.mxu0 %v54
  %v347 = vpop.f32.mrf.mxu0
  %v348 = vadd.f32 %v179, %v347
  %v349 = vpop.f32.mrf.mxu0
  %350 = vmatprep.mubr.f32.mxu0 %v57
  %351 = vmatmul.mubr.f32.gmra.mxu0 %v56
  %v352 = vpop.f32.mrf.mxu0
  %v353 = vadd.f32 %v179, %v352
  %v354 = vpop.f32.mrf.mxu0
  %355 = vmatprep.mubr.f32.mxu0 %v59
  %356 = vmatmul.mubr.f32.gmra.mxu0 %v58
  %v357 = vpop.f32.mrf.mxu0
  %v358 = vadd.f32 %v179, %v357
  %v359 = vpop.f32.mrf.mxu0
  %360 = vmatprep.mubr.f32.mxu0 %v61
  %361 = vmatmul.mubr.f32.gmra.mxu0 %v60
  %v362 = vpop.f32.mrf.mxu0
  %v363 = vadd.f32 %v179, %v362
  %v364 = vpop.f32.mrf.mxu0
  %365 = vmatprep.mubr.f32.mxu0 %v63
  %366 = vmatmul.mubr.f32.gmra.mxu0 %v62
  %v367 = vpop.f32.mrf.mxu0
  %v368 = vadd.f32 %v179, %v367
  %v369 = vpop.f32.mrf.mxu0
  %370 = vmatprep.mubr.f32.mxu0 %v65
  %371 = vmatmul.mubr.f32.gmra.mxu0 %v64
  %v372 = vpop.f32.mrf.mxu0
  %v373 = vadd.f32 %v179, %v372
  %v374 = vpop.f32.mrf.mxu0
  %375 = vmatprep.mubr.f32.mxu0 %v67
  %376 = vmatmul.mubr.f32.gmra.mxu0 %v66
  %v377 = vpop.f32.mrf.mxu0
  %v378 = vadd.f32 %v179, %v377
  %v379 = vpop.f32.mrf.mxu0
  %380 = vmatprep.mubr.f32.mxu0 %v69
  %381 = vmatmul.mubr.f32.gmra.mxu0 %v68
  %v382 = vpop.f32.mrf.mxu0
  %v383 = vadd.f32 %v179, %v382
  %v384 = vpop.f32.mrf.mxu0
  %385 = vmatprep.mubr.f32.mxu0 %v71
  %386 = vmatmul.mubr.f32.gmra.mxu0 %v70
  %v387 = vpop.f32.mrf.mxu0
  %v388 = vadd.f32 %v179, %v387
  %v389 = vpop.f32.mrf.mxu0
  %390 = vmatprep.mubr.f32.mxu0 %v73
  %391 = vmatmul.mubr.f32.gmra.mxu0 %v72
  %v392 = vpop.f32.mrf.mxu0
  %v393 = vadd.f32 %v179, %v392
  %v394 = vpop.f32.mrf.mxu0
  %395 = vmatprep.mubr.f32.mxu0 %v75
  %396 = vmatmul.mubr.f32.gmra.mxu0 %v74
  %v397 = vpop.f32.mrf.mxu0
  %v398 = vadd.f32 %v179, %v397
  %v399 = vpop.f32.mrf.mxu0
  %400 = vmatprep.mubr.f32.mxu0 %v77
  %401 = vmatmul.mubr.f32.gmra.mxu0 %v76
  %v402 = vpop.f32.mrf.mxu0
  %v403 = vadd.f32 %v179, %v402
  %v404 = vpop.f32.mrf.mxu0
  %405 = vmatprep.mubr.f32.mxu0 %v79
  %406 = vmatmul.mubr.f32.gmra.mxu0 %v78
  %v407 = vpop.f32.mrf.mxu0
  %v408 = vadd.f32 %v179, %v407
  %v409 = vpop.f32.mrf.mxu0
  %410 = vmatprep.mubr.f32.mxu0 %v81
  %411 = vmatmul.mubr.f32.gmra.mxu0 %v80
  %v412 = vpop.f32.mrf.mxu0
  %v413 = vadd.f32 %v179, %v412
  %v414 = vpop.f32.mrf.mxu0
  %415 = vmatprep.mubr.f32.mxu0 %v83
  %416 = vmatmul.mubr.f32.gmra.mxu0 %v82
  %v417 = vpop.f32.mrf.mxu0
  %v418 = vadd.f32 %v179, %v417
  %v419 = vpop.f32.mrf.mxu0
  %420 = vmatprep.mubr.f32.mxu0 %v85
  %421 = vmatmul.mubr.f32.gmra.mxu0 %v84
  %v422 = vpop.f32.mrf.mxu0
  %v423 = vadd.f32 %v179, %v422
  %v424 = vpop.f32.mrf.mxu0
  %425 = vmatprep.mubr.f32.mxu0 %v87
  %426 = vmatmul.mubr.f32.gmra.mxu0 %v86
  %v427 = vpop.f32.mrf.mxu0
  %v428 = vadd.f32 %v179, %v427
  %v429 = vpop.f32.mrf.mxu0
  %430 = vmatprep.mubr.f32.mxu0 %v89
  %431 = vmatmul.mubr.f32.gmra.mxu0 %v88
  %v432 = vpop.f32.mrf.mxu0
  %v433 = vadd.f32 %v179, %v432
  %v434 = vpop.f32.mrf.mxu0
  %435 = vmatprep.mubr.f32.mxu0 %v91
  %436 = vmatmul.mubr.f32.gmra.mxu0 %v90
  %v437 = vpop.f32.mrf.mxu0
  %v438 = vadd.f32 %v179, %v437
  %v439 = vpop.f32.mrf.mxu0
  %440 = vmatprep.mubr.f32.mxu0 %v93
  %441 = vmatmul.mubr.f32.gmra.mxu0 %v92
  %v442 = vpop.f32.mrf.mxu0
  %v443 = vadd.f32 %v179, %v442
  %v444 = vpop.f32.mrf.mxu0
  %445 = vmatprep.mubr.f32.mxu0 %v95
  %446 = vmatmul.mubr.f32.gmra.mxu0 %v94
  %v447 = vpop.f32.mrf.mxu0
  %v448 = vadd.f32 %v179, %v447
  %v449 = vpop.f32.mrf.mxu0
  %450 = vmatprep.mubr.f32.mxu0 %v97
  %451 = vmatmul.mubr.f32.gmra.mxu0 %v96
  %v452 = vpop.f32.mrf.mxu0
  %v453 = vadd.f32 %v179, %v452
  %v454 = vpop.f32.mrf.mxu0
  %455 = vmatprep.mubr.f32.mxu0 %v99
  %456 = vmatmul.mubr.f32.gmra.mxu0 %v98
  %v457 = vpop.f32.mrf.mxu0
  %v458 = vadd.f32 %v179, %v457
  %v459 = vpop.f32.mrf.mxu0
  %460 = vmatprep.mubr.f32.mxu0 %v101
  %461 = vmatmul.mubr.f32.gmra.mxu0 %v100
  %v462 = vpop.f32.mrf.mxu0
  %v463 = vadd.f32 %v179, %v462
  %v464 = vpop.f32.mrf.mxu0
  %465 = vmatprep.mubr.f32.mxu0 %v103
  %466 = vmatmul.mubr.f32.gmra.mxu0 %v102
  %v467 = vpop.f32.mrf.mxu0
  %v468 = vadd.f32 %v179, %v467
  %v469 = vpop.f32.mrf.mxu0
  %470 = vmatprep.mubr.f32.mxu0 %v105
  %471 = vmatmul.mubr.f32.gmra.mxu0 %v104
  %v472 = vpop.f32.mrf.mxu0
  %v473 = vadd.f32 %v179, %v472
  %v474 = vpop.f32.mrf.mxu0
  %475 = vmatprep.mubr.f32.mxu0 %v107
  %476 = vmatmul.mubr.f32.gmra.mxu0 %v106
  %v477 = vpop.f32.mrf.mxu0
  %v478 = vadd.f32 %v179, %v477
  %v479 = vpop.f32.mrf.mxu0
  %480 = vmatprep.mubr.f32.mxu0 %v109
  %481 = vmatmul.mubr.f32.gmra.mxu0 %v108
  %v482 = vpop.f32.mrf.mxu0
  %v483 = vadd.f32 %v179, %v482
  %v484 = vpop.f32.mrf.mxu0
  %485 = vmatprep.mubr.f32.mxu0 %v111
  %486 = vmatmul.mubr.f32.gmra.mxu0 %v110
  %v487 = vpop.f32.mrf.mxu0
  %v488 = vadd.f32 %v179, %v487
  %v489 = vpop.f32.mrf.mxu0
  %490 = vmatprep.mubr.f32.mxu0 %v113
  %491 = vmatmul.mubr.f32.gmra.mxu0 %v112
  %v492 = vpop.f32.mrf.mxu0
  %v493 = vadd.f32 %v179, %v492
  %v494 = vpop.f32.mrf.mxu0
  %495 = vmatprep.mubr.f32.mxu0 %v115
  %496 = vmatmul.mubr.f32.gmra.mxu0 %v114
  %v497 = vpop.f32.mrf.mxu0
  %v498 = vadd.f32 %v179, %v497
  %v499 = vpop.f32.mrf.mxu0
  %500 = vmatprep.mubr.f32.mxu0 %v117
  %501 = vmatmul.mubr.f32.gmra.mxu0 %v116
  %v502 = vpop.f32.mrf.mxu0
  %v503 = vadd.f32 %v179, %v502
  %v504 = vpop.f32.mrf.mxu0
  %505 = vmatprep.mubr.f32.mxu0 %v119
  %506 = vmatmul.mubr.f32.gmra.mxu0 %v118
  %v507 = vpop.f32.mrf.mxu0
  %v508 = vadd.f32 %v179, %v507
  %v509 = vpop.f32.mrf.mxu0
  %510 = vmatprep.mubr.f32.mxu0 %v121
  %511 = vmatmul.mubr.f32.gmra.mxu0 %v120
  %v512 = vpop.f32.mrf.mxu0
  %v513 = vadd.f32 %v179, %v512
  %v514 = vpop.f32.mrf.mxu0
  %515 = vmatprep.mubr.f32.mxu0 %v123
  %516 = vmatmul.mubr.f32.gmra.mxu0 %v122
  %v517 = vpop.f32.mrf.mxu0
  %v518 = vadd.f32 %v179, %v517
  %v519 = vpop.f32.mrf.mxu0
  %520 = vmatprep.mubr.f32.mxu0 %v125
  %521 = vmatmul.mubr.f32.gmra.mxu0 %v124
  %v522 = vpop.f32.mrf.mxu0
  %v523 = vadd.f32 %v179, %v522
  %v524 = vpop.f32.mrf.mxu0
  %525 = vmatprep.mubr.f32.mxu0 %v127
  %526 = vmatmul.mubr.f32.gmra.mxu0 %v126
  %v527 = vpop.f32.mrf.mxu0
  %v528 = vadd.f32 %v179, %v527
  %v529 = vpop.f32.mrf.mxu0
  %530 = vmatprep.mubr.f32.mxu0 %v129
  %531 = vmatmul.mubr.f32.gmra.mxu0 %v128
  %v532 = vpop.f32.mrf.mxu0
  %v533 = vadd.f32 %v179, %v532
  %v534 = vpop.f32.mrf.mxu0
  %535 = vmatprep.mubr.f32.mxu0 %v131
  %536 = vmatmul.mubr.f32.gmra.mxu0 %v130
  %v537 = vpop.f32.mrf.mxu0
  %v538 = vadd.f32 %v179, %v537
  %v539 = vpop.f32.mrf.mxu0
  %540 = vmatprep.mubr.f32.mxu0 %v133
  %541 = vmatmul.mubr.f32.gmra.mxu0 %v132
  %v542 = vpop.f32.mrf.mxu0
  %v543 = vadd.f32 %v179, %v542
  %v544 = vpop.f32.mrf.mxu0
  %545 = vmatprep.mubr.f32.mxu0 %v135
  %546 = vmatmul.mubr.f32.gmra.mxu0 %v134
  %v547 = vpop.f32.mrf.mxu0
  %v548 = vadd.f32 %v179, %v547
  %v549 = vpop.f32.mrf.mxu0
  %550 = vmatprep.mubr.f32.mxu0 %v137
  %551 = vmatmul.mubr.f32.gmra.mxu0 %v136
  %v552 = vpop.f32.mrf.mxu0
  %v553 = vadd.f32 %v179, %v552
  %v554 = vpop.f32.mrf.mxu0
  %555 = vmatprep.mubr.f32.mxu0 %v139
  %556 = vmatmul.mubr.f32.gmra.mxu0 %v138
  %v557 = vpop.f32.mrf.mxu0
  %v558 = vadd.f32 %v179, %v557
  %v559 = vpop.f32.mrf.mxu0
  %560 = vmatprep.mubr.f32.mxu0 %v141
  %561 = vmatmul.mubr.f32.gmra.mxu0 %v140
  %v562 = vpop.f32.mrf.mxu0
  %v563 = vadd.f32 %v179, %v562
  %v564 = vpop.f32.mrf.mxu0
  %565 = vdwg.mxu0
  %v566 = vmax.f32 %v248, 0.0
  %v567 = vmax.f32 %v253, 0.0
  %v568 = vmax.f32 %v258, 0.0
  %v569 = vmax.f32 %v263, 0.0
  %v570 = vmax.f32 %v268, 0.0
  %v571 = vmax.f32 %v273, 0.0
  %v572 = vmax.f32 %v278, 0.0
  %v573 = vmax.f32 %v283, 0.0
  %v574 = vmax.f32 %v288, 0.0
  %v575 = vmax.f32 %v293, 0.0
  %v576 = vmax.f32 %v298, 0.0
  %v577 = vmax.f32 %v303, 0.0
  %v578 = vmax.f32 %v308, 0.0
  %v579 = vmax.f32 %v313, 0.0
  %v580 = vmax.f32 %v318, 0.0
  %v581 = vmax.f32 %v323, 0.0
  %v582 = vmax.f32 %v328, 0.0
  %v583 = vmax.f32 %v333, 0.0
  %v584 = vmax.f32 %v338, 0.0
  %v585 = vmax.f32 %v343, 0.0
  %v586 = vmax.f32 %v348, 0.0
  %v587 = vmax.f32 %v353, 0.0
  %v588 = vmax.f32 %v358, 0.0
  %v589 = vmax.f32 %v363, 0.0
  %v590 = vmax.f32 %v368, 0.0
  %v591 = vmax.f32 %v373, 0.0
  %v592 = vmax.f32 %v378, 0.0
  %v593 = vmax.f32 %v383, 0.0
  %v594 = vmax.f32 %v388, 0.0
  %v595 = vmax.f32 %v393, 0.0
  %v596 = vmax.f32 %v398, 0.0
  %v597 = vmax.f32 %v403, 0.0
  %v598 = vmax.f32 %v408, 0.0
  %v599 = vmax.f32 %v413, 0.0
  %v600 = vmax.f32 %v418, 0.0
  %v601 = vmax.f32 %v423, 0.0
  %v602 = vmax.f32 %v428, 0.0
  %v603 = vmax.f32 %v433, 0.0
  %v604 = vmax.f32 %v438, 0.0
  %v605 = vmax.f32 %v443, 0.0
  %v606 = vmax.f32 %v448, 0.0
  %v607 = vmax.f32 %v453, 0.0
  %v608 = vmax.f32 %v458, 0.0
  %v609 = vmax.f32 %v463, 0.0
  %v610 = vmax.f32 %v468, 0.0
  %v611 = vmax.f32 %v473, 0.0
  %v612 = vmax.f32 %v478, 0.0
  %v613 = vmax.f32 %v483, 0.0
  %v614 = vmax.f32 %v488, 0.0
  %v615 = vmax.f32 %v493, 0.0
  %v616 = vmax.f32 %v498, 0.0
  %v617 = vmax.f32 %v503, 0.0
  %v618 = vmax.f32 %v508, 0.0
  %v619 = vmax.f32 %v513, 0.0
  %v620 = vmax.f32 %v518, 0.0
  %v621 = vmax.f32 %v523, 0.0
  %v622 = vmax.f32 %v528, 0.0
  %v623 = vmax.f32 %v533, 0.0
  %v624 = vmax.f32 %v538, 0.0
  %v625 = vmax.f32 %v543, 0.0
  %v626 = vmax.f32 %v548, 0.0
  %v627 = vmax.f32 %v553, 0.0
  %v628 = vmax.f32 %v558, 0.0
  %v629 = vmax.f32 %v563, 0.0
  %630 = vst [vmem:[%s3] sm:$0xff] %v566
  %631 = vst [vmem:[%s3 + $0x8] sm:$0xff] %v567
  %632 = vst [vmem:[%s3 + $0x10] sm:$0xff] %v568
  %633 = vst [vmem:[%s3 + $0x18] sm:$0xff] %v569
  %634 = vst [vmem:[%s3 + $0x20] sm:$0xff] %v570
  %635 = vst [vmem:[%s3 + $0x28] sm:$0xff] %v571
  %636 = vst [vmem:[%s3 + $0x30] sm:$0xff] %v572
  %637 = vst [vmem:[%s3 + $0x38] sm:$0xff] %v573
  %638 = vst [vmem:[%s3 + $0x40] sm:$0xff] %v574
  %639 = vst [vmem:[%s3 + $0x48] sm:$0xff] %v575
  %640 = vst [vmem:[%s3 + $0x50] sm:$0xff] %v576
  %641 = vst [vmem:[%s3 + $0x58] sm:$0xff] %v577
  %642 = vst [vmem:[%s3 + $0x60] sm:$0xff] %v578
  %643 = vst [vmem:[%s3 + $0x68] sm:$0xff] %v579
  %644 = vst [vmem:[%s3 + $0x70] sm:$0xff] %v580
  %645 = vst [vmem:[%s3 + $0x78] sm:$0xff] %v581
  %646 = vst [vmem:[%s3 + $0x80] sm:$0xff] %v582
  %647 = vst [vmem:[%s3 + $0x88] sm:$0xff] %v583
  %648 = vst [vmem:[%s3 + $0x90] sm:$0xff] %v584
  %649 = vst [vmem:[%s3 + $0x98] sm:$0xff] %v585
  %650 = vst [vmem:[%s3 + $0xa0] sm:$0xff] %v586
  %651 = vst [vmem:[%s3 + $0xa8] sm:$0xff] %v587
  %652 = vst [vmem:[%s3 + $0xb0] sm:$0xff] %v588
  %653 = vst [vmem:[%s3 + $0xb8] sm:$0xff] %v589
  %654 = vst [vmem:[%s3 + $0xc0] sm:$0xff] %v590
  %655 = vst [vmem:[%s3 + $0xc8] sm:$0xff] %v591
  %656 = vst [vmem:[%s3 + $0xd0] sm:$0xff] %v592
  %657 = vst [vmem:[%s3 + $0xd8] sm:$0xff] %v593
  %658 = vst [vmem:[%s3 + $0xe0] sm:$0xff] %v594
  %659 = vst [vmem:[%s3 + $0xe8] sm:$0xff] %v595
  %660 = vst [vmem:[%s3 + $0xf0] sm:$0xff] %v596
  %661 = vst [vmem:[%s3 + $0xf8] sm:$0xff] %v597
  %662 = vst [vmem:[%s3 + $0x100] sm:$0xff] %v598
  %663 = vst [vmem:[%s3 + $0x108] sm:$0xff] %v599
  %664 = vst [vmem:[%s3 + $0x110] sm:$0xff] %v600
  %665 = vst [vmem:[%s3 + $0x118] sm:$0xff] %v601
  %666 = vst [vmem:[%s3 + $0x120] sm:$0xff] %v602
  %667 = vst [vmem:[%s3 + $0x128] sm:$0xff] %v603
  %668 = vst [vmem:[%s3 + $0x130] sm:$0xff] %v604
  %669 = vst [vmem:[%s3 + $0x138] sm:$0xff] %v605
  %670 = vst [vmem:[%s3 + $0x140] sm:$0xff] %v606
  %671 = vst [vmem:[%s3 + $0x148] sm:$0xff] %v607
  %672 = vst [vmem:[%s3 + $0x150] sm:$0xff] %v608
  %673 = vst [vmem:[%s3 + $0x158] sm:$0xff] %v609
  %674 = vst [vmem:[%s3 + $0x160] sm:$0xff] %v610
  %675 = vst [vmem:[%s3 + $0x168] sm:$0xff] %v611
  %676 = vst [vmem:[%s3 + $0x170] sm:$0xff] %v612
  %677 = vst [vmem:[%s3 + $0x178] sm:$0xff] %v613
  %678 = vst [vmem:[%s3 + $0x180] sm:$0xff] %v614
  %679 = vst [vmem:[%s3 + $0x188] sm:$0xff] %v615
  %680 = vst [vmem:[%s3 + $0x190] sm:$0xff] %v616
  %681 = vst [vmem:[%s3 + $0x198] sm:$0xff] %v617
  %682 = vst [vmem:[%s3 + $0x1a0] sm:$0xff] %v618
  %683 = vst [vmem:[%s3 + $0x1a8] sm:$0xff] %v619
  %684 = vst [vmem:[%s3 + $0x1b0] sm:$0xff] %v620
  %685 = vst [vmem:[%s3 + $0x1b8] sm:$0xff] %v621
  %686 = vst [vmem:[%s3 + $0x1c0] sm:$0xff] %v622
  %687 = vst [vmem:[%s3 + $0x1c8] sm:$0xff] %v623
  %688 = vst [vmem:[%s3 + $0x1d0] sm:$0xff] %v624
  %689 = vst [vmem:[%s3 + $0x1d8] sm:$0xff] %v625
  %690 = vst [vmem:[%s3 + $0x1e0] sm:$0xff] %v626
  %691 = vst [vmem:[%s3 + $0x1e8] sm:$0xff] %v627
  %692 = vst [vmem:[%s3 + $0x1f0] sm:$0xff] %v628
  %693 = vst [vmem:[%s3 + $0x1f8] sm:$0xff] %v629
  // Predicated region
  $region14: #{_forward_impl.54} parent=0 // pred_check
    _
  $region15: #{_forward_impl.54} parent=0 // pred_check_branch
    %695 = sbr.rel (0) target = $region17
  $region16: #{_forward_impl.54} parent=0 // pred_region
    _
  $region17: #{_forward_impl.54} parent=0 // pred_fallthru
    _
  // Predicated region
  $region18: #{_forward_impl.54} parent=0 // pred_check
    _
  $region19: #{_forward_impl.54} parent=0 // pred_check_branch
    %697 = sbr.rel (0) target = $region21
  $region20: #{_forward_impl.54} parent=0 // pred_region
    _
  $region21: #{_forward_impl.54} parent=0 // pred_fallthru
    _

// kernel: _forward_impl.55
$region0: #{_forward_impl.55}
  #allocation0 [shape = 'u32[]', space=smem, size = 0x4, offset = 0x4, fixed_abs, tag = 'smem constant byte address 0x4 - core index']
  #allocation1 [shape = 'u32[144,128]{1,0:T(1,128)}', space=vmem, size = 0x12000, scoped, tag = 'internal scratch']
  %s0 = inlined_call_operand.vmem [shape: f32[9,128,128], index: 0, kind: input, shape index: {}]
  %s1 = inlined_call_operand.vmem [shape: f32[128,128], index: 1, kind: output, shape index: {}]
  %s2 = sld [smem:[#allocation0]]
  $region14: #{_forward_impl.55} parent=0
    _
  %s4 = ssub.s32 1, %s2
  %s5 = scalar_select 0, %s4, %s2
  // Predicated region
  $region2: #{_forward_impl.55} parent=0 // pred_check
    _
  $region3: #{_forward_impl.55} parent=0 // pred_check_branch
    %7 = sbr.rel (0) target = $region5
  $region4: #{_forward_impl.55} parent=0 // pred_region
    _
  $region5: #{_forward_impl.55} parent=0 // pred_fallthru
    _
  %v8 = vld [vmem:[%s0] sm:$0xff]
  %v9 = vld [vmem:[%s0 + $0x8] sm:$0xff]
  %v10 = vld [vmem:[%s0 + $0x10] sm:$0xff]
  %v11 = vld [vmem:[%s0 + $0x18] sm:$0xff]
  %v12 = vld [vmem:[%s0 + $0x20] sm:$0xff]
  %v13 = vld [vmem:[%s0 + $0x28] sm:$0xff]
  %v14 = vld [vmem:[%s0 + $0x30] sm:$0xff]
  %v15 = vld [vmem:[%s0 + $0x38] sm:$0xff]
  %v16 = vld [vmem:[%s0 + $0x40] sm:$0xff]
  %v17 = vld [vmem:[%s0 + $0x48] sm:$0xff]
  %v18 = vld [vmem:[%s0 + $0x50] sm:$0xff]
  %v19 = vld [vmem:[%s0 + $0x58] sm:$0xff]
  %v20 = vld [vmem:[%s0 + $0x60] sm:$0xff]
  %v21 = vld [vmem:[%s0 + $0x68] sm:$0xff]
  %v22 = vld [vmem:[%s0 + $0x70] sm:$0xff]
  %v23 = vld [vmem:[%s0 + $0x78] sm:$0xff]
  %s24 = scalar_lea.vmem %s0, 128
  %v25 = vld [vmem:[%s24] sm:$0xff]
  %v26 = vld [vmem:[%s24 + $0x8] sm:$0xff]
  %v27 = vld [vmem:[%s24 + $0x10] sm:$0xff]
  %v28 = vld [vmem:[%s24 + $0x18] sm:$0xff]
  %v29 = vld [vmem:[%s24 + $0x20] sm:$0xff]
  %v30 = vld [vmem:[%s24 + $0x28] sm:$0xff]
  %v31 = vld [vmem:[%s24 + $0x30] sm:$0xff]
  %v32 = vld [vmem:[%s24 + $0x38] sm:$0xff]
  %v33 = vld [vmem:[%s24 + $0x40] sm:$0xff]
  %v34 = vld [vmem:[%s24 + $0x48] sm:$0xff]
  %v35 = vld [vmem:[%s24 + $0x50] sm:$0xff]
  %v36 = vld [vmem:[%s24 + $0x58] sm:$0xff]
  %v37 = vld [vmem:[%s24 + $0x60] sm:$0xff]
  %v38 = vld [vmem:[%s24 + $0x68] sm:$0xff]
  %v39 = vld [vmem:[%s24 + $0x70] sm:$0xff]
  %v40 = vld [vmem:[%s24 + $0x78] sm:$0xff]
  %v41 = vmax.f32 %v8, %v25
  %v42 = vmax.f32 %v9, %v26
  %v43 = vmax.f32 %v10, %v27
  %v44 = vmax.f32 %v11, %v28
  %v45 = vmax.f32 %v12, %v29
  %v46 = vmax.f32 %v13, %v30
  %v47 = vmax.f32 %v14, %v31
  %v48 = vmax.f32 %v15, %v32
  %v49 = vmax.f32 %v16, %v33
  %v50 = vmax.f32 %v17, %v34
  %v51 = vmax.f32 %v18, %v35
  %v52 = vmax.f32 %v19, %v36
  %v53 = vmax.f32 %v20, %v37
  %v54 = vmax.f32 %v21, %v38
  %v55 = vmax.f32 %v22, %v39
  %v56 = vmax.f32 %v23, %v40
  %s57 = scalar_lea.vmem %s0, 256
  %v58 = vld [vmem:[%s57] sm:$0xff]
  %v59 = vld [vmem:[%s57 + $0x8] sm:$0xff]
  %v60 = vld [vmem:[%s57 + $0x10] sm:$0xff]
  %v61 = vld [vmem:[%s57 + $0x18] sm:$0xff]
  %v62 = vld [vmem:[%s57 + $0x20] sm:$0xff]
  %v63 = vld [vmem:[%s57 + $0x28] sm:$0xff]
  %v64 = vld [vmem:[%s57 + $0x30] sm:$0xff]
  %v65 = vld [vmem:[%s57 + $0x38] sm:$0xff]
  %v66 = vld [vmem:[%s57 + $0x40] sm:$0xff]
  %v67 = vld [vmem:[%s57 + $0x48] sm:$0xff]
  %v68 = vld [vmem:[%s57 + $0x50] sm:$0xff]
  %v69 = vld [vmem:[%s57 + $0x58] sm:$0xff]
  %v70 = vld [vmem:[%s57 + $0x60] sm:$0xff]
  %v71 = vld [vmem:[%s57 + $0x68] sm:$0xff]
  %v72 = vld [vmem:[%s57 + $0x70] sm:$0xff]
  %v73 = vld [vmem:[%s57 + $0x78] sm:$0xff]
  %v74 = vmax.f32 %v41, %v58
  %v75 = vmax.f32 %v42, %v59
  %v76 = vmax.f32 %v43, %v60
  %v77 = vmax.f32 %v44, %v61
  %v78 = vmax.f32 %v45, %v62
  %v79 = vmax.f32 %v46, %v63
  %v80 = vmax.f32 %v47, %v64
  %v81 = vmax.f32 %v48, %v65
  %v82 = vmax.f32 %v49, %v66
  %v83 = vmax.f32 %v50, %v67
  %v84 = vmax.f32 %v51, %v68
  %v85 = vmax.f32 %v52, %v69
  %v86 = vmax.f32 %v53, %v70
  %v87 = vmax.f32 %v54, %v71
  %v88 = vmax.f32 %v55, %v72
  %v89 = vmax.f32 %v56, %v73
  %s90 = scalar_lea.vmem %s0, 384
  %v91 = vld [vmem:[%s90] sm:$0xff]
  %v92 = vld [vmem:[%s90 + $0x8] sm:$0xff]
  %v93 = vld [vmem:[%s90 + $0x10] sm:$0xff]
  %v94 = vld [vmem:[%s90 + $0x18] sm:$0xff]
  %v95 = vld [vmem:[%s90 + $0x20] sm:$0xff]
  %v96 = vld [vmem:[%s90 + $0x28] sm:$0xff]
  %v97 = vld [vmem:[%s90 + $0x30] sm:$0xff]
  %v98 = vld [vmem:[%s90 + $0x38] sm:$0xff]
  %v99 = vld [vmem:[%s90 + $0x40] sm:$0xff]
  %v100 = vld [vmem:[%s90 + $0x48] sm:$0xff]
  %v101 = vld [vmem:[%s90 + $0x50] sm:$0xff]
  %v102 = vld [vmem:[%s90 + $0x58] sm:$0xff]
  %v103 = vld [vmem:[%s90 + $0x60] sm:$0xff]
  %v104 = vld [vmem:[%s90 + $0x68] sm:$0xff]
  %v105 = vld [vmem:[%s90 + $0x70] sm:$0xff]
  %v106 = vld [vmem:[%s90 + $0x78] sm:$0xff]
  %v107 = vmax.f32 %v74, %v91
  %v108 = vmax.f32 %v75, %v92
  %v109 = vmax.f32 %v76, %v93
  %v110 = vmax.f32 %v77, %v94
  %v111 = vmax.f32 %v78, %v95
  %v112 = vmax.f32 %v79, %v96
  %v113 = vmax.f32 %v80, %v97
  %v114 = vmax.f32 %v81, %v98
  %v115 = vmax.f32 %v82, %v99
  %v116 = vmax.f32 %v83, %v100
  %v117 = vmax.f32 %v84, %v101
  %v118 = vmax.f32 %v85, %v102
  %v119 = vmax.f32 %v86, %v103
  %v120 = vmax.f32 %v87, %v104
  %v121 = vmax.f32 %v88, %v105
  %v122 = vmax.f32 %v89, %v106
  %s123 = scalar_lea.vmem %s0, 512
  %v124 = vld [vmem:[%s123] sm:$0xff]
  %v125 = vld [vmem:[%s123 + $0x8] sm:$0xff]
  %v126 = vld [vmem:[%s123 + $0x10] sm:$0xff]
  %v127 = vld [vmem:[%s123 + $0x18] sm:$0xff]
  %v128 = vld [vmem:[%s123 + $0x20] sm:$0xff]
  %v129 = vld [vmem:[%s123 + $0x28] sm:$0xff]
  %v130 = vld [vmem:[%s123 + $0x30] sm:$0xff]
  %v131 = vld [vmem:[%s123 + $0x38] sm:$0xff]
  %v132 = vld [vmem:[%s123 + $0x40] sm:$0xff]
  %v133 = vld [vmem:[%s123 + $0x48] sm:$0xff]
  %v134 = vld [vmem:[%s123 + $0x50] sm:$0xff]
  %v135 = vld [vmem:[%s123 + $0x58] sm:$0xff]
  %v136 = vld [vmem:[%s123 + $0x60] sm:$0xff]
  %v137 = vld [vmem:[%s123 + $0x68] sm:$0xff]
  %v138 = vld [vmem:[%s123 + $0x70] sm:$0xff]
  %v139 = vld [vmem:[%s123 + $0x78] sm:$0xff]
  %v140 = vmax.f32 %v107, %v124
  %v141 = vmax.f32 %v108, %v125
  %v142 = vmax.f32 %v109, %v126
  %v143 = vmax.f32 %v110, %v127
  %v144 = vmax.f32 %v111, %v128
  %v145 = vmax.f32 %v112, %v129
  %v146 = vmax.f32 %v113, %v130
  %v147 = vmax.f32 %v114, %v131
  %v148 = vmax.f32 %v115, %v132
  %v149 = vmax.f32 %v116, %v133
  %v150 = vmax.f32 %v117, %v134
  %v151 = vmax.f32 %v118, %v135
  %v152 = vmax.f32 %v119, %v136
  %v153 = vmax.f32 %v120, %v137
  %v154 = vmax.f32 %v121, %v138
  %v155 = vmax.f32 %v122, %v139
  %s156 = scalar_lea.vmem %s0, 640
  %v157 = vld [vmem:[%s156] sm:$0xff]
  %v158 = vld [vmem:[%s156 + $0x8] sm:$0xff]
  %v159 = vld [vmem:[%s156 + $0x10] sm:$0xff]
  %v160 = vld [vmem:[%s156 + $0x18] sm:$0xff]
  %v161 = vld [vmem:[%s156 + $0x20] sm:$0xff]
  %v162 = vld [vmem:[%s156 + $0x28] sm:$0xff]
  %v163 = vld [vmem:[%s156 + $0x30] sm:$0xff]
  %v164 = vld [vmem:[%s156 + $0x38] sm:$0xff]
  %v165 = vld [vmem:[%s156 + $0x40] sm:$0xff]
  %v166 = vld [vmem:[%s156 + $0x48] sm:$0xff]
  %v167 = vld [vmem:[%s156 + $0x50] sm:$0xff]
  %v168 = vld [vmem:[%s156 + $0x58] sm:$0xff]
  %v169 = vld [vmem:[%s156 + $0x60] sm:$0xff]
  %v170 = vld [vmem:[%s156 + $0x68] sm:$0xff]
  %v171 = vld [vmem:[%s156 + $0x70] sm:$0xff]
  %v172 = vld [vmem:[%s156 + $0x78] sm:$0xff]
  %v173 = vmax.f32 %v140, %v157
  %v174 = vmax.f32 %v141, %v158
  %v175 = vmax.f32 %v142, %v159
  %v176 = vmax.f32 %v143, %v160
  %v177 = vmax.f32 %v144, %v161
  %v178 = vmax.f32 %v145, %v162
  %v179 = vmax.f32 %v146, %v163
  %v180 = vmax.f32 %v147, %v164
  %v181 = vmax.f32 %v148, %v165
  %v182 = vmax.f32 %v149, %v166
  %v183 = vmax.f32 %v150, %v167
  %v184 = vmax.f32 %v151, %v168
  %v185 = vmax.f32 %v152, %v169
  %v186 = vmax.f32 %v153, %v170
  %v187 = vmax.f32 %v154, %v171
  %v188 = vmax.f32 %v155, %v172
  %s189 = scalar_lea.vmem %s0, 768
  %v190 = vld [vmem:[%s189] sm:$0xff]
  %v191 = vld [vmem:[%s189 + $0x8] sm:$0xff]
  %v192 = vld [vmem:[%s189 + $0x10] sm:$0xff]
  %v193 = vld [vmem:[%s189 + $0x18] sm:$0xff]
  %v194 = vld [vmem:[%s189 + $0x20] sm:$0xff]
  %v195 = vld [vmem:[%s189 + $0x28] sm:$0xff]
  %v196 = vld [vmem:[%s189 + $0x30] sm:$0xff]
  %v197 = vld [vmem:[%s189 + $0x38] sm:$0xff]
  %v198 = vld [vmem:[%s189 + $0x40] sm:$0xff]
  %v199 = vld [vmem:[%s189 + $0x48] sm:$0xff]
  %v200 = vld [vmem:[%s189 + $0x50] sm:$0xff]
  %v201 = vld [vmem:[%s189 + $0x58] sm:$0xff]
  %v202 = vld [vmem:[%s189 + $0x60] sm:$0xff]
  %v203 = vld [vmem:[%s189 + $0x68] sm:$0xff]
  %v204 = vld [vmem:[%s189 + $0x70] sm:$0xff]
  %v205 = vld [vmem:[%s189 + $0x78] sm:$0xff]
  %v206 = vmax.f32 %v173, %v190
  %v207 = vmax.f32 %v174, %v191
  %v208 = vmax.f32 %v175, %v192
  %v209 = vmax.f32 %v176, %v193
  %v210 = vmax.f32 %v177, %v194
  %v211 = vmax.f32 %v178, %v195
  %v212 = vmax.f32 %v179, %v196
  %v213 = vmax.f32 %v180, %v197
  %v214 = vmax.f32 %v181, %v198
  %v215 = vmax.f32 %v182, %v199
  %v216 = vmax.f32 %v183, %v200
  %v217 = vmax.f32 %v184, %v201
  %v218 = vmax.f32 %v185, %v202
  %v219 = vmax.f32 %v186, %v203
  %v220 = vmax.f32 %v187, %v204
  %v221 = vmax.f32 %v188, %v205
  %s222 = scalar_lea.vmem %s0, 896
  %v223 = vld [vmem:[%s222] sm:$0xff]
  %v224 = vld [vmem:[%s222 + $0x8] sm:$0xff]
  %v225 = vld [vmem:[%s222 + $0x10] sm:$0xff]
  %v226 = vld [vmem:[%s222 + $0x18] sm:$0xff]
  %v227 = vld [vmem:[%s222 + $0x20] sm:$0xff]
  %v228 = vld [vmem:[%s222 + $0x28] sm:$0xff]
  %v229 = vld [vmem:[%s222 + $0x30] sm:$0xff]
  %v230 = vld [vmem:[%s222 + $0x38] sm:$0xff]
  %v231 = vld [vmem:[%s222 + $0x40] sm:$0xff]
  %v232 = vld [vmem:[%s222 + $0x48] sm:$0xff]
  %v233 = vld [vmem:[%s222 + $0x50] sm:$0xff]
  %v234 = vld [vmem:[%s222 + $0x58] sm:$0xff]
  %v235 = vld [vmem:[%s222 + $0x60] sm:$0xff]
  %v236 = vld [vmem:[%s222 + $0x68] sm:$0xff]
  %v237 = vld [vmem:[%s222 + $0x70] sm:$0xff]
  %v238 = vld [vmem:[%s222 + $0x78] sm:$0xff]
  %v239 = vmax.f32 %v206, %v223
  %v240 = vmax.f32 %v207, %v224
  %v241 = vmax.f32 %v208, %v225
  %v242 = vmax.f32 %v209, %v226
  %v243 = vmax.f32 %v210, %v227
  %v244 = vmax.f32 %v211, %v228
  %v245 = vmax.f32 %v212, %v229
  %v246 = vmax.f32 %v213, %v230
  %v247 = vmax.f32 %v214, %v231
  %v248 = vmax.f32 %v215, %v232
  %v249 = vmax.f32 %v216, %v233
  %v250 = vmax.f32 %v217, %v234
  %v251 = vmax.f32 %v218, %v235
  %v252 = vmax.f32 %v219, %v236
  %v253 = vmax.f32 %v220, %v237
  %v254 = vmax.f32 %v221, %v238
  %s255 = scalar_lea.vmem %s0, 1024
  %v256 = vld [vmem:[%s255] sm:$0xff]
  %v257 = vld [vmem:[%s255 + $0x8] sm:$0xff]
  %v258 = vld [vmem:[%s255 + $0x10] sm:$0xff]
  %v259 = vld [vmem:[%s255 + $0x18] sm:$0xff]
  %v260 = vld [vmem:[%s255 + $0x20] sm:$0xff]
  %v261 = vld [vmem:[%s255 + $0x28] sm:$0xff]
  %v262 = vld [vmem:[%s255 + $0x30] sm:$0xff]
  %v263 = vld [vmem:[%s255 + $0x38] sm:$0xff]
  %v264 = vld [vmem:[%s255 + $0x40] sm:$0xff]
  %v265 = vld [vmem:[%s255 + $0x48] sm:$0xff]
  %v266 = vld [vmem:[%s255 + $0x50] sm:$0xff]
  %v267 = vld [vmem:[%s255 + $0x58] sm:$0xff]
  %v268 = vld [vmem:[%s255 + $0x60] sm:$0xff]
  %v269 = vld [vmem:[%s255 + $0x68] sm:$0xff]
  %v270 = vld [vmem:[%s255 + $0x70] sm:$0xff]
  %v271 = vld [vmem:[%s255 + $0x78] sm:$0xff]
  %v272 = vmax.f32 %v239, %v256
  %v273 = vmax.f32 %v240, %v257
  %v274 = vmax.f32 %v241, %v258
  %v275 = vmax.f32 %v242, %v259
  %v276 = vmax.f32 %v243, %v260
  %v277 = vmax.f32 %v244, %v261
  %v278 = vmax.f32 %v245, %v262
  %v279 = vmax.f32 %v246, %v263
  %v280 = vmax.f32 %v247, %v264
  %v281 = vmax.f32 %v248, %v265
  %v282 = vmax.f32 %v249, %v266
  %v283 = vmax.f32 %v250, %v267
  %v284 = vmax.f32 %v251, %v268
  %v285 = vmax.f32 %v252, %v269
  %v286 = vmax.f32 %v253, %v270
  %v287 = vmax.f32 %v254, %v271
  %288 = vst [vmem:[%s1] sm:$0xff] %v272
  %289 = vst [vmem:[%s1 + $0x8] sm:$0xff] %v273
  %290 = vst [vmem:[%s1 + $0x10] sm:$0xff] %v274
  %291 = vst [vmem:[%s1 + $0x18] sm:$0xff] %v275
  %292 = vst [vmem:[%s1 + $0x20] sm:$0xff] %v276
  %293 = vst [vmem:[%s1 + $0x28] sm:$0xff] %v277
  %294 = vst [vmem:[%s1 + $0x30] sm:$0xff] %v278
  %295 = vst [vmem:[%s1 + $0x38] sm:$0xff] %v279
  %296 = vst [vmem:[%s1 + $0x40] sm:$0xff] %v280
  %297 = vst [vmem:[%s1 + $0x48] sm:$0xff] %v281
  %298 = vst [vmem:[%s1 + $0x50] sm:$0xff] %v282
  %299 = vst [vmem:[%s1 + $0x58] sm:$0xff] %v283
  %300 = vst [vmem:[%s1 + $0x60] sm:$0xff] %v284
  %301 = vst [vmem:[%s1 + $0x68] sm:$0xff] %v285
  %302 = vst [vmem:[%s1 + $0x70] sm:$0xff] %v286
  %303 = vst [vmem:[%s1 + $0x78] sm:$0xff] %v287
  // Predicated region
  $region6: #{_forward_impl.55} parent=0 // pred_check
    _
  $region7: #{_forward_impl.55} parent=0 // pred_check_branch
    %305 = sbr.rel (0) target = $region9
  $region8: #{_forward_impl.55} parent=0 // pred_region
    _
  $region9: #{_forward_impl.55} parent=0 // pred_fallthru
    _
  // Predicated region
  $region10: #{_forward_impl.55} parent=0 // pred_check
    _
  $region11: #{_forward_impl.55} parent=0 // pred_check_branch
    %307 = sbr.rel (0) target = $region13
  $region12: #{_forward_impl.55} parent=0 // pred_region
    _
  $region13: #{_forward_impl.55} parent=0 // pred_fallthru
    _

// kernel: _forward_impl.56
$region0: #{_forward_impl.56}
  #allocation0 [shape = 'u32[]', space=smem, size = 0x4, offset = 0x4, fixed_abs, tag = 'smem constant byte address 0x4 - core index']
  #allocation1 [shape = 'u32[144,128]{1,0:T(1,128)}', space=vmem, size = 0x12000, scoped, tag = 'internal scratch']
  %s0 = inlined_call_operand.vmem [shape: f32[128,128], index: 0, kind: input, shape index: {}]
  %s1 = inlined_call_operand.vmem [shape: f32[128,128], index: 1, kind: input, shape index: {}]
  %s2 = inlined_call_operand.vmem [shape: f32[1,128], index: 2, kind: input, shape index: {}]
  %s3 = inlined_call_operand.vmem [shape: f32[128,128], index: 3, kind: output, shape index: {}]
  %s4 = sld [smem:[#allocation0]]
  $region22: #{_forward_impl.56} parent=0
    _
  %s6 = ssub.s32 1, %s4
  %s7 = scalar_select 0, %s6, %s4
  // Predicated region
  $region2: #{_forward_impl.56} parent=0 // pred_check
    _
  $region3: #{_forward_impl.56} parent=0 // pred_check_branch
    %9 = sbr.rel (0) target = $region5
  $region4: #{_forward_impl.56} parent=0 // pred_region
    _
  $region5: #{_forward_impl.56} parent=0 // pred_fallthru
    _
  // Predicated region
  $region6: #{_forward_impl.56} parent=0 // pred_check
    _
  $region7: #{_forward_impl.56} parent=0 // pred_check_branch
    %11 = sbr.rel (0) target = $region9
  $region8: #{_forward_impl.56} parent=0 // pred_region
    _
  $region9: #{_forward_impl.56} parent=0 // pred_fallthru
    _
  // Predicated region
  $region10: #{_forward_impl.56} parent=0 // pred_check
    _
  $region11: #{_forward_impl.56} parent=0 // pred_check_branch
    %13 = sbr.rel (0) target = $region13
  $region12: #{_forward_impl.56} parent=0 // pred_region
    _
  $region13: #{_forward_impl.56} parent=0 // pred_fallthru
    _
  %v14 = vld [vmem:[%s0] sm:$0xff]
  %v15 = vld [vmem:[%s0 + $0x8] sm:$0xff]
  %v16 = vld [vmem:[%s0 + $0x10] sm:$0xff]
  %v17 = vld [vmem:[%s0 + $0x18] sm:$0xff]
  %v18 = vld [vmem:[%s0 + $0x20] sm:$0xff]
  %v19 = vld [vmem:[%s0 + $0x28] sm:$0xff]
  %v20 = vld [vmem:[%s0 + $0x30] sm:$0xff]
  %v21 = vld [vmem:[%s0 + $0x38] sm:$0xff]
  %v22 = vld [vmem:[%s0 + $0x40] sm:$0xff]
  %v23 = vld [vmem:[%s0 + $0x48] sm:$0xff]
  %v24 = vld [vmem:[%s0 + $0x50] sm:$0xff]
  %v25 = vld [vmem:[%s0 + $0x58] sm:$0xff]
  %v26 = vld [vmem:[%s0 + $0x60] sm:$0xff]
  %v27 = vld [vmem:[%s0 + $0x68] sm:$0xff]
  %v28 = vld [vmem:[%s0 + $0x70] sm:$0xff]
  %v29 = vld [vmem:[%s0 + $0x78] sm:$0xff]
  %v30 = vld [vmem:[%s1] sm:$0xff]
  %v31 = vld [vmem:[%s1 + $0x8] sm:$0xff]
  %v32 = vld [vmem:[%s1 + $0x10] sm:$0xff]
  %v33 = vld [vmem:[%s1 + $0x18] sm:$0xff]
  %v34 = vld [vmem:[%s1 + $0x20] sm:$0xff]
  %v35 = vld [vmem:[%s1 + $0x28] sm:$0xff]
  %v36 = vld [vmem:[%s1 + $0x30] sm:$0xff]
  %v37 = vld [vmem:[%s1 + $0x38] sm:$0xff]
  %v38 = vld [vmem:[%s1 + $0x40] sm:$0xff]
  %v39 = vld [vmem:[%s1 + $0x48] sm:$0xff]
  %v40 = vld [vmem:[%s1 + $0x50] sm:$0xff]
  %v41 = vld [vmem:[%s1 + $0x58] sm:$0xff]
  %v42 = vld [vmem:[%s1 + $0x60] sm:$0xff]
  %v43 = vld [vmem:[%s1 + $0x68] sm:$0xff]
  %v44 = vld [vmem:[%s1 + $0x70] sm:$0xff]
  %v45 = vld [vmem:[%s1 + $0x78] sm:$0xff]
  %v46 = vld [vmem:[%s2] sm:$0x1]
  %v48 = vlaneseq
  %v49 = vshrl.u32 %v48, 7
  %v50 = vsub.s32 0, %v49
  %v51 = vrot.slane %v46, %v50
  %53 = vmatprep.subr.mxu0 0.0
  %54 = vmatpush1.msra.mxu0 %v45
  %55 = vmatprep.subr.mxu0 0.0
  %56 = vmatpush1.msra.mxu0 %v44
  %57 = vmatprep.subr.mxu0 0.0
  %58 = vmatpush1.msra.mxu0 %v43
  %59 = vmatprep.subr.mxu0 0.0
  %60 = vmatpush1.msra.mxu0 %v42
  %61 = vmatprep.subr.mxu0 0.0
  %62 = vmatpush1.msra.mxu0 %v41
  %63 = vmatprep.subr.mxu0 0.0
  %64 = vmatpush1.msra.mxu0 %v40
  %65 = vmatprep.subr.mxu0 0.0
  %66 = vmatpush1.msra.mxu0 %v39
  %67 = vmatprep.subr.mxu0 0.0
  %68 = vmatpush1.msra.mxu0 %v38
  %69 = vmatprep.subr.mxu0 0.0
  %70 = vmatpush1.msra.mxu0 %v37
  %71 = vmatprep.subr.mxu0 0.0
  %72 = vmatpush1.msra.mxu0 %v36
  %73 = vmatprep.subr.mxu0 0.0
  %74 = vmatpush1.msra.mxu0 %v35
  %75 = vmatprep.subr.mxu0 0.0
  %76 = vmatpush1.msra.mxu0 %v34
  %77 = vmatprep.subr.mxu0 0.0
  %78 = vmatpush1.msra.mxu0 %v33
  %79 = vmatprep.subr.mxu0 0.0
  %80 = vmatpush1.msra.mxu0 %v32
  %81 = vmatprep.subr.mxu0 0.0
  %82 = vmatpush1.msra.mxu0 %v31
  %83 = vmatprep.subr.mxu0 0.0
  %84 = vmatpush1.msra.mxu0 %v30
  %85 = vmatprep.subr.mxu0 0.0
  %86 = vmatpush2.msra.mxu0 0.0
  %87 = vmatprep.subr.mxu0 0.0
  %88 = vmatpush2.msra.mxu0 0.0
  %89 = vmatprep.subr.mxu0 0.0
  %90 = vmatpush2.msra.mxu0 0.0
  %91 = vmatprep.subr.mxu0 0.0
  %92 = vmatpush2.msra.mxu0 0.0
  %93 = vmatprep.subr.mxu0 0.0
  %94 = vmatpush2.msra.mxu0 0.0
  %95 = vmatprep.subr.mxu0 0.0
  %96 = vmatpush2.msra.mxu0 0.0
  %97 = vmatprep.subr.mxu0 0.0
  %98 = vmatpush2.msra.mxu0 0.0
  %99 = vmatprep.subr.mxu0 0.0
  %100 = vmatpush2.msra.mxu0 0.0
  %101 = vmatprep.subr.mxu0 0.0
  %102 = vmatpush2.msra.mxu0 0.0
  %103 = vmatprep.subr.mxu0 0.0
  %104 = vmatpush2.msra.mxu0 0.0
  %105 = vmatprep.subr.mxu0 0.0
  %106 = vmatpush2.msra.mxu0 0.0
  %107 = vmatprep.subr.mxu0 0.0
  %108 = vmatpush2.msra.mxu0 0.0
  %109 = vmatprep.subr.mxu0 0.0
  %110 = vmatpush2.msra.mxu0 0.0
  %111 = vmatprep.subr.mxu0 0.0
  %112 = vmatpush2.msra.mxu0 0.0
  %113 = vmatprep.subr.mxu0 0.0
  %114 = vmatpush2.msra.mxu0 0.0
  %115 = vmatprep.subr.mxu0 0.0
  %116 = vmatpush2.msra.mxu0 0.0
  %117 = vmatprep.mubr.f32.mxu0 0.0
  %118 = vmatmul.mubr.f32.gmra.mxu0 %v14
  %v119 = vpop.f32.mrf.mxu0
  %v120 = vadd.f32 %v51, %v119
  %v121 = vpop.f32.mrf.mxu0
  %122 = vmatprep.mubr.f32.mxu0 0.0
  %123 = vmatmul.mubr.f32.gmra.mxu0 %v15
  %v124 = vpop.f32.mrf.mxu0
  %v125 = vadd.f32 %v51, %v124
  %v126 = vpop.f32.mrf.mxu0
  %127 = vmatprep.mubr.f32.mxu0 0.0
  %128 = vmatmul.mubr.f32.gmra.mxu0 %v16
  %v129 = vpop.f32.mrf.mxu0
  %v130 = vadd.f32 %v51, %v129
  %v131 = vpop.f32.mrf.mxu0
  %132 = vmatprep.mubr.f32.mxu0 0.0
  %133 = vmatmul.mubr.f32.gmra.mxu0 %v17
  %v134 = vpop.f32.mrf.mxu0
  %v135 = vadd.f32 %v51, %v134
  %v136 = vpop.f32.mrf.mxu0
  %137 = vmatprep.mubr.f32.mxu0 0.0
  %138 = vmatmul.mubr.f32.gmra.mxu0 %v18
  %v139 = vpop.f32.mrf.mxu0
  %v140 = vadd.f32 %v51, %v139
  %v141 = vpop.f32.mrf.mxu0
  %142 = vmatprep.mubr.f32.mxu0 0.0
  %143 = vmatmul.mubr.f32.gmra.mxu0 %v19
  %v144 = vpop.f32.mrf.mxu0
  %v145 = vadd.f32 %v51, %v144
  %v146 = vpop.f32.mrf.mxu0
  %147 = vmatprep.mubr.f32.mxu0 0.0
  %148 = vmatmul.mubr.f32.gmra.mxu0 %v20
  %v149 = vpop.f32.mrf.mxu0
  %v150 = vadd.f32 %v51, %v149
  %v151 = vpop.f32.mrf.mxu0
  %152 = vmatprep.mubr.f32.mxu0 0.0
  %153 = vmatmul.mubr.f32.gmra.mxu0 %v21
  %v154 = vpop.f32.mrf.mxu0
  %v155 = vadd.f32 %v51, %v154
  %v156 = vpop.f32.mrf.mxu0
  %157 = vmatprep.mubr.f32.mxu0 0.0
  %158 = vmatmul.mubr.f32.gmra.mxu0 %v22
  %v159 = vpop.f32.mrf.mxu0
  %v160 = vadd.f32 %v51, %v159
  %v161 = vpop.f32.mrf.mxu0
  %162 = vmatprep.mubr.f32.mxu0 0.0
  %163 = vmatmul.mubr.f32.gmra.mxu0 %v23
  %v164 = vpop.f32.mrf.mxu0
  %v165 = vadd.f32 %v51, %v164
  %v166 = vpop.f32.mrf.mxu0
  %167 = vmatprep.mubr.f32.mxu0 0.0
  %168 = vmatmul.mubr.f32.gmra.mxu0 %v24
  %v169 = vpop.f32.mrf.mxu0
  %v170 = vadd.f32 %v51, %v169
  %v171 = vpop.f32.mrf.mxu0
  %172 = vmatprep.mubr.f32.mxu0 0.0
  %173 = vmatmul.mubr.f32.gmra.mxu0 %v25
  %v174 = vpop.f32.mrf.mxu0
  %v175 = vadd.f32 %v51, %v174
  %v176 = vpop.f32.mrf.mxu0
  %177 = vmatprep.mubr.f32.mxu0 0.0
  %178 = vmatmul.mubr.f32.gmra.mxu0 %v26
  %v179 = vpop.f32.mrf.mxu0
  %v180 = vadd.f32 %v51, %v179
  %v181 = vpop.f32.mrf.mxu0
  %182 = vmatprep.mubr.f32.mxu0 0.0
  %183 = vmatmul.mubr.f32.gmra.mxu0 %v27
  %v184 = vpop.f32.mrf.mxu0
  %v185 = vadd.f32 %v51, %v184
  %v186 = vpop.f32.mrf.mxu0
  %187 = vmatprep.mubr.f32.mxu0 0.0
  %188 = vmatmul.mubr.f32.gmra.mxu0 %v28
  %v189 = vpop.f32.mrf.mxu0
  %v190 = vadd.f32 %v51, %v189
  %v191 = vpop.f32.mrf.mxu0
  %192 = vmatprep.mubr.f32.mxu0 0.0
  %193 = vmatmul.mubr.f32.gmra.mxu0 %v29
  %v194 = vpop.f32.mrf.mxu0
  %v195 = vadd.f32 %v51, %v194
  %v196 = vpop.f32.mrf.mxu0
  %197 = vdwg.mxu0
  %v198 = vmax.f32 %v120, 0.0
  %v199 = vmax.f32 %v125, 0.0
  %v200 = vmax.f32 %v130, 0.0
  %v201 = vmax.f32 %v135, 0.0
  %v202 = vmax.f32 %v140, 0.0
  %v203 = vmax.f32 %v145, 0.0
  %v204 = vmax.f32 %v150, 0.0
  %v205 = vmax.f32 %v155, 0.0
  %v206 = vmax.f32 %v160, 0.0
  %v207 = vmax.f32 %v165, 0.0
  %v208 = vmax.f32 %v170, 0.0
  %v209 = vmax.f32 %v175, 0.0
  %v210 = vmax.f32 %v180, 0.0
  %v211 = vmax.f32 %v185, 0.0
  %v212 = vmax.f32 %v190, 0.0
  %v213 = vmax.f32 %v195, 0.0
  %214 = vst [vmem:[%s3] sm:$0xff] %v198
  %215 = vst [vmem:[%s3 + $0x8] sm:$0xff] %v199
  %216 = vst [vmem:[%s3 + $0x10] sm:$0xff] %v200
  %217 = vst [vmem:[%s3 + $0x18] sm:$0xff] %v201
  %218 = vst [vmem:[%s3 + $0x20] sm:$0xff] %v202
  %219 = vst [vmem:[%s3 + $0x28] sm:$0xff] %v203
  %220 = vst [vmem:[%s3 + $0x30] sm:$0xff] %v204
  %221 = vst [vmem:[%s3 + $0x38] sm:$0xff] %v205
  %222 = vst [vmem:[%s3 + $0x40] sm:$0xff] %v206
  %223 = vst [vmem:[%s3 + $0x48] sm:$0xff] %v207
  %224 = vst [vmem:[%s3 + $0x50] sm:$0xff] %v208
  %225 = vst [vmem:[%s3 + $0x58] sm:$0xff] %v209
  %226 = vst [vmem:[%s3 + $0x60] sm:$0xff] %v210
  %227 = vst [vmem:[%s3 + $0x68] sm:$0xff] %v211
  %228 = vst [vmem:[%s3 + $0x70] sm:$0xff] %v212
  %229 = vst [vmem:[%s3 + $0x78] sm:$0xff] %v213
  // Predicated region
  $region14: #{_forward_impl.56} parent=0 // pred_check
    _
  $region15: #{_forward_impl.56} parent=0 // pred_check_branch
    %231 = sbr.rel (0) target = $region17
  $region16: #{_forward_impl.56} parent=0 // pred_region
    _
  $region17: #{_forward_impl.56} parent=0 // pred_fallthru
    _
  // Predicated region
  $region18: #{_forward_impl.56} parent=0 // pred_check
    _
  $region19: #{_forward_impl.56} parent=0 // pred_check_branch
    %233 = sbr.rel (0) target = $region21
  $region20: #{_forward_impl.56} parent=0 // pred_region
    _
  $region21: #{_forward_impl.56} parent=0 // pred_fallthru
    _

// kernel: _forward_impl.58
$region0: #{_forward_impl.58}
  #allocation0 [shape = 'u32[]', space=smem, size = 0x4, offset = 0x4, fixed_abs, tag = 'smem constant byte address 0x4 - core index']
  #allocation1 [shape = 'u32[144,128]{1,0:T(1,128)}', space=vmem, size = 0x12000, scoped, tag = 'internal scratch']
  %s0 = inlined_call_operand.vmem [shape: f32[128,128], index: 0, kind: input, shape index: {}]
  %s1 = inlined_call_operand.vmem [shape: f32[128,128], index: 1, kind: input, shape index: {}]
  %s2 = inlined_call_operand.vmem [shape: f32[1,128], index: 2, kind: input, shape index: {}]
  %s3 = inlined_call_operand.vmem [shape: f32[128,128], index: 3, kind: output, shape index: {}]
  %s4 = sld [smem:[#allocation0]]
  $region22: #{_forward_impl.58} parent=0
    _
  %s6 = ssub.s32 1, %s4
  %s7 = scalar_select 0, %s6, %s4
  // Predicated region
  $region2: #{_forward_impl.58} parent=0 // pred_check
    _
  $region3: #{_forward_impl.58} parent=0 // pred_check_branch
    %9 = sbr.rel (0) target = $region5
  $region4: #{_forward_impl.58} parent=0 // pred_region
    _
  $region5: #{_forward_impl.58} parent=0 // pred_fallthru
    _
  // Predicated region
  $region6: #{_forward_impl.58} parent=0 // pred_check
    _
  $region7: #{_forward_impl.58} parent=0 // pred_check_branch
    %11 = sbr.rel (0) target = $region9
  $region8: #{_forward_impl.58} parent=0 // pred_region
    _
  $region9: #{_forward_impl.58} parent=0 // pred_fallthru
    _
  // Predicated region
  $region10: #{_forward_impl.58} parent=0 // pred_check
    _
  $region11: #{_forward_impl.58} parent=0 // pred_check_branch
    %13 = sbr.rel (0) target = $region13
  $region12: #{_forward_impl.58} parent=0 // pred_region
    _
  $region13: #{_forward_impl.58} parent=0 // pred_fallthru
    _
  %v14 = vld [vmem:[%s0] sm:$0xff]
  %v15 = vld [vmem:[%s0 + $0x8] sm:$0xff]
  %v16 = vld [vmem:[%s0 + $0x10] sm:$0xff]
  %v17 = vld [vmem:[%s0 + $0x18] sm:$0xff]
  %v18 = vld [vmem:[%s0 + $0x20] sm:$0xff]
  %v19 = vld [vmem:[%s0 + $0x28] sm:$0xff]
  %v20 = vld [vmem:[%s0 + $0x30] sm:$0xff]
  %v21 = vld [vmem:[%s0 + $0x38] sm:$0xff]
  %v22 = vld [vmem:[%s0 + $0x40] sm:$0xff]
  %v23 = vld [vmem:[%s0 + $0x48] sm:$0xff]
  %v24 = vld [vmem:[%s0 + $0x50] sm:$0xff]
  %v25 = vld [vmem:[%s0 + $0x58] sm:$0xff]
  %v26 = vld [vmem:[%s0 + $0x60] sm:$0xff]
  %v27 = vld [vmem:[%s0 + $0x68] sm:$0xff]
  %v28 = vld [vmem:[%s0 + $0x70] sm:$0xff]
  %v29 = vld [vmem:[%s0 + $0x78] sm:$0xff]
  %v30 = vld [vmem:[%s1] sm:$0xff]
  %v31 = vld [vmem:[%s1 + $0x8] sm:$0xff]
  %v32 = vld [vmem:[%s1 + $0x10] sm:$0xff]
  %v33 = vld [vmem:[%s1 + $0x18] sm:$0xff]
  %v34 = vld [vmem:[%s1 + $0x20] sm:$0xff]
  %v35 = vld [vmem:[%s1 + $0x28] sm:$0xff]
  %v36 = vld [vmem:[%s1 + $0x30] sm:$0xff]
  %v37 = vld [vmem:[%s1 + $0x38] sm:$0xff]
  %v38 = vld [vmem:[%s1 + $0x40] sm:$0xff]
  %v39 = vld [vmem:[%s1 + $0x48] sm:$0xff]
  %v40 = vld [vmem:[%s1 + $0x50] sm:$0xff]
  %v41 = vld [vmem:[%s1 + $0x58] sm:$0xff]
  %v42 = vld [vmem:[%s1 + $0x60] sm:$0xff]
  %v43 = vld [vmem:[%s1 + $0x68] sm:$0xff]
  %v44 = vld [vmem:[%s1 + $0x70] sm:$0xff]
  %v45 = vld [vmem:[%s1 + $0x78] sm:$0xff]
  %v46 = vld [vmem:[%s2] sm:$0x1]
  %v48 = vlaneseq
  %v49 = vshrl.u32 %v48, 7
  %v50 = vsub.s32 0, %v49
  %v51 = vrot.slane %v46, %v50
  %53 = vmatprep.subr.mxu0 0.0
  %54 = vmatpush1.msra.mxu0 %v45
  %55 = vmatprep.subr.mxu0 0.0
  %56 = vmatpush1.msra.mxu0 %v44
  %57 = vmatprep.subr.mxu0 0.0
  %58 = vmatpush1.msra.mxu0 %v43
  %59 = vmatprep.subr.mxu0 0.0
  %60 = vmatpush1.msra.mxu0 %v42
  %61 = vmatprep.subr.mxu0 0.0
  %62 = vmatpush1.msra.mxu0 %v41
  %63 = vmatprep.subr.mxu0 0.0
  %64 = vmatpush1.msra.mxu0 %v40
  %65 = vmatprep.subr.mxu0 0.0
  %66 = vmatpush1.msra.mxu0 %v39
  %67 = vmatprep.subr.mxu0 0.0
  %68 = vmatpush1.msra.mxu0 %v38
  %69 = vmatprep.subr.mxu0 0.0
  %70 = vmatpush1.msra.mxu0 %v37
  %71 = vmatprep.subr.mxu0 0.0
  %72 = vmatpush1.msra.mxu0 %v36
  %73 = vmatprep.subr.mxu0 0.0
  %74 = vmatpush1.msra.mxu0 %v35
  %75 = vmatprep.subr.mxu0 0.0
  %76 = vmatpush1.msra.mxu0 %v34
  %77 = vmatprep.subr.mxu0 0.0
  %78 = vmatpush1.msra.mxu0 %v33
  %79 = vmatprep.subr.mxu0 0.0
  %80 = vmatpush1.msra.mxu0 %v32
  %81 = vmatprep.subr.mxu0 0.0
  %82 = vmatpush1.msra.mxu0 %v31
  %83 = vmatprep.subr.mxu0 0.0
  %84 = vmatpush1.msra.mxu0 %v30
  %85 = vmatprep.subr.mxu0 0.0
  %86 = vmatpush2.msra.mxu0 0.0
  %87 = vmatprep.subr.mxu0 0.0
  %88 = vmatpush2.msra.mxu0 0.0
  %89 = vmatprep.subr.mxu0 0.0
  %90 = vmatpush2.msra.mxu0 0.0
  %91 = vmatprep.subr.mxu0 0.0
  %92 = vmatpush2.msra.mxu0 0.0
  %93 = vmatprep.subr.mxu0 0.0
  %94 = vmatpush2.msra.mxu0 0.0
  %95 = vmatprep.subr.mxu0 0.0
  %96 = vmatpush2.msra.mxu0 0.0
  %97 = vmatprep.subr.mxu0 0.0
  %98 = vmatpush2.msra.mxu0 0.0
  %99 = vmatprep.subr.mxu0 0.0
  %100 = vmatpush2.msra.mxu0 0.0
  %101 = vmatprep.subr.mxu0 0.0
  %102 = vmatpush2.msra.mxu0 0.0
  %103 = vmatprep.subr.mxu0 0.0
  %104 = vmatpush2.msra.mxu0 0.0
  %105 = vmatprep.subr.mxu0 0.0
  %106 = vmatpush2.msra.mxu0 0.0
  %107 = vmatprep.subr.mxu0 0.0
  %108 = vmatpush2.msra.mxu0 0.0
  %109 = vmatprep.subr.mxu0 0.0
  %110 = vmatpush2.msra.mxu0 0.0
  %111 = vmatprep.subr.mxu0 0.0
  %112 = vmatpush2.msra.mxu0 0.0
  %113 = vmatprep.subr.mxu0 0.0
  %114 = vmatpush2.msra.mxu0 0.0
  %115 = vmatprep.subr.mxu0 0.0
  %116 = vmatpush2.msra.mxu0 0.0
  %117 = vmatprep.mubr.f32.mxu0 0.0
  %118 = vmatmul.mubr.f32.gmra.mxu0 %v14
  %v119 = vpop.f32.mrf.mxu0
  %v120 = vadd.f32 %v51, %v119
  %v121 = vpop.f32.mrf.mxu0
  %122 = vmatprep.mubr.f32.mxu0 0.0
  %123 = vmatmul.mubr.f32.gmra.mxu0 %v15
  %v124 = vpop.f32.mrf.mxu0
  %v125 = vadd.f32 %v51, %v124
  %v126 = vpop.f32.mrf.mxu0
  %127 = vmatprep.mubr.f32.mxu0 0.0
  %128 = vmatmul.mubr.f32.gmra.mxu0 %v16
  %v129 = vpop.f32.mrf.mxu0
  %v130 = vadd.f32 %v51, %v129
  %v131 = vpop.f32.mrf.mxu0
  %132 = vmatprep.mubr.f32.mxu0 0.0
  %133 = vmatmul.mubr.f32.gmra.mxu0 %v17
  %v134 = vpop.f32.mrf.mxu0
  %v135 = vadd.f32 %v51, %v134
  %v136 = vpop.f32.mrf.mxu0
  %137 = vmatprep.mubr.f32.mxu0 0.0
  %138 = vmatmul.mubr.f32.gmra.mxu0 %v18
  %v139 = vpop.f32.mrf.mxu0
  %v140 = vadd.f32 %v51, %v139
  %v141 = vpop.f32.mrf.mxu0
  %142 = vmatprep.mubr.f32.mxu0 0.0
  %143 = vmatmul.mubr.f32.gmra.mxu0 %v19
  %v144 = vpop.f32.mrf.mxu0
  %v145 = vadd.f32 %v51, %v144
  %v146 = vpop.f32.mrf.mxu0
  %147 = vmatprep.mubr.f32.mxu0 0.0
  %148 = vmatmul.mubr.f32.gmra.mxu0 %v20
  %v149 = vpop.f32.mrf.mxu0
  %v150 = vadd.f32 %v51, %v149
  %v151 = vpop.f32.mrf.mxu0
  %152 = vmatprep.mubr.f32.mxu0 0.0
  %153 = vmatmul.mubr.f32.gmra.mxu0 %v21
  %v154 = vpop.f32.mrf.mxu0
  %v155 = vadd.f32 %v51, %v154
  %v156 = vpop.f32.mrf.mxu0
  %157 = vmatprep.mubr.f32.mxu0 0.0
  %158 = vmatmul.mubr.f32.gmra.mxu0 %v22
  %v159 = vpop.f32.mrf.mxu0
  %v160 = vadd.f32 %v51, %v159
  %v161 = vpop.f32.mrf.mxu0
  %162 = vmatprep.mubr.f32.mxu0 0.0
  %163 = vmatmul.mubr.f32.gmra.mxu0 %v23
  %v164 = vpop.f32.mrf.mxu0
  %v165 = vadd.f32 %v51, %v164
  %v166 = vpop.f32.mrf.mxu0
  %167 = vmatprep.mubr.f32.mxu0 0.0
  %168 = vmatmul.mubr.f32.gmra.mxu0 %v24
  %v169 = vpop.f32.mrf.mxu0
  %v170 = vadd.f32 %v51, %v169
  %v171 = vpop.f32.mrf.mxu0
  %172 = vmatprep.mubr.f32.mxu0 0.0
  %173 = vmatmul.mubr.f32.gmra.mxu0 %v25
  %v174 = vpop.f32.mrf.mxu0
  %v175 = vadd.f32 %v51, %v174
  %v176 = vpop.f32.mrf.mxu0
  %177 = vmatprep.mubr.f32.mxu0 0.0
  %178 = vmatmul.mubr.f32.gmra.mxu0 %v26
  %v179 = vpop.f32.mrf.mxu0
  %v180 = vadd.f32 %v51, %v179
  %v181 = vpop.f32.mrf.mxu0
  %182 = vmatprep.mubr.f32.mxu0 0.0
  %183 = vmatmul.mubr.f32.gmra.mxu0 %v27
  %v184 = vpop.f32.mrf.mxu0
  %v185 = vadd.f32 %v51, %v184
  %v186 = vpop.f32.mrf.mxu0
  %187 = vmatprep.mubr.f32.mxu0 0.0
  %188 = vmatmul.mubr.f32.gmra.mxu0 %v28
  %v189 = vpop.f32.mrf.mxu0
  %v190 = vadd.f32 %v51, %v189
  %v191 = vpop.f32.mrf.mxu0
  %192 = vmatprep.mubr.f32.mxu0 0.0
  %193 = vmatmul.mubr.f32.gmra.mxu0 %v29
  %v194 = vpop.f32.mrf.mxu0
  %v195 = vadd.f32 %v51, %v194
  %v196 = vpop.f32.mrf.mxu0
  %197 = vdwg.mxu0
  %198 = vst [vmem:[%s3] sm:$0xff] %v120
  %199 = vst [vmem:[%s3 + $0x8] sm:$0xff] %v125
  %200 = vst [vmem:[%s3 + $0x10] sm:$0xff] %v130
  %201 = vst [vmem:[%s3 + $0x18] sm:$0xff] %v135
  %202 = vst [vmem:[%s3 + $0x20] sm:$0xff] %v140
  %203 = vst [vmem:[%s3 + $0x28] sm:$0xff] %v145
  %204 = vst [vmem:[%s3 + $0x30] sm:$0xff] %v150
  %205 = vst [vmem:[%s3 + $0x38] sm:$0xff] %v155
  %206 = vst [vmem:[%s3 + $0x40] sm:$0xff] %v160
  %207 = vst [vmem:[%s3 + $0x48] sm:$0xff] %v165
  %208 = vst [vmem:[%s3 + $0x50] sm:$0xff] %v170
  %209 = vst [vmem:[%s3 + $0x58] sm:$0xff] %v175
  %210 = vst [vmem:[%s3 + $0x60] sm:$0xff] %v180
  %211 = vst [vmem:[%s3 + $0x68] sm:$0xff] %v185
  %212 = vst [vmem:[%s3 + $0x70] sm:$0xff] %v190
  %213 = vst [vmem:[%s3 + $0x78] sm:$0xff] %v195
  // Predicated region
  $region14: #{_forward_impl.58} parent=0 // pred_check
    _
  $region15: #{_forward_impl.58} parent=0 // pred_check_branch
    %215 = sbr.rel (0) target = $region17
  $region16: #{_forward_impl.58} parent=0 // pred_region
    _
  $region17: #{_forward_impl.58} parent=0 // pred_fallthru
    _
  // Predicated region
  $region18: #{_forward_impl.58} parent=0 // pred_check
    _
  $region19: #{_forward_impl.58} parent=0 // pred_check_branch
    %217 = sbr.rel (0) target = $region21
  $region20: #{_forward_impl.58} parent=0 // pred_region
    _
  $region21: #{_forward_impl.58} parent=0 // pred_fallthru
    _

// kernel: _forward_impl.57
$region0: #{_forward_impl.57}
  #allocation0 [shape = 'u32[]', space=smem, size = 0x4, offset = 0x4, fixed_abs, tag = 'smem constant byte address 0x4 - core index']
  #allocation1 [shape = 'u32[144,128]{1,0:T(1,128)}', space=vmem, size = 0x12000, scoped, tag = 'internal scratch']
  %s0 = inlined_call_operand.vmem [shape: f32[128,256], index: 0, kind: input, shape index: {}]
  %s1 = inlined_call_operand.vmem [shape: f32[256,128], index: 1, kind: input, shape index: {}]
  %s2 = inlined_call_operand.vmem [shape: f32[1,128], index: 2, kind: input, shape index: {}]
  %s3 = inlined_call_operand.vmem [shape: f32[128,128], index: 3, kind: output, shape index: {}]
  %s4 = sld [smem:[#allocation0]]
  $region22: #{_forward_impl.57} parent=0
    _
  %s6 = ssub.s32 1, %s4
  %s7 = scalar_select 0, %s6, %s4
  // Predicated region
  $region2: #{_forward_impl.57} parent=0 // pred_check
    _
  $region3: #{_forward_impl.57} parent=0 // pred_check_branch
    %9 = sbr.rel (0) target = $region5
  $region4: #{_forward_impl.57} parent=0 // pred_region
    _
  $region5: #{_forward_impl.57} parent=0 // pred_fallthru
    _
  // Predicated region
  $region6: #{_forward_impl.57} parent=0 // pred_check
    _
  $region7: #{_forward_impl.57} parent=0 // pred_check_branch
    %11 = sbr.rel (0) target = $region9
  $region8: #{_forward_impl.57} parent=0 // pred_region
    _
  $region9: #{_forward_impl.57} parent=0 // pred_fallthru
    _
  // Predicated region
  $region10: #{_forward_impl.57} parent=0 // pred_check
    _
  $region11: #{_forward_impl.57} parent=0 // pred_check_branch
    %13 = sbr.rel (0) target = $region13
  $region12: #{_forward_impl.57} parent=0 // pred_region
    _
  $region13: #{_forward_impl.57} parent=0 // pred_fallthru
    _
  %v14 = vld [vmem:[%s0] sm:$0xff]
  %v15 = vld [vmem:[%s0 + $0x8] sm:$0xff]
  %v16 = vld [vmem:[%s0 + $0x10] sm:$0xff]
  %v17 = vld [vmem:[%s0 + $0x18] sm:$0xff]
  %v18 = vld [vmem:[%s0 + $0x20] sm:$0xff]
  %v19 = vld [vmem:[%s0 + $0x28] sm:$0xff]
  %v20 = vld [vmem:[%s0 + $0x30] sm:$0xff]
  %v21 = vld [vmem:[%s0 + $0x38] sm:$0xff]
  %v22 = vld [vmem:[%s0 + $0x40] sm:$0xff]
  %v23 = vld [vmem:[%s0 + $0x48] sm:$0xff]
  %v24 = vld [vmem:[%s0 + $0x50] sm:$0xff]
  %v25 = vld [vmem:[%s0 + $0x58] sm:$0xff]
  %v26 = vld [vmem:[%s0 + $0x60] sm:$0xff]
  %v27 = vld [vmem:[%s0 + $0x68] sm:$0xff]
  %v28 = vld [vmem:[%s0 + $0x70] sm:$0xff]
  %v29 = vld [vmem:[%s0 + $0x78] sm:$0xff]
  %v30 = vld [vmem:[%s0 + $0x80] sm:$0xff]
  %v31 = vld [vmem:[%s0 + $0x88] sm:$0xff]
  %v32 = vld [vmem:[%s0 + $0x90] sm:$0xff]
  %v33 = vld [vmem:[%s0 + $0x98] sm:$0xff]
  %v34 = vld [vmem:[%s0 + $0xa0] sm:$0xff]
  %v35 = vld [vmem:[%s0 + $0xa8] sm:$0xff]
  %v36 = vld [vmem:[%s0 + $0xb0] sm:$0xff]
  %v37 = vld [vmem:[%s0 + $0xb8] sm:$0xff]
  %v38 = vld [vmem:[%s0 + $0xc0] sm:$0xff]
  %v39 = vld [vmem:[%s0 + $0xc8] sm:$0xff]
  %v40 = vld [vmem:[%s0 + $0xd0] sm:$0xff]
  %v41 = vld [vmem:[%s0 + $0xd8] sm:$0xff]
  %v42 = vld [vmem:[%s0 + $0xe0] sm:$0xff]
  %v43 = vld [vmem:[%s0 + $0xe8] sm:$0xff]
  %v44 = vld [vmem:[%s0 + $0xf0] sm:$0xff]
  %v45 = vld [vmem:[%s0 + $0xf8] sm:$0xff]
  %v46 = vld [vmem:[%s1] sm:$0xff]
  %v47 = vld [vmem:[%s1 + $0x8] sm:$0xff]
  %v48 = vld [vmem:[%s1 + $0x10] sm:$0xff]
  %v49 = vld [vmem:[%s1 + $0x18] sm:$0xff]
  %v50 = vld [vmem:[%s1 + $0x20] sm:$0xff]
  %v51 = vld [vmem:[%s1 + $0x28] sm:$0xff]
  %v52 = vld [vmem:[%s1 + $0x30] sm:$0xff]
  %v53 = vld [vmem:[%s1 + $0x38] sm:$0xff]
  %v54 = vld [vmem:[%s1 + $0x40] sm:$0xff]
  %v55 = vld [vmem:[%s1 + $0x48] sm:$0xff]
  %v56 = vld [vmem:[%s1 + $0x50] sm:$0xff]
  %v57 = vld [vmem:[%s1 + $0x58] sm:$0xff]
  %v58 = vld [vmem:[%s1 + $0x60] sm:$0xff]
  %v59 = vld [vmem:[%s1 + $0x68] sm:$0xff]
  %v60 = vld [vmem:[%s1 + $0x70] sm:$0xff]
  %v61 = vld [vmem:[%s1 + $0x78] sm:$0xff]
  %v62 = vld [vmem:[%s1 + $0x80] sm:$0xff]
  %v63 = vld [vmem:[%s1 + $0x88] sm:$0xff]
  %v64 = vld [vmem:[%s1 + $0x90] sm:$0xff]
  %v65 = vld [vmem:[%s1 + $0x98] sm:$0xff]
  %v66 = vld [vmem:[%s1 + $0xa0] sm:$0xff]
  %v67 = vld [vmem:[%s1 + $0xa8] sm:$0xff]
  %v68 = vld [vmem:[%s1 + $0xb0] sm:$0xff]
  %v69 = vld [vmem:[%s1 + $0xb8] sm:$0xff]
  %v70 = vld [vmem:[%s1 + $0xc0] sm:$0xff]
  %v71 = vld [vmem:[%s1 + $0xc8] sm:$0xff]
  %v72 = vld [vmem:[%s1 + $0xd0] sm:$0xff]
  %v73 = vld [vmem:[%s1 + $0xd8] sm:$0xff]
  %v74 = vld [vmem:[%s1 + $0xe0] sm:$0xff]
  %v75 = vld [vmem:[%s1 + $0xe8] sm:$0xff]
  %v76 = vld [vmem:[%s1 + $0xf0] sm:$0xff]
  %v77 = vld [vmem:[%s1 + $0xf8] sm:$0xff]
  %v78 = vld [vmem:[%s2] sm:$0x1]
  %v80 = vlaneseq
  %v81 = vshrl.u32 %v80, 7
  %v82 = vsub.s32 0, %v81
  %v83 = vrot.slane %v78, %v82
  %85 = vmatprep.subr.mxu0 0.0
  %86 = vmatpush1.msra.mxu0 %v61
  %87 = vmatprep.subr.mxu0 0.0
  %88 = vmatpush1.msra.mxu0 %v60
  %89 = vmatprep.subr.mxu0 0.0
  %90 = vmatpush1.msra.mxu0 %v59
  %91 = vmatprep.subr.mxu0 0.0
  %92 = vmatpush1.msra.mxu0 %v58
  %93 = vmatprep.subr.mxu0 0.0
  %94 = vmatpush1.msra.mxu0 %v57
  %95 = vmatprep.subr.mxu0 0.0
  %96 = vmatpush1.msra.mxu0 %v56
  %97 = vmatprep.subr.mxu0 0.0
  %98 = vmatpush1.msra.mxu0 %v55
  %99 = vmatprep.subr.mxu0 0.0
  %100 = vmatpush1.msra.mxu0 %v54
  %101 = vmatprep.subr.mxu0 0.0
  %102 = vmatpush1.msra.mxu0 %v53
  %103 = vmatprep.subr.mxu0 0.0
  %104 = vmatpush1.msra.mxu0 %v52
  %105 = vmatprep.subr.mxu0 0.0
  %106 = vmatpush1.msra.mxu0 %v51
  %107 = vmatprep.subr.mxu0 0.0
  %108 = vmatpush1.msra.mxu0 %v50
  %109 = vmatprep.subr.mxu0 0.0
  %110 = vmatpush1.msra.mxu0 %v49
  %111 = vmatprep.subr.mxu0 0.0
  %112 = vmatpush1.msra.mxu0 %v48
  %113 = vmatprep.subr.mxu0 0.0
  %114 = vmatpush1.msra.mxu0 %v47
  %115 = vmatprep.subr.mxu0 0.0
  %116 = vmatpush1.msra.mxu0 %v46
  %117 = vmatprep.subr.mxu0 0.0
  %118 = vmatpush2.msra.mxu0 %v77
  %119 = vmatprep.subr.mxu0 0.0
  %120 = vmatpush2.msra.mxu0 %v76
  %121 = vmatprep.subr.mxu0 0.0
  %122 = vmatpush2.msra.mxu0 %v75
  %123 = vmatprep.subr.mxu0 0.0
  %124 = vmatpush2.msra.mxu0 %v74
  %125 = vmatprep.subr.mxu0 0.0
  %126 = vmatpush2.msra.mxu0 %v73
  %127 = vmatprep.subr.mxu0 0.0
  %128 = vmatpush2.msra.mxu0 %v72
  %129 = vmatprep.subr.mxu0 0.0
  %130 = vmatpush2.msra.mxu0 %v71
  %131 = vmatprep.subr.mxu0 0.0
  %132 = vmatpush2.msra.mxu0 %v70
  %133 = vmatprep.subr.mxu0 0.0
  %134 = vmatpush2.msra.mxu0 %v69
  %135 = vmatprep.subr.mxu0 0.0
  %136 = vmatpush2.msra.mxu0 %v68
  %137 = vmatprep.subr.mxu0 0.0
  %138 = vmatpush2.msra.mxu0 %v67
  %139 = vmatprep.subr.mxu0 0.0
  %140 = vmatpush2.msra.mxu0 %v66
  %141 = vmatprep.subr.mxu0 0.0
  %142 = vmatpush2.msra.mxu0 %v65
  %143 = vmatprep.subr.mxu0 0.0
  %144 = vmatpush2.msra.mxu0 %v64
  %145 = vmatprep.subr.mxu0 0.0
  %146 = vmatpush2.msra.mxu0 %v63
  %147 = vmatprep.subr.mxu0 0.0
  %148 = vmatpush2.msra.mxu0 %v62
  %149 = vmatprep.mubr.f32.mxu0 %v15
  %150 = vmatmul.mubr.f32.gmra.mxu0 %v14
  %v151 = vpop.f32.mrf.mxu0
  %v152 = vadd.f32 %v83, %v151
  %v153 = vpop.f32.mrf.mxu0
  %154 = vmatprep.mubr.f32.mxu0 %v17
  %155 = vmatmul.mubr.f32.gmra.mxu0 %v16
  %v156 = vpop.f32.mrf.mxu0
  %v157 = vadd.f32 %v83, %v156
  %v158 = vpop.f32.mrf.mxu0
  %159 = vmatprep.mubr.f32.mxu0 %v19
  %160 = vmatmul.mubr.f32.gmra.mxu0 %v18
  %v161 = vpop.f32.mrf.mxu0
  %v162 = vadd.f32 %v83, %v161
  %v163 = vpop.f32.mrf.mxu0
  %164 = vmatprep.mubr.f32.mxu0 %v21
  %165 = vmatmul.mubr.f32.gmra.mxu0 %v20
  %v166 = vpop.f32.mrf.mxu0
  %v167 = vadd.f32 %v83, %v166
  %v168 = vpop.f32.mrf.mxu0
  %169 = vmatprep.mubr.f32.mxu0 %v23
  %170 = vmatmul.mubr.f32.gmra.mxu0 %v22
  %v171 = vpop.f32.mrf.mxu0
  %v172 = vadd.f32 %v83, %v171
  %v173 = vpop.f32.mrf.mxu0
  %174 = vmatprep.mubr.f32.mxu0 %v25
  %175 = vmatmul.mubr.f32.gmra.mxu0 %v24
  %v176 = vpop.f32.mrf.mxu0
  %v177 = vadd.f32 %v83, %v176
  %v178 = vpop.f32.mrf.mxu0
  %179 = vmatprep.mubr.f32.mxu0 %v27
  %180 = vmatmul.mubr.f32.gmra.mxu0 %v26
  %v181 = vpop.f32.mrf.mxu0
  %v182 = vadd.f32 %v83, %v181
  %v183 = vpop.f32.mrf.mxu0
  %184 = vmatprep.mubr.f32.mxu0 %v29
  %185 = vmatmul.mubr.f32.gmra.mxu0 %v28
  %v186 = vpop.f32.mrf.mxu0
  %v187 = vadd.f32 %v83, %v186
  %v188 = vpop.f32.mrf.mxu0
  %189 = vmatprep.mubr.f32.mxu0 %v31
  %190 = vmatmul.mubr.f32.gmra.mxu0 %v30
  %v191 = vpop.f32.mrf.mxu0
  %v192 = vadd.f32 %v83, %v191
  %v193 = vpop.f32.mrf.mxu0
  %194 = vmatprep.mubr.f32.mxu0 %v33
  %195 = vmatmul.mubr.f32.gmra.mxu0 %v32
  %v196 = vpop.f32.mrf.mxu0
  %v197 = vadd.f32 %v83, %v196
  %v198 = vpop.f32.mrf.mxu0
  %199 = vmatprep.mubr.f32.mxu0 %v35
  %200 = vmatmul.mubr.f32.gmra.mxu0 %v34
  %v201 = vpop.f32.mrf.mxu0
  %v202 = vadd.f32 %v83, %v201
  %v203 = vpop.f32.mrf.mxu0
  %204 = vmatprep.mubr.f32.mxu0 %v37
  %205 = vmatmul.mubr.f32.gmra.mxu0 %v36
  %v206 = vpop.f32.mrf.mxu0
  %v207 = vadd.f32 %v83, %v206
  %v208 = vpop.f32.mrf.mxu0
  %209 = vmatprep.mubr.f32.mxu0 %v39
  %210 = vmatmul.mubr.f32.gmra.mxu0 %v38
  %v211 = vpop.f32.mrf.mxu0
  %v212 = vadd.f32 %v83, %v211
  %v213 = vpop.f32.mrf.mxu0
  %214 = vmatprep.mubr.f32.mxu0 %v41
  %215 = vmatmul.mubr.f32.gmra.mxu0 %v40
  %v216 = vpop.f32.mrf.mxu0
  %v217 = vadd.f32 %v83, %v216
  %v218 = vpop.f32.mrf.mxu0
  %219 = vmatprep.mubr.f32.mxu0 %v43
  %220 = vmatmul.mubr.f32.gmra.mxu0 %v42
  %v221 = vpop.f32.mrf.mxu0
  %v222 = vadd.f32 %v83, %v221
  %v223 = vpop.f32.mrf.mxu0
  %224 = vmatprep.mubr.f32.mxu0 %v45
  %225 = vmatmul.mubr.f32.gmra.mxu0 %v44
  %v226 = vpop.f32.mrf.mxu0
  %v227 = vadd.f32 %v83, %v226
  %v228 = vpop.f32.mrf.mxu0
  %229 = vdwg.mxu0
  %v230 = vmax.f32 %v152, 0.0
  %v231 = vmax.f32 %v157, 0.0
  %v232 = vmax.f32 %v162, 0.0
  %v233 = vmax.f32 %v167, 0.0
  %v234 = vmax.f32 %v172, 0.0
  %v235 = vmax.f32 %v177, 0.0
  %v236 = vmax.f32 %v182, 0.0
  %v237 = vmax.f32 %v187, 0.0
  %v238 = vmax.f32 %v192, 0.0
  %v239 = vmax.f32 %v197, 0.0
  %v240 = vmax.f32 %v202, 0.0
  %v241 = vmax.f32 %v207, 0.0
  %v242 = vmax.f32 %v212, 0.0
  %v243 = vmax.f32 %v217, 0.0
  %v244 = vmax.f32 %v222, 0.0
  %v245 = vmax.f32 %v227, 0.0
  %246 = vst [vmem:[%s3] sm:$0xff] %v230
  %247 = vst [vmem:[%s3 + $0x8] sm:$0xff] %v231
  %248 = vst [vmem:[%s3 + $0x10] sm:$0xff] %v232
  %249 = vst [vmem:[%s3 + $0x18] sm:$0xff] %v233
  %250 = vst [vmem:[%s3 + $0x20] sm:$0xff] %v234
  %251 = vst [vmem:[%s3 + $0x28] sm:$0xff] %v235
  %252 = vst [vmem:[%s3 + $0x30] sm:$0xff] %v236
  %253 = vst [vmem:[%s3 + $0x38] sm:$0xff] %v237
  %254 = vst [vmem:[%s3 + $0x40] sm:$0xff] %v238
  %255 = vst [vmem:[%s3 + $0x48] sm:$0xff] %v239
  %256 = vst [vmem:[%s3 + $0x50] sm:$0xff] %v240
  %257 = vst [vmem:[%s3 + $0x58] sm:$0xff] %v241
  %258 = vst [vmem:[%s3 + $0x60] sm:$0xff] %v242
  %259 = vst [vmem:[%s3 + $0x68] sm:$0xff] %v243
  %260 = vst [vmem:[%s3 + $0x70] sm:$0xff] %v244
  %261 = vst [vmem:[%s3 + $0x78] sm:$0xff] %v245
  // Predicated region
  $region14: #{_forward_impl.57} parent=0 // pred_check
    _
  $region15: #{_forward_impl.57} parent=0 // pred_check_branch
    %263 = sbr.rel (0) target = $region17
  $region16: #{_forward_impl.57} parent=0 // pred_region
    _
  $region17: #{_forward_impl.57} parent=0 // pred_fallthru
    _
  // Predicated region
  $region18: #{_forward_impl.57} parent=0 // pred_check
    _
  $region19: #{_forward_impl.57} parent=0 // pred_check_branch
    %265 = sbr.rel (0) target = $region21
  $region20: #{_forward_impl.57} parent=0 // pred_region
    _
  $region21: #{_forward_impl.57} parent=0 // pred_fallthru
    _

// kernel: _forward_impl.59
$region0: #{_forward_impl.59}
  #allocation0 [shape = 'u32[]', space=smem, size = 0x4, offset = 0x4, fixed_abs, tag = 'smem constant byte address 0x4 - core index']
  #allocation1 [shape = 'u32[144,128]{1,0:T(1,128)}', space=vmem, size = 0x12000, scoped, tag = 'internal scratch']
  %s0 = inlined_call_operand.vmem [shape: f32[128,128], index: 0, kind: input, shape index: {}]
  %s1 = inlined_call_operand.vmem [shape: f32[128,128], index: 1, kind: input, shape index: {}]
  %s2 = inlined_call_operand.vmem [shape: f32[1,128], index: 2, kind: input, shape index: {}]
  %s3 = inlined_call_operand.vmem [shape: f32[128,128], index: 3, kind: input, shape index: {}]
  %s4 = inlined_call_operand.vmem [shape: f32[128,128], index: 4, kind: output, shape index: {}]
  %s5 = sld [smem:[#allocation0]]
  $region26: #{_forward_impl.59} parent=0
    _
  %s7 = ssub.s32 1, %s5
  %s8 = scalar_select 0, %s7, %s5
  // Predicated region
  $region2: #{_forward_impl.59} parent=0 // pred_check
    _
  $region3: #{_forward_impl.59} parent=0 // pred_check_branch
    %10 = sbr.rel (0) target = $region5
  $region4: #{_forward_impl.59} parent=0 // pred_region
    _
  $region5: #{_forward_impl.59} parent=0 // pred_fallthru
    _
  // Predicated region
  $region6: #{_forward_impl.59} parent=0 // pred_check
    _
  $region7: #{_forward_impl.59} parent=0 // pred_check_branch
    %12 = sbr.rel (0) target = $region9
  $region8: #{_forward_impl.59} parent=0 // pred_region
    _
  $region9: #{_forward_impl.59} parent=0 // pred_fallthru
    _
  // Predicated region
  $region10: #{_forward_impl.59} parent=0 // pred_check
    _
  $region11: #{_forward_impl.59} parent=0 // pred_check_branch
    %14 = sbr.rel (0) target = $region13
  $region12: #{_forward_impl.59} parent=0 // pred_region
    _
  $region13: #{_forward_impl.59} parent=0 // pred_fallthru
    _
  // Predicated region
  $region14: #{_forward_impl.59} parent=0 // pred_check
    _
  $region15: #{_forward_impl.59} parent=0 // pred_check_branch
    %16 = sbr.rel (0) target = $region17
  $region16: #{_forward_impl.59} parent=0 // pred_region
    _
  $region17: #{_forward_impl.59} parent=0 // pred_fallthru
    _
  %v17 = vld [vmem:[%s0] sm:$0xff]
  %v18 = vld [vmem:[%s0 + $0x8] sm:$0xff]
  %v19 = vld [vmem:[%s0 + $0x10] sm:$0xff]
  %v20 = vld [vmem:[%s0 + $0x18] sm:$0xff]
  %v21 = vld [vmem:[%s0 + $0x20] sm:$0xff]
  %v22 = vld [vmem:[%s0 + $0x28] sm:$0xff]
  %v23 = vld [vmem:[%s0 + $0x30] sm:$0xff]
  %v24 = vld [vmem:[%s0 + $0x38] sm:$0xff]
  %v25 = vld [vmem:[%s0 + $0x40] sm:$0xff]
  %v26 = vld [vmem:[%s0 + $0x48] sm:$0xff]
  %v27 = vld [vmem:[%s0 + $0x50] sm:$0xff]
  %v28 = vld [vmem:[%s0 + $0x58] sm:$0xff]
  %v29 = vld [vmem:[%s0 + $0x60] sm:$0xff]
  %v30 = vld [vmem:[%s0 + $0x68] sm:$0xff]
  %v31 = vld [vmem:[%s0 + $0x70] sm:$0xff]
  %v32 = vld [vmem:[%s0 + $0x78] sm:$0xff]
  %v33 = vld [vmem:[%s1] sm:$0xff]
  %v34 = vld [vmem:[%s1 + $0x8] sm:$0xff]
  %v35 = vld [vmem:[%s1 + $0x10] sm:$0xff]
  %v36 = vld [vmem:[%s1 + $0x18] sm:$0xff]
  %v37 = vld [vmem:[%s1 + $0x20] sm:$0xff]
  %v38 = vld [vmem:[%s1 + $0x28] sm:$0xff]
  %v39 = vld [vmem:[%s1 + $0x30] sm:$0xff]
  %v40 = vld [vmem:[%s1 + $0x38] sm:$0xff]
  %v41 = vld [vmem:[%s1 + $0x40] sm:$0xff]
  %v42 = vld [vmem:[%s1 + $0x48] sm:$0xff]
  %v43 = vld [vmem:[%s1 + $0x50] sm:$0xff]
  %v44 = vld [vmem:[%s1 + $0x58] sm:$0xff]
  %v45 = vld [vmem:[%s1 + $0x60] sm:$0xff]
  %v46 = vld [vmem:[%s1 + $0x68] sm:$0xff]
  %v47 = vld [vmem:[%s1 + $0x70] sm:$0xff]
  %v48 = vld [vmem:[%s1 + $0x78] sm:$0xff]
  %v49 = vld [vmem:[%s2] sm:$0x1]
  %v51 = vlaneseq
  %v52 = vshrl.u32 %v51, 7
  %v53 = vsub.s32 0, %v52
  %v54 = vrot.slane %v49, %v53
  %56 = vmatprep.subr.mxu0 0.0
  %57 = vmatpush1.msra.mxu0 %v48
  %58 = vmatprep.subr.mxu0 0.0
  %59 = vmatpush1.msra.mxu0 %v47
  %60 = vmatprep.subr.mxu0 0.0
  %61 = vmatpush1.msra.mxu0 %v46
  %62 = vmatprep.subr.mxu0 0.0
  %63 = vmatpush1.msra.mxu0 %v45
  %64 = vmatprep.subr.mxu0 0.0
  %65 = vmatpush1.msra.mxu0 %v44
  %66 = vmatprep.subr.mxu0 0.0
  %67 = vmatpush1.msra.mxu0 %v43
  %68 = vmatprep.subr.mxu0 0.0
  %69 = vmatpush1.msra.mxu0 %v42
  %70 = vmatprep.subr.mxu0 0.0
  %71 = vmatpush1.msra.mxu0 %v41
  %72 = vmatprep.subr.mxu0 0.0
  %73 = vmatpush1.msra.mxu0 %v40
  %74 = vmatprep.subr.mxu0 0.0
  %75 = vmatpush1.msra.mxu0 %v39
  %76 = vmatprep.subr.mxu0 0.0
  %77 = vmatpush1.msra.mxu0 %v38
  %78 = vmatprep.subr.mxu0 0.0
  %79 = vmatpush1.msra.mxu0 %v37
  %80 = vmatprep.subr.mxu0 0.0
  %81 = vmatpush1.msra.mxu0 %v36
  %82 = vmatprep.subr.mxu0 0.0
  %83 = vmatpush1.msra.mxu0 %v35
  %84 = vmatprep.subr.mxu0 0.0
  %85 = vmatpush1.msra.mxu0 %v34
  %86 = vmatprep.subr.mxu0 0.0
  %87 = vmatpush1.msra.mxu0 %v33
  %88 = vmatprep.subr.mxu0 0.0
  %89 = vmatpush2.msra.mxu0 0.0
  %90 = vmatprep.subr.mxu0 0.0
  %91 = vmatpush2.msra.mxu0 0.0
  %92 = vmatprep.subr.mxu0 0.0
  %93 = vmatpush2.msra.mxu0 0.0
  %94 = vmatprep.subr.mxu0 0.0
  %95 = vmatpush2.msra.mxu0 0.0
  %96 = vmatprep.subr.mxu0 0.0
  %97 = vmatpush2.msra.mxu0 0.0
  %98 = vmatprep.subr.mxu0 0.0
  %99 = vmatpush2.msra.mxu0 0.0
  %100 = vmatprep.subr.mxu0 0.0
  %101 = vmatpush2.msra.mxu0 0.0
  %102 = vmatprep.subr.mxu0 0.0
  %103 = vmatpush2.msra.mxu0 0.0
  %104 = vmatprep.subr.mxu0 0.0
  %105 = vmatpush2.msra.mxu0 0.0
  %106 = vmatprep.subr.mxu0 0.0
  %107 = vmatpush2.msra.mxu0 0.0
  %108 = vmatprep.subr.mxu0 0.0
  %109 = vmatpush2.msra.mxu0 0.0
  %110 = vmatprep.subr.mxu0 0.0
  %111 = vmatpush2.msra.mxu0 0.0
  %112 = vmatprep.subr.mxu0 0.0
  %113 = vmatpush2.msra.mxu0 0.0
  %114 = vmatprep.subr.mxu0 0.0
  %115 = vmatpush2.msra.mxu0 0.0
  %116 = vmatprep.subr.mxu0 0.0
  %117 = vmatpush2.msra.mxu0 0.0
  %118 = vmatprep.subr.mxu0 0.0
  %119 = vmatpush2.msra.mxu0 0.0
  %120 = vmatprep.mubr.f32.mxu0 0.0
  %121 = vmatmul.mubr.f32.gmra.mxu0 %v17
  %v122 = vpop.f32.mrf.mxu0
  %v123 = vadd.f32 %v54, %v122
  %v124 = vpop.f32.mrf.mxu0
  %125 = vmatprep.mubr.f32.mxu0 0.0
  %126 = vmatmul.mubr.f32.gmra.mxu0 %v18
  %v127 = vpop.f32.mrf.mxu0
  %v128 = vadd.f32 %v54, %v127
  %v129 = vpop.f32.mrf.mxu0
  %130 = vmatprep.mubr.f32.mxu0 0.0
  %131 = vmatmul.mubr.f32.gmra.mxu0 %v19
  %v132 = vpop.f32.mrf.mxu0
  %v133 = vadd.f32 %v54, %v132
  %v134 = vpop.f32.mrf.mxu0
  %135 = vmatprep.mubr.f32.mxu0 0.0
  %136 = vmatmul.mubr.f32.gmra.mxu0 %v20
  %v137 = vpop.f32.mrf.mxu0
  %v138 = vadd.f32 %v54, %v137
  %v139 = vpop.f32.mrf.mxu0
  %140 = vmatprep.mubr.f32.mxu0 0.0
  %141 = vmatmul.mubr.f32.gmra.mxu0 %v21
  %v142 = vpop.f32.mrf.mxu0
  %v143 = vadd.f32 %v54, %v142
  %v144 = vpop.f32.mrf.mxu0
  %145 = vmatprep.mubr.f32.mxu0 0.0
  %146 = vmatmul.mubr.f32.gmra.mxu0 %v22
  %v147 = vpop.f32.mrf.mxu0
  %v148 = vadd.f32 %v54, %v147
  %v149 = vpop.f32.mrf.mxu0
  %150 = vmatprep.mubr.f32.mxu0 0.0
  %151 = vmatmul.mubr.f32.gmra.mxu0 %v23
  %v152 = vpop.f32.mrf.mxu0
  %v153 = vadd.f32 %v54, %v152
  %v154 = vpop.f32.mrf.mxu0
  %155 = vmatprep.mubr.f32.mxu0 0.0
  %156 = vmatmul.mubr.f32.gmra.mxu0 %v24
  %v157 = vpop.f32.mrf.mxu0
  %v158 = vadd.f32 %v54, %v157
  %v159 = vpop.f32.mrf.mxu0
  %160 = vmatprep.mubr.f32.mxu0 0.0
  %161 = vmatmul.mubr.f32.gmra.mxu0 %v25
  %v162 = vpop.f32.mrf.mxu0
  %v163 = vadd.f32 %v54, %v162
  %v164 = vpop.f32.mrf.mxu0
  %165 = vmatprep.mubr.f32.mxu0 0.0
  %166 = vmatmul.mubr.f32.gmra.mxu0 %v26
  %v167 = vpop.f32.mrf.mxu0
  %v168 = vadd.f32 %v54, %v167
  %v169 = vpop.f32.mrf.mxu0
  %170 = vmatprep.mubr.f32.mxu0 0.0
  %171 = vmatmul.mubr.f32.gmra.mxu0 %v27
  %v172 = vpop.f32.mrf.mxu0
  %v173 = vadd.f32 %v54, %v172
  %v174 = vpop.f32.mrf.mxu0
  %175 = vmatprep.mubr.f32.mxu0 0.0
  %176 = vmatmul.mubr.f32.gmra.mxu0 %v28
  %v177 = vpop.f32.mrf.mxu0
  %v178 = vadd.f32 %v54, %v177
  %v179 = vpop.f32.mrf.mxu0
  %180 = vmatprep.mubr.f32.mxu0 0.0
  %181 = vmatmul.mubr.f32.gmra.mxu0 %v29
  %v182 = vpop.f32.mrf.mxu0
  %v183 = vadd.f32 %v54, %v182
  %v184 = vpop.f32.mrf.mxu0
  %185 = vmatprep.mubr.f32.mxu0 0.0
  %186 = vmatmul.mubr.f32.gmra.mxu0 %v30
  %v187 = vpop.f32.mrf.mxu0
  %v188 = vadd.f32 %v54, %v187
  %v189 = vpop.f32.mrf.mxu0
  %190 = vmatprep.mubr.f32.mxu0 0.0
  %191 = vmatmul.mubr.f32.gmra.mxu0 %v31
  %v192 = vpop.f32.mrf.mxu0
  %v193 = vadd.f32 %v54, %v192
  %v194 = vpop.f32.mrf.mxu0
  %195 = vmatprep.mubr.f32.mxu0 0.0
  %196 = vmatmul.mubr.f32.gmra.mxu0 %v32
  %v197 = vpop.f32.mrf.mxu0
  %v198 = vadd.f32 %v54, %v197
  %v199 = vpop.f32.mrf.mxu0
  %200 = vdwg.mxu0
  %v201 = vld [vmem:[%s3] sm:$0xff]
  %v202 = vld [vmem:[%s3 + $0x8] sm:$0xff]
  %v203 = vld [vmem:[%s3 + $0x10] sm:$0xff]
  %v204 = vld [vmem:[%s3 + $0x18] sm:$0xff]
  %v205 = vld [vmem:[%s3 + $0x20] sm:$0xff]
  %v206 = vld [vmem:[%s3 + $0x28] sm:$0xff]
  %v207 = vld [vmem:[%s3 + $0x30] sm:$0xff]
  %v208 = vld [vmem:[%s3 + $0x38] sm:$0xff]
  %v209 = vld [vmem:[%s3 + $0x40] sm:$0xff]
  %v210 = vld [vmem:[%s3 + $0x48] sm:$0xff]
  %v211 = vld [vmem:[%s3 + $0x50] sm:$0xff]
  %v212 = vld [vmem:[%s3 + $0x58] sm:$0xff]
  %v213 = vld [vmem:[%s3 + $0x60] sm:$0xff]
  %v214 = vld [vmem:[%s3 + $0x68] sm:$0xff]
  %v215 = vld [vmem:[%s3 + $0x70] sm:$0xff]
  %v216 = vld [vmem:[%s3 + $0x78] sm:$0xff]
  %v217 = vadd.f32 %v123, %v201
  %v218 = vadd.f32 %v128, %v202
  %v219 = vadd.f32 %v133, %v203
  %v220 = vadd.f32 %v138, %v204
  %v221 = vadd.f32 %v143, %v205
  %v222 = vadd.f32 %v148, %v206
  %v223 = vadd.f32 %v153, %v207
  %v224 = vadd.f32 %v158, %v208
  %v225 = vadd.f32 %v163, %v209
  %v226 = vadd.f32 %v168, %v210
  %v227 = vadd.f32 %v173, %v211
  %v228 = vadd.f32 %v178, %v212
  %v229 = vadd.f32 %v183, %v213
  %v230 = vadd.f32 %v188, %v214
  %v231 = vadd.f32 %v193, %v215
  %v232 = vadd.f32 %v198, %v216
  %v233 = vmax.f32 %v217, 0.0
  %v234 = vmax.f32 %v218, 0.0
  %v235 = vmax.f32 %v219, 0.0
  %v236 = vmax.f32 %v220, 0.0
  %v237 = vmax.f32 %v221, 0.0
  %v238 = vmax.f32 %v222, 0.0
  %v239 = vmax.f32 %v223, 0.0
  %v240 = vmax.f32 %v224, 0.0
  %v241 = vmax.f32 %v225, 0.0
  %v242 = vmax.f32 %v226, 0.0
  %v243 = vmax.f32 %v227, 0.0
  %v244 = vmax.f32 %v228, 0.0
  %v245 = vmax.f32 %v229, 0.0
  %v246 = vmax.f32 %v230, 0.0
  %v247 = vmax.f32 %v231, 0.0
  %v248 = vmax.f32 %v232, 0.0
  %249 = vst [vmem:[%s4] sm:$0xff] %v233
  %250 = vst [vmem:[%s4 + $0x8] sm:$0xff] %v234
  %251 = vst [vmem:[%s4 + $0x10] sm:$0xff] %v235
  %252 = vst [vmem:[%s4 + $0x18] sm:$0xff] %v236
  %253 = vst [vmem:[%s4 + $0x20] sm:$0xff] %v237
  %254 = vst [vmem:[%s4 + $0x28] sm:$0xff] %v238
  %255 = vst [vmem:[%s4 + $0x30] sm:$0xff] %v239
  %256 = vst [vmem:[%s4 + $0x38] sm:$0xff] %v240
  %257 = vst [vmem:[%s4 + $0x40] sm:$0xff] %v241
  %258 = vst [vmem:[%s4 + $0x48] sm:$0xff] %v242
  %259 = vst [vmem:[%s4 + $0x50] sm:$0xff] %v243
  %260 = vst [vmem:[%s4 + $0x58] sm:$0xff] %v244
  %261 = vst [vmem:[%s4 + $0x60] sm:$0xff] %v245
  %262 = vst [vmem:[%s4 + $0x68] sm:$0xff] %v246
  %263 = vst [vmem:[%s4 + $0x70] sm:$0xff] %v247
  %264 = vst [vmem:[%s4 + $0x78] sm:$0xff] %v248
  // Predicated region
  $region18: #{_forward_impl.59} parent=0 // pred_check
    _
  $region19: #{_forward_impl.59} parent=0 // pred_check_branch
    %266 = sbr.rel (0) target = $region21
  $region20: #{_forward_impl.59} parent=0 // pred_region
    _
  $region21: #{_forward_impl.59} parent=0 // pred_fallthru
    _
  // Predicated region
  $region22: #{_forward_impl.59} parent=0 // pred_check
    _
  $region23: #{_forward_impl.59} parent=0 // pred_check_branch
    %268 = sbr.rel (0) target = $region25
  $region24: #{_forward_impl.59} parent=0 // pred_region
    _
  $region25: #{_forward_impl.59} parent=0 // pred_fallthru
    _

// kernel: _forward_impl.68
$region0: #{_forward_impl.68}
  #allocation0 [shape = 'u32[]', space=smem, size = 0x4, offset = 0x4, fixed_abs, tag = 'smem constant byte address 0x4 - core index']
  #allocation1 [shape = 'u32[144,128]{1,0:T(1,128)}', space=vmem, size = 0x12000, scoped, tag = 'internal scratch']
  %s0 = inlined_call_operand.vmem [shape: f32[32,128], index: 0, kind: input, shape index: {}]
  %s1 = inlined_call_operand.vmem [shape: f32[128,128], index: 1, kind: input, shape index: {}]
  %s2 = inlined_call_operand.vmem [shape: f32[1,128], index: 2, kind: input, shape index: {}]
  %s3 = inlined_call_operand.vmem [shape: f32[32,128], index: 3, kind: output, shape index: {}]
  %s4 = sld [smem:[#allocation0]]
  $region22: #{_forward_impl.68} parent=0
    _
  %s6 = ssub.s32 1, %s4
  %s7 = scalar_select 0, %s6, %s4
  // Predicated region
  $region2: #{_forward_impl.68} parent=0 // pred_check
    _
  $region3: #{_forward_impl.68} parent=0 // pred_check_branch
    %9 = sbr.rel (0) target = $region5
  $region4: #{_forward_impl.68} parent=0 // pred_region
    _
  $region5: #{_forward_impl.68} parent=0 // pred_fallthru
    _
  // Predicated region
  $region6: #{_forward_impl.68} parent=0 // pred_check
    _
  $region7: #{_forward_impl.68} parent=0 // pred_check_branch
    %11 = sbr.rel (0) target = $region9
  $region8: #{_forward_impl.68} parent=0 // pred_region
    _
  $region9: #{_forward_impl.68} parent=0 // pred_fallthru
    _
  // Predicated region
  $region10: #{_forward_impl.68} parent=0 // pred_check
    _
  $region11: #{_forward_impl.68} parent=0 // pred_check_branch
    %13 = sbr.rel (0) target = $region13
  $region12: #{_forward_impl.68} parent=0 // pred_region
    _
  $region13: #{_forward_impl.68} parent=0 // pred_fallthru
    _
  %v14 = vld [vmem:[%s0] sm:$0xff]
  %v15 = vld [vmem:[%s0 + $0x8] sm:$0xff]
  %v16 = vld [vmem:[%s0 + $0x10] sm:$0xff]
  %v17 = vld [vmem:[%s0 + $0x18] sm:$0xff]
  %v18 = vld [vmem:[%s1] sm:$0xff]
  %v19 = vld [vmem:[%s1 + $0x8] sm:$0xff]
  %v20 = vld [vmem:[%s1 + $0x10] sm:$0xff]
  %v21 = vld [vmem:[%s1 + $0x18] sm:$0xff]
  %v22 = vld [vmem:[%s1 + $0x20] sm:$0xff]
  %v23 = vld [vmem:[%s1 + $0x28] sm:$0xff]
  %v24 = vld [vmem:[%s1 + $0x30] sm:$0xff]
  %v25 = vld [vmem:[%s1 + $0x38] sm:$0xff]
  %v26 = vld [vmem:[%s1 + $0x40] sm:$0xff]
  %v27 = vld [vmem:[%s1 + $0x48] sm:$0xff]
  %v28 = vld [vmem:[%s1 + $0x50] sm:$0xff]
  %v29 = vld [vmem:[%s1 + $0x58] sm:$0xff]
  %v30 = vld [vmem:[%s1 + $0x60] sm:$0xff]
  %v31 = vld [vmem:[%s1 + $0x68] sm:$0xff]
  %v32 = vld [vmem:[%s1 + $0x70] sm:$0xff]
  %v33 = vld [vmem:[%s1 + $0x78] sm:$0xff]
  %v34 = vld [vmem:[%s2] sm:$0x1]
  %v36 = vlaneseq
  %v37 = vshrl.u32 %v36, 7
  %v38 = vsub.s32 0, %v37
  %v39 = vrot.slane %v34, %v38
  %41 = vmatprep.subr.mxu0 0.0
  %42 = vmatpush1.msra.mxu0 %v33
  %43 = vmatprep.subr.mxu0 0.0
  %44 = vmatpush1.msra.mxu0 %v32
  %45 = vmatprep.subr.mxu0 0.0
  %46 = vmatpush1.msra.mxu0 %v31
  %47 = vmatprep.subr.mxu0 0.0
  %48 = vmatpush1.msra.mxu0 %v30
  %49 = vmatprep.subr.mxu0 0.0
  %50 = vmatpush1.msra.mxu0 %v29
  %51 = vmatprep.subr.mxu0 0.0
  %52 = vmatpush1.msra.mxu0 %v28
  %53 = vmatprep.subr.mxu0 0.0
  %54 = vmatpush1.msra.mxu0 %v27
  %55 = vmatprep.subr.mxu0 0.0
  %56 = vmatpush1.msra.mxu0 %v26
  %57 = vmatprep.subr.mxu0 0.0
  %58 = vmatpush1.msra.mxu0 %v25
  %59 = vmatprep.subr.mxu0 0.0
  %60 = vmatpush1.msra.mxu0 %v24
  %61 = vmatprep.subr.mxu0 0.0
  %62 = vmatpush1.msra.mxu0 %v23
  %63 = vmatprep.subr.mxu0 0.0
  %64 = vmatpush1.msra.mxu0 %v22
  %65 = vmatprep.subr.mxu0 0.0
  %66 = vmatpush1.msra.mxu0 %v21
  %67 = vmatprep.subr.mxu0 0.0
  %68 = vmatpush1.msra.mxu0 %v20
  %69 = vmatprep.subr.mxu0 0.0
  %70 = vmatpush1.msra.mxu0 %v19
  %71 = vmatprep.subr.mxu0 0.0
  %72 = vmatpush1.msra.mxu0 %v18
  %73 = vmatprep.subr.mxu0 0.0
  %74 = vmatpush2.msra.mxu0 0.0
  %75 = vmatprep.subr.mxu0 0.0
  %76 = vmatpush2.msra.mxu0 0.0
  %77 = vmatprep.subr.mxu0 0.0
  %78 = vmatpush2.msra.mxu0 0.0
  %79 = vmatprep.subr.mxu0 0.0
  %80 = vmatpush2.msra.mxu0 0.0
  %81 = vmatprep.subr.mxu0 0.0
  %82 = vmatpush2.msra.mxu0 0.0
  %83 = vmatprep.subr.mxu0 0.0
  %84 = vmatpush2.msra.mxu0 0.0
  %85 = vmatprep.subr.mxu0 0.0
  %86 = vmatpush2.msra.mxu0 0.0
  %87 = vmatprep.subr.mxu0 0.0
  %88 = vmatpush2.msra.mxu0 0.0
  %89 = vmatprep.subr.mxu0 0.0
  %90 = vmatpush2.msra.mxu0 0.0
  %91 = vmatprep.subr.mxu0 0.0
  %92 = vmatpush2.msra.mxu0 0.0
  %93 = vmatprep.subr.mxu0 0.0
  %94 = vmatpush2.msra.mxu0 0.0
  %95 = vmatprep.subr.mxu0 0.0
  %96 = vmatpush2.msra.mxu0 0.0
  %97 = vmatprep.subr.mxu0 0.0
  %98 = vmatpush2.msra.mxu0 0.0
  %99 = vmatprep.subr.mxu0 0.0
  %100 = vmatpush2.msra.mxu0 0.0
  %101 = vmatprep.subr.mxu0 0.0
  %102 = vmatpush2.msra.mxu0 0.0
  %103 = vmatprep.subr.mxu0 0.0
  %104 = vmatpush2.msra.mxu0 0.0
  %105 = vmatprep.mubr.f32.mxu0 0.0
  %106 = vmatmul.mubr.f32.gmra.mxu0 %v14
  %v107 = vpop.f32.mrf.mxu0
  %v108 = vadd.f32 %v39, %v107
  %v109 = vpop.f32.mrf.mxu0
  %110 = vmatprep.mubr.f32.mxu0 0.0
  %111 = vmatmul.mubr.f32.gmra.mxu0 %v15
  %v112 = vpop.f32.mrf.mxu0
  %v113 = vadd.f32 %v39, %v112
  %v114 = vpop.f32.mrf.mxu0
  %115 = vmatprep.mubr.f32.mxu0 0.0
  %116 = vmatmul.mubr.f32.gmra.mxu0 %v16
  %v117 = vpop.f32.mrf.mxu0
  %v118 = vadd.f32 %v39, %v117
  %v119 = vpop.f32.mrf.mxu0
  %120 = vmatprep.mubr.f32.mxu0 0.0
  %121 = vmatmul.mubr.f32.gmra.mxu0 %v17
  %v122 = vpop.f32.mrf.mxu0
  %v123 = vadd.f32 %v39, %v122
  %v124 = vpop.f32.mrf.mxu0
  %125 = vdwg.mxu0
  %126 = vst [vmem:[%s3] sm:$0xff] %v108
  %127 = vst [vmem:[%s3 + $0x8] sm:$0xff] %v113
  %128 = vst [vmem:[%s3 + $0x10] sm:$0xff] %v118
  %129 = vst [vmem:[%s3 + $0x18] sm:$0xff] %v123
  // Predicated region
  $region14: #{_forward_impl.68} parent=0 // pred_check
    _
  $region15: #{_forward_impl.68} parent=0 // pred_check_branch
    %131 = sbr.rel (0) target = $region17
  $region16: #{_forward_impl.68} parent=0 // pred_region
    _
  $region17: #{_forward_impl.68} parent=0 // pred_fallthru
    _
  // Predicated region
  $region18: #{_forward_impl.68} parent=0 // pred_check
    _
  $region19: #{_forward_impl.68} parent=0 // pred_check_branch
    %133 = sbr.rel (0) target = $region21
  $region20: #{_forward_impl.68} parent=0 // pred_region
    _
  $region21: #{_forward_impl.68} parent=0 // pred_fallthru
    _

// kernel: _forward_impl.67
$region0: #{_forward_impl.67}
  #allocation0 [shape = 'u32[]', space=smem, size = 0x4, offset = 0x4, fixed_abs, tag = 'smem constant byte address 0x4 - core index']
  #allocation1 [shape = 'u32[144,128]{1,0:T(1,128)}', space=vmem, size = 0x12000, scoped, tag = 'internal scratch']
  %s0 = inlined_call_operand.vmem [shape: f32[32,384], index: 0, kind: input, shape index: {}]
  %s1 = inlined_call_operand.vmem [shape: f32[384,128], index: 1, kind: input, shape index: {}]
  %s2 = inlined_call_operand.vmem [shape: f32[1,128], index: 2, kind: input, shape index: {}]
  %s3 = inlined_call_operand.vmem [shape: f32[32,128], index: 3, kind: output, shape index: {}]
  %s4 = sld [smem:[#allocation0]]
  $region22: #{_forward_impl.67} parent=0
    _
  %s6 = ssub.s32 1, %s4
  %s7 = scalar_select 0, %s6, %s4
  // Predicated region
  $region2: #{_forward_impl.67} parent=0 // pred_check
    _
  $region3: #{_forward_impl.67} parent=0 // pred_check_branch
    %9 = sbr.rel (0) target = $region5
  $region4: #{_forward_impl.67} parent=0 // pred_region
    _
  $region5: #{_forward_impl.67} parent=0 // pred_fallthru
    _
  // Predicated region
  $region6: #{_forward_impl.67} parent=0 // pred_check
    _
  $region7: #{_forward_impl.67} parent=0 // pred_check_branch
    %11 = sbr.rel (0) target = $region9
  $region8: #{_forward_impl.67} parent=0 // pred_region
    _
  $region9: #{_forward_impl.67} parent=0 // pred_fallthru
    _
  // Predicated region
  $region10: #{_forward_impl.67} parent=0 // pred_check
    _
  $region11: #{_forward_impl.67} parent=0 // pred_check_branch
    %13 = sbr.rel (0) target = $region13
  $region12: #{_forward_impl.67} parent=0 // pred_region
    _
  $region13: #{_forward_impl.67} parent=0 // pred_fallthru
    _
  %v14 = vld [vmem:[%s0] sm:$0xff]
  %v15 = vld [vmem:[%s0 + $0x8] sm:$0xff]
  %v16 = vld [vmem:[%s0 + $0x10] sm:$0xff]
  %v17 = vld [vmem:[%s0 + $0x18] sm:$0xff]
  %v18 = vld [vmem:[%s0 + $0x20] sm:$0xff]
  %v19 = vld [vmem:[%s0 + $0x28] sm:$0xff]
  %v20 = vld [vmem:[%s0 + $0x30] sm:$0xff]
  %v21 = vld [vmem:[%s0 + $0x38] sm:$0xff]
  %v22 = vld [vmem:[%s0 + $0x40] sm:$0xff]
  %v23 = vld [vmem:[%s0 + $0x48] sm:$0xff]
  %v24 = vld [vmem:[%s0 + $0x50] sm:$0xff]
  %v25 = vld [vmem:[%s0 + $0x58] sm:$0xff]
  %v26 = vld [vmem:[%s1] sm:$0xff]
  %v27 = vld [vmem:[%s1 + $0x8] sm:$0xff]
  %v28 = vld [vmem:[%s1 + $0x10] sm:$0xff]
  %v29 = vld [vmem:[%s1 + $0x18] sm:$0xff]
  %v30 = vld [vmem:[%s1 + $0x20] sm:$0xff]
  %v31 = vld [vmem:[%s1 + $0x28] sm:$0xff]
  %v32 = vld [vmem:[%s1 + $0x30] sm:$0xff]
  %v33 = vld [vmem:[%s1 + $0x38] sm:$0xff]
  %v34 = vld [vmem:[%s1 + $0x40] sm:$0xff]
  %v35 = vld [vmem:[%s1 + $0x48] sm:$0xff]
  %v36 = vld [vmem:[%s1 + $0x50] sm:$0xff]
  %v37 = vld [vmem:[%s1 + $0x58] sm:$0xff]
  %v38 = vld [vmem:[%s1 + $0x60] sm:$0xff]
  %v39 = vld [vmem:[%s1 + $0x68] sm:$0xff]
  %v40 = vld [vmem:[%s1 + $0x70] sm:$0xff]
  %v41 = vld [vmem:[%s1 + $0x78] sm:$0xff]
  %v42 = vld [vmem:[%s1 + $0x80] sm:$0xff]
  %v43 = vld [vmem:[%s1 + $0x88] sm:$0xff]
  %v44 = vld [vmem:[%s1 + $0x90] sm:$0xff]
  %v45 = vld [vmem:[%s1 + $0x98] sm:$0xff]
  %v46 = vld [vmem:[%s1 + $0xa0] sm:$0xff]
  %v47 = vld [vmem:[%s1 + $0xa8] sm:$0xff]
  %v48 = vld [vmem:[%s1 + $0xb0] sm:$0xff]
  %v49 = vld [vmem:[%s1 + $0xb8] sm:$0xff]
  %v50 = vld [vmem:[%s1 + $0xc0] sm:$0xff]
  %v51 = vld [vmem:[%s1 + $0xc8] sm:$0xff]
  %v52 = vld [vmem:[%s1 + $0xd0] sm:$0xff]
  %v53 = vld [vmem:[%s1 + $0xd8] sm:$0xff]
  %v54 = vld [vmem:[%s1 + $0xe0] sm:$0xff]
  %v55 = vld [vmem:[%s1 + $0xe8] sm:$0xff]
  %v56 = vld [vmem:[%s1 + $0xf0] sm:$0xff]
  %v57 = vld [vmem:[%s1 + $0xf8] sm:$0xff]
  %v58 = vld [vmem:[%s1 + $0x100] sm:$0xff]
  %v59 = vld [vmem:[%s1 + $0x108] sm:$0xff]
  %v60 = vld [vmem:[%s1 + $0x110] sm:$0xff]
  %v61 = vld [vmem:[%s1 + $0x118] sm:$0xff]
  %v62 = vld [vmem:[%s1 + $0x120] sm:$0xff]
  %v63 = vld [vmem:[%s1 + $0x128] sm:$0xff]
  %v64 = vld [vmem:[%s1 + $0x130] sm:$0xff]
  %v65 = vld [vmem:[%s1 + $0x138] sm:$0xff]
  %v66 = vld [vmem:[%s1 + $0x140] sm:$0xff]
  %v67 = vld [vmem:[%s1 + $0x148] sm:$0xff]
  %v68 = vld [vmem:[%s1 + $0x150] sm:$0xff]
  %v69 = vld [vmem:[%s1 + $0x158] sm:$0xff]
  %v70 = vld [vmem:[%s1 + $0x160] sm:$0xff]
  %v71 = vld [vmem:[%s1 + $0x168] sm:$0xff]
  %v72 = vld [vmem:[%s1 + $0x170] sm:$0xff]
  %v73 = vld [vmem:[%s1 + $0x178] sm:$0xff]
  %v74 = vld [vmem:[%s2] sm:$0x1]
  %v76 = vlaneseq
  %v77 = vshrl.u32 %v76, 7
  %v78 = vsub.s32 0, %v77
  %v79 = vrot.slane %v74, %v78
  %81 = vmatprep.subr.mxu0 0.0
  %82 = vmatpush1.msra.mxu0 %v41
  %83 = vmatprep.subr.mxu0 0.0
  %84 = vmatpush1.msra.mxu0 %v40
  %85 = vmatprep.subr.mxu0 0.0
  %86 = vmatpush1.msra.mxu0 %v39
  %87 = vmatprep.subr.mxu0 0.0
  %88 = vmatpush1.msra.mxu0 %v38
  %89 = vmatprep.subr.mxu0 0.0
  %90 = vmatpush1.msra.mxu0 %v37
  %91 = vmatprep.subr.mxu0 0.0
  %92 = vmatpush1.msra.mxu0 %v36
  %93 = vmatprep.subr.mxu0 0.0
  %94 = vmatpush1.msra.mxu0 %v35
  %95 = vmatprep.subr.mxu0 0.0
  %96 = vmatpush1.msra.mxu0 %v34
  %97 = vmatprep.subr.mxu0 0.0
  %98 = vmatpush1.msra.mxu0 %v33
  %99 = vmatprep.subr.mxu0 0.0
  %100 = vmatpush1.msra.mxu0 %v32
  %101 = vmatprep.subr.mxu0 0.0
  %102 = vmatpush1.msra.mxu0 %v31
  %103 = vmatprep.subr.mxu0 0.0
  %104 = vmatpush1.msra.mxu0 %v30
  %105 = vmatprep.subr.mxu0 0.0
  %106 = vmatpush1.msra.mxu0 %v29
  %107 = vmatprep.subr.mxu0 0.0
  %108 = vmatpush1.msra.mxu0 %v28
  %109 = vmatprep.subr.mxu0 0.0
  %110 = vmatpush1.msra.mxu0 %v27
  %111 = vmatprep.subr.mxu0 0.0
  %112 = vmatpush1.msra.mxu0 %v26
  %113 = vmatprep.subr.mxu0 0.0
  %114 = vmatpush2.msra.mxu0 %v57
  %115 = vmatprep.subr.mxu0 0.0
  %116 = vmatpush2.msra.mxu0 %v56
  %117 = vmatprep.subr.mxu0 0.0
  %118 = vmatpush2.msra.mxu0 %v55
  %119 = vmatprep.subr.mxu0 0.0
  %120 = vmatpush2.msra.mxu0 %v54
  %121 = vmatprep.subr.mxu0 0.0
  %122 = vmatpush2.msra.mxu0 %v53
  %123 = vmatprep.subr.mxu0 0.0
  %124 = vmatpush2.msra.mxu0 %v52
  %125 = vmatprep.subr.mxu0 0.0
  %126 = vmatpush2.msra.mxu0 %v51
  %127 = vmatprep.subr.mxu0 0.0
  %128 = vmatpush2.msra.mxu0 %v50
  %129 = vmatprep.subr.mxu0 0.0
  %130 = vmatpush2.msra.mxu0 %v49
  %131 = vmatprep.subr.mxu0 0.0
  %132 = vmatpush2.msra.mxu0 %v48
  %133 = vmatprep.subr.mxu0 0.0
  %134 = vmatpush2.msra.mxu0 %v47
  %135 = vmatprep.subr.mxu0 0.0
  %136 = vmatpush2.msra.mxu0 %v46
  %137 = vmatprep.subr.mxu0 0.0
  %138 = vmatpush2.msra.mxu0 %v45
  %139 = vmatprep.subr.mxu0 0.0
  %140 = vmatpush2.msra.mxu0 %v44
  %141 = vmatprep.subr.mxu0 0.0
  %142 = vmatpush2.msra.mxu0 %v43
  %143 = vmatprep.subr.mxu0 0.0
  %144 = vmatpush2.msra.mxu0 %v42
  %145 = vmatprep.mubr.f32.mxu0 %v15
  %146 = vmatmul.mubr.f32.gmra.mxu0 %v14
  %v147 = vpop.f32.mrf.mxu0
  %v148 = vadd.f32 %v79, %v147
  %v149 = vpop.f32.mrf.mxu0
  %150 = vmatprep.mubr.f32.mxu0 %v18
  %151 = vmatmul.mubr.f32.gmra.mxu0 %v17
  %v152 = vpop.f32.mrf.mxu0
  %v153 = vadd.f32 %v79, %v152
  %v154 = vpop.f32.mrf.mxu0
  %155 = vmatprep.mubr.f32.mxu0 %v21
  %156 = vmatmul.mubr.f32.gmra.mxu0 %v20
  %v157 = vpop.f32.mrf.mxu0
  %v158 = vadd.f32 %v79, %v157
  %v159 = vpop.f32.mrf.mxu0
  %160 = vmatprep.mubr.f32.mxu0 %v24
  %161 = vmatmul.mubr.f32.gmra.mxu0 %v23
  %v162 = vpop.f32.mrf.mxu0
  %v163 = vadd.f32 %v79, %v162
  %v164 = vpop.f32.mrf.mxu0
  %165 = vdwg.mxu0
  %166 = vmatprep.subr.mxu0 0.0
  %167 = vmatpush1.msra.mxu0 %v73
  %168 = vmatprep.subr.mxu0 0.0
  %169 = vmatpush1.msra.mxu0 %v72
  %170 = vmatprep.subr.mxu0 0.0
  %171 = vmatpush1.msra.mxu0 %v71
  %172 = vmatprep.subr.mxu0 0.0
  %173 = vmatpush1.msra.mxu0 %v70
  %174 = vmatprep.subr.mxu0 0.0
  %175 = vmatpush1.msra.mxu0 %v69
  %176 = vmatprep.subr.mxu0 0.0
  %177 = vmatpush1.msra.mxu0 %v68
  %178 = vmatprep.subr.mxu0 0.0
  %179 = vmatpush1.msra.mxu0 %v67
  %180 = vmatprep.subr.mxu0 0.0
  %181 = vmatpush1.msra.mxu0 %v66
  %182 = vmatprep.subr.mxu0 0.0
  %183 = vmatpush1.msra.mxu0 %v65
  %184 = vmatprep.subr.mxu0 0.0
  %185 = vmatpush1.msra.mxu0 %v64
  %186 = vmatprep.subr.mxu0 0.0
  %187 = vmatpush1.msra.mxu0 %v63
  %188 = vmatprep.subr.mxu0 0.0
  %189 = vmatpush1.msra.mxu0 %v62
  %190 = vmatprep.subr.mxu0 0.0
  %191 = vmatpush1.msra.mxu0 %v61
  %192 = vmatprep.subr.mxu0 0.0
  %193 = vmatpush1.msra.mxu0 %v60
  %194 = vmatprep.subr.mxu0 0.0
  %195 = vmatpush1.msra.mxu0 %v59
  %196 = vmatprep.subr.mxu0 0.0
  %197 = vmatpush1.msra.mxu0 %v58
  %198 = vmatprep.subr.mxu0 0.0
  %199 = vmatpush2.msra.mxu0 0.0
  %200 = vmatprep.subr.mxu0 0.0
  %201 = vmatpush2.msra.mxu0 0.0
  %202 = vmatprep.subr.mxu0 0.0
  %203 = vmatpush2.msra.mxu0 0.0
  %204 = vmatprep.subr.mxu0 0.0
  %205 = vmatpush2.msra.mxu0 0.0
  %206 = vmatprep.subr.mxu0 0.0
  %207 = vmatpush2.msra.mxu0 0.0
  %208 = vmatprep.subr.mxu0 0.0
  %209 = vmatpush2.msra.mxu0 0.0
  %210 = vmatprep.subr.mxu0 0.0
  %211 = vmatpush2.msra.mxu0 0.0
  %212 = vmatprep.subr.mxu0 0.0
  %213 = vmatpush2.msra.mxu0 0.0
  %214 = vmatprep.subr.mxu0 0.0
  %215 = vmatpush2.msra.mxu0 0.0
  %216 = vmatprep.subr.mxu0 0.0
  %217 = vmatpush2.msra.mxu0 0.0
  %218 = vmatprep.subr.mxu0 0.0
  %219 = vmatpush2.msra.mxu0 0.0
  %220 = vmatprep.subr.mxu0 0.0
  %221 = vmatpush2.msra.mxu0 0.0
  %222 = vmatprep.subr.mxu0 0.0
  %223 = vmatpush2.msra.mxu0 0.0
  %224 = vmatprep.subr.mxu0 0.0
  %225 = vmatpush2.msra.mxu0 0.0
  %226 = vmatprep.subr.mxu0 0.0
  %227 = vmatpush2.msra.mxu0 0.0
  %228 = vmatprep.subr.mxu0 0.0
  %229 = vmatpush2.msra.mxu0 0.0
  %230 = vmatprep.mubr.f32.mxu0 0.0
  %231 = vmatmul.mubr.f32.gmra.mxu0 %v16
  %v232 = vpop.f32.mrf.mxu0
  %v233 = vadd.f32 %v148, %v232
  %v234 = vpop.f32.mrf.mxu0
  %235 = vmatprep.mubr.f32.mxu0 0.0
  %236 = vmatmul.mubr.f32.gmra.mxu0 %v19
  %v237 = vpop.f32.mrf.mxu0
  %v238 = vadd.f32 %v153, %v237
  %v239 = vpop.f32.mrf.mxu0
  %240 = vmatprep.mubr.f32.mxu0 0.0
  %241 = vmatmul.mubr.f32.gmra.mxu0 %v22
  %v242 = vpop.f32.mrf.mxu0
  %v243 = vadd.f32 %v158, %v242
  %v244 = vpop.f32.mrf.mxu0
  %245 = vmatprep.mubr.f32.mxu0 0.0
  %246 = vmatmul.mubr.f32.gmra.mxu0 %v25
  %v247 = vpop.f32.mrf.mxu0
  %v248 = vadd.f32 %v163, %v247
  %v249 = vpop.f32.mrf.mxu0
  %250 = vdwg.mxu0
  %v251 = vmax.f32 %v233, 0.0
  %v252 = vmax.f32 %v238, 0.0
  %v253 = vmax.f32 %v243, 0.0
  %v254 = vmax.f32 %v248, 0.0
  %255 = vst [vmem:[%s3] sm:$0xff] %v251
  %256 = vst [vmem:[%s3 + $0x8] sm:$0xff] %v252
  %257 = vst [vmem:[%s3 + $0x10] sm:$0xff] %v253
  %258 = vst [vmem:[%s3 + $0x18] sm:$0xff] %v254
  // Predicated region
  $region14: #{_forward_impl.67} parent=0 // pred_check
    _
  $region15: #{_forward_impl.67} parent=0 // pred_check_branch
    %260 = sbr.rel (0) target = $region17
  $region16: #{_forward_impl.67} parent=0 // pred_region
    _
  $region17: #{_forward_impl.67} parent=0 // pred_fallthru
    _
  // Predicated region
  $region18: #{_forward_impl.67} parent=0 // pred_check
    _
  $region19: #{_forward_impl.67} parent=0 // pred_check_branch
    %262 = sbr.rel (0) target = $region21
  $region20: #{_forward_impl.67} parent=0 // pred_region
    _
  $region21: #{_forward_impl.67} parent=0 // pred_fallthru
    _

// kernel: _forward_impl.69
$region0: #{_forward_impl.69}
  #allocation0 [shape = 'u32[]', space=smem, size = 0x4, offset = 0x4, fixed_abs, tag = 'smem constant byte address 0x4 - core index']
  #allocation1 [shape = 'u32[144,128]{1,0:T(1,128)}', space=vmem, size = 0x12000, scoped, tag = 'internal scratch']
  %s0 = inlined_call_operand.vmem [shape: f32[32,128], index: 0, kind: input, shape index: {}]
  %s1 = inlined_call_operand.vmem [shape: f32[128,128], index: 1, kind: input, shape index: {}]
  %s2 = inlined_call_operand.vmem [shape: f32[1,128], index: 2, kind: input, shape index: {}]
  %s3 = inlined_call_operand.vmem [shape: f32[32,128], index: 3, kind: input, shape index: {}]
  %s4 = inlined_call_operand.vmem [shape: f32[32,128], index: 4, kind: output, shape index: {}]
  %s5 = sld [smem:[#allocation0]]
  $region26: #{_forward_impl.69} parent=0
    _
  %s7 = ssub.s32 1, %s5
  %s8 = scalar_select 0, %s7, %s5
  // Predicated region
  $region2: #{_forward_impl.69} parent=0 // pred_check
    _
  $region3: #{_forward_impl.69} parent=0 // pred_check_branch
    %10 = sbr.rel (0) target = $region5
  $region4: #{_forward_impl.69} parent=0 // pred_region
    _
  $region5: #{_forward_impl.69} parent=0 // pred_fallthru
    _
  // Predicated region
  $region6: #{_forward_impl.69} parent=0 // pred_check
    _
  $region7: #{_forward_impl.69} parent=0 // pred_check_branch
    %12 = sbr.rel (0) target = $region9
  $region8: #{_forward_impl.69} parent=0 // pred_region
    _
  $region9: #{_forward_impl.69} parent=0 // pred_fallthru
    _
  // Predicated region
  $region10: #{_forward_impl.69} parent=0 // pred_check
    _
  $region11: #{_forward_impl.69} parent=0 // pred_check_branch
    %14 = sbr.rel (0) target = $region13
  $region12: #{_forward_impl.69} parent=0 // pred_region
    _
  $region13: #{_forward_impl.69} parent=0 // pred_fallthru
    _
  // Predicated region
  $region14: #{_forward_impl.69} parent=0 // pred_check
    _
  $region15: #{_forward_impl.69} parent=0 // pred_check_branch
    %16 = sbr.rel (0) target = $region17
  $region16: #{_forward_impl.69} parent=0 // pred_region
    _
  $region17: #{_forward_impl.69} parent=0 // pred_fallthru
    _
  %v17 = vld [vmem:[%s0] sm:$0xff]
  %v18 = vld [vmem:[%s0 + $0x8] sm:$0xff]
  %v19 = vld [vmem:[%s0 + $0x10] sm:$0xff]
  %v20 = vld [vmem:[%s0 + $0x18] sm:$0xff]
  %v21 = vld [vmem:[%s1] sm:$0xff]
  %v22 = vld [vmem:[%s1 + $0x8] sm:$0xff]
  %v23 = vld [vmem:[%s1 + $0x10] sm:$0xff]
  %v24 = vld [vmem:[%s1 + $0x18] sm:$0xff]
  %v25 = vld [vmem:[%s1 + $0x20] sm:$0xff]
  %v26 = vld [vmem:[%s1 + $0x28] sm:$0xff]
  %v27 = vld [vmem:[%s1 + $0x30] sm:$0xff]
  %v28 = vld [vmem:[%s1 + $0x38] sm:$0xff]
  %v29 = vld [vmem:[%s1 + $0x40] sm:$0xff]
  %v30 = vld [vmem:[%s1 + $0x48] sm:$0xff]
  %v31 = vld [vmem:[%s1 + $0x50] sm:$0xff]
  %v32 = vld [vmem:[%s1 + $0x58] sm:$0xff]
  %v33 = vld [vmem:[%s1 + $0x60] sm:$0xff]
  %v34 = vld [vmem:[%s1 + $0x68] sm:$0xff]
  %v35 = vld [vmem:[%s1 + $0x70] sm:$0xff]
  %v36 = vld [vmem:[%s1 + $0x78] sm:$0xff]
  %v37 = vld [vmem:[%s2] sm:$0x1]
  %v39 = vlaneseq
  %v40 = vshrl.u32 %v39, 7
  %v41 = vsub.s32 0, %v40
  %v42 = vrot.slane %v37, %v41
  %44 = vmatprep.subr.mxu0 0.0
  %45 = vmatpush1.msra.mxu0 %v36
  %46 = vmatprep.subr.mxu0 0.0
  %47 = vmatpush1.msra.mxu0 %v35
  %48 = vmatprep.subr.mxu0 0.0
  %49 = vmatpush1.msra.mxu0 %v34
  %50 = vmatprep.subr.mxu0 0.0
  %51 = vmatpush1.msra.mxu0 %v33
  %52 = vmatprep.subr.mxu0 0.0
  %53 = vmatpush1.msra.mxu0 %v32
  %54 = vmatprep.subr.mxu0 0.0
  %55 = vmatpush1.msra.mxu0 %v31
  %56 = vmatprep.subr.mxu0 0.0
  %57 = vmatpush1.msra.mxu0 %v30
  %58 = vmatprep.subr.mxu0 0.0
  %59 = vmatpush1.msra.mxu0 %v29
  %60 = vmatprep.subr.mxu0 0.0
  %61 = vmatpush1.msra.mxu0 %v28
  %62 = vmatprep.subr.mxu0 0.0
  %63 = vmatpush1.msra.mxu0 %v27
  %64 = vmatprep.subr.mxu0 0.0
  %65 = vmatpush1.msra.mxu0 %v26
  %66 = vmatprep.subr.mxu0 0.0
  %67 = vmatpush1.msra.mxu0 %v25
  %68 = vmatprep.subr.mxu0 0.0
  %69 = vmatpush1.msra.mxu0 %v24
  %70 = vmatprep.subr.mxu0 0.0
  %71 = vmatpush1.msra.mxu0 %v23
  %72 = vmatprep.subr.mxu0 0.0
  %73 = vmatpush1.msra.mxu0 %v22
  %74 = vmatprep.subr.mxu0 0.0
  %75 = vmatpush1.msra.mxu0 %v21
  %76 = vmatprep.subr.mxu0 0.0
  %77 = vmatpush2.msra.mxu0 0.0
  %78 = vmatprep.subr.mxu0 0.0
  %79 = vmatpush2.msra.mxu0 0.0
  %80 = vmatprep.subr.mxu0 0.0
  %81 = vmatpush2.msra.mxu0 0.0
  %82 = vmatprep.subr.mxu0 0.0
  %83 = vmatpush2.msra.mxu0 0.0
  %84 = vmatprep.subr.mxu0 0.0
  %85 = vmatpush2.msra.mxu0 0.0
  %86 = vmatprep.subr.mxu0 0.0
  %87 = vmatpush2.msra.mxu0 0.0
  %88 = vmatprep.subr.mxu0 0.0
  %89 = vmatpush2.msra.mxu0 0.0
  %90 = vmatprep.subr.mxu0 0.0
  %91 = vmatpush2.msra.mxu0 0.0
  %92 = vmatprep.subr.mxu0 0.0
  %93 = vmatpush2.msra.mxu0 0.0
  %94 = vmatprep.subr.mxu0 0.0
  %95 = vmatpush2.msra.mxu0 0.0
  %96 = vmatprep.subr.mxu0 0.0
  %97 = vmatpush2.msra.mxu0 0.0
  %98 = vmatprep.subr.mxu0 0.0
  %99 = vmatpush2.msra.mxu0 0.0
  %100 = vmatprep.subr.mxu0 0.0
  %101 = vmatpush2.msra.mxu0 0.0
  %102 = vmatprep.subr.mxu0 0.0
  %103 = vmatpush2.msra.mxu0 0.0
  %104 = vmatprep.subr.mxu0 0.0
  %105 = vmatpush2.msra.mxu0 0.0
  %106 = vmatprep.subr.mxu0 0.0
  %107 = vmatpush2.msra.mxu0 0.0
  %108 = vmatprep.mubr.f32.mxu0 0.0
  %109 = vmatmul.mubr.f32.gmra.mxu0 %v17
  %v110 = vpop.f32.mrf.mxu0
  %v111 = vadd.f32 %v42, %v110
  %v112 = vpop.f32.mrf.mxu0
  %113 = vmatprep.mubr.f32.mxu0 0.0
  %114 = vmatmul.mubr.f32.gmra.mxu0 %v18
  %v115 = vpop.f32.mrf.mxu0
  %v116 = vadd.f32 %v42, %v115
  %v117 = vpop.f32.mrf.mxu0
  %118 = vmatprep.mubr.f32.mxu0 0.0
  %119 = vmatmul.mubr.f32.gmra.mxu0 %v19
  %v120 = vpop.f32.mrf.mxu0
  %v121 = vadd.f32 %v42, %v120
  %v122 = vpop.f32.mrf.mxu0
  %123 = vmatprep.mubr.f32.mxu0 0.0
  %124 = vmatmul.mubr.f32.gmra.mxu0 %v20
  %v125 = vpop.f32.mrf.mxu0
  %v126 = vadd.f32 %v42, %v125
  %v127 = vpop.f32.mrf.mxu0
  %128 = vdwg.mxu0
  %v129 = vld [vmem:[%s3] sm:$0xff]
  %v130 = vld [vmem:[%s3 + $0x8] sm:$0xff]
  %v131 = vld [vmem:[%s3 + $0x10] sm:$0xff]
  %v132 = vld [vmem:[%s3 + $0x18] sm:$0xff]
  %v133 = vadd.f32 %v111, %v129
  %v134 = vadd.f32 %v116, %v130
  %v135 = vadd.f32 %v121, %v131
  %v136 = vadd.f32 %v126, %v132
  %v137 = vmax.f32 %v133, 0.0
  %v138 = vmax.f32 %v134, 0.0
  %v139 = vmax.f32 %v135, 0.0
  %v140 = vmax.f32 %v136, 0.0
  %141 = vst [vmem:[%s4] sm:$0xff] %v137
  %142 = vst [vmem:[%s4 + $0x8] sm:$0xff] %v138
  %143 = vst [vmem:[%s4 + $0x10] sm:$0xff] %v139
  %144 = vst [vmem:[%s4 + $0x18] sm:$0xff] %v140
  // Predicated region
  $region18: #{_forward_impl.69} parent=0 // pred_check
    _
  $region19: #{_forward_impl.69} parent=0 // pred_check_branch
    %146 = sbr.rel (0) target = $region21
  $region20: #{_forward_impl.69} parent=0 // pred_region
    _
  $region21: #{_forward_impl.69} parent=0 // pred_fallthru
    _
  // Predicated region
  $region22: #{_forward_impl.69} parent=0 // pred_check
    _
  $region23: #{_forward_impl.69} parent=0 // pred_check_branch
    %148 = sbr.rel (0) target = $region25
  $region24: #{_forward_impl.69} parent=0 // pred_region
    _
  $region25: #{_forward_impl.69} parent=0 // pred_fallthru
    _

// kernel: _forward_impl.70
$region0: #{_forward_impl.70}
  #allocation0 [shape = 'u32[]', space=smem, size = 0x4, offset = 0x4, fixed_abs, tag = 'smem constant byte address 0x4 - core index']
  #allocation1 [shape = 'u32[144,128]{1,0:T(1,128)}', space=vmem, size = 0x12000, scoped, tag = 'internal scratch']
  %s0 = inlined_call_operand.vmem [shape: f32[32,128], index: 0, kind: input, shape index: {}]
  %s1 = inlined_call_operand.vmem [shape: f32[128,128], index: 1, kind: input, shape index: {}]
  %s2 = inlined_call_operand.vmem [shape: f32[1,128], index: 2, kind: input, shape index: {}]
  %s3 = inlined_call_operand.vmem [shape: f32[32,128], index: 3, kind: output, shape index: {}]
  %s4 = sld [smem:[#allocation0]]
  $region22: #{_forward_impl.70} parent=0
    _
  %s6 = ssub.s32 1, %s4
  %s7 = scalar_select 0, %s6, %s4
  // Predicated region
  $region2: #{_forward_impl.70} parent=0 // pred_check
    _
  $region3: #{_forward_impl.70} parent=0 // pred_check_branch
    %9 = sbr.rel (0) target = $region5
  $region4: #{_forward_impl.70} parent=0 // pred_region
    _
  $region5: #{_forward_impl.70} parent=0 // pred_fallthru
    _
  // Predicated region
  $region6: #{_forward_impl.70} parent=0 // pred_check
    _
  $region7: #{_forward_impl.70} parent=0 // pred_check_branch
    %11 = sbr.rel (0) target = $region9
  $region8: #{_forward_impl.70} parent=0 // pred_region
    _
  $region9: #{_forward_impl.70} parent=0 // pred_fallthru
    _
  // Predicated region
  $region10: #{_forward_impl.70} parent=0 // pred_check
    _
  $region11: #{_forward_impl.70} parent=0 // pred_check_branch
    %13 = sbr.rel (0) target = $region13
  $region12: #{_forward_impl.70} parent=0 // pred_region
    _
  $region13: #{_forward_impl.70} parent=0 // pred_fallthru
    _
  %v14 = vld [vmem:[%s0] sm:$0xff]
  %v15 = vld [vmem:[%s0 + $0x8] sm:$0xff]
  %v16 = vld [vmem:[%s0 + $0x10] sm:$0xff]
  %v17 = vld [vmem:[%s0 + $0x18] sm:$0xff]
  %v18 = vld [vmem:[%s1] sm:$0xff]
  %v19 = vld [vmem:[%s1 + $0x8] sm:$0xff]
  %v20 = vld [vmem:[%s1 + $0x10] sm:$0xff]
  %v21 = vld [vmem:[%s1 + $0x18] sm:$0xff]
  %v22 = vld [vmem:[%s1 + $0x20] sm:$0xff]
  %v23 = vld [vmem:[%s1 + $0x28] sm:$0xff]
  %v24 = vld [vmem:[%s1 + $0x30] sm:$0xff]
  %v25 = vld [vmem:[%s1 + $0x38] sm:$0xff]
  %v26 = vld [vmem:[%s1 + $0x40] sm:$0xff]
  %v27 = vld [vmem:[%s1 + $0x48] sm:$0xff]
  %v28 = vld [vmem:[%s1 + $0x50] sm:$0xff]
  %v29 = vld [vmem:[%s1 + $0x58] sm:$0xff]
  %v30 = vld [vmem:[%s1 + $0x60] sm:$0xff]
  %v31 = vld [vmem:[%s1 + $0x68] sm:$0xff]
  %v32 = vld [vmem:[%s1 + $0x70] sm:$0xff]
  %v33 = vld [vmem:[%s1 + $0x78] sm:$0xff]
  %v34 = vld [vmem:[%s2] sm:$0x1]
  %v36 = vlaneseq
  %v37 = vshrl.u32 %v36, 7
  %v38 = vsub.s32 0, %v37
  %v39 = vrot.slane %v34, %v38
  %41 = vmatprep.subr.mxu0 0.0
  %42 = vmatpush1.msra.mxu0 %v33
  %43 = vmatprep.subr.mxu0 0.0
  %44 = vmatpush1.msra.mxu0 %v32
  %45 = vmatprep.subr.mxu0 0.0
  %46 = vmatpush1.msra.mxu0 %v31
  %47 = vmatprep.subr.mxu0 0.0
  %48 = vmatpush1.msra.mxu0 %v30
  %49 = vmatprep.subr.mxu0 0.0
  %50 = vmatpush1.msra.mxu0 %v29
  %51 = vmatprep.subr.mxu0 0.0
  %52 = vmatpush1.msra.mxu0 %v28
  %53 = vmatprep.subr.mxu0 0.0
  %54 = vmatpush1.msra.mxu0 %v27
  %55 = vmatprep.subr.mxu0 0.0
  %56 = vmatpush1.msra.mxu0 %v26
  %57 = vmatprep.subr.mxu0 0.0
  %58 = vmatpush1.msra.mxu0 %v25
  %59 = vmatprep.subr.mxu0 0.0
  %60 = vmatpush1.msra.mxu0 %v24
  %61 = vmatprep.subr.mxu0 0.0
  %62 = vmatpush1.msra.mxu0 %v23
  %63 = vmatprep.subr.mxu0 0.0
  %64 = vmatpush1.msra.mxu0 %v22
  %65 = vmatprep.subr.mxu0 0.0
  %66 = vmatpush1.msra.mxu0 %v21
  %67 = vmatprep.subr.mxu0 0.0
  %68 = vmatpush1.msra.mxu0 %v20
  %69 = vmatprep.subr.mxu0 0.0
  %70 = vmatpush1.msra.mxu0 %v19
  %71 = vmatprep.subr.mxu0 0.0
  %72 = vmatpush1.msra.mxu0 %v18
  %73 = vmatprep.subr.mxu0 0.0
  %74 = vmatpush2.msra.mxu0 0.0
  %75 = vmatprep.subr.mxu0 0.0
  %76 = vmatpush2.msra.mxu0 0.0
  %77 = vmatprep.subr.mxu0 0.0
  %78 = vmatpush2.msra.mxu0 0.0
  %79 = vmatprep.subr.mxu0 0.0
  %80 = vmatpush2.msra.mxu0 0.0
  %81 = vmatprep.subr.mxu0 0.0
  %82 = vmatpush2.msra.mxu0 0.0
  %83 = vmatprep.subr.mxu0 0.0
  %84 = vmatpush2.msra.mxu0 0.0
  %85 = vmatprep.subr.mxu0 0.0
  %86 = vmatpush2.msra.mxu0 0.0
  %87 = vmatprep.subr.mxu0 0.0
  %88 = vmatpush2.msra.mxu0 0.0
  %89 = vmatprep.subr.mxu0 0.0
  %90 = vmatpush2.msra.mxu0 0.0
  %91 = vmatprep.subr.mxu0 0.0
  %92 = vmatpush2.msra.mxu0 0.0
  %93 = vmatprep.subr.mxu0 0.0
  %94 = vmatpush2.msra.mxu0 0.0
  %95 = vmatprep.subr.mxu0 0.0
  %96 = vmatpush2.msra.mxu0 0.0
  %97 = vmatprep.subr.mxu0 0.0
  %98 = vmatpush2.msra.mxu0 0.0
  %99 = vmatprep.subr.mxu0 0.0
  %100 = vmatpush2.msra.mxu0 0.0
  %101 = vmatprep.subr.mxu0 0.0
  %102 = vmatpush2.msra.mxu0 0.0
  %103 = vmatprep.subr.mxu0 0.0
  %104 = vmatpush2.msra.mxu0 0.0
  %105 = vmatprep.mubr.f32.mxu0 0.0
  %106 = vmatmul.mubr.f32.gmra.mxu0 %v14
  %v107 = vpop.f32.mrf.mxu0
  %v108 = vadd.f32 %v39, %v107
  %v109 = vpop.f32.mrf.mxu0
  %110 = vmatprep.mubr.f32.mxu0 0.0
  %111 = vmatmul.mubr.f32.gmra.mxu0 %v15
  %v112 = vpop.f32.mrf.mxu0
  %v113 = vadd.f32 %v39, %v112
  %v114 = vpop.f32.mrf.mxu0
  %115 = vmatprep.mubr.f32.mxu0 0.0
  %116 = vmatmul.mubr.f32.gmra.mxu0 %v16
  %v117 = vpop.f32.mrf.mxu0
  %v118 = vadd.f32 %v39, %v117
  %v119 = vpop.f32.mrf.mxu0
  %120 = vmatprep.mubr.f32.mxu0 0.0
  %121 = vmatmul.mubr.f32.gmra.mxu0 %v17
  %v122 = vpop.f32.mrf.mxu0
  %v123 = vadd.f32 %v39, %v122
  %v124 = vpop.f32.mrf.mxu0
  %125 = vdwg.mxu0
  %v126 = vmax.f32 %v108, 0.0
  %v127 = vmax.f32 %v113, 0.0
  %v128 = vmax.f32 %v118, 0.0
  %v129 = vmax.f32 %v123, 0.0
  %130 = vst [vmem:[%s3] sm:$0xff] %v126
  %131 = vst [vmem:[%s3 + $0x8] sm:$0xff] %v127
  %132 = vst [vmem:[%s3 + $0x10] sm:$0xff] %v128
  %133 = vst [vmem:[%s3 + $0x18] sm:$0xff] %v129
  // Predicated region
  $region14: #{_forward_impl.70} parent=0 // pred_check
    _
  $region15: #{_forward_impl.70} parent=0 // pred_check_branch
    %135 = sbr.rel (0) target = $region17
  $region16: #{_forward_impl.70} parent=0 // pred_region
    _
  $region17: #{_forward_impl.70} parent=0 // pred_fallthru
    _
  // Predicated region
  $region18: #{_forward_impl.70} parent=0 // pred_check
    _
  $region19: #{_forward_impl.70} parent=0 // pred_check_branch
    %137 = sbr.rel (0) target = $region21
  $region20: #{_forward_impl.70} parent=0 // pred_region
    _
  $region21: #{_forward_impl.70} parent=0 // pred_fallthru
    _

// kernel: _forward_impl.80
$region0: #{_forward_impl.80}
  #allocation0 [shape = 'u32[]', space=smem, size = 0x4, offset = 0x4, fixed_abs, tag = 'smem constant byte address 0x4 - core index']
  #allocation1 [shape = 'u32[144,128]{1,0:T(1,128)}', space=vmem, size = 0x12000, scoped, tag = 'internal scratch']
  %s0 = inlined_call_operand.vmem [shape: f32[8,640], index: 0, kind: input, shape index: {}]
  %s1 = inlined_call_operand.vmem [shape: f32[640,128], index: 1, kind: input, shape index: {}]
  %s2 = inlined_call_operand.vmem [shape: f32[1,128], index: 2, kind: input, shape index: {}]
  %s3 = inlined_call_operand.vmem [shape: f32[8,128], index: 3, kind: output, shape index: {}]
  %s4 = sld [smem:[#allocation0]]
  $region22: #{_forward_impl.80} parent=0
    _
  %s6 = ssub.s32 1, %s4
  %s7 = scalar_select 0, %s6, %s4
  // Predicated region
  $region2: #{_forward_impl.80} parent=0 // pred_check
    _
  $region3: #{_forward_impl.80} parent=0 // pred_check_branch
    %9 = sbr.rel (0) target = $region5
  $region4: #{_forward_impl.80} parent=0 // pred_region
    _
  $region5: #{_forward_impl.80} parent=0 // pred_fallthru
    _
  // Predicated region
  $region6: #{_forward_impl.80} parent=0 // pred_check
    _
  $region7: #{_forward_impl.80} parent=0 // pred_check_branch
    %11 = sbr.rel (0) target = $region9
  $region8: #{_forward_impl.80} parent=0 // pred_region
    _
  $region9: #{_forward_impl.80} parent=0 // pred_fallthru
    _
  // Predicated region
  $region10: #{_forward_impl.80} parent=0 // pred_check
    _
  $region11: #{_forward_impl.80} parent=0 // pred_check_branch
    %13 = sbr.rel (0) target = $region13
  $region12: #{_forward_impl.80} parent=0 // pred_region
    _
  $region13: #{_forward_impl.80} parent=0 // pred_fallthru
    _
  %v14 = vld [vmem:[%s0] sm:$0xff]
  %v15 = vld [vmem:[%s0 + $0x8] sm:$0xff]
  %v16 = vld [vmem:[%s0 + $0x10] sm:$0xff]
  %v17 = vld [vmem:[%s0 + $0x18] sm:$0xff]
  %v18 = vld [vmem:[%s0 + $0x20] sm:$0xff]
  %v19 = vld [vmem:[%s1] sm:$0xff]
  %v20 = vld [vmem:[%s1 + $0x8] sm:$0xff]
  %v21 = vld [vmem:[%s1 + $0x10] sm:$0xff]
  %v22 = vld [vmem:[%s1 + $0x18] sm:$0xff]
  %v23 = vld [vmem:[%s1 + $0x20] sm:$0xff]
  %v24 = vld [vmem:[%s1 + $0x28] sm:$0xff]
  %v25 = vld [vmem:[%s1 + $0x30] sm:$0xff]
  %v26 = vld [vmem:[%s1 + $0x38] sm:$0xff]
  %v27 = vld [vmem:[%s1 + $0x40] sm:$0xff]
  %v28 = vld [vmem:[%s1 + $0x48] sm:$0xff]
  %v29 = vld [vmem:[%s1 + $0x50] sm:$0xff]
  %v30 = vld [vmem:[%s1 + $0x58] sm:$0xff]
  %v31 = vld [vmem:[%s1 + $0x60] sm:$0xff]
  %v32 = vld [vmem:[%s1 + $0x68] sm:$0xff]
  %v33 = vld [vmem:[%s1 + $0x70] sm:$0xff]
  %v34 = vld [vmem:[%s1 + $0x78] sm:$0xff]
  %v35 = vld [vmem:[%s1 + $0x80] sm:$0xff]
  %v36 = vld [vmem:[%s1 + $0x88] sm:$0xff]
  %v37 = vld [vmem:[%s1 + $0x90] sm:$0xff]
  %v38 = vld [vmem:[%s1 + $0x98] sm:$0xff]
  %v39 = vld [vmem:[%s1 + $0xa0] sm:$0xff]
  %v40 = vld [vmem:[%s1 + $0xa8] sm:$0xff]
  %v41 = vld [vmem:[%s1 + $0xb0] sm:$0xff]
  %v42 = vld [vmem:[%s1 + $0xb8] sm:$0xff]
  %v43 = vld [vmem:[%s1 + $0xc0] sm:$0xff]
  %v44 = vld [vmem:[%s1 + $0xc8] sm:$0xff]
  %v45 = vld [vmem:[%s1 + $0xd0] sm:$0xff]
  %v46 = vld [vmem:[%s1 + $0xd8] sm:$0xff]
  %v47 = vld [vmem:[%s1 + $0xe0] sm:$0xff]
  %v48 = vld [vmem:[%s1 + $0xe8] sm:$0xff]
  %v49 = vld [vmem:[%s1 + $0xf0] sm:$0xff]
  %v50 = vld [vmem:[%s1 + $0xf8] sm:$0xff]
  %v51 = vld [vmem:[%s1 + $0x100] sm:$0xff]
  %v52 = vld [vmem:[%s1 + $0x108] sm:$0xff]
  %v53 = vld [vmem:[%s1 + $0x110] sm:$0xff]
  %v54 = vld [vmem:[%s1 + $0x118] sm:$0xff]
  %v55 = vld [vmem:[%s1 + $0x120] sm:$0xff]
  %v56 = vld [vmem:[%s1 + $0x128] sm:$0xff]
  %v57 = vld [vmem:[%s1 + $0x130] sm:$0xff]
  %v58 = vld [vmem:[%s1 + $0x138] sm:$0xff]
  %v59 = vld [vmem:[%s1 + $0x140] sm:$0xff]
  %v60 = vld [vmem:[%s1 + $0x148] sm:$0xff]
  %v61 = vld [vmem:[%s1 + $0x150] sm:$0xff]
  %v62 = vld [vmem:[%s1 + $0x158] sm:$0xff]
  %v63 = vld [vmem:[%s1 + $0x160] sm:$0xff]
  %v64 = vld [vmem:[%s1 + $0x168] sm:$0xff]
  %v65 = vld [vmem:[%s1 + $0x170] sm:$0xff]
  %v66 = vld [vmem:[%s1 + $0x178] sm:$0xff]
  %v67 = vld [vmem:[%s1 + $0x180] sm:$0xff]
  %v68 = vld [vmem:[%s1 + $0x188] sm:$0xff]
  %v69 = vld [vmem:[%s1 + $0x190] sm:$0xff]
  %v70 = vld [vmem:[%s1 + $0x198] sm:$0xff]
  %v71 = vld [vmem:[%s1 + $0x1a0] sm:$0xff]
  %v72 = vld [vmem:[%s1 + $0x1a8] sm:$0xff]
  %v73 = vld [vmem:[%s1 + $0x1b0] sm:$0xff]
  %v74 = vld [vmem:[%s1 + $0x1b8] sm:$0xff]
  %v75 = vld [vmem:[%s1 + $0x1c0] sm:$0xff]
  %v76 = vld [vmem:[%s1 + $0x1c8] sm:$0xff]
  %v77 = vld [vmem:[%s1 + $0x1d0] sm:$0xff]
  %v78 = vld [vmem:[%s1 + $0x1d8] sm:$0xff]
  %v79 = vld [vmem:[%s1 + $0x1e0] sm:$0xff]
  %v80 = vld [vmem:[%s1 + $0x1e8] sm:$0xff]
  %v81 = vld [vmem:[%s1 + $0x1f0] sm:$0xff]
  %v82 = vld [vmem:[%s1 + $0x1f8] sm:$0xff]
  %v83 = vld [vmem:[%s1 + $0x200] sm:$0xff]
  %v84 = vld [vmem:[%s1 + $0x208] sm:$0xff]
  %v85 = vld [vmem:[%s1 + $0x210] sm:$0xff]
  %v86 = vld [vmem:[%s1 + $0x218] sm:$0xff]
  %v87 = vld [vmem:[%s1 + $0x220] sm:$0xff]
  %v88 = vld [vmem:[%s1 + $0x228] sm:$0xff]
  %v89 = vld [vmem:[%s1 + $0x230] sm:$0xff]
  %v90 = vld [vmem:[%s1 + $0x238] sm:$0xff]
  %v91 = vld [vmem:[%s1 + $0x240] sm:$0xff]
  %v92 = vld [vmem:[%s1 + $0x248] sm:$0xff]
  %v93 = vld [vmem:[%s1 + $0x250] sm:$0xff]
  %v94 = vld [vmem:[%s1 + $0x258] sm:$0xff]
  %v95 = vld [vmem:[%s1 + $0x260] sm:$0xff]
  %v96 = vld [vmem:[%s1 + $0x268] sm:$0xff]
  %v97 = vld [vmem:[%s1 + $0x270] sm:$0xff]
  %v98 = vld [vmem:[%s1 + $0x278] sm:$0xff]
  %v99 = vld [vmem:[%s2] sm:$0x1]
  %v101 = vlaneseq
  %v102 = vshrl.u32 %v101, 7
  %v103 = vsub.s32 0, %v102
  %v104 = vrot.slane %v99, %v103
  %106 = vmatprep.subr.mxu0 0.0
  %107 = vmatpush1.msra.mxu0 %v34
  %108 = vmatprep.subr.mxu0 0.0
  %109 = vmatpush1.msra.mxu0 %v33
  %110 = vmatprep.subr.mxu0 0.0
  %111 = vmatpush1.msra.mxu0 %v32
  %112 = vmatprep.subr.mxu0 0.0
  %113 = vmatpush1.msra.mxu0 %v31
  %114 = vmatprep.subr.mxu0 0.0
  %115 = vmatpush1.msra.mxu0 %v30
  %116 = vmatprep.subr.mxu0 0.0
  %117 = vmatpush1.msra.mxu0 %v29
  %118 = vmatprep.subr.mxu0 0.0
  %119 = vmatpush1.msra.mxu0 %v28
  %120 = vmatprep.subr.mxu0 0.0
  %121 = vmatpush1.msra.mxu0 %v27
  %122 = vmatprep.subr.mxu0 0.0
  %123 = vmatpush1.msra.mxu0 %v26
  %124 = vmatprep.subr.mxu0 0.0
  %125 = vmatpush1.msra.mxu0 %v25
  %126 = vmatprep.subr.mxu0 0.0
  %127 = vmatpush1.msra.mxu0 %v24
  %128 = vmatprep.subr.mxu0 0.0
  %129 = vmatpush1.msra.mxu0 %v23
  %130 = vmatprep.subr.mxu0 0.0
  %131 = vmatpush1.msra.mxu0 %v22
  %132 = vmatprep.subr.mxu0 0.0
  %133 = vmatpush1.msra.mxu0 %v21
  %134 = vmatprep.subr.mxu0 0.0
  %135 = vmatpush1.msra.mxu0 %v20
  %136 = vmatprep.subr.mxu0 0.0
  %137 = vmatpush1.msra.mxu0 %v19
  %138 = vmatprep.subr.mxu0 0.0
  %139 = vmatpush2.msra.mxu0 %v50
  %140 = vmatprep.subr.mxu0 0.0
  %141 = vmatpush2.msra.mxu0 %v49
  %142 = vmatprep.subr.mxu0 0.0
  %143 = vmatpush2.msra.mxu0 %v48
  %144 = vmatprep.subr.mxu0 0.0
  %145 = vmatpush2.msra.mxu0 %v47
  %146 = vmatprep.subr.mxu0 0.0
  %147 = vmatpush2.msra.mxu0 %v46
  %148 = vmatprep.subr.mxu0 0.0
  %149 = vmatpush2.msra.mxu0 %v45
  %150 = vmatprep.subr.mxu0 0.0
  %151 = vmatpush2.msra.mxu0 %v44
  %152 = vmatprep.subr.mxu0 0.0
  %153 = vmatpush2.msra.mxu0 %v43
  %154 = vmatprep.subr.mxu0 0.0
  %155 = vmatpush2.msra.mxu0 %v42
  %156 = vmatprep.subr.mxu0 0.0
  %157 = vmatpush2.msra.mxu0 %v41
  %158 = vmatprep.subr.mxu0 0.0
  %159 = vmatpush2.msra.mxu0 %v40
  %160 = vmatprep.subr.mxu0 0.0
  %161 = vmatpush2.msra.mxu0 %v39
  %162 = vmatprep.subr.mxu0 0.0
  %163 = vmatpush2.msra.mxu0 %v38
  %164 = vmatprep.subr.mxu0 0.0
  %165 = vmatpush2.msra.mxu0 %v37
  %166 = vmatprep.subr.mxu0 0.0
  %167 = vmatpush2.msra.mxu0 %v36
  %168 = vmatprep.subr.mxu0 0.0
  %169 = vmatpush2.msra.mxu0 %v35
  %170 = vmatprep.mubr.f32.mxu0 %v15
  %171 = vmatmul.mubr.f32.gmra.mxu0 %v14
  %v172 = vpop.f32.mrf.mxu0
  %v173 = vadd.f32 %v104, %v172
  %v174 = vpop.f32.mrf.mxu0
  %175 = vdwg.mxu0
  %176 = vmatprep.subr.mxu0 0.0
  %177 = vmatpush1.msra.mxu0 %v66
  %178 = vmatprep.subr.mxu0 0.0
  %179 = vmatpush1.msra.mxu0 %v65
  %180 = vmatprep.subr.mxu0 0.0
  %181 = vmatpush1.msra.mxu0 %v64
  %182 = vmatprep.subr.mxu0 0.0
  %183 = vmatpush1.msra.mxu0 %v63
  %184 = vmatprep.subr.mxu0 0.0
  %185 = vmatpush1.msra.mxu0 %v62
  %186 = vmatprep.subr.mxu0 0.0
  %187 = vmatpush1.msra.mxu0 %v61
  %188 = vmatprep.subr.mxu0 0.0
  %189 = vmatpush1.msra.mxu0 %v60
  %190 = vmatprep.subr.mxu0 0.0
  %191 = vmatpush1.msra.mxu0 %v59
  %192 = vmatprep.subr.mxu0 0.0
  %193 = vmatpush1.msra.mxu0 %v58
  %194 = vmatprep.subr.mxu0 0.0
  %195 = vmatpush1.msra.mxu0 %v57
  %196 = vmatprep.subr.mxu0 0.0
  %197 = vmatpush1.msra.mxu0 %v56
  %198 = vmatprep.subr.mxu0 0.0
  %199 = vmatpush1.msra.mxu0 %v55
  %200 = vmatprep.subr.mxu0 0.0
  %201 = vmatpush1.msra.mxu0 %v54
  %202 = vmatprep.subr.mxu0 0.0
  %203 = vmatpush1.msra.mxu0 %v53
  %204 = vmatprep.subr.mxu0 0.0
  %205 = vmatpush1.msra.mxu0 %v52
  %206 = vmatprep.subr.mxu0 0.0
  %207 = vmatpush1.msra.mxu0 %v51
  %208 = vmatprep.subr.mxu0 0.0
  %209 = vmatpush2.msra.mxu0 %v82
  %210 = vmatprep.subr.mxu0 0.0
  %211 = vmatpush2.msra.mxu0 %v81
  %212 = vmatprep.subr.mxu0 0.0
  %213 = vmatpush2.msra.mxu0 %v80
  %214 = vmatprep.subr.mxu0 0.0
  %215 = vmatpush2.msra.mxu0 %v79
  %216 = vmatprep.subr.mxu0 0.0
  %217 = vmatpush2.msra.mxu0 %v78
  %218 = vmatprep.subr.mxu0 0.0
  %219 = vmatpush2.msra.mxu0 %v77
  %220 = vmatprep.subr.mxu0 0.0
  %221 = vmatpush2.msra.mxu0 %v76
  %222 = vmatprep.subr.mxu0 0.0
  %223 = vmatpush2.msra.mxu0 %v75
  %224 = vmatprep.subr.mxu0 0.0
  %225 = vmatpush2.msra.mxu0 %v74
  %226 = vmatprep.subr.mxu0 0.0
  %227 = vmatpush2.msra.mxu0 %v73
  %228 = vmatprep.subr.mxu0 0.0
  %229 = vmatpush2.msra.mxu0 %v72
  %230 = vmatprep.subr.mxu0 0.0
  %231 = vmatpush2.msra.mxu0 %v71
  %232 = vmatprep.subr.mxu0 0.0
  %233 = vmatpush2.msra.mxu0 %v70
  %234 = vmatprep.subr.mxu0 0.0
  %235 = vmatpush2.msra.mxu0 %v69
  %236 = vmatprep.subr.mxu0 0.0
  %237 = vmatpush2.msra.mxu0 %v68
  %238 = vmatprep.subr.mxu0 0.0
  %239 = vmatpush2.msra.mxu0 %v67
  %240 = vmatprep.mubr.f32.mxu0 %v17
  %241 = vmatmul.mubr.f32.gmra.mxu0 %v16
  %v242 = vpop.f32.mrf.mxu0
  %v243 = vadd.f32 %v173, %v242
  %v244 = vpop.f32.mrf.mxu0
  %245 = vdwg.mxu0
  %246 = vmatprep.subr.mxu0 0.0
  %247 = vmatpush1.msra.mxu0 %v98
  %248 = vmatprep.subr.mxu0 0.0
  %249 = vmatpush1.msra.mxu0 %v97
  %250 = vmatprep.subr.mxu0 0.0
  %251 = vmatpush1.msra.mxu0 %v96
  %252 = vmatprep.subr.mxu0 0.0
  %253 = vmatpush1.msra.mxu0 %v95
  %254 = vmatprep.subr.mxu0 0.0
  %255 = vmatpush1.msra.mxu0 %v94
  %256 = vmatprep.subr.mxu0 0.0
  %257 = vmatpush1.msra.mxu0 %v93
  %258 = vmatprep.subr.mxu0 0.0
  %259 = vmatpush1.msra.mxu0 %v92
  %260 = vmatprep.subr.mxu0 0.0
  %261 = vmatpush1.msra.mxu0 %v91
  %262 = vmatprep.subr.mxu0 0.0
  %263 = vmatpush1.msra.mxu0 %v90
  %264 = vmatprep.subr.mxu0 0.0
  %265 = vmatpush1.msra.mxu0 %v89
  %266 = vmatprep.subr.mxu0 0.0
  %267 = vmatpush1.msra.mxu0 %v88
  %268 = vmatprep.subr.mxu0 0.0
  %269 = vmatpush1.msra.mxu0 %v87
  %270 = vmatprep.subr.mxu0 0.0
  %271 = vmatpush1.msra.mxu0 %v86
  %272 = vmatprep.subr.mxu0 0.0
  %273 = vmatpush1.msra.mxu0 %v85
  %274 = vmatprep.subr.mxu0 0.0
  %275 = vmatpush1.msra.mxu0 %v84
  %276 = vmatprep.subr.mxu0 0.0
  %277 = vmatpush1.msra.mxu0 %v83
  %278 = vmatprep.subr.mxu0 0.0
  %279 = vmatpush2.msra.mxu0 0.0
  %280 = vmatprep.subr.mxu0 0.0
  %281 = vmatpush2.msra.mxu0 0.0
  %282 = vmatprep.subr.mxu0 0.0
  %283 = vmatpush2.msra.mxu0 0.0
  %284 = vmatprep.subr.mxu0 0.0
  %285 = vmatpush2.msra.mxu0 0.0
  %286 = vmatprep.subr.mxu0 0.0
  %287 = vmatpush2.msra.mxu0 0.0
  %288 = vmatprep.subr.mxu0 0.0
  %289 = vmatpush2.msra.mxu0 0.0
  %290 = vmatprep.subr.mxu0 0.0
  %291 = vmatpush2.msra.mxu0 0.0
  %292 = vmatprep.subr.mxu0 0.0
  %293 = vmatpush2.msra.mxu0 0.0
  %294 = vmatprep.subr.mxu0 0.0
  %295 = vmatpush2.msra.mxu0 0.0
  %296 = vmatprep.subr.mxu0 0.0
  %297 = vmatpush2.msra.mxu0 0.0
  %298 = vmatprep.subr.mxu0 0.0
  %299 = vmatpush2.msra.mxu0 0.0
  %300 = vmatprep.subr.mxu0 0.0
  %301 = vmatpush2.msra.mxu0 0.0
  %302 = vmatprep.subr.mxu0 0.0
  %303 = vmatpush2.msra.mxu0 0.0
  %304 = vmatprep.subr.mxu0 0.0
  %305 = vmatpush2.msra.mxu0 0.0
  %306 = vmatprep.subr.mxu0 0.0
  %307 = vmatpush2.msra.mxu0 0.0
  %308 = vmatprep.subr.mxu0 0.0
  %309 = vmatpush2.msra.mxu0 0.0
  %310 = vmatprep.mubr.f32.mxu0 0.0
  %311 = vmatmul.mubr.f32.gmra.mxu0 %v18
  %v312 = vpop.f32.mrf.mxu0
  %v313 = vadd.f32 %v243, %v312
  %v314 = vpop.f32.mrf.mxu0
  %315 = vdwg.mxu0
  %v316 = vmax.f32 %v313, 0.0
  %317 = vst [vmem:[%s3] sm:$0xff] %v316
  // Predicated region
  $region14: #{_forward_impl.80} parent=0 // pred_check
    _
  $region15: #{_forward_impl.80} parent=0 // pred_check_branch
    %319 = sbr.rel (0) target = $region17
  $region16: #{_forward_impl.80} parent=0 // pred_region
    _
  $region17: #{_forward_impl.80} parent=0 // pred_fallthru
    _
  // Predicated region
  $region18: #{_forward_impl.80} parent=0 // pred_check
    _
  $region19: #{_forward_impl.80} parent=0 // pred_check_branch
    %321 = sbr.rel (0) target = $region21
  $region20: #{_forward_impl.80} parent=0 // pred_region
    _
  $region21: #{_forward_impl.80} parent=0 // pred_fallthru
    _

// kernel: _forward_impl.81
$region0: #{_forward_impl.81}
  #allocation0 [shape = 'u32[]', space=smem, size = 0x4, offset = 0x4, fixed_abs, tag = 'smem constant byte address 0x4 - core index']
  #allocation1 [shape = 'u32[144,128]{1,0:T(1,128)}', space=vmem, size = 0x12000, scoped, tag = 'internal scratch']
  %s0 = inlined_call_operand.vmem [shape: f32[8,128], index: 0, kind: input, shape index: {}]
  %s1 = inlined_call_operand.vmem [shape: f32[128,256], index: 1, kind: input, shape index: {}]
  %s2 = inlined_call_operand.vmem [shape: f32[1,256], index: 2, kind: input, shape index: {}]
  %s3 = inlined_call_operand.vmem [shape: f32[8,256], index: 3, kind: output, shape index: {}]
  %s4 = sld [smem:[#allocation0]]
  $region22: #{_forward_impl.81} parent=0
    _
  %s6 = ssub.s32 1, %s4
  %s7 = scalar_select 0, %s6, %s4
  // Predicated region
  $region2: #{_forward_impl.81} parent=0 // pred_check
    _
  $region3: #{_forward_impl.81} parent=0 // pred_check_branch
    %9 = sbr.rel (0) target = $region5
  $region4: #{_forward_impl.81} parent=0 // pred_region
    _
  $region5: #{_forward_impl.81} parent=0 // pred_fallthru
    _
  // Predicated region
  $region6: #{_forward_impl.81} parent=0 // pred_check
    _
  $region7: #{_forward_impl.81} parent=0 // pred_check_branch
    %11 = sbr.rel (0) target = $region9
  $region8: #{_forward_impl.81} parent=0 // pred_region
    _
  $region9: #{_forward_impl.81} parent=0 // pred_fallthru
    _
  // Predicated region
  $region10: #{_forward_impl.81} parent=0 // pred_check
    _
  $region11: #{_forward_impl.81} parent=0 // pred_check_branch
    %13 = sbr.rel (0) target = $region13
  $region12: #{_forward_impl.81} parent=0 // pred_region
    _
  $region13: #{_forward_impl.81} parent=0 // pred_fallthru
    _
  %v14 = vld [vmem:[%s0] sm:$0xff]
  %v15 = vld [vmem:[%s1] sm:$0xff]
  %v16 = vld [vmem:[%s1 + $0x8] sm:$0xff]
  %v17 = vld [vmem:[%s1 + $0x10] sm:$0xff]
  %v18 = vld [vmem:[%s1 + $0x18] sm:$0xff]
  %v19 = vld [vmem:[%s1 + $0x20] sm:$0xff]
  %v20 = vld [vmem:[%s1 + $0x28] sm:$0xff]
  %v21 = vld [vmem:[%s1 + $0x30] sm:$0xff]
  %v22 = vld [vmem:[%s1 + $0x38] sm:$0xff]
  %v23 = vld [vmem:[%s1 + $0x40] sm:$0xff]
  %v24 = vld [vmem:[%s1 + $0x48] sm:$0xff]
  %v25 = vld [vmem:[%s1 + $0x50] sm:$0xff]
  %v26 = vld [vmem:[%s1 + $0x58] sm:$0xff]
  %v27 = vld [vmem:[%s1 + $0x60] sm:$0xff]
  %v28 = vld [vmem:[%s1 + $0x68] sm:$0xff]
  %v29 = vld [vmem:[%s1 + $0x70] sm:$0xff]
  %v30 = vld [vmem:[%s1 + $0x78] sm:$0xff]
  %v31 = vld [vmem:[%s1 + $0x80] sm:$0xff]
  %v32 = vld [vmem:[%s1 + $0x88] sm:$0xff]
  %v33 = vld [vmem:[%s1 + $0x90] sm:$0xff]
  %v34 = vld [vmem:[%s1 + $0x98] sm:$0xff]
  %v35 = vld [vmem:[%s1 + $0xa0] sm:$0xff]
  %v36 = vld [vmem:[%s1 + $0xa8] sm:$0xff]
  %v37 = vld [vmem:[%s1 + $0xb0] sm:$0xff]
  %v38 = vld [vmem:[%s1 + $0xb8] sm:$0xff]
  %v39 = vld [vmem:[%s1 + $0xc0] sm:$0xff]
  %v40 = vld [vmem:[%s1 + $0xc8] sm:$0xff]
  %v41 = vld [vmem:[%s1 + $0xd0] sm:$0xff]
  %v42 = vld [vmem:[%s1 + $0xd8] sm:$0xff]
  %v43 = vld [vmem:[%s1 + $0xe0] sm:$0xff]
  %v44 = vld [vmem:[%s1 + $0xe8] sm:$0xff]
  %v45 = vld [vmem:[%s1 + $0xf0] sm:$0xff]
  %v46 = vld [vmem:[%s1 + $0xf8] sm:$0xff]
  %v47 = vld [vmem:[%s2] sm:$0x3]
  %v49 = vlaneseq
  %v50 = vshrl.u32 %v49, 7
  %v51 = vsub.s32 0, %v50
  %v52 = vrot.slane %v47, %v51
  %v53 = vlaneseq
  %v54 = vshrl.u32 %v53, 7
  %v55 = vsub.s32 1, %v54
  %v56 = vrot.slane %v47, %v55
  %59 = vmatprep.subr.mxu0 %v46
  %60 = vmatpush1.msra.mxu0 %v45
  %61 = vmatprep.subr.mxu0 %v44
  %62 = vmatpush1.msra.mxu0 %v43
  %63 = vmatprep.subr.mxu0 %v42
  %64 = vmatpush1.msra.mxu0 %v41
  %65 = vmatprep.subr.mxu0 %v40
  %66 = vmatpush1.msra.mxu0 %v39
  %67 = vmatprep.subr.mxu0 %v38
  %68 = vmatpush1.msra.mxu0 %v37
  %69 = vmatprep.subr.mxu0 %v36
  %70 = vmatpush1.msra.mxu0 %v35
  %71 = vmatprep.subr.mxu0 %v34
  %72 = vmatpush1.msra.mxu0 %v33
  %73 = vmatprep.subr.mxu0 %v32
  %74 = vmatpush1.msra.mxu0 %v31
  %75 = vmatprep.subr.mxu0 %v30
  %76 = vmatpush1.msra.mxu0 %v29
  %77 = vmatprep.subr.mxu0 %v28
  %78 = vmatpush1.msra.mxu0 %v27
  %79 = vmatprep.subr.mxu0 %v26
  %80 = vmatpush1.msra.mxu0 %v25
  %81 = vmatprep.subr.mxu0 %v24
  %82 = vmatpush1.msra.mxu0 %v23
  %83 = vmatprep.subr.mxu0 %v22
  %84 = vmatpush1.msra.mxu0 %v21
  %85 = vmatprep.subr.mxu0 %v20
  %86 = vmatpush1.msra.mxu0 %v19
  %87 = vmatprep.subr.mxu0 %v18
  %88 = vmatpush1.msra.mxu0 %v17
  %89 = vmatprep.subr.mxu0 %v16
  %90 = vmatpush1.msra.mxu0 %v15
  %91 = vmatprep.subr.mxu0 0.0
  %92 = vmatpush2.msra.mxu0 0.0
  %93 = vmatprep.subr.mxu0 0.0
  %94 = vmatpush2.msra.mxu0 0.0
  %95 = vmatprep.subr.mxu0 0.0
  %96 = vmatpush2.msra.mxu0 0.0
  %97 = vmatprep.subr.mxu0 0.0
  %98 = vmatpush2.msra.mxu0 0.0
  %99 = vmatprep.subr.mxu0 0.0
  %100 = vmatpush2.msra.mxu0 0.0
  %101 = vmatprep.subr.mxu0 0.0
  %102 = vmatpush2.msra.mxu0 0.0
  %103 = vmatprep.subr.mxu0 0.0
  %104 = vmatpush2.msra.mxu0 0.0
  %105 = vmatprep.subr.mxu0 0.0
  %106 = vmatpush2.msra.mxu0 0.0
  %107 = vmatprep.subr.mxu0 0.0
  %108 = vmatpush2.msra.mxu0 0.0
  %109 = vmatprep.subr.mxu0 0.0
  %110 = vmatpush2.msra.mxu0 0.0
  %111 = vmatprep.subr.mxu0 0.0
  %112 = vmatpush2.msra.mxu0 0.0
  %113 = vmatprep.subr.mxu0 0.0
  %114 = vmatpush2.msra.mxu0 0.0
  %115 = vmatprep.subr.mxu0 0.0
  %116 = vmatpush2.msra.mxu0 0.0
  %117 = vmatprep.subr.mxu0 0.0
  %118 = vmatpush2.msra.mxu0 0.0
  %119 = vmatprep.subr.mxu0 0.0
  %120 = vmatpush2.msra.mxu0 0.0
  %121 = vmatprep.subr.mxu0 0.0
  %122 = vmatpush2.msra.mxu0 0.0
  %123 = vmatprep.mubr.f32.mxu0 0.0
  %124 = vmatmul.mubr.f32.gmra.mxu0 %v14
  %v125 = vpop.f32.mrf.mxu0
  %v126 = vadd.f32 %v52, %v125
  %v127 = vpop.f32.mrf.mxu0
  %v128 = vadd.f32 %v56, %v127
  %129 = vdwg.mxu0
  %130 = vst [vmem:[%s3] sm:$0xff] %v126
  %131 = vst [vmem:[%s3 + $0x8] sm:$0xff] %v128
  // Predicated region
  $region14: #{_forward_impl.81} parent=0 // pred_check
    _
  $region15: #{_forward_impl.81} parent=0 // pred_check_branch
    %133 = sbr.rel (0) target = $region17
  $region16: #{_forward_impl.81} parent=0 // pred_region
    _
  $region17: #{_forward_impl.81} parent=0 // pred_fallthru
    _
  // Predicated region
  $region18: #{_forward_impl.81} parent=0 // pred_check
    _
  $region19: #{_forward_impl.81} parent=0 // pred_check_branch
    %135 = sbr.rel (0) target = $region21
  $region20: #{_forward_impl.81} parent=0 // pred_region
    _
  $region21: #{_forward_impl.81} parent=0 // pred_fallthru
    _

// kernel: _forward_impl.82
$region0: #{_forward_impl.82}
  #allocation0 [shape = 'u32[]', space=smem, size = 0x4, offset = 0x4, fixed_abs, tag = 'smem constant byte address 0x4 - core index']
  #allocation1 [shape = 'u32[144,128]{1,0:T(1,128)}', space=vmem, size = 0x12000, scoped, tag = 'internal scratch']
  %s0 = inlined_call_operand.vmem [shape: f32[8,128], index: 0, kind: input, shape index: {}]
  %s1 = inlined_call_operand.vmem [shape: f32[128,256], index: 1, kind: input, shape index: {}]
  %s2 = inlined_call_operand.vmem [shape: f32[1,256], index: 2, kind: input, shape index: {}]
  %s3 = inlined_call_operand.vmem [shape: f32[8,256], index: 3, kind: input, shape index: {}]
  %s4 = inlined_call_operand.vmem [shape: f32[8,256], index: 4, kind: output, shape index: {}]
  %s5 = sld [smem:[#allocation0]]
  $region26: #{_forward_impl.82} parent=0
    _
  %s7 = ssub.s32 1, %s5
  %s8 = scalar_select 0, %s7, %s5
  // Predicated region
  $region2: #{_forward_impl.82} parent=0 // pred_check
    _
  $region3: #{_forward_impl.82} parent=0 // pred_check_branch
    %10 = sbr.rel (0) target = $region5
  $region4: #{_forward_impl.82} parent=0 // pred_region
    _
  $region5: #{_forward_impl.82} parent=0 // pred_fallthru
    _
  // Predicated region
  $region6: #{_forward_impl.82} parent=0 // pred_check
    _
  $region7: #{_forward_impl.82} parent=0 // pred_check_branch
    %12 = sbr.rel (0) target = $region9
  $region8: #{_forward_impl.82} parent=0 // pred_region
    _
  $region9: #{_forward_impl.82} parent=0 // pred_fallthru
    _
  // Predicated region
  $region10: #{_forward_impl.82} parent=0 // pred_check
    _
  $region11: #{_forward_impl.82} parent=0 // pred_check_branch
    %14 = sbr.rel (0) target = $region13
  $region12: #{_forward_impl.82} parent=0 // pred_region
    _
  $region13: #{_forward_impl.82} parent=0 // pred_fallthru
    _
  // Predicated region
  $region14: #{_forward_impl.82} parent=0 // pred_check
    _
  $region15: #{_forward_impl.82} parent=0 // pred_check_branch
    %16 = sbr.rel (0) target = $region17
  $region16: #{_forward_impl.82} parent=0 // pred_region
    _
  $region17: #{_forward_impl.82} parent=0 // pred_fallthru
    _
  %v17 = vld [vmem:[%s0] sm:$0xff]
  %v18 = vld [vmem:[%s1] sm:$0xff]
  %v19 = vld [vmem:[%s1 + $0x8] sm:$0xff]
  %v20 = vld [vmem:[%s1 + $0x10] sm:$0xff]
  %v21 = vld [vmem:[%s1 + $0x18] sm:$0xff]
  %v22 = vld [vmem:[%s1 + $0x20] sm:$0xff]
  %v23 = vld [vmem:[%s1 + $0x28] sm:$0xff]
  %v24 = vld [vmem:[%s1 + $0x30] sm:$0xff]
  %v25 = vld [vmem:[%s1 + $0x38] sm:$0xff]
  %v26 = vld [vmem:[%s1 + $0x40] sm:$0xff]
  %v27 = vld [vmem:[%s1 + $0x48] sm:$0xff]
  %v28 = vld [vmem:[%s1 + $0x50] sm:$0xff]
  %v29 = vld [vmem:[%s1 + $0x58] sm:$0xff]
  %v30 = vld [vmem:[%s1 + $0x60] sm:$0xff]
  %v31 = vld [vmem:[%s1 + $0x68] sm:$0xff]
  %v32 = vld [vmem:[%s1 + $0x70] sm:$0xff]
  %v33 = vld [vmem:[%s1 + $0x78] sm:$0xff]
  %v34 = vld [vmem:[%s1 + $0x80] sm:$0xff]
  %v35 = vld [vmem:[%s1 + $0x88] sm:$0xff]
  %v36 = vld [vmem:[%s1 + $0x90] sm:$0xff]
  %v37 = vld [vmem:[%s1 + $0x98] sm:$0xff]
  %v38 = vld [vmem:[%s1 + $0xa0] sm:$0xff]
  %v39 = vld [vmem:[%s1 + $0xa8] sm:$0xff]
  %v40 = vld [vmem:[%s1 + $0xb0] sm:$0xff]
  %v41 = vld [vmem:[%s1 + $0xb8] sm:$0xff]
  %v42 = vld [vmem:[%s1 + $0xc0] sm:$0xff]
  %v43 = vld [vmem:[%s1 + $0xc8] sm:$0xff]
  %v44 = vld [vmem:[%s1 + $0xd0] sm:$0xff]
  %v45 = vld [vmem:[%s1 + $0xd8] sm:$0xff]
  %v46 = vld [vmem:[%s1 + $0xe0] sm:$0xff]
  %v47 = vld [vmem:[%s1 + $0xe8] sm:$0xff]
  %v48 = vld [vmem:[%s1 + $0xf0] sm:$0xff]
  %v49 = vld [vmem:[%s1 + $0xf8] sm:$0xff]
  %v50 = vld [vmem:[%s2] sm:$0x3]
  %v52 = vlaneseq
  %v53 = vshrl.u32 %v52, 7
  %v54 = vsub.s32 0, %v53
  %v55 = vrot.slane %v50, %v54
  %v56 = vlaneseq
  %v57 = vshrl.u32 %v56, 7
  %v58 = vsub.s32 1, %v57
  %v59 = vrot.slane %v50, %v58
  %62 = vmatprep.subr.mxu0 %v49
  %63 = vmatpush1.msra.mxu0 %v48
  %64 = vmatprep.subr.mxu0 %v47
  %65 = vmatpush1.msra.mxu0 %v46
  %66 = vmatprep.subr.mxu0 %v45
  %67 = vmatpush1.msra.mxu0 %v44
  %68 = vmatprep.subr.mxu0 %v43
  %69 = vmatpush1.msra.mxu0 %v42
  %70 = vmatprep.subr.mxu0 %v41
  %71 = vmatpush1.msra.mxu0 %v40
  %72 = vmatprep.subr.mxu0 %v39
  %73 = vmatpush1.msra.mxu0 %v38
  %74 = vmatprep.subr.mxu0 %v37
  %75 = vmatpush1.msra.mxu0 %v36
  %76 = vmatprep.subr.mxu0 %v35
  %77 = vmatpush1.msra.mxu0 %v34
  %78 = vmatprep.subr.mxu0 %v33
  %79 = vmatpush1.msra.mxu0 %v32
  %80 = vmatprep.subr.mxu0 %v31
  %81 = vmatpush1.msra.mxu0 %v30
  %82 = vmatprep.subr.mxu0 %v29
  %83 = vmatpush1.msra.mxu0 %v28
  %84 = vmatprep.subr.mxu0 %v27
  %85 = vmatpush1.msra.mxu0 %v26
  %86 = vmatprep.subr.mxu0 %v25
  %87 = vmatpush1.msra.mxu0 %v24
  %88 = vmatprep.subr.mxu0 %v23
  %89 = vmatpush1.msra.mxu0 %v22
  %90 = vmatprep.subr.mxu0 %v21
  %91 = vmatpush1.msra.mxu0 %v20
  %92 = vmatprep.subr.mxu0 %v19
  %93 = vmatpush1.msra.mxu0 %v18
  %94 = vmatprep.subr.mxu0 0.0
  %95 = vmatpush2.msra.mxu0 0.0
  %96 = vmatprep.subr.mxu0 0.0
  %97 = vmatpush2.msra.mxu0 0.0
  %98 = vmatprep.subr.mxu0 0.0
  %99 = vmatpush2.msra.mxu0 0.0
  %100 = vmatprep.subr.mxu0 0.0
  %101 = vmatpush2.msra.mxu0 0.0
  %102 = vmatprep.subr.mxu0 0.0
  %103 = vmatpush2.msra.mxu0 0.0
  %104 = vmatprep.subr.mxu0 0.0
  %105 = vmatpush2.msra.mxu0 0.0
  %106 = vmatprep.subr.mxu0 0.0
  %107 = vmatpush2.msra.mxu0 0.0
  %108 = vmatprep.subr.mxu0 0.0
  %109 = vmatpush2.msra.mxu0 0.0
  %110 = vmatprep.subr.mxu0 0.0
  %111 = vmatpush2.msra.mxu0 0.0
  %112 = vmatprep.subr.mxu0 0.0
  %113 = vmatpush2.msra.mxu0 0.0
  %114 = vmatprep.subr.mxu0 0.0
  %115 = vmatpush2.msra.mxu0 0.0
  %116 = vmatprep.subr.mxu0 0.0
  %117 = vmatpush2.msra.mxu0 0.0
  %118 = vmatprep.subr.mxu0 0.0
  %119 = vmatpush2.msra.mxu0 0.0
  %120 = vmatprep.subr.mxu0 0.0
  %121 = vmatpush2.msra.mxu0 0.0
  %122 = vmatprep.subr.mxu0 0.0
  %123 = vmatpush2.msra.mxu0 0.0
  %124 = vmatprep.subr.mxu0 0.0
  %125 = vmatpush2.msra.mxu0 0.0
  %126 = vmatprep.mubr.f32.mxu0 0.0
  %127 = vmatmul.mubr.f32.gmra.mxu0 %v17
  %v128 = vpop.f32.mrf.mxu0
  %v129 = vadd.f32 %v55, %v128
  %v130 = vpop.f32.mrf.mxu0
  %v131 = vadd.f32 %v59, %v130
  %132 = vdwg.mxu0
  %v133 = vld [vmem:[%s3] sm:$0xff]
  %v134 = vld [vmem:[%s3 + $0x8] sm:$0xff]
  %v135 = vadd.f32 %v129, %v133
  %v136 = vadd.f32 %v131, %v134
  %v137 = vmax.f32 %v135, 0.0
  %v138 = vmax.f32 %v136, 0.0
  %139 = vst [vmem:[%s4] sm:$0xff] %v137
  %140 = vst [vmem:[%s4 + $0x8] sm:$0xff] %v138
  // Predicated region
  $region18: #{_forward_impl.82} parent=0 // pred_check
    _
  $region19: #{_forward_impl.82} parent=0 // pred_check_branch
    %142 = sbr.rel (0) target = $region21
  $region20: #{_forward_impl.82} parent=0 // pred_region
    _
  $region21: #{_forward_impl.82} parent=0 // pred_fallthru
    _
  // Predicated region
  $region22: #{_forward_impl.82} parent=0 // pred_check
    _
  $region23: #{_forward_impl.82} parent=0 // pred_check_branch
    %144 = sbr.rel (0) target = $region25
  $region24: #{_forward_impl.82} parent=0 // pred_region
    _
  $region25: #{_forward_impl.82} parent=0 // pred_fallthru
    _

// kernel: _forward_impl.83
$region0: #{_forward_impl.83}
  #allocation0 [shape = 'u32[]', space=smem, size = 0x4, offset = 0x4, fixed_abs, tag = 'smem constant byte address 0x4 - core index']
  #allocation1 [shape = 'u32[144,128]{1,0:T(1,128)}', space=vmem, size = 0x12000, scoped, tag = 'internal scratch']
  %s0 = inlined_call_operand.vmem [shape: f32[8,256], index: 0, kind: input, shape index: {}]
  %s1 = inlined_call_operand.vmem [shape: f32[256,128], index: 1, kind: input, shape index: {}]
  %s2 = inlined_call_operand.vmem [shape: f32[1,128], index: 2, kind: input, shape index: {}]
  %s3 = inlined_call_operand.vmem [shape: f32[8,128], index: 3, kind: output, shape index: {}]
  %s4 = sld [smem:[#allocation0]]
  $region22: #{_forward_impl.83} parent=0
    _
  %s6 = ssub.s32 1, %s4
  %s7 = scalar_select 0, %s6, %s4
  // Predicated region
  $region2: #{_forward_impl.83} parent=0 // pred_check
    _
  $region3: #{_forward_impl.83} parent=0 // pred_check_branch
    %9 = sbr.rel (0) target = $region5
  $region4: #{_forward_impl.83} parent=0 // pred_region
    _
  $region5: #{_forward_impl.83} parent=0 // pred_fallthru
    _
  // Predicated region
  $region6: #{_forward_impl.83} parent=0 // pred_check
    _
  $region7: #{_forward_impl.83} parent=0 // pred_check_branch
    %11 = sbr.rel (0) target = $region9
  $region8: #{_forward_impl.83} parent=0 // pred_region
    _
  $region9: #{_forward_impl.83} parent=0 // pred_fallthru
    _
  // Predicated region
  $region10: #{_forward_impl.83} parent=0 // pred_check
    _
  $region11: #{_forward_impl.83} parent=0 // pred_check_branch
    %13 = sbr.rel (0) target = $region13
  $region12: #{_forward_impl.83} parent=0 // pred_region
    _
  $region13: #{_forward_impl.83} parent=0 // pred_fallthru
    _
  %v14 = vld [vmem:[%s0] sm:$0xff]
  %v15 = vld [vmem:[%s0 + $0x8] sm:$0xff]
  %v16 = vld [vmem:[%s1] sm:$0xff]
  %v17 = vld [vmem:[%s1 + $0x8] sm:$0xff]
  %v18 = vld [vmem:[%s1 + $0x10] sm:$0xff]
  %v19 = vld [vmem:[%s1 + $0x18] sm:$0xff]
  %v20 = vld [vmem:[%s1 + $0x20] sm:$0xff]
  %v21 = vld [vmem:[%s1 + $0x28] sm:$0xff]
  %v22 = vld [vmem:[%s1 + $0x30] sm:$0xff]
  %v23 = vld [vmem:[%s1 + $0x38] sm:$0xff]
  %v24 = vld [vmem:[%s1 + $0x40] sm:$0xff]
  %v25 = vld [vmem:[%s1 + $0x48] sm:$0xff]
  %v26 = vld [vmem:[%s1 + $0x50] sm:$0xff]
  %v27 = vld [vmem:[%s1 + $0x58] sm:$0xff]
  %v28 = vld [vmem:[%s1 + $0x60] sm:$0xff]
  %v29 = vld [vmem:[%s1 + $0x68] sm:$0xff]
  %v30 = vld [vmem:[%s1 + $0x70] sm:$0xff]
  %v31 = vld [vmem:[%s1 + $0x78] sm:$0xff]
  %v32 = vld [vmem:[%s1 + $0x80] sm:$0xff]
  %v33 = vld [vmem:[%s1 + $0x88] sm:$0xff]
  %v34 = vld [vmem:[%s1 + $0x90] sm:$0xff]
  %v35 = vld [vmem:[%s1 + $0x98] sm:$0xff]
  %v36 = vld [vmem:[%s1 + $0xa0] sm:$0xff]
  %v37 = vld [vmem:[%s1 + $0xa8] sm:$0xff]
  %v38 = vld [vmem:[%s1 + $0xb0] sm:$0xff]
  %v39 = vld [vmem:[%s1 + $0xb8] sm:$0xff]
  %v40 = vld [vmem:[%s1 + $0xc0] sm:$0xff]
  %v41 = vld [vmem:[%s1 + $0xc8] sm:$0xff]
  %v42 = vld [vmem:[%s1 + $0xd0] sm:$0xff]
  %v43 = vld [vmem:[%s1 + $0xd8] sm:$0xff]
  %v44 = vld [vmem:[%s1 + $0xe0] sm:$0xff]
  %v45 = vld [vmem:[%s1 + $0xe8] sm:$0xff]
  %v46 = vld [vmem:[%s1 + $0xf0] sm:$0xff]
  %v47 = vld [vmem:[%s1 + $0xf8] sm:$0xff]
  %v48 = vld [vmem:[%s2] sm:$0x1]
  %v50 = vlaneseq
  %v51 = vshrl.u32 %v50, 7
  %v52 = vsub.s32 0, %v51
  %v53 = vrot.slane %v48, %v52
  %55 = vmatprep.subr.mxu0 0.0
  %56 = vmatpush1.msra.mxu0 %v31
  %57 = vmatprep.subr.mxu0 0.0
  %58 = vmatpush1.msra.mxu0 %v30
  %59 = vmatprep.subr.mxu0 0.0
  %60 = vmatpush1.msra.mxu0 %v29
  %61 = vmatprep.subr.mxu0 0.0
  %62 = vmatpush1.msra.mxu0 %v28
  %63 = vmatprep.subr.mxu0 0.0
  %64 = vmatpush1.msra.mxu0 %v27
  %65 = vmatprep.subr.mxu0 0.0
  %66 = vmatpush1.msra.mxu0 %v26
  %67 = vmatprep.subr.mxu0 0.0
  %68 = vmatpush1.msra.mxu0 %v25
  %69 = vmatprep.subr.mxu0 0.0
  %70 = vmatpush1.msra.mxu0 %v24
  %71 = vmatprep.subr.mxu0 0.0
  %72 = vmatpush1.msra.mxu0 %v23
  %73 = vmatprep.subr.mxu0 0.0
  %74 = vmatpush1.msra.mxu0 %v22
  %75 = vmatprep.subr.mxu0 0.0
  %76 = vmatpush1.msra.mxu0 %v21
  %77 = vmatprep.subr.mxu0 0.0
  %78 = vmatpush1.msra.mxu0 %v20
  %79 = vmatprep.subr.mxu0 0.0
  %80 = vmatpush1.msra.mxu0 %v19
  %81 = vmatprep.subr.mxu0 0.0
  %82 = vmatpush1.msra.mxu0 %v18
  %83 = vmatprep.subr.mxu0 0.0
  %84 = vmatpush1.msra.mxu0 %v17
  %85 = vmatprep.subr.mxu0 0.0
  %86 = vmatpush1.msra.mxu0 %v16
  %87 = vmatprep.subr.mxu0 0.0
  %88 = vmatpush2.msra.mxu0 %v47
  %89 = vmatprep.subr.mxu0 0.0
  %90 = vmatpush2.msra.mxu0 %v46
  %91 = vmatprep.subr.mxu0 0.0
  %92 = vmatpush2.msra.mxu0 %v45
  %93 = vmatprep.subr.mxu0 0.0
  %94 = vmatpush2.msra.mxu0 %v44
  %95 = vmatprep.subr.mxu0 0.0
  %96 = vmatpush2.msra.mxu0 %v43
  %97 = vmatprep.subr.mxu0 0.0
  %98 = vmatpush2.msra.mxu0 %v42
  %99 = vmatprep.subr.mxu0 0.0
  %100 = vmatpush2.msra.mxu0 %v41
  %101 = vmatprep.subr.mxu0 0.0
  %102 = vmatpush2.msra.mxu0 %v40
  %103 = vmatprep.subr.mxu0 0.0
  %104 = vmatpush2.msra.mxu0 %v39
  %105 = vmatprep.subr.mxu0 0.0
  %106 = vmatpush2.msra.mxu0 %v38
  %107 = vmatprep.subr.mxu0 0.0
  %108 = vmatpush2.msra.mxu0 %v37
  %109 = vmatprep.subr.mxu0 0.0
  %110 = vmatpush2.msra.mxu0 %v36
  %111 = vmatprep.subr.mxu0 0.0
  %112 = vmatpush2.msra.mxu0 %v35
  %113 = vmatprep.subr.mxu0 0.0
  %114 = vmatpush2.msra.mxu0 %v34
  %115 = vmatprep.subr.mxu0 0.0
  %116 = vmatpush2.msra.mxu0 %v33
  %117 = vmatprep.subr.mxu0 0.0
  %118 = vmatpush2.msra.mxu0 %v32
  %119 = vmatprep.mubr.f32.mxu0 %v15
  %120 = vmatmul.mubr.f32.gmra.mxu0 %v14
  %v121 = vpop.f32.mrf.mxu0
  %v122 = vadd.f32 %v53, %v121
  %v123 = vpop.f32.mrf.mxu0
  %124 = vdwg.mxu0
  %v125 = vmax.f32 %v122, 0.0
  %126 = vst [vmem:[%s3] sm:$0xff] %v125
  // Predicated region
  $region14: #{_forward_impl.83} parent=0 // pred_check
    _
  $region15: #{_forward_impl.83} parent=0 // pred_check_branch
    %128 = sbr.rel (0) target = $region17
  $region16: #{_forward_impl.83} parent=0 // pred_region
    _
  $region17: #{_forward_impl.83} parent=0 // pred_fallthru
    _
  // Predicated region
  $region18: #{_forward_impl.83} parent=0 // pred_check
    _
  $region19: #{_forward_impl.83} parent=0 // pred_check_branch
    %130 = sbr.rel (0) target = $region21
  $region20: #{_forward_impl.83} parent=0 // pred_region
    _
  $region21: #{_forward_impl.83} parent=0 // pred_fallthru
    _

// kernel: _forward_impl.102
$region0: #{_forward_impl.102}
  #allocation0 [shape = 'u32[]', space=smem, size = 0x4, offset = 0x4, fixed_abs, tag = 'smem constant byte address 0x4 - core index']
  #allocation1 [shape = 'u32[144,128]{1,0:T(1,128)}', space=vmem, size = 0x12000, scoped, tag = 'internal scratch']
  %s0 = inlined_call_operand.vmem [shape: f32[8,512], index: 0, kind: input, shape index: {}]
  %s1 = inlined_call_operand.vmem [shape: f32[512,128], index: 1, kind: input, shape index: {}]
  %s2 = inlined_call_operand.vmem [shape: f32[1,128], index: 2, kind: input, shape index: {}]
  %s3 = inlined_call_operand.vmem [shape: f32[8,128], index: 3, kind: output, shape index: {}]
  %s4 = sld [smem:[#allocation0]]
  $region22: #{_forward_impl.102} parent=0
    _
  %s6 = ssub.s32 1, %s4
  %s7 = scalar_select 0, %s6, %s4
  // Predicated region
  $region2: #{_forward_impl.102} parent=0 // pred_check
    _
  $region3: #{_forward_impl.102} parent=0 // pred_check_branch
    %9 = sbr.rel (0) target = $region5
  $region4: #{_forward_impl.102} parent=0 // pred_region
    _
  $region5: #{_forward_impl.102} parent=0 // pred_fallthru
    _
  // Predicated region
  $region6: #{_forward_impl.102} parent=0 // pred_check
    _
  $region7: #{_forward_impl.102} parent=0 // pred_check_branch
    %11 = sbr.rel (0) target = $region9
  $region8: #{_forward_impl.102} parent=0 // pred_region
    _
  $region9: #{_forward_impl.102} parent=0 // pred_fallthru
    _
  // Predicated region
  $region10: #{_forward_impl.102} parent=0 // pred_check
    _
  $region11: #{_forward_impl.102} parent=0 // pred_check_branch
    %13 = sbr.rel (0) target = $region13
  $region12: #{_forward_impl.102} parent=0 // pred_region
    _
  $region13: #{_forward_impl.102} parent=0 // pred_fallthru
    _
  %v14 = vld [vmem:[%s0] sm:$0xff]
  %v15 = vld [vmem:[%s0 + $0x8] sm:$0xff]
  %v16 = vld [vmem:[%s0 + $0x10] sm:$0xff]
  %v17 = vld [vmem:[%s0 + $0x18] sm:$0xff]
  %v18 = vld [vmem:[%s1] sm:$0xff]
  %v19 = vld [vmem:[%s1 + $0x8] sm:$0xff]
  %v20 = vld [vmem:[%s1 + $0x10] sm:$0xff]
  %v21 = vld [vmem:[%s1 + $0x18] sm:$0xff]
  %v22 = vld [vmem:[%s1 + $0x20] sm:$0xff]
  %v23 = vld [vmem:[%s1 + $0x28] sm:$0xff]
  %v24 = vld [vmem:[%s1 + $0x30] sm:$0xff]
  %v25 = vld [vmem:[%s1 + $0x38] sm:$0xff]
  %v26 = vld [vmem:[%s1 + $0x40] sm:$0xff]
  %v27 = vld [vmem:[%s1 + $0x48] sm:$0xff]
  %v28 = vld [vmem:[%s1 + $0x50] sm:$0xff]
  %v29 = vld [vmem:[%s1 + $0x58] sm:$0xff]
  %v30 = vld [vmem:[%s1 + $0x60] sm:$0xff]
  %v31 = vld [vmem:[%s1 + $0x68] sm:$0xff]
  %v32 = vld [vmem:[%s1 + $0x70] sm:$0xff]
  %v33 = vld [vmem:[%s1 + $0x78] sm:$0xff]
  %v34 = vld [vmem:[%s1 + $0x80] sm:$0xff]
  %v35 = vld [vmem:[%s1 + $0x88] sm:$0xff]
  %v36 = vld [vmem:[%s1 + $0x90] sm:$0xff]
  %v37 = vld [vmem:[%s1 + $0x98] sm:$0xff]
  %v38 = vld [vmem:[%s1 + $0xa0] sm:$0xff]
  %v39 = vld [vmem:[%s1 + $0xa8] sm:$0xff]
  %v40 = vld [vmem:[%s1 + $0xb0] sm:$0xff]
  %v41 = vld [vmem:[%s1 + $0xb8] sm:$0xff]
  %v42 = vld [vmem:[%s1 + $0xc0] sm:$0xff]
  %v43 = vld [vmem:[%s1 + $0xc8] sm:$0xff]
  %v44 = vld [vmem:[%s1 + $0xd0] sm:$0xff]
  %v45 = vld [vmem:[%s1 + $0xd8] sm:$0xff]
  %v46 = vld [vmem:[%s1 + $0xe0] sm:$0xff]
  %v47 = vld [vmem:[%s1 + $0xe8] sm:$0xff]
  %v48 = vld [vmem:[%s1 + $0xf0] sm:$0xff]
  %v49 = vld [vmem:[%s1 + $0xf8] sm:$0xff]
  %v50 = vld [vmem:[%s1 + $0x100] sm:$0xff]
  %v51 = vld [vmem:[%s1 + $0x108] sm:$0xff]
  %v52 = vld [vmem:[%s1 + $0x110] sm:$0xff]
  %v53 = vld [vmem:[%s1 + $0x118] sm:$0xff]
  %v54 = vld [vmem:[%s1 + $0x120] sm:$0xff]
  %v55 = vld [vmem:[%s1 + $0x128] sm:$0xff]
  %v56 = vld [vmem:[%s1 + $0x130] sm:$0xff]
  %v57 = vld [vmem:[%s1 + $0x138] sm:$0xff]
  %v58 = vld [vmem:[%s1 + $0x140] sm:$0xff]
  %v59 = vld [vmem:[%s1 + $0x148] sm:$0xff]
  %v60 = vld [vmem:[%s1 + $0x150] sm:$0xff]
  %v61 = vld [vmem:[%s1 + $0x158] sm:$0xff]
  %v62 = vld [vmem:[%s1 + $0x160] sm:$0xff]
  %v63 = vld [vmem:[%s1 + $0x168] sm:$0xff]
  %v64 = vld [vmem:[%s1 + $0x170] sm:$0xff]
  %v65 = vld [vmem:[%s1 + $0x178] sm:$0xff]
  %v66 = vld [vmem:[%s1 + $0x180] sm:$0xff]
  %v67 = vld [vmem:[%s1 + $0x188] sm:$0xff]
  %v68 = vld [vmem:[%s1 + $0x190] sm:$0xff]
  %v69 = vld [vmem:[%s1 + $0x198] sm:$0xff]
  %v70 = vld [vmem:[%s1 + $0x1a0] sm:$0xff]
  %v71 = vld [vmem:[%s1 + $0x1a8] sm:$0xff]
  %v72 = vld [vmem:[%s1 + $0x1b0] sm:$0xff]
  %v73 = vld [vmem:[%s1 + $0x1b8] sm:$0xff]
  %v74 = vld [vmem:[%s1 + $0x1c0] sm:$0xff]
  %v75 = vld [vmem:[%s1 + $0x1c8] sm:$0xff]
  %v76 = vld [vmem:[%s1 + $0x1d0] sm:$0xff]
  %v77 = vld [vmem:[%s1 + $0x1d8] sm:$0xff]
  %v78 = vld [vmem:[%s1 + $0x1e0] sm:$0xff]
  %v79 = vld [vmem:[%s1 + $0x1e8] sm:$0xff]
  %v80 = vld [vmem:[%s1 + $0x1f0] sm:$0xff]
  %v81 = vld [vmem:[%s1 + $0x1f8] sm:$0xff]
  %v82 = vld [vmem:[%s2] sm:$0x1]
  %v84 = vlaneseq
  %v85 = vshrl.u32 %v84, 7
  %v86 = vsub.s32 0, %v85
  %v87 = vrot.slane %v82, %v86
  %89 = vmatprep.subr.mxu0 0.0
  %90 = vmatpush1.msra.mxu0 %v33
  %91 = vmatprep.subr.mxu0 0.0
  %92 = vmatpush1.msra.mxu0 %v32
  %93 = vmatprep.subr.mxu0 0.0
  %94 = vmatpush1.msra.mxu0 %v31
  %95 = vmatprep.subr.mxu0 0.0
  %96 = vmatpush1.msra.mxu0 %v30
  %97 = vmatprep.subr.mxu0 0.0
  %98 = vmatpush1.msra.mxu0 %v29
  %99 = vmatprep.subr.mxu0 0.0
  %100 = vmatpush1.msra.mxu0 %v28
  %101 = vmatprep.subr.mxu0 0.0
  %102 = vmatpush1.msra.mxu0 %v27
  %103 = vmatprep.subr.mxu0 0.0
  %104 = vmatpush1.msra.mxu0 %v26
  %105 = vmatprep.subr.mxu0 0.0
  %106 = vmatpush1.msra.mxu0 %v25
  %107 = vmatprep.subr.mxu0 0.0
  %108 = vmatpush1.msra.mxu0 %v24
  %109 = vmatprep.subr.mxu0 0.0
  %110 = vmatpush1.msra.mxu0 %v23
  %111 = vmatprep.subr.mxu0 0.0
  %112 = vmatpush1.msra.mxu0 %v22
  %113 = vmatprep.subr.mxu0 0.0
  %114 = vmatpush1.msra.mxu0 %v21
  %115 = vmatprep.subr.mxu0 0.0
  %116 = vmatpush1.msra.mxu0 %v20
  %117 = vmatprep.subr.mxu0 0.0
  %118 = vmatpush1.msra.mxu0 %v19
  %119 = vmatprep.subr.mxu0 0.0
  %120 = vmatpush1.msra.mxu0 %v18
  %121 = vmatprep.subr.mxu0 0.0
  %122 = vmatpush2.msra.mxu0 %v49
  %123 = vmatprep.subr.mxu0 0.0
  %124 = vmatpush2.msra.mxu0 %v48
  %125 = vmatprep.subr.mxu0 0.0
  %126 = vmatpush2.msra.mxu0 %v47
  %127 = vmatprep.subr.mxu0 0.0
  %128 = vmatpush2.msra.mxu0 %v46
  %129 = vmatprep.subr.mxu0 0.0
  %130 = vmatpush2.msra.mxu0 %v45
  %131 = vmatprep.subr.mxu0 0.0
  %132 = vmatpush2.msra.mxu0 %v44
  %133 = vmatprep.subr.mxu0 0.0
  %134 = vmatpush2.msra.mxu0 %v43
  %135 = vmatprep.subr.mxu0 0.0
  %136 = vmatpush2.msra.mxu0 %v42
  %137 = vmatprep.subr.mxu0 0.0
  %138 = vmatpush2.msra.mxu0 %v41
  %139 = vmatprep.subr.mxu0 0.0
  %140 = vmatpush2.msra.mxu0 %v40
  %141 = vmatprep.subr.mxu0 0.0
  %142 = vmatpush2.msra.mxu0 %v39
  %143 = vmatprep.subr.mxu0 0.0
  %144 = vmatpush2.msra.mxu0 %v38
  %145 = vmatprep.subr.mxu0 0.0
  %146 = vmatpush2.msra.mxu0 %v37
  %147 = vmatprep.subr.mxu0 0.0
  %148 = vmatpush2.msra.mxu0 %v36
  %149 = vmatprep.subr.mxu0 0.0
  %150 = vmatpush2.msra.mxu0 %v35
  %151 = vmatprep.subr.mxu0 0.0
  %152 = vmatpush2.msra.mxu0 %v34
  %153 = vmatprep.mubr.f32.mxu0 %v15
  %154 = vmatmul.mubr.f32.gmra.mxu0 %v14
  %v155 = vpop.f32.mrf.mxu0
  %v156 = vadd.f32 %v87, %v155
  %v157 = vpop.f32.mrf.mxu0
  %158 = vdwg.mxu0
  %159 = vmatprep.subr.mxu0 0.0
  %160 = vmatpush1.msra.mxu0 %v65
  %161 = vmatprep.subr.mxu0 0.0
  %162 = vmatpush1.msra.mxu0 %v64
  %163 = vmatprep.subr.mxu0 0.0
  %164 = vmatpush1.msra.mxu0 %v63
  %165 = vmatprep.subr.mxu0 0.0
  %166 = vmatpush1.msra.mxu0 %v62
  %167 = vmatprep.subr.mxu0 0.0
  %168 = vmatpush1.msra.mxu0 %v61
  %169 = vmatprep.subr.mxu0 0.0
  %170 = vmatpush1.msra.mxu0 %v60
  %171 = vmatprep.subr.mxu0 0.0
  %172 = vmatpush1.msra.mxu0 %v59
  %173 = vmatprep.subr.mxu0 0.0
  %174 = vmatpush1.msra.mxu0 %v58
  %175 = vmatprep.subr.mxu0 0.0
  %176 = vmatpush1.msra.mxu0 %v57
  %177 = vmatprep.subr.mxu0 0.0
  %178 = vmatpush1.msra.mxu0 %v56
  %179 = vmatprep.subr.mxu0 0.0
  %180 = vmatpush1.msra.mxu0 %v55
  %181 = vmatprep.subr.mxu0 0.0
  %182 = vmatpush1.msra.mxu0 %v54
  %183 = vmatprep.subr.mxu0 0.0
  %184 = vmatpush1.msra.mxu0 %v53
  %185 = vmatprep.subr.mxu0 0.0
  %186 = vmatpush1.msra.mxu0 %v52
  %187 = vmatprep.subr.mxu0 0.0
  %188 = vmatpush1.msra.mxu0 %v51
  %189 = vmatprep.subr.mxu0 0.0
  %190 = vmatpush1.msra.mxu0 %v50
  %191 = vmatprep.subr.mxu0 0.0
  %192 = vmatpush2.msra.mxu0 %v81
  %193 = vmatprep.subr.mxu0 0.0
  %194 = vmatpush2.msra.mxu0 %v80
  %195 = vmatprep.subr.mxu0 0.0
  %196 = vmatpush2.msra.mxu0 %v79
  %197 = vmatprep.subr.mxu0 0.0
  %198 = vmatpush2.msra.mxu0 %v78
  %199 = vmatprep.subr.mxu0 0.0
  %200 = vmatpush2.msra.mxu0 %v77
  %201 = vmatprep.subr.mxu0 0.0
  %202 = vmatpush2.msra.mxu0 %v76
  %203 = vmatprep.subr.mxu0 0.0
  %204 = vmatpush2.msra.mxu0 %v75
  %205 = vmatprep.subr.mxu0 0.0
  %206 = vmatpush2.msra.mxu0 %v74
  %207 = vmatprep.subr.mxu0 0.0
  %208 = vmatpush2.msra.mxu0 %v73
  %209 = vmatprep.subr.mxu0 0.0
  %210 = vmatpush2.msra.mxu0 %v72
  %211 = vmatprep.subr.mxu0 0.0
  %212 = vmatpush2.msra.mxu0 %v71
  %213 = vmatprep.subr.mxu0 0.0
  %214 = vmatpush2.msra.mxu0 %v70
  %215 = vmatprep.subr.mxu0 0.0
  %216 = vmatpush2.msra.mxu0 %v69
  %217 = vmatprep.subr.mxu0 0.0
  %218 = vmatpush2.msra.mxu0 %v68
  %219 = vmatprep.subr.mxu0 0.0
  %220 = vmatpush2.msra.mxu0 %v67
  %221 = vmatprep.subr.mxu0 0.0
  %222 = vmatpush2.msra.mxu0 %v66
  %223 = vmatprep.mubr.f32.mxu0 %v17
  %224 = vmatmul.mubr.f32.gmra.mxu0 %v16
  %v225 = vpop.f32.mrf.mxu0
  %v226 = vadd.f32 %v156, %v225
  %v227 = vpop.f32.mrf.mxu0
  %228 = vdwg.mxu0
  %v229 = vmax.f32 %v226, 0.0
  %230 = vst [vmem:[%s3] sm:$0xff] %v229
  // Predicated region
  $region14: #{_forward_impl.102} parent=0 // pred_check
    _
  $region15: #{_forward_impl.102} parent=0 // pred_check_branch
    %232 = sbr.rel (0) target = $region17
  $region16: #{_forward_impl.102} parent=0 // pred_region
    _
  $region17: #{_forward_impl.102} parent=0 // pred_fallthru
    _
  // Predicated region
  $region18: #{_forward_impl.102} parent=0 // pred_check
    _
  $region19: #{_forward_impl.102} parent=0 // pred_check_branch
    %234 = sbr.rel (0) target = $region21
  $region20: #{_forward_impl.102} parent=0 // pred_region
    _
  $region21: #{_forward_impl.102} parent=0 // pred_fallthru
    _

// kernel: _forward_impl.99
$region0: #{_forward_impl.99}
  #allocation0 [shape = 'u32[]', space=smem, size = 0x4, offset = 0x4, fixed_abs, tag = 'smem constant byte address 0x4 - core index']
  #allocation1 [shape = 'u32[144,128]{1,0:T(1,128)}', space=vmem, size = 0x12000, scoped, tag = 'internal scratch']
  %s0 = inlined_call_operand.vmem [shape: f32[8,1152], index: 0, kind: input, shape index: {}]
  %s1 = inlined_call_operand.vmem [shape: f32[1152,128], index: 1, kind: input, shape index: {}]
  %s2 = inlined_call_operand.vmem [shape: f32[1,128], index: 2, kind: input, shape index: {}]
  %s3 = inlined_call_operand.vmem [shape: f32[8,128], index: 3, kind: output, shape index: {}]
  %s4 = sld [smem:[#allocation0]]
  $region22: #{_forward_impl.99} parent=0
    _
  %s6 = ssub.s32 1, %s4
  %s7 = scalar_select 0, %s6, %s4
  // Predicated region
  $region2: #{_forward_impl.99} parent=0 // pred_check
    _
  $region3: #{_forward_impl.99} parent=0 // pred_check_branch
    %9 = sbr.rel (0) target = $region5
  $region4: #{_forward_impl.99} parent=0 // pred_region
    _
  $region5: #{_forward_impl.99} parent=0 // pred_fallthru
    _
  // Predicated region
  $region6: #{_forward_impl.99} parent=0 // pred_check
    _
  $region7: #{_forward_impl.99} parent=0 // pred_check_branch
    %11 = sbr.rel (0) target = $region9
  $region8: #{_forward_impl.99} parent=0 // pred_region
    _
  $region9: #{_forward_impl.99} parent=0 // pred_fallthru
    _
  // Predicated region
  $region10: #{_forward_impl.99} parent=0 // pred_check
    _
  $region11: #{_forward_impl.99} parent=0 // pred_check_branch
    %13 = sbr.rel (0) target = $region13
  $region12: #{_forward_impl.99} parent=0 // pred_region
    _
  $region13: #{_forward_impl.99} parent=0 // pred_fallthru
    _
  %v14 = vld [vmem:[%s0] sm:$0xff]
  %v15 = vld [vmem:[%s0 + $0x8] sm:$0xff]
  %v16 = vld [vmem:[%s0 + $0x10] sm:$0xff]
  %v17 = vld [vmem:[%s0 + $0x18] sm:$0xff]
  %v18 = vld [vmem:[%s0 + $0x20] sm:$0xff]
  %v19 = vld [vmem:[%s0 + $0x28] sm:$0xff]
  %v20 = vld [vmem:[%s0 + $0x30] sm:$0xff]
  %v21 = vld [vmem:[%s0 + $0x38] sm:$0xff]
  %v22 = vld [vmem:[%s0 + $0x40] sm:$0xff]
  %v23 = vld [vmem:[%s1] sm:$0xff]
  %v24 = vld [vmem:[%s1 + $0x8] sm:$0xff]
  %v25 = vld [vmem:[%s1 + $0x10] sm:$0xff]
  %v26 = vld [vmem:[%s1 + $0x18] sm:$0xff]
  %v27 = vld [vmem:[%s1 + $0x20] sm:$0xff]
  %v28 = vld [vmem:[%s1 + $0x28] sm:$0xff]
  %v29 = vld [vmem:[%s1 + $0x30] sm:$0xff]
  %v30 = vld [vmem:[%s1 + $0x38] sm:$0xff]
  %v31 = vld [vmem:[%s1 + $0x40] sm:$0xff]
  %v32 = vld [vmem:[%s1 + $0x48] sm:$0xff]
  %v33 = vld [vmem:[%s1 + $0x50] sm:$0xff]
  %v34 = vld [vmem:[%s1 + $0x58] sm:$0xff]
  %v35 = vld [vmem:[%s1 + $0x60] sm:$0xff]
  %v36 = vld [vmem:[%s1 + $0x68] sm:$0xff]
  %v37 = vld [vmem:[%s1 + $0x70] sm:$0xff]
  %v38 = vld [vmem:[%s1 + $0x78] sm:$0xff]
  %v39 = vld [vmem:[%s1 + $0x80] sm:$0xff]
  %v40 = vld [vmem:[%s1 + $0x88] sm:$0xff]
  %v41 = vld [vmem:[%s1 + $0x90] sm:$0xff]
  %v42 = vld [vmem:[%s1 + $0x98] sm:$0xff]
  %v43 = vld [vmem:[%s1 + $0xa0] sm:$0xff]
  %v44 = vld [vmem:[%s1 + $0xa8] sm:$0xff]
  %v45 = vld [vmem:[%s1 + $0xb0] sm:$0xff]
  %v46 = vld [vmem:[%s1 + $0xb8] sm:$0xff]
  %v47 = vld [vmem:[%s1 + $0xc0] sm:$0xff]
  %v48 = vld [vmem:[%s1 + $0xc8] sm:$0xff]
  %v49 = vld [vmem:[%s1 + $0xd0] sm:$0xff]
  %v50 = vld [vmem:[%s1 + $0xd8] sm:$0xff]
  %v51 = vld [vmem:[%s1 + $0xe0] sm:$0xff]
  %v52 = vld [vmem:[%s1 + $0xe8] sm:$0xff]
  %v53 = vld [vmem:[%s1 + $0xf0] sm:$0xff]
  %v54 = vld [vmem:[%s1 + $0xf8] sm:$0xff]
  %v55 = vld [vmem:[%s1 + $0x100] sm:$0xff]
  %v56 = vld [vmem:[%s1 + $0x108] sm:$0xff]
  %v57 = vld [vmem:[%s1 + $0x110] sm:$0xff]
  %v58 = vld [vmem:[%s1 + $0x118] sm:$0xff]
  %v59 = vld [vmem:[%s1 + $0x120] sm:$0xff]
  %v60 = vld [vmem:[%s1 + $0x128] sm:$0xff]
  %v61 = vld [vmem:[%s1 + $0x130] sm:$0xff]
  %v62 = vld [vmem:[%s1 + $0x138] sm:$0xff]
  %v63 = vld [vmem:[%s1 + $0x140] sm:$0xff]
  %v64 = vld [vmem:[%s1 + $0x148] sm:$0xff]
  %v65 = vld [vmem:[%s1 + $0x150] sm:$0xff]
  %v66 = vld [vmem:[%s1 + $0x158] sm:$0xff]
  %v67 = vld [vmem:[%s1 + $0x160] sm:$0xff]
  %v68 = vld [vmem:[%s1 + $0x168] sm:$0xff]
  %v69 = vld [vmem:[%s1 + $0x170] sm:$0xff]
  %v70 = vld [vmem:[%s1 + $0x178] sm:$0xff]
  %v71 = vld [vmem:[%s1 + $0x180] sm:$0xff]
  %v72 = vld [vmem:[%s1 + $0x188] sm:$0xff]
  %v73 = vld [vmem:[%s1 + $0x190] sm:$0xff]
  %v74 = vld [vmem:[%s1 + $0x198] sm:$0xff]
  %v75 = vld [vmem:[%s1 + $0x1a0] sm:$0xff]
  %v76 = vld [vmem:[%s1 + $0x1a8] sm:$0xff]
  %v77 = vld [vmem:[%s1 + $0x1b0] sm:$0xff]
  %v78 = vld [vmem:[%s1 + $0x1b8] sm:$0xff]
  %v79 = vld [vmem:[%s1 + $0x1c0] sm:$0xff]
  %v80 = vld [vmem:[%s1 + $0x1c8] sm:$0xff]
  %v81 = vld [vmem:[%s1 + $0x1d0] sm:$0xff]
  %v82 = vld [vmem:[%s1 + $0x1d8] sm:$0xff]
  %v83 = vld [vmem:[%s1 + $0x1e0] sm:$0xff]
  %v84 = vld [vmem:[%s1 + $0x1e8] sm:$0xff]
  %v85 = vld [vmem:[%s1 + $0x1f0] sm:$0xff]
  %v86 = vld [vmem:[%s1 + $0x1f8] sm:$0xff]
  %v87 = vld [vmem:[%s1 + $0x200] sm:$0xff]
  %v88 = vld [vmem:[%s1 + $0x208] sm:$0xff]
  %v89 = vld [vmem:[%s1 + $0x210] sm:$0xff]
  %v90 = vld [vmem:[%s1 + $0x218] sm:$0xff]
  %v91 = vld [vmem:[%s1 + $0x220] sm:$0xff]
  %v92 = vld [vmem:[%s1 + $0x228] sm:$0xff]
  %v93 = vld [vmem:[%s1 + $0x230] sm:$0xff]
  %v94 = vld [vmem:[%s1 + $0x238] sm:$0xff]
  %v95 = vld [vmem:[%s1 + $0x240] sm:$0xff]
  %v96 = vld [vmem:[%s1 + $0x248] sm:$0xff]
  %v97 = vld [vmem:[%s1 + $0x250] sm:$0xff]
  %v98 = vld [vmem:[%s1 + $0x258] sm:$0xff]
  %v99 = vld [vmem:[%s1 + $0x260] sm:$0xff]
  %v100 = vld [vmem:[%s1 + $0x268] sm:$0xff]
  %v101 = vld [vmem:[%s1 + $0x270] sm:$0xff]
  %v102 = vld [vmem:[%s1 + $0x278] sm:$0xff]
  %v103 = vld [vmem:[%s1 + $0x280] sm:$0xff]
  %v104 = vld [vmem:[%s1 + $0x288] sm:$0xff]
  %v105 = vld [vmem:[%s1 + $0x290] sm:$0xff]
  %v106 = vld [vmem:[%s1 + $0x298] sm:$0xff]
  %v107 = vld [vmem:[%s1 + $0x2a0] sm:$0xff]
  %v108 = vld [vmem:[%s1 + $0x2a8] sm:$0xff]
  %v109 = vld [vmem:[%s1 + $0x2b0] sm:$0xff]
  %v110 = vld [vmem:[%s1 + $0x2b8] sm:$0xff]
  %v111 = vld [vmem:[%s1 + $0x2c0] sm:$0xff]
  %v112 = vld [vmem:[%s1 + $0x2c8] sm:$0xff]
  %v113 = vld [vmem:[%s1 + $0x2d0] sm:$0xff]
  %v114 = vld [vmem:[%s1 + $0x2d8] sm:$0xff]
  %v115 = vld [vmem:[%s1 + $0x2e0] sm:$0xff]
  %v116 = vld [vmem:[%s1 + $0x2e8] sm:$0xff]
  %v117 = vld [vmem:[%s1 + $0x2f0] sm:$0xff]
  %v118 = vld [vmem:[%s1 + $0x2f8] sm:$0xff]
  %v119 = vld [vmem:[%s1 + $0x300] sm:$0xff]
  %v120 = vld [vmem:[%s1 + $0x308] sm:$0xff]
  %v121 = vld [vmem:[%s1 + $0x310] sm:$0xff]
  %v122 = vld [vmem:[%s1 + $0x318] sm:$0xff]
  %v123 = vld [vmem:[%s1 + $0x320] sm:$0xff]
  %v124 = vld [vmem:[%s1 + $0x328] sm:$0xff]
  %v125 = vld [vmem:[%s1 + $0x330] sm:$0xff]
  %v126 = vld [vmem:[%s1 + $0x338] sm:$0xff]
  %v127 = vld [vmem:[%s1 + $0x340] sm:$0xff]
  %v128 = vld [vmem:[%s1 + $0x348] sm:$0xff]
  %v129 = vld [vmem:[%s1 + $0x350] sm:$0xff]
  %v130 = vld [vmem:[%s1 + $0x358] sm:$0xff]
  %v131 = vld [vmem:[%s1 + $0x360] sm:$0xff]
  %v132 = vld [vmem:[%s1 + $0x368] sm:$0xff]
  %v133 = vld [vmem:[%s1 + $0x370] sm:$0xff]
  %v134 = vld [vmem:[%s1 + $0x378] sm:$0xff]
  %v135 = vld [vmem:[%s1 + $0x380] sm:$0xff]
  %v136 = vld [vmem:[%s1 + $0x388] sm:$0xff]
  %v137 = vld [vmem:[%s1 + $0x390] sm:$0xff]
  %v138 = vld [vmem:[%s1 + $0x398] sm:$0xff]
  %v139 = vld [vmem:[%s1 + $0x3a0] sm:$0xff]
  %v140 = vld [vmem:[%s1 + $0x3a8] sm:$0xff]
  %v141 = vld [vmem:[%s1 + $0x3b0] sm:$0xff]
  %v142 = vld [vmem:[%s1 + $0x3b8] sm:$0xff]
  %v143 = vld [vmem:[%s1 + $0x3c0] sm:$0xff]
  %v144 = vld [vmem:[%s1 + $0x3c8] sm:$0xff]
  %v145 = vld [vmem:[%s1 + $0x3d0] sm:$0xff]
  %v146 = vld [vmem:[%s1 + $0x3d8] sm:$0xff]
  %v147 = vld [vmem:[%s1 + $0x3e0] sm:$0xff]
  %v148 = vld [vmem:[%s1 + $0x3e8] sm:$0xff]
  %v149 = vld [vmem:[%s1 + $0x3f0] sm:$0xff]
  %v150 = vld [vmem:[%s1 + $0x3f8] sm:$0xff]
  %v151 = vld [vmem:[%s1 + $0x400] sm:$0xff]
  %v152 = vld [vmem:[%s1 + $0x408] sm:$0xff]
  %v153 = vld [vmem:[%s1 + $0x410] sm:$0xff]
  %v154 = vld [vmem:[%s1 + $0x418] sm:$0xff]
  %v155 = vld [vmem:[%s1 + $0x420] sm:$0xff]
  %v156 = vld [vmem:[%s1 + $0x428] sm:$0xff]
  %v157 = vld [vmem:[%s1 + $0x430] sm:$0xff]
  %v158 = vld [vmem:[%s1 + $0x438] sm:$0xff]
  %v159 = vld [vmem:[%s1 + $0x440] sm:$0xff]
  %v160 = vld [vmem:[%s1 + $0x448] sm:$0xff]
  %v161 = vld [vmem:[%s1 + $0x450] sm:$0xff]
  %v162 = vld [vmem:[%s1 + $0x458] sm:$0xff]
  %v163 = vld [vmem:[%s1 + $0x460] sm:$0xff]
  %v164 = vld [vmem:[%s1 + $0x468] sm:$0xff]
  %v165 = vld [vmem:[%s1 + $0x470] sm:$0xff]
  %v166 = vld [vmem:[%s1 + $0x478] sm:$0xff]
  %v167 = vld [vmem:[%s2] sm:$0x1]
  %v169 = vlaneseq
  %v170 = vshrl.u32 %v169, 7
  %v171 = vsub.s32 0, %v170
  %v172 = vrot.slane %v167, %v171
  %174 = vmatprep.subr.mxu0 0.0
  %175 = vmatpush1.msra.mxu0 %v38
  %176 = vmatprep.subr.mxu0 0.0
  %177 = vmatpush1.msra.mxu0 %v37
  %178 = vmatprep.subr.mxu0 0.0
  %179 = vmatpush1.msra.mxu0 %v36
  %180 = vmatprep.subr.mxu0 0.0
  %181 = vmatpush1.msra.mxu0 %v35
  %182 = vmatprep.subr.mxu0 0.0
  %183 = vmatpush1.msra.mxu0 %v34
  %184 = vmatprep.subr.mxu0 0.0
  %185 = vmatpush1.msra.mxu0 %v33
  %186 = vmatprep.subr.mxu0 0.0
  %187 = vmatpush1.msra.mxu0 %v32
  %188 = vmatprep.subr.mxu0 0.0
  %189 = vmatpush1.msra.mxu0 %v31
  %190 = vmatprep.subr.mxu0 0.0
  %191 = vmatpush1.msra.mxu0 %v30
  %192 = vmatprep.subr.mxu0 0.0
  %193 = vmatpush1.msra.mxu0 %v29
  %194 = vmatprep.subr.mxu0 0.0
  %195 = vmatpush1.msra.mxu0 %v28
  %196 = vmatprep.subr.mxu0 0.0
  %197 = vmatpush1.msra.mxu0 %v27
  %198 = vmatprep.subr.mxu0 0.0
  %199 = vmatpush1.msra.mxu0 %v26
  %200 = vmatprep.subr.mxu0 0.0
  %201 = vmatpush1.msra.mxu0 %v25
  %202 = vmatprep.subr.mxu0 0.0
  %203 = vmatpush1.msra.mxu0 %v24
  %204 = vmatprep.subr.mxu0 0.0
  %205 = vmatpush1.msra.mxu0 %v23
  %206 = vmatprep.subr.mxu0 0.0
  %207 = vmatpush2.msra.mxu0 %v54
  %208 = vmatprep.subr.mxu0 0.0
  %209 = vmatpush2.msra.mxu0 %v53
  %210 = vmatprep.subr.mxu0 0.0
  %211 = vmatpush2.msra.mxu0 %v52
  %212 = vmatprep.subr.mxu0 0.0
  %213 = vmatpush2.msra.mxu0 %v51
  %214 = vmatprep.subr.mxu0 0.0
  %215 = vmatpush2.msra.mxu0 %v50
  %216 = vmatprep.subr.mxu0 0.0
  %217 = vmatpush2.msra.mxu0 %v49
  %218 = vmatprep.subr.mxu0 0.0
  %219 = vmatpush2.msra.mxu0 %v48
  %220 = vmatprep.subr.mxu0 0.0
  %221 = vmatpush2.msra.mxu0 %v47
  %222 = vmatprep.subr.mxu0 0.0
  %223 = vmatpush2.msra.mxu0 %v46
  %224 = vmatprep.subr.mxu0 0.0
  %225 = vmatpush2.msra.mxu0 %v45
  %226 = vmatprep.subr.mxu0 0.0
  %227 = vmatpush2.msra.mxu0 %v44
  %228 = vmatprep.subr.mxu0 0.0
  %229 = vmatpush2.msra.mxu0 %v43
  %230 = vmatprep.subr.mxu0 0.0
  %231 = vmatpush2.msra.mxu0 %v42
  %232 = vmatprep.subr.mxu0 0.0
  %233 = vmatpush2.msra.mxu0 %v41
  %234 = vmatprep.subr.mxu0 0.0
  %235 = vmatpush2.msra.mxu0 %v40
  %236 = vmatprep.subr.mxu0 0.0
  %237 = vmatpush2.msra.mxu0 %v39
  %238 = vmatprep.mubr.f32.mxu0 %v15
  %239 = vmatmul.mubr.f32.gmra.mxu0 %v14
  %v240 = vpop.f32.mrf.mxu0
  %v241 = vadd.f32 %v172, %v240
  %v242 = vpop.f32.mrf.mxu0
  %243 = vdwg.mxu0
  %244 = vmatprep.subr.mxu0 0.0
  %245 = vmatpush1.msra.mxu0 %v70
  %246 = vmatprep.subr.mxu0 0.0
  %247 = vmatpush1.msra.mxu0 %v69
  %248 = vmatprep.subr.mxu0 0.0
  %249 = vmatpush1.msra.mxu0 %v68
  %250 = vmatprep.subr.mxu0 0.0
  %251 = vmatpush1.msra.mxu0 %v67
  %252 = vmatprep.subr.mxu0 0.0
  %253 = vmatpush1.msra.mxu0 %v66
  %254 = vmatprep.subr.mxu0 0.0
  %255 = vmatpush1.msra.mxu0 %v65
  %256 = vmatprep.subr.mxu0 0.0
  %257 = vmatpush1.msra.mxu0 %v64
  %258 = vmatprep.subr.mxu0 0.0
  %259 = vmatpush1.msra.mxu0 %v63
  %260 = vmatprep.subr.mxu0 0.0
  %261 = vmatpush1.msra.mxu0 %v62
  %262 = vmatprep.subr.mxu0 0.0
  %263 = vmatpush1.msra.mxu0 %v61
  %264 = vmatprep.subr.mxu0 0.0
  %265 = vmatpush1.msra.mxu0 %v60
  %266 = vmatprep.subr.mxu0 0.0
  %267 = vmatpush1.msra.mxu0 %v59
  %268 = vmatprep.subr.mxu0 0.0
  %269 = vmatpush1.msra.mxu0 %v58
  %270 = vmatprep.subr.mxu0 0.0
  %271 = vmatpush1.msra.mxu0 %v57
  %272 = vmatprep.subr.mxu0 0.0
  %273 = vmatpush1.msra.mxu0 %v56
  %274 = vmatprep.subr.mxu0 0.0
  %275 = vmatpush1.msra.mxu0 %v55
  %276 = vmatprep.subr.mxu0 0.0
  %277 = vmatpush2.msra.mxu0 %v86
  %278 = vmatprep.subr.mxu0 0.0
  %279 = vmatpush2.msra.mxu0 %v85
  %280 = vmatprep.subr.mxu0 0.0
  %281 = vmatpush2.msra.mxu0 %v84
  %282 = vmatprep.subr.mxu0 0.0
  %283 = vmatpush2.msra.mxu0 %v83
  %284 = vmatprep.subr.mxu0 0.0
  %285 = vmatpush2.msra.mxu0 %v82
  %286 = vmatprep.subr.mxu0 0.0
  %287 = vmatpush2.msra.mxu0 %v81
  %288 = vmatprep.subr.mxu0 0.0
  %289 = vmatpush2.msra.mxu0 %v80
  %290 = vmatprep.subr.mxu0 0.0
  %291 = vmatpush2.msra.mxu0 %v79
  %292 = vmatprep.subr.mxu0 0.0
  %293 = vmatpush2.msra.mxu0 %v78
  %294 = vmatprep.subr.mxu0 0.0
  %295 = vmatpush2.msra.mxu0 %v77
  %296 = vmatprep.subr.mxu0 0.0
  %297 = vmatpush2.msra.mxu0 %v76
  %298 = vmatprep.subr.mxu0 0.0
  %299 = vmatpush2.msra.mxu0 %v75
  %300 = vmatprep.subr.mxu0 0.0
  %301 = vmatpush2.msra.mxu0 %v74
  %302 = vmatprep.subr.mxu0 0.0
  %303 = vmatpush2.msra.mxu0 %v73
  %304 = vmatprep.subr.mxu0 0.0
  %305 = vmatpush2.msra.mxu0 %v72
  %306 = vmatprep.subr.mxu0 0.0
  %307 = vmatpush2.msra.mxu0 %v71
  %308 = vmatprep.mubr.f32.mxu0 %v17
  %309 = vmatmul.mubr.f32.gmra.mxu0 %v16
  %v310 = vpop.f32.mrf.mxu0
  %v311 = vadd.f32 %v241, %v310
  %v312 = vpop.f32.mrf.mxu0
  %313 = vdwg.mxu0
  %314 = vmatprep.subr.mxu0 0.0
  %315 = vmatpush1.msra.mxu0 %v102
  %316 = vmatprep.subr.mxu0 0.0
  %317 = vmatpush1.msra.mxu0 %v101
  %318 = vmatprep.subr.mxu0 0.0
  %319 = vmatpush1.msra.mxu0 %v100
  %320 = vmatprep.subr.mxu0 0.0
  %321 = vmatpush1.msra.mxu0 %v99
  %322 = vmatprep.subr.mxu0 0.0
  %323 = vmatpush1.msra.mxu0 %v98
  %324 = vmatprep.subr.mxu0 0.0
  %325 = vmatpush1.msra.mxu0 %v97
  %326 = vmatprep.subr.mxu0 0.0
  %327 = vmatpush1.msra.mxu0 %v96
  %328 = vmatprep.subr.mxu0 0.0
  %329 = vmatpush1.msra.mxu0 %v95
  %330 = vmatprep.subr.mxu0 0.0
  %331 = vmatpush1.msra.mxu0 %v94
  %332 = vmatprep.subr.mxu0 0.0
  %333 = vmatpush1.msra.mxu0 %v93
  %334 = vmatprep.subr.mxu0 0.0
  %335 = vmatpush1.msra.mxu0 %v92
  %336 = vmatprep.subr.mxu0 0.0
  %337 = vmatpush1.msra.mxu0 %v91
  %338 = vmatprep.subr.mxu0 0.0
  %339 = vmatpush1.msra.mxu0 %v90
  %340 = vmatprep.subr.mxu0 0.0
  %341 = vmatpush1.msra.mxu0 %v89
  %342 = vmatprep.subr.mxu0 0.0
  %343 = vmatpush1.msra.mxu0 %v88
  %344 = vmatprep.subr.mxu0 0.0
  %345 = vmatpush1.msra.mxu0 %v87
  %346 = vmatprep.subr.mxu0 0.0
  %347 = vmatpush2.msra.mxu0 %v118
  %348 = vmatprep.subr.mxu0 0.0
  %349 = vmatpush2.msra.mxu0 %v117
  %350 = vmatprep.subr.mxu0 0.0
  %351 = vmatpush2.msra.mxu0 %v116
  %352 = vmatprep.subr.mxu0 0.0
  %353 = vmatpush2.msra.mxu0 %v115
  %354 = vmatprep.subr.mxu0 0.0
  %355 = vmatpush2.msra.mxu0 %v114
  %356 = vmatprep.subr.mxu0 0.0
  %357 = vmatpush2.msra.mxu0 %v113
  %358 = vmatprep.subr.mxu0 0.0
  %359 = vmatpush2.msra.mxu0 %v112
  %360 = vmatprep.subr.mxu0 0.0
  %361 = vmatpush2.msra.mxu0 %v111
  %362 = vmatprep.subr.mxu0 0.0
  %363 = vmatpush2.msra.mxu0 %v110
  %364 = vmatprep.subr.mxu0 0.0
  %365 = vmatpush2.msra.mxu0 %v109
  %366 = vmatprep.subr.mxu0 0.0
  %367 = vmatpush2.msra.mxu0 %v108
  %368 = vmatprep.subr.mxu0 0.0
  %369 = vmatpush2.msra.mxu0 %v107
  %370 = vmatprep.subr.mxu0 0.0
  %371 = vmatpush2.msra.mxu0 %v106
  %372 = vmatprep.subr.mxu0 0.0
  %373 = vmatpush2.msra.mxu0 %v105
  %374 = vmatprep.subr.mxu0 0.0
  %375 = vmatpush2.msra.mxu0 %v104
  %376 = vmatprep.subr.mxu0 0.0
  %377 = vmatpush2.msra.mxu0 %v103
  %378 = vmatprep.mubr.f32.mxu0 %v19
  %379 = vmatmul.mubr.f32.gmra.mxu0 %v18
  %v380 = vpop.f32.mrf.mxu0
  %v381 = vadd.f32 %v311, %v380
  %v382 = vpop.f32.mrf.mxu0
  %383 = vdwg.mxu0
  %384 = vmatprep.subr.mxu0 0.0
  %385 = vmatpush1.msra.mxu0 %v134
  %386 = vmatprep.subr.mxu0 0.0
  %387 = vmatpush1.msra.mxu0 %v133
  %388 = vmatprep.subr.mxu0 0.0
  %389 = vmatpush1.msra.mxu0 %v132
  %390 = vmatprep.subr.mxu0 0.0
  %391 = vmatpush1.msra.mxu0 %v131
  %392 = vmatprep.subr.mxu0 0.0
  %393 = vmatpush1.msra.mxu0 %v130
  %394 = vmatprep.subr.mxu0 0.0
  %395 = vmatpush1.msra.mxu0 %v129
  %396 = vmatprep.subr.mxu0 0.0
  %397 = vmatpush1.msra.mxu0 %v128
  %398 = vmatprep.subr.mxu0 0.0
  %399 = vmatpush1.msra.mxu0 %v127
  %400 = vmatprep.subr.mxu0 0.0
  %401 = vmatpush1.msra.mxu0 %v126
  %402 = vmatprep.subr.mxu0 0.0
  %403 = vmatpush1.msra.mxu0 %v125
  %404 = vmatprep.subr.mxu0 0.0
  %405 = vmatpush1.msra.mxu0 %v124
  %406 = vmatprep.subr.mxu0 0.0
  %407 = vmatpush1.msra.mxu0 %v123
  %408 = vmatprep.subr.mxu0 0.0
  %409 = vmatpush1.msra.mxu0 %v122
  %410 = vmatprep.subr.mxu0 0.0
  %411 = vmatpush1.msra.mxu0 %v121
  %412 = vmatprep.subr.mxu0 0.0
  %413 = vmatpush1.msra.mxu0 %v120
  %414 = vmatprep.subr.mxu0 0.0
  %415 = vmatpush1.msra.mxu0 %v119
  %416 = vmatprep.subr.mxu0 0.0
  %417 = vmatpush2.msra.mxu0 %v150
  %418 = vmatprep.subr.mxu0 0.0
  %419 = vmatpush2.msra.mxu0 %v149
  %420 = vmatprep.subr.mxu0 0.0
  %421 = vmatpush2.msra.mxu0 %v148
  %422 = vmatprep.subr.mxu0 0.0
  %423 = vmatpush2.msra.mxu0 %v147
  %424 = vmatprep.subr.mxu0 0.0
  %425 = vmatpush2.msra.mxu0 %v146
  %426 = vmatprep.subr.mxu0 0.0
  %427 = vmatpush2.msra.mxu0 %v145
  %428 = vmatprep.subr.mxu0 0.0
  %429 = vmatpush2.msra.mxu0 %v144
  %430 = vmatprep.subr.mxu0 0.0
  %431 = vmatpush2.msra.mxu0 %v143
  %432 = vmatprep.subr.mxu0 0.0
  %433 = vmatpush2.msra.mxu0 %v142
  %434 = vmatprep.subr.mxu0 0.0
  %435 = vmatpush2.msra.mxu0 %v141
  %436 = vmatprep.subr.mxu0 0.0
  %437 = vmatpush2.msra.mxu0 %v140
  %438 = vmatprep.subr.mxu0 0.0
  %439 = vmatpush2.msra.mxu0 %v139
  %440 = vmatprep.subr.mxu0 0.0
  %441 = vmatpush2.msra.mxu0 %v138
  %442 = vmatprep.subr.mxu0 0.0
  %443 = vmatpush2.msra.mxu0 %v137
  %444 = vmatprep.subr.mxu0 0.0
  %445 = vmatpush2.msra.mxu0 %v136
  %446 = vmatprep.subr.mxu0 0.0
  %447 = vmatpush2.msra.mxu0 %v135
  %448 = vmatprep.mubr.f32.mxu0 %v21
  %449 = vmatmul.mubr.f32.gmra.mxu0 %v20
  %v450 = vpop.f32.mrf.mxu0
  %v451 = vadd.f32 %v381, %v450
  %v452 = vpop.f32.mrf.mxu0
  %453 = vdwg.mxu0
  %454 = vmatprep.subr.mxu0 0.0
  %455 = vmatpush1.msra.mxu0 %v166
  %456 = vmatprep.subr.mxu0 0.0
  %457 = vmatpush1.msra.mxu0 %v165
  %458 = vmatprep.subr.mxu0 0.0
  %459 = vmatpush1.msra.mxu0 %v164
  %460 = vmatprep.subr.mxu0 0.0
  %461 = vmatpush1.msra.mxu0 %v163
  %462 = vmatprep.subr.mxu0 0.0
  %463 = vmatpush1.msra.mxu0 %v162
  %464 = vmatprep.subr.mxu0 0.0
  %465 = vmatpush1.msra.mxu0 %v161
  %466 = vmatprep.subr.mxu0 0.0
  %467 = vmatpush1.msra.mxu0 %v160
  %468 = vmatprep.subr.mxu0 0.0
  %469 = vmatpush1.msra.mxu0 %v159
  %470 = vmatprep.subr.mxu0 0.0
  %471 = vmatpush1.msra.mxu0 %v158
  %472 = vmatprep.subr.mxu0 0.0
  %473 = vmatpush1.msra.mxu0 %v157
  %474 = vmatprep.subr.mxu0 0.0
  %475 = vmatpush1.msra.mxu0 %v156
  %476 = vmatprep.subr.mxu0 0.0
  %477 = vmatpush1.msra.mxu0 %v155
  %478 = vmatprep.subr.mxu0 0.0
  %479 = vmatpush1.msra.mxu0 %v154
  %480 = vmatprep.subr.mxu0 0.0
  %481 = vmatpush1.msra.mxu0 %v153
  %482 = vmatprep.subr.mxu0 0.0
  %483 = vmatpush1.msra.mxu0 %v152
  %484 = vmatprep.subr.mxu0 0.0
  %485 = vmatpush1.msra.mxu0 %v151
  %486 = vmatprep.subr.mxu0 0.0
  %487 = vmatpush2.msra.mxu0 0.0
  %488 = vmatprep.subr.mxu0 0.0
  %489 = vmatpush2.msra.mxu0 0.0
  %490 = vmatprep.subr.mxu0 0.0
  %491 = vmatpush2.msra.mxu0 0.0
  %492 = vmatprep.subr.mxu0 0.0
  %493 = vmatpush2.msra.mxu0 0.0
  %494 = vmatprep.subr.mxu0 0.0
  %495 = vmatpush2.msra.mxu0 0.0
  %496 = vmatprep.subr.mxu0 0.0
  %497 = vmatpush2.msra.mxu0 0.0
  %498 = vmatprep.subr.mxu0 0.0
  %499 = vmatpush2.msra.mxu0 0.0
  %500 = vmatprep.subr.mxu0 0.0
  %501 = vmatpush2.msra.mxu0 0.0
  %502 = vmatprep.subr.mxu0 0.0
  %503 = vmatpush2.msra.mxu0 0.0
  %504 = vmatprep.subr.mxu0 0.0
  %505 = vmatpush2.msra.mxu0 0.0
  %506 = vmatprep.subr.mxu0 0.0
  %507 = vmatpush2.msra.mxu0 0.0
  %508 = vmatprep.subr.mxu0 0.0
  %509 = vmatpush2.msra.mxu0 0.0
  %510 = vmatprep.subr.mxu0 0.0
  %511 = vmatpush2.msra.mxu0 0.0
  %512 = vmatprep.subr.mxu0 0.0
  %513 = vmatpush2.msra.mxu0 0.0
  %514 = vmatprep.subr.mxu0 0.0
  %515 = vmatpush2.msra.mxu0 0.0
  %516 = vmatprep.subr.mxu0 0.0
  %517 = vmatpush2.msra.mxu0 0.0
  %518 = vmatprep.mubr.f32.mxu0 0.0
  %519 = vmatmul.mubr.f32.gmra.mxu0 %v22
  %v520 = vpop.f32.mrf.mxu0
  %v521 = vadd.f32 %v451, %v520
  %v522 = vpop.f32.mrf.mxu0
  %523 = vdwg.mxu0
  %v524 = vmax.f32 %v521, 0.0
  %525 = vst [vmem:[%s3] sm:$0xff] %v524
  // Predicated region
  $region14: #{_forward_impl.99} parent=0 // pred_check
    _
  $region15: #{_forward_impl.99} parent=0 // pred_check_branch
    %527 = sbr.rel (0) target = $region17
  $region16: #{_forward_impl.99} parent=0 // pred_region
    _
  $region17: #{_forward_impl.99} parent=0 // pred_fallthru
    _
  // Predicated region
  $region18: #{_forward_impl.99} parent=0 // pred_check
    _
  $region19: #{_forward_impl.99} parent=0 // pred_check_branch
    %529 = sbr.rel (0) target = $region21
  $region20: #{_forward_impl.99} parent=0 // pred_region
    _
  $region21: #{_forward_impl.99} parent=0 // pred_fallthru
    _

// kernel: _forward_impl.101
$region0: #{_forward_impl.101}
  #allocation0 [shape = 'u32[]', space=smem, size = 0x4, offset = 0x4, fixed_abs, tag = 'smem constant byte address 0x4 - core index']
  #allocation1 [shape = 'u32[144,128]{1,0:T(1,128)}', space=vmem, size = 0x12000, scoped, tag = 'internal scratch']
  %s0 = inlined_call_operand.vmem [shape: f32[8,128], index: 0, kind: input, shape index: {}]
  %s1 = inlined_call_operand.vmem [shape: f32[128,512], index: 1, kind: input, shape index: {}]
  %s2 = inlined_call_operand.vmem [shape: f32[1,512], index: 2, kind: input, shape index: {}]
  %s3 = inlined_call_operand.vmem [shape: f32[8,512], index: 3, kind: input, shape index: {}]
  %s4 = inlined_call_operand.vmem [shape: f32[8,512], index: 4, kind: output, shape index: {}]
  %s5 = sld [smem:[#allocation0]]
  $region26: #{_forward_impl.101} parent=0
    _
  %s7 = ssub.s32 1, %s5
  %s8 = scalar_select 0, %s7, %s5
  // Predicated region
  $region2: #{_forward_impl.101} parent=0 // pred_check
    _
  $region3: #{_forward_impl.101} parent=0 // pred_check_branch
    %10 = sbr.rel (0) target = $region5
  $region4: #{_forward_impl.101} parent=0 // pred_region
    _
  $region5: #{_forward_impl.101} parent=0 // pred_fallthru
    _
  // Predicated region
  $region6: #{_forward_impl.101} parent=0 // pred_check
    _
  $region7: #{_forward_impl.101} parent=0 // pred_check_branch
    %12 = sbr.rel (0) target = $region9
  $region8: #{_forward_impl.101} parent=0 // pred_region
    _
  $region9: #{_forward_impl.101} parent=0 // pred_fallthru
    _
  // Predicated region
  $region10: #{_forward_impl.101} parent=0 // pred_check
    _
  $region11: #{_forward_impl.101} parent=0 // pred_check_branch
    %14 = sbr.rel (0) target = $region13
  $region12: #{_forward_impl.101} parent=0 // pred_region
    _
  $region13: #{_forward_impl.101} parent=0 // pred_fallthru
    _
  // Predicated region
  $region14: #{_forward_impl.101} parent=0 // pred_check
    _
  $region15: #{_forward_impl.101} parent=0 // pred_check_branch
    %16 = sbr.rel (0) target = $region17
  $region16: #{_forward_impl.101} parent=0 // pred_region
    _
  $region17: #{_forward_impl.101} parent=0 // pred_fallthru
    _
  %v17 = vld [vmem:[%s0] sm:$0xff]
  %v18 = vld [vmem:[%s1] sm:$0xff]
  %v19 = vld [vmem:[%s1 + $0x8] sm:$0xff]
  %v20 = vld [vmem:[%s1 + $0x10] sm:$0xff]
  %v21 = vld [vmem:[%s1 + $0x18] sm:$0xff]
  %v22 = vld [vmem:[%s1 + $0x20] sm:$0xff]
  %v23 = vld [vmem:[%s1 + $0x28] sm:$0xff]
  %v24 = vld [vmem:[%s1 + $0x30] sm:$0xff]
  %v25 = vld [vmem:[%s1 + $0x38] sm:$0xff]
  %v26 = vld [vmem:[%s1 + $0x40] sm:$0xff]
  %v27 = vld [vmem:[%s1 + $0x48] sm:$0xff]
  %v28 = vld [vmem:[%s1 + $0x50] sm:$0xff]
  %v29 = vld [vmem:[%s1 + $0x58] sm:$0xff]
  %v30 = vld [vmem:[%s1 + $0x60] sm:$0xff]
  %v31 = vld [vmem:[%s1 + $0x68] sm:$0xff]
  %v32 = vld [vmem:[%s1 + $0x70] sm:$0xff]
  %v33 = vld [vmem:[%s1 + $0x78] sm:$0xff]
  %v34 = vld [vmem:[%s1 + $0x80] sm:$0xff]
  %v35 = vld [vmem:[%s1 + $0x88] sm:$0xff]
  %v36 = vld [vmem:[%s1 + $0x90] sm:$0xff]
  %v37 = vld [vmem:[%s1 + $0x98] sm:$0xff]
  %v38 = vld [vmem:[%s1 + $0xa0] sm:$0xff]
  %v39 = vld [vmem:[%s1 + $0xa8] sm:$0xff]
  %v40 = vld [vmem:[%s1 + $0xb0] sm:$0xff]
  %v41 = vld [vmem:[%s1 + $0xb8] sm:$0xff]
  %v42 = vld [vmem:[%s1 + $0xc0] sm:$0xff]
  %v43 = vld [vmem:[%s1 + $0xc8] sm:$0xff]
  %v44 = vld [vmem:[%s1 + $0xd0] sm:$0xff]
  %v45 = vld [vmem:[%s1 + $0xd8] sm:$0xff]
  %v46 = vld [vmem:[%s1 + $0xe0] sm:$0xff]
  %v47 = vld [vmem:[%s1 + $0xe8] sm:$0xff]
  %v48 = vld [vmem:[%s1 + $0xf0] sm:$0xff]
  %v49 = vld [vmem:[%s1 + $0xf8] sm:$0xff]
  %v50 = vld [vmem:[%s1 + $0x100] sm:$0xff]
  %v51 = vld [vmem:[%s1 + $0x108] sm:$0xff]
  %v52 = vld [vmem:[%s1 + $0x110] sm:$0xff]
  %v53 = vld [vmem:[%s1 + $0x118] sm:$0xff]
  %v54 = vld [vmem:[%s1 + $0x120] sm:$0xff]
  %v55 = vld [vmem:[%s1 + $0x128] sm:$0xff]
  %v56 = vld [vmem:[%s1 + $0x130] sm:$0xff]
  %v57 = vld [vmem:[%s1 + $0x138] sm:$0xff]
  %v58 = vld [vmem:[%s1 + $0x140] sm:$0xff]
  %v59 = vld [vmem:[%s1 + $0x148] sm:$0xff]
  %v60 = vld [vmem:[%s1 + $0x150] sm:$0xff]
  %v61 = vld [vmem:[%s1 + $0x158] sm:$0xff]
  %v62 = vld [vmem:[%s1 + $0x160] sm:$0xff]
  %v63 = vld [vmem:[%s1 + $0x168] sm:$0xff]
  %v64 = vld [vmem:[%s1 + $0x170] sm:$0xff]
  %v65 = vld [vmem:[%s1 + $0x178] sm:$0xff]
  %v66 = vld [vmem:[%s1 + $0x180] sm:$0xff]
  %v67 = vld [vmem:[%s1 + $0x188] sm:$0xff]
  %v68 = vld [vmem:[%s1 + $0x190] sm:$0xff]
  %v69 = vld [vmem:[%s1 + $0x198] sm:$0xff]
  %v70 = vld [vmem:[%s1 + $0x1a0] sm:$0xff]
  %v71 = vld [vmem:[%s1 + $0x1a8] sm:$0xff]
  %v72 = vld [vmem:[%s1 + $0x1b0] sm:$0xff]
  %v73 = vld [vmem:[%s1 + $0x1b8] sm:$0xff]
  %v74 = vld [vmem:[%s1 + $0x1c0] sm:$0xff]
  %v75 = vld [vmem:[%s1 + $0x1c8] sm:$0xff]
  %v76 = vld [vmem:[%s1 + $0x1d0] sm:$0xff]
  %v77 = vld [vmem:[%s1 + $0x1d8] sm:$0xff]
  %v78 = vld [vmem:[%s1 + $0x1e0] sm:$0xff]
  %v79 = vld [vmem:[%s1 + $0x1e8] sm:$0xff]
  %v80 = vld [vmem:[%s1 + $0x1f0] sm:$0xff]
  %v81 = vld [vmem:[%s1 + $0x1f8] sm:$0xff]
  %v82 = vld [vmem:[%s2] sm:$0xf]
  %v84 = vlaneseq
  %v85 = vshrl.u32 %v84, 7
  %v86 = vsub.s32 0, %v85
  %v87 = vrot.slane %v82, %v86
  %v88 = vlaneseq
  %v89 = vshrl.u32 %v88, 7
  %v90 = vsub.s32 1, %v89
  %v91 = vrot.slane %v82, %v90
  %v92 = vlaneseq
  %v93 = vshrl.u32 %v92, 7
  %v94 = vsub.s32 2, %v93
  %v95 = vrot.slane %v82, %v94
  %v96 = vlaneseq
  %v97 = vshrl.u32 %v96, 7
  %v98 = vsub.s32 3, %v97
  %v99 = vrot.slane %v82, %v98
  %104 = vmatprep.subr.mxu0 %v79
  %105 = vmatpush1.msra.mxu0 %v78
  %106 = vmatprep.subr.mxu0 %v75
  %107 = vmatpush1.msra.mxu0 %v74
  %108 = vmatprep.subr.mxu0 %v71
  %109 = vmatpush1.msra.mxu0 %v70
  %110 = vmatprep.subr.mxu0 %v67
  %111 = vmatpush1.msra.mxu0 %v66
  %112 = vmatprep.subr.mxu0 %v63
  %113 = vmatpush1.msra.mxu0 %v62
  %114 = vmatprep.subr.mxu0 %v59
  %115 = vmatpush1.msra.mxu0 %v58
  %116 = vmatprep.subr.mxu0 %v55
  %117 = vmatpush1.msra.mxu0 %v54
  %118 = vmatprep.subr.mxu0 %v51
  %119 = vmatpush1.msra.mxu0 %v50
  %120 = vmatprep.subr.mxu0 %v47
  %121 = vmatpush1.msra.mxu0 %v46
  %122 = vmatprep.subr.mxu0 %v43
  %123 = vmatpush1.msra.mxu0 %v42
  %124 = vmatprep.subr.mxu0 %v39
  %125 = vmatpush1.msra.mxu0 %v38
  %126 = vmatprep.subr.mxu0 %v35
  %127 = vmatpush1.msra.mxu0 %v34
  %128 = vmatprep.subr.mxu0 %v31
  %129 = vmatpush1.msra.mxu0 %v30
  %130 = vmatprep.subr.mxu0 %v27
  %131 = vmatpush1.msra.mxu0 %v26
  %132 = vmatprep.subr.mxu0 %v23
  %133 = vmatpush1.msra.mxu0 %v22
  %134 = vmatprep.subr.mxu0 %v19
  %135 = vmatpush1.msra.mxu0 %v18
  %136 = vmatprep.subr.mxu0 0.0
  %137 = vmatpush2.msra.mxu0 0.0
  %138 = vmatprep.subr.mxu0 0.0
  %139 = vmatpush2.msra.mxu0 0.0
  %140 = vmatprep.subr.mxu0 0.0
  %141 = vmatpush2.msra.mxu0 0.0
  %142 = vmatprep.subr.mxu0 0.0
  %143 = vmatpush2.msra.mxu0 0.0
  %144 = vmatprep.subr.mxu0 0.0
  %145 = vmatpush2.msra.mxu0 0.0
  %146 = vmatprep.subr.mxu0 0.0
  %147 = vmatpush2.msra.mxu0 0.0
  %148 = vmatprep.subr.mxu0 0.0
  %149 = vmatpush2.msra.mxu0 0.0
  %150 = vmatprep.subr.mxu0 0.0
  %151 = vmatpush2.msra.mxu0 0.0
  %152 = vmatprep.subr.mxu0 0.0
  %153 = vmatpush2.msra.mxu0 0.0
  %154 = vmatprep.subr.mxu0 0.0
  %155 = vmatpush2.msra.mxu0 0.0
  %156 = vmatprep.subr.mxu0 0.0
  %157 = vmatpush2.msra.mxu0 0.0
  %158 = vmatprep.subr.mxu0 0.0
  %159 = vmatpush2.msra.mxu0 0.0
  %160 = vmatprep.subr.mxu0 0.0
  %161 = vmatpush2.msra.mxu0 0.0
  %162 = vmatprep.subr.mxu0 0.0
  %163 = vmatpush2.msra.mxu0 0.0
  %164 = vmatprep.subr.mxu0 0.0
  %165 = vmatpush2.msra.mxu0 0.0
  %166 = vmatprep.subr.mxu0 0.0
  %167 = vmatpush2.msra.mxu0 0.0
  %168 = vmatprep.mubr.f32.mxu0 0.0
  %169 = vmatmul.mubr.f32.gmra.mxu0 %v17
  %v170 = vpop.f32.mrf.mxu0
  %v171 = vadd.f32 %v87, %v170
  %v172 = vpop.f32.mrf.mxu0
  %v173 = vadd.f32 %v91, %v172
  %174 = vdwg.mxu0
  %175 = vmatprep.subr.mxu0 %v81
  %176 = vmatpush1.msra.mxu0 %v80
  %177 = vmatprep.subr.mxu0 %v77
  %178 = vmatpush1.msra.mxu0 %v76
  %179 = vmatprep.subr.mxu0 %v73
  %180 = vmatpush1.msra.mxu0 %v72
  %181 = vmatprep.subr.mxu0 %v69
  %182 = vmatpush1.msra.mxu0 %v68
  %183 = vmatprep.subr.mxu0 %v65
  %184 = vmatpush1.msra.mxu0 %v64
  %185 = vmatprep.subr.mxu0 %v61
  %186 = vmatpush1.msra.mxu0 %v60
  %187 = vmatprep.subr.mxu0 %v57
  %188 = vmatpush1.msra.mxu0 %v56
  %189 = vmatprep.subr.mxu0 %v53
  %190 = vmatpush1.msra.mxu0 %v52
  %191 = vmatprep.subr.mxu0 %v49
  %192 = vmatpush1.msra.mxu0 %v48
  %193 = vmatprep.subr.mxu0 %v45
  %194 = vmatpush1.msra.mxu0 %v44
  %195 = vmatprep.subr.mxu0 %v41
  %196 = vmatpush1.msra.mxu0 %v40
  %197 = vmatprep.subr.mxu0 %v37
  %198 = vmatpush1.msra.mxu0 %v36
  %199 = vmatprep.subr.mxu0 %v33
  %200 = vmatpush1.msra.mxu0 %v32
  %201 = vmatprep.subr.mxu0 %v29
  %202 = vmatpush1.msra.mxu0 %v28
  %203 = vmatprep.subr.mxu0 %v25
  %204 = vmatpush1.msra.mxu0 %v24
  %205 = vmatprep.subr.mxu0 %v21
  %206 = vmatpush1.msra.mxu0 %v20
  %207 = vmatprep.subr.mxu0 0.0
  %208 = vmatpush2.msra.mxu0 0.0
  %209 = vmatprep.subr.mxu0 0.0
  %210 = vmatpush2.msra.mxu0 0.0
  %211 = vmatprep.subr.mxu0 0.0
  %212 = vmatpush2.msra.mxu0 0.0
  %213 = vmatprep.subr.mxu0 0.0
  %214 = vmatpush2.msra.mxu0 0.0
  %215 = vmatprep.subr.mxu0 0.0
  %216 = vmatpush2.msra.mxu0 0.0
  %217 = vmatprep.subr.mxu0 0.0
  %218 = vmatpush2.msra.mxu0 0.0
  %219 = vmatprep.subr.mxu0 0.0
  %220 = vmatpush2.msra.mxu0 0.0
  %221 = vmatprep.subr.mxu0 0.0
  %222 = vmatpush2.msra.mxu0 0.0
  %223 = vmatprep.subr.mxu0 0.0
  %224 = vmatpush2.msra.mxu0 0.0
  %225 = vmatprep.subr.mxu0 0.0
  %226 = vmatpush2.msra.mxu0 0.0
  %227 = vmatprep.subr.mxu0 0.0
  %228 = vmatpush2.msra.mxu0 0.0
  %229 = vmatprep.subr.mxu0 0.0
  %230 = vmatpush2.msra.mxu0 0.0
  %231 = vmatprep.subr.mxu0 0.0
  %232 = vmatpush2.msra.mxu0 0.0
  %233 = vmatprep.subr.mxu0 0.0
  %234 = vmatpush2.msra.mxu0 0.0
  %235 = vmatprep.subr.mxu0 0.0
  %236 = vmatpush2.msra.mxu0 0.0
  %237 = vmatprep.subr.mxu0 0.0
  %238 = vmatpush2.msra.mxu0 0.0
  %239 = vmatprep.mubr.f32.mxu0 0.0
  %240 = vmatmul.mubr.f32.gmra.mxu0 %v17
  %v241 = vpop.f32.mrf.mxu0
  %v242 = vadd.f32 %v95, %v241
  %v243 = vpop.f32.mrf.mxu0
  %v244 = vadd.f32 %v99, %v243
  %245 = vdwg.mxu0
  %v246 = vld [vmem:[%s3] sm:$0xff]
  %v247 = vld [vmem:[%s3 + $0x8] sm:$0xff]
  %v248 = vld [vmem:[%s3 + $0x10] sm:$0xff]
  %v249 = vld [vmem:[%s3 + $0x18] sm:$0xff]
  %v250 = vadd.f32 %v171, %v246
  %v251 = vadd.f32 %v173, %v247
  %v252 = vadd.f32 %v242, %v248
  %v253 = vadd.f32 %v244, %v249
  %v254 = vmax.f32 %v250, 0.0
  %v255 = vmax.f32 %v251, 0.0
  %v256 = vmax.f32 %v252, 0.0
  %v257 = vmax.f32 %v253, 0.0
  %258 = vst [vmem:[%s4] sm:$0xff] %v254
  %259 = vst [vmem:[%s4 + $0x8] sm:$0xff] %v255
  %260 = vst [vmem:[%s4 + $0x10] sm:$0xff] %v256
  %261 = vst [vmem:[%s4 + $0x18] sm:$0xff] %v257
  // Predicated region
  $region18: #{_forward_impl.101} parent=0 // pred_check
    _
  $region19: #{_forward_impl.101} parent=0 // pred_check_branch
    %263 = sbr.rel (0) target = $region21
  $region20: #{_forward_impl.101} parent=0 // pred_region
    _
  $region21: #{_forward_impl.101} parent=0 // pred_fallthru
    _
  // Predicated region
  $region22: #{_forward_impl.101} parent=0 // pred_check
    _
  $region23: #{_forward_impl.101} parent=0 // pred_check_branch
    %265 = sbr.rel (0) target = $region25
  $region24: #{_forward_impl.101} parent=0 // pred_region
    _
  $region25: #{_forward_impl.101} parent=0 // pred_fallthru
    _

// kernel: _forward_impl.100
$region0: #{_forward_impl.100}
  #allocation0 [shape = 'u32[]', space=smem, size = 0x4, offset = 0x4, fixed_abs, tag = 'smem constant byte address 0x4 - core index']
  #allocation1 [shape = 'u32[144,128]{1,0:T(1,128)}', space=vmem, size = 0x12000, scoped, tag = 'internal scratch']
  %s0 = inlined_call_operand.vmem [shape: f32[8,256], index: 0, kind: input, shape index: {}]
  %s1 = inlined_call_operand.vmem [shape: f32[256,512], index: 1, kind: input, shape index: {}]
  %s2 = inlined_call_operand.vmem [shape: f32[1,512], index: 2, kind: input, shape index: {}]
  %s3 = inlined_call_operand.vmem [shape: f32[8,512], index: 3, kind: output, shape index: {}]
  %s4 = sld [smem:[#allocation0]]
  $region22: #{_forward_impl.100} parent=0
    _
  %s6 = ssub.s32 1, %s4
  %s7 = scalar_select 0, %s6, %s4
  // Predicated region
  $region2: #{_forward_impl.100} parent=0 // pred_check
    _
  $region3: #{_forward_impl.100} parent=0 // pred_check_branch
    %9 = sbr.rel (0) target = $region5
  $region4: #{_forward_impl.100} parent=0 // pred_region
    _
  $region5: #{_forward_impl.100} parent=0 // pred_fallthru
    _
  // Predicated region
  $region6: #{_forward_impl.100} parent=0 // pred_check
    _
  $region7: #{_forward_impl.100} parent=0 // pred_check_branch
    %11 = sbr.rel (0) target = $region9
  $region8: #{_forward_impl.100} parent=0 // pred_region
    _
  $region9: #{_forward_impl.100} parent=0 // pred_fallthru
    _
  // Predicated region
  $region10: #{_forward_impl.100} parent=0 // pred_check
    _
  $region11: #{_forward_impl.100} parent=0 // pred_check_branch
    %13 = sbr.rel (0) target = $region13
  $region12: #{_forward_impl.100} parent=0 // pred_region
    _
  $region13: #{_forward_impl.100} parent=0 // pred_fallthru
    _
  %v14 = vld [vmem:[%s0] sm:$0xff]
  %v15 = vld [vmem:[%s0 + $0x8] sm:$0xff]
  %v16 = vld [vmem:[%s1] sm:$0xff]
  %v17 = vld [vmem:[%s1 + $0x8] sm:$0xff]
  %v18 = vld [vmem:[%s1 + $0x10] sm:$0xff]
  %v19 = vld [vmem:[%s1 + $0x18] sm:$0xff]
  %v20 = vld [vmem:[%s1 + $0x20] sm:$0xff]
  %v21 = vld [vmem:[%s1 + $0x28] sm:$0xff]
  %v22 = vld [vmem:[%s1 + $0x30] sm:$0xff]
  %v23 = vld [vmem:[%s1 + $0x38] sm:$0xff]
  %v24 = vld [vmem:[%s1 + $0x40] sm:$0xff]
  %v25 = vld [vmem:[%s1 + $0x48] sm:$0xff]
  %v26 = vld [vmem:[%s1 + $0x50] sm:$0xff]
  %v27 = vld [vmem:[%s1 + $0x58] sm:$0xff]
  %v28 = vld [vmem:[%s1 + $0x60] sm:$0xff]
  %v29 = vld [vmem:[%s1 + $0x68] sm:$0xff]
  %v30 = vld [vmem:[%s1 + $0x70] sm:$0xff]
  %v31 = vld [vmem:[%s1 + $0x78] sm:$0xff]
  %v32 = vld [vmem:[%s1 + $0x80] sm:$0xff]
  %v33 = vld [vmem:[%s1 + $0x88] sm:$0xff]
  %v34 = vld [vmem:[%s1 + $0x90] sm:$0xff]
  %v35 = vld [vmem:[%s1 + $0x98] sm:$0xff]
  %v36 = vld [vmem:[%s1 + $0xa0] sm:$0xff]
  %v37 = vld [vmem:[%s1 + $0xa8] sm:$0xff]
  %v38 = vld [vmem:[%s1 + $0xb0] sm:$0xff]
  %v39 = vld [vmem:[%s1 + $0xb8] sm:$0xff]
  %v40 = vld [vmem:[%s1 + $0xc0] sm:$0xff]
  %v41 = vld [vmem:[%s1 + $0xc8] sm:$0xff]
  %v42 = vld [vmem:[%s1 + $0xd0] sm:$0xff]
  %v43 = vld [vmem:[%s1 + $0xd8] sm:$0xff]
  %v44 = vld [vmem:[%s1 + $0xe0] sm:$0xff]
  %v45 = vld [vmem:[%s1 + $0xe8] sm:$0xff]
  %v46 = vld [vmem:[%s1 + $0xf0] sm:$0xff]
  %v47 = vld [vmem:[%s1 + $0xf8] sm:$0xff]
  %v48 = vld [vmem:[%s1 + $0x100] sm:$0xff]
  %v49 = vld [vmem:[%s1 + $0x108] sm:$0xff]
  %v50 = vld [vmem:[%s1 + $0x110] sm:$0xff]
  %v51 = vld [vmem:[%s1 + $0x118] sm:$0xff]
  %v52 = vld [vmem:[%s1 + $0x120] sm:$0xff]
  %v53 = vld [vmem:[%s1 + $0x128] sm:$0xff]
  %v54 = vld [vmem:[%s1 + $0x130] sm:$0xff]
  %v55 = vld [vmem:[%s1 + $0x138] sm:$0xff]
  %v56 = vld [vmem:[%s1 + $0x140] sm:$0xff]
  %v57 = vld [vmem:[%s1 + $0x148] sm:$0xff]
  %v58 = vld [vmem:[%s1 + $0x150] sm:$0xff]
  %v59 = vld [vmem:[%s1 + $0x158] sm:$0xff]
  %v60 = vld [vmem:[%s1 + $0x160] sm:$0xff]
  %v61 = vld [vmem:[%s1 + $0x168] sm:$0xff]
  %v62 = vld [vmem:[%s1 + $0x170] sm:$0xff]
  %v63 = vld [vmem:[%s1 + $0x178] sm:$0xff]
  %v64 = vld [vmem:[%s1 + $0x180] sm:$0xff]
  %v65 = vld [vmem:[%s1 + $0x188] sm:$0xff]
  %v66 = vld [vmem:[%s1 + $0x190] sm:$0xff]
  %v67 = vld [vmem:[%s1 + $0x198] sm:$0xff]
  %v68 = vld [vmem:[%s1 + $0x1a0] sm:$0xff]
  %v69 = vld [vmem:[%s1 + $0x1a8] sm:$0xff]
  %v70 = vld [vmem:[%s1 + $0x1b0] sm:$0xff]
  %v71 = vld [vmem:[%s1 + $0x1b8] sm:$0xff]
  %v72 = vld [vmem:[%s1 + $0x1c0] sm:$0xff]
  %v73 = vld [vmem:[%s1 + $0x1c8] sm:$0xff]
  %v74 = vld [vmem:[%s1 + $0x1d0] sm:$0xff]
  %v75 = vld [vmem:[%s1 + $0x1d8] sm:$0xff]
  %v76 = vld [vmem:[%s1 + $0x1e0] sm:$0xff]
  %v77 = vld [vmem:[%s1 + $0x1e8] sm:$0xff]
  %v78 = vld [vmem:[%s1 + $0x1f0] sm:$0xff]
  %v79 = vld [vmem:[%s1 + $0x1f8] sm:$0xff]
  %v80 = vld [vmem:[%s1 + $0x200] sm:$0xff]
  %v81 = vld [vmem:[%s1 + $0x208] sm:$0xff]
  %v82 = vld [vmem:[%s1 + $0x210] sm:$0xff]
  %v83 = vld [vmem:[%s1 + $0x218] sm:$0xff]
  %v84 = vld [vmem:[%s1 + $0x220] sm:$0xff]
  %v85 = vld [vmem:[%s1 + $0x228] sm:$0xff]
  %v86 = vld [vmem:[%s1 + $0x230] sm:$0xff]
  %v87 = vld [vmem:[%s1 + $0x238] sm:$0xff]
  %v88 = vld [vmem:[%s1 + $0x240] sm:$0xff]
  %v89 = vld [vmem:[%s1 + $0x248] sm:$0xff]
  %v90 = vld [vmem:[%s1 + $0x250] sm:$0xff]
  %v91 = vld [vmem:[%s1 + $0x258] sm:$0xff]
  %v92 = vld [vmem:[%s1 + $0x260] sm:$0xff]
  %v93 = vld [vmem:[%s1 + $0x268] sm:$0xff]
  %v94 = vld [vmem:[%s1 + $0x270] sm:$0xff]
  %v95 = vld [vmem:[%s1 + $0x278] sm:$0xff]
  %v96 = vld [vmem:[%s1 + $0x280] sm:$0xff]
  %v97 = vld [vmem:[%s1 + $0x288] sm:$0xff]
  %v98 = vld [vmem:[%s1 + $0x290] sm:$0xff]
  %v99 = vld [vmem:[%s1 + $0x298] sm:$0xff]
  %v100 = vld [vmem:[%s1 + $0x2a0] sm:$0xff]
  %v101 = vld [vmem:[%s1 + $0x2a8] sm:$0xff]
  %v102 = vld [vmem:[%s1 + $0x2b0] sm:$0xff]
  %v103 = vld [vmem:[%s1 + $0x2b8] sm:$0xff]
  %v104 = vld [vmem:[%s1 + $0x2c0] sm:$0xff]
  %v105 = vld [vmem:[%s1 + $0x2c8] sm:$0xff]
  %v106 = vld [vmem:[%s1 + $0x2d0] sm:$0xff]
  %v107 = vld [vmem:[%s1 + $0x2d8] sm:$0xff]
  %v108 = vld [vmem:[%s1 + $0x2e0] sm:$0xff]
  %v109 = vld [vmem:[%s1 + $0x2e8] sm:$0xff]
  %v110 = vld [vmem:[%s1 + $0x2f0] sm:$0xff]
  %v111 = vld [vmem:[%s1 + $0x2f8] sm:$0xff]
  %v112 = vld [vmem:[%s1 + $0x300] sm:$0xff]
  %v113 = vld [vmem:[%s1 + $0x308] sm:$0xff]
  %v114 = vld [vmem:[%s1 + $0x310] sm:$0xff]
  %v115 = vld [vmem:[%s1 + $0x318] sm:$0xff]
  %v116 = vld [vmem:[%s1 + $0x320] sm:$0xff]
  %v117 = vld [vmem:[%s1 + $0x328] sm:$0xff]
  %v118 = vld [vmem:[%s1 + $0x330] sm:$0xff]
  %v119 = vld [vmem:[%s1 + $0x338] sm:$0xff]
  %v120 = vld [vmem:[%s1 + $0x340] sm:$0xff]
  %v121 = vld [vmem:[%s1 + $0x348] sm:$0xff]
  %v122 = vld [vmem:[%s1 + $0x350] sm:$0xff]
  %v123 = vld [vmem:[%s1 + $0x358] sm:$0xff]
  %v124 = vld [vmem:[%s1 + $0x360] sm:$0xff]
  %v125 = vld [vmem:[%s1 + $0x368] sm:$0xff]
  %v126 = vld [vmem:[%s1 + $0x370] sm:$0xff]
  %v127 = vld [vmem:[%s1 + $0x378] sm:$0xff]
  %v128 = vld [vmem:[%s1 + $0x380] sm:$0xff]
  %v129 = vld [vmem:[%s1 + $0x388] sm:$0xff]
  %v130 = vld [vmem:[%s1 + $0x390] sm:$0xff]
  %v131 = vld [vmem:[%s1 + $0x398] sm:$0xff]
  %v132 = vld [vmem:[%s1 + $0x3a0] sm:$0xff]
  %v133 = vld [vmem:[%s1 + $0x3a8] sm:$0xff]
  %v134 = vld [vmem:[%s1 + $0x3b0] sm:$0xff]
  %v135 = vld [vmem:[%s1 + $0x3b8] sm:$0xff]
  %v136 = vld [vmem:[%s1 + $0x3c0] sm:$0xff]
  %v137 = vld [vmem:[%s1 + $0x3c8] sm:$0xff]
  %v138 = vld [vmem:[%s1 + $0x3d0] sm:$0xff]
  %v139 = vld [vmem:[%s1 + $0x3d8] sm:$0xff]
  %v140 = vld [vmem:[%s1 + $0x3e0] sm:$0xff]
  %v141 = vld [vmem:[%s1 + $0x3e8] sm:$0xff]
  %v142 = vld [vmem:[%s1 + $0x3f0] sm:$0xff]
  %v143 = vld [vmem:[%s1 + $0x3f8] sm:$0xff]
  %v144 = vld [vmem:[%s2] sm:$0xf]
  %v146 = vlaneseq
  %v147 = vshrl.u32 %v146, 7
  %v148 = vsub.s32 0, %v147
  %v149 = vrot.slane %v144, %v148
  %v150 = vlaneseq
  %v151 = vshrl.u32 %v150, 7
  %v152 = vsub.s32 1, %v151
  %v153 = vrot.slane %v144, %v152
  %v154 = vlaneseq
  %v155 = vshrl.u32 %v154, 7
  %v156 = vsub.s32 2, %v155
  %v157 = vrot.slane %v144, %v156
  %v158 = vlaneseq
  %v159 = vshrl.u32 %v158, 7
  %v160 = vsub.s32 3, %v159
  %v161 = vrot.slane %v144, %v160
  %166 = vmatprep.subr.mxu0 %v77
  %167 = vmatpush1.msra.mxu0 %v76
  %168 = vmatprep.subr.mxu0 %v73
  %169 = vmatpush1.msra.mxu0 %v72
  %170 = vmatprep.subr.mxu0 %v69
  %171 = vmatpush1.msra.mxu0 %v68
  %172 = vmatprep.subr.mxu0 %v65
  %173 = vmatpush1.msra.mxu0 %v64
  %174 = vmatprep.subr.mxu0 %v61
  %175 = vmatpush1.msra.mxu0 %v60
  %176 = vmatprep.subr.mxu0 %v57
  %177 = vmatpush1.msra.mxu0 %v56
  %178 = vmatprep.subr.mxu0 %v53
  %179 = vmatpush1.msra.mxu0 %v52
  %180 = vmatprep.subr.mxu0 %v49
  %181 = vmatpush1.msra.mxu0 %v48
  %182 = vmatprep.subr.mxu0 %v45
  %183 = vmatpush1.msra.mxu0 %v44
  %184 = vmatprep.subr.mxu0 %v41
  %185 = vmatpush1.msra.mxu0 %v40
  %186 = vmatprep.subr.mxu0 %v37
  %187 = vmatpush1.msra.mxu0 %v36
  %188 = vmatprep.subr.mxu0 %v33
  %189 = vmatpush1.msra.mxu0 %v32
  %190 = vmatprep.subr.mxu0 %v29
  %191 = vmatpush1.msra.mxu0 %v28
  %192 = vmatprep.subr.mxu0 %v25
  %193 = vmatpush1.msra.mxu0 %v24
  %194 = vmatprep.subr.mxu0 %v21
  %195 = vmatpush1.msra.mxu0 %v20
  %196 = vmatprep.subr.mxu0 %v17
  %197 = vmatpush1.msra.mxu0 %v16
  %198 = vmatprep.subr.mxu0 %v141
  %199 = vmatpush2.msra.mxu0 %v140
  %200 = vmatprep.subr.mxu0 %v137
  %201 = vmatpush2.msra.mxu0 %v136
  %202 = vmatprep.subr.mxu0 %v133
  %203 = vmatpush2.msra.mxu0 %v132
  %204 = vmatprep.subr.mxu0 %v129
  %205 = vmatpush2.msra.mxu0 %v128
  %206 = vmatprep.subr.mxu0 %v125
  %207 = vmatpush2.msra.mxu0 %v124
  %208 = vmatprep.subr.mxu0 %v121
  %209 = vmatpush2.msra.mxu0 %v120
  %210 = vmatprep.subr.mxu0 %v117
  %211 = vmatpush2.msra.mxu0 %v116
  %212 = vmatprep.subr.mxu0 %v113
  %213 = vmatpush2.msra.mxu0 %v112
  %214 = vmatprep.subr.mxu0 %v109
  %215 = vmatpush2.msra.mxu0 %v108
  %216 = vmatprep.subr.mxu0 %v105
  %217 = vmatpush2.msra.mxu0 %v104
  %218 = vmatprep.subr.mxu0 %v101
  %219 = vmatpush2.msra.mxu0 %v100
  %220 = vmatprep.subr.mxu0 %v97
  %221 = vmatpush2.msra.mxu0 %v96
  %222 = vmatprep.subr.mxu0 %v93
  %223 = vmatpush2.msra.mxu0 %v92
  %224 = vmatprep.subr.mxu0 %v89
  %225 = vmatpush2.msra.mxu0 %v88
  %226 = vmatprep.subr.mxu0 %v85
  %227 = vmatpush2.msra.mxu0 %v84
  %228 = vmatprep.subr.mxu0 %v81
  %229 = vmatpush2.msra.mxu0 %v80
  %230 = vmatprep.mubr.f32.mxu0 %v15
  %231 = vmatmul.mubr.f32.gmra.mxu0 %v14
  %v232 = vpop.f32.mrf.mxu0
  %v233 = vadd.f32 %v149, %v232
  %v234 = vpop.f32.mrf.mxu0
  %v235 = vadd.f32 %v153, %v234
  %236 = vdwg.mxu0
  %237 = vmatprep.subr.mxu0 %v79
  %238 = vmatpush1.msra.mxu0 %v78
  %239 = vmatprep.subr.mxu0 %v75
  %240 = vmatpush1.msra.mxu0 %v74
  %241 = vmatprep.subr.mxu0 %v71
  %242 = vmatpush1.msra.mxu0 %v70
  %243 = vmatprep.subr.mxu0 %v67
  %244 = vmatpush1.msra.mxu0 %v66
  %245 = vmatprep.subr.mxu0 %v63
  %246 = vmatpush1.msra.mxu0 %v62
  %247 = vmatprep.subr.mxu0 %v59
  %248 = vmatpush1.msra.mxu0 %v58
  %249 = vmatprep.subr.mxu0 %v55
  %250 = vmatpush1.msra.mxu0 %v54
  %251 = vmatprep.subr.mxu0 %v51
  %252 = vmatpush1.msra.mxu0 %v50
  %253 = vmatprep.subr.mxu0 %v47
  %254 = vmatpush1.msra.mxu0 %v46
  %255 = vmatprep.subr.mxu0 %v43
  %256 = vmatpush1.msra.mxu0 %v42
  %257 = vmatprep.subr.mxu0 %v39
  %258 = vmatpush1.msra.mxu0 %v38
  %259 = vmatprep.subr.mxu0 %v35
  %260 = vmatpush1.msra.mxu0 %v34
  %261 = vmatprep.subr.mxu0 %v31
  %262 = vmatpush1.msra.mxu0 %v30
  %263 = vmatprep.subr.mxu0 %v27
  %264 = vmatpush1.msra.mxu0 %v26
  %265 = vmatprep.subr.mxu0 %v23
  %266 = vmatpush1.msra.mxu0 %v22
  %267 = vmatprep.subr.mxu0 %v19
  %268 = vmatpush1.msra.mxu0 %v18
  %269 = vmatprep.subr.mxu0 %v143
  %270 = vmatpush2.msra.mxu0 %v142
  %271 = vmatprep.subr.mxu0 %v139
  %272 = vmatpush2.msra.mxu0 %v138
  %273 = vmatprep.subr.mxu0 %v135
  %274 = vmatpush2.msra.mxu0 %v134
  %275 = vmatprep.subr.mxu0 %v131
  %276 = vmatpush2.msra.mxu0 %v130
  %277 = vmatprep.subr.mxu0 %v127
  %278 = vmatpush2.msra.mxu0 %v126
  %279 = vmatprep.subr.mxu0 %v123
  %280 = vmatpush2.msra.mxu0 %v122
  %281 = vmatprep.subr.mxu0 %v119
  %282 = vmatpush2.msra.mxu0 %v118
  %283 = vmatprep.subr.mxu0 %v115
  %284 = vmatpush2.msra.mxu0 %v114
  %285 = vmatprep.subr.mxu0 %v111
  %286 = vmatpush2.msra.mxu0 %v110
  %287 = vmatprep.subr.mxu0 %v107
  %288 = vmatpush2.msra.mxu0 %v106
  %289 = vmatprep.subr.mxu0 %v103
  %290 = vmatpush2.msra.mxu0 %v102
  %291 = vmatprep.subr.mxu0 %v99
  %292 = vmatpush2.msra.mxu0 %v98
  %293 = vmatprep.subr.mxu0 %v95
  %294 = vmatpush2.msra.mxu0 %v94
  %295 = vmatprep.subr.mxu0 %v91
  %296 = vmatpush2.msra.mxu0 %v90
  %297 = vmatprep.subr.mxu0 %v87
  %298 = vmatpush2.msra.mxu0 %v86
  %299 = vmatprep.subr.mxu0 %v83
  %300 = vmatpush2.msra.mxu0 %v82
  %301 = vmatprep.mubr.f32.mxu0 %v15
  %302 = vmatmul.mubr.f32.gmra.mxu0 %v14
  %v303 = vpop.f32.mrf.mxu0
  %v304 = vadd.f32 %v157, %v303
  %v305 = vpop.f32.mrf.mxu0
  %v306 = vadd.f32 %v161, %v305
  %307 = vdwg.mxu0
  %308 = vst [vmem:[%s3] sm:$0xff] %v233
  %309 = vst [vmem:[%s3 + $0x8] sm:$0xff] %v235
  %310 = vst [vmem:[%s3 + $0x10] sm:$0xff] %v304
  %311 = vst [vmem:[%s3 + $0x18] sm:$0xff] %v306
  // Predicated region
  $region14: #{_forward_impl.100} parent=0 // pred_check
    _
  $region15: #{_forward_impl.100} parent=0 // pred_check_branch
    %313 = sbr.rel (0) target = $region17
  $region16: #{_forward_impl.100} parent=0 // pred_region
    _
  $region17: #{_forward_impl.100} parent=0 // pred_fallthru
    _
  // Predicated region
  $region18: #{_forward_impl.100} parent=0 // pred_check
    _
  $region19: #{_forward_impl.100} parent=0 // pred_check_branch
    %315 = sbr.rel (0) target = $region21
  $region20: #{_forward_impl.100} parent=0 // pred_region
    _
  $region21: #{_forward_impl.100} parent=0 // pred_fallthru
    _

</llo_original>
